<compile_context>
chip_gen: v5e
topology: v5e:2x2
jax: 0.10.0
libtpu: 0.0.40
codegen_flags: <defaults>
</compile_context>

<pallas_src>
import random

import jax
import jax.numpy as jnp
from jax.experimental import pallas as pl
from jax.experimental.pallas import tpu as pltpu

# ---------------- config (small, consistent with the module) ----------------
EN_VOCAB = 40          # encoder vocab
CN_VOCAB = 50          # decoder.cn_vocab_size
EMB_DIM = 16
HID_DIM = 16           # encoder GRU hidden size per direction
N_LAYERS = 2           # encoder.n_layers == decoder.n_layers
DEC_HID = 2 * HID_DIM  # decoder hidden = concat(fwd, bwd) encoder hidden
BATCH = 2
SRC_LEN = 8
TGT_LEN = 6
VPAD = 128             # vocab head padded to a full lane width
NEG_PAD = -1e30        # pad-lane bias so argmax never selects a pad lane

_VMEM_SPEC = pl.BlockSpec(memory_space=pltpu.MemorySpace.VMEM)
_SMEM_SPEC = pl.BlockSpec(memory_space=pltpu.MemorySpace.SMEM)


# --------------------------- shared GRU cell math -----------------------------
def _gru_step(x, h, w_ih, w_hh, b_ih, b_hh, hid):
    """PyTorch nn.GRU cell with stacked gate weights.

    w_ih: (I, 3H)  w_hh: (H, 3H)  b_ih/b_hh: (*, 3H), gate order [r, z, n].
    r = sigmoid(x Wir + b_ir + h Whr + b_hr)
    z = sigmoid(x Wiz + b_iz + h Whz + b_hz)
    n = tanh  (x Win + b_in + r * (h Whn + b_hn))
    h' = (1 - z) * n + z * h
    """
    gi = jnp.dot(x, w_ih, preferred_element_type=jnp.float32) + b_ih
    gh = jnp.dot(h, w_hh, preferred_element_type=jnp.float32) + b_hh
    r = jax.nn.sigmoid(gi[:, :hid] + gh[:, :hid])
    z = jax.nn.sigmoid(gi[:, hid:2 * hid] + gh[:, hid:2 * hid])
    n = jnp.tanh(gi[:, 2 * hid:] + r * gh[:, 2 * hid:])
    return (1.0 - z) * n + z * h


# ----------------------------- encoder kernel --------------------------------
def _encoder_kernel(src_ref,
                    wih0_ref, whh0_ref, bih0_ref, bhh0_ref,   # layer 0, dirs stacked (2, ...)
                    wih1_ref, whh1_ref, bih1_ref, bhh1_ref,   # layer 1
                    enc_out_ref, dec_h0_ref):
    """Full bidirectional 2-layer GRU encoder in one kernel.

    src_ref: (S, B, E) embedded source.
    enc_out_ref: (S, B, 2H) final-layer outputs.
    dec_h0_ref: (L, B, 2H) decoder initial hidden (cat(fwd_final, bwd_final)).
    """
    S, B, _ = src_ref.shape
    H = HID_DIM

    xs = [src_ref[t] for t in range(S)]                # list of (B, E)
    layer_refs = [(wih0_ref, whh0_ref, bih0_ref, bhh0_ref),
                  (wih1_ref, whh1_ref, bih1_ref, bhh1_ref)]

    for l in range(N_LAYERS):
        wih_r, whh_r, bih_r, bhh_r = layer_refs[l]
        # hoist weight loads + bias broadcasts out of the time loops
        dirs = []
        for d in range(2):
            dirs.append((wih_r[d], whh_r[d],
                         jnp.broadcast_to(bih_r[d], (B, 3 * H)),
                         jnp.broadcast_to(bhh_r[d], (B, 3 * H))))
        (wih_f, whh_f, bih_f, bhh_f) = dirs[0]
        (wih_b, whh_b, bih_b, bhh_b) = dirs[1]

        h = jnp.zeros((B, H), jnp.float32)
        fwd = []
        for t in range(S):
            h = _gru_step(xs[t], h, wih_f, whh_f, bih_f, bhh_f, H)
            fwd.append(h)
        hf = h

        h = jnp.zeros((B, H), jnp.float32)
        bwd = [None] * S
        for t in reversed(range(S)):
            h = _gru_step(xs[t], h, wih_b, whh_b, bih_b, bhh_b, H)
            bwd[t] = h
        hb = h

        xs = [jnp.concatenate([fwd[t], bwd[t]], axis=-1) for t in range(S)]
        # PyTorch: h_n.view(L, 2, B, H); cat(fwd, bwd) along features
        dec_h0_ref[l] = jnp.concatenate([hf, hb], axis=-1)

    for t in range(S):
        enc_out_ref[t] = xs[t]


def encoder_pallas(params, src_emb_sbe):
    S, B, _ = src_emb_sbe.shape
    enc_args = []
    for l in range(N_LAYERS):
        p = params["enc"][l]
        enc_args += [p["w_ih"], p["w_hh"], p["b_ih"], p["b_hh"]]
    return pl.pallas_call(
        _encoder_kernel,
        out_shape=(jax.ShapeDtypeStruct((S, B, 2 * HID_DIM), jnp.float32),
                   jax.ShapeDtypeStruct((N_LAYERS, B, 2 * HID_DIM), jnp.float32)),
        in_specs=[_VMEM_SPEC] * (1 + len(enc_args)),
        out_specs=(_VMEM_SPEC, _VMEM_SPEC),
    )(src_emb_sbe, *enc_args)


# ----------------------------- decoder kernel --------------------------------
def _decoder_kernel(flags_ref,                       # SMEM (T-1,) int32
                    tgt_emb_ref, cn_emb_ref, h0_ref,
                    wih0_ref, whh0_ref, bih0_ref, bhh0_ref,
                    wih1_ref, whh1_ref, bih1_ref, bhh1_ref,
                    w1_ref, b1_ref, w2_ref, b2_ref, w3_ref, b3_ref,
                    out_ref, preds_ref):
    """All T-1 decoder steps fused (embed-select, 2 GRU cells, vocab head).

    tgt_emb_ref: (T, B, E) teacher-forced embeddings.
    cn_emb_ref:  (V, E) embedding table (greedy path via one-hot matmul).
    h0_ref:      (L, B, 2H) initial hidden from the encoder.
    out_ref:     (T, B, VPAD) logits (row 0 left zero, like PyTorch).
    preds_ref:   (B, T-1) int32 greedy tokens.
    """
    T, B, _ = tgt_emb_ref.shape
    V = cn_emb_ref.shape[0]
    VP = out_ref.shape[2]
    H = h0_ref.shape[2]

    # hoist all weight loads / bias broadcasts out of the time loop
    layer_params = [
        (wih0_ref[...], whh0_ref[...],
         jnp.broadcast_to(bih0_ref[...], (B, 3 * H)),
         jnp.broadcast_to(bhh0_ref[...], (B, 3 * H))),
        (wih1_ref[...], whh1_ref[...],
         jnp.broadcast_to(bih1_ref[...], (B, 3 * H)),
         jnp.broadcast_to(bhh1_ref[...], (B, 3 * H))),
    ]
    w1 = w1_ref[...]; b1 = jnp.broadcast_to(b1_ref[...], (B, w1_ref.shape[1]))
    w2 = w2_ref[...]; b2 = jnp.broadcast_to(b2_ref[...], (B, w2_ref.shape[1]))
    w3 = w3_ref[...]; b3 = jnp.broadcast_to(b3_ref[...], (B, w3_ref.shape[1]))
    cn_emb = cn_emb_ref[...]

    out_ref[0] = jnp.zeros((B, VP), jnp.float32)       # step 0 stays zero
    hidden = [h0_ref[0], h0_ref[1]]
    x_emb = tgt_emb_ref[0]                             # input = target[:, 0]
    tops = []

    for t in range(1, T):
        x = x_emb
        for l in range(N_LAYERS):
            wih, whh, bih, bhh = layer_params[l]
            hidden[l] = _gru_step(x, hidden[l], wih, whh, bih, bhh, H)
            x = hidden[l]
        z1 = jnp.dot(x, w1, preferred_element_type=jnp.float32) + b1
        z2 = jnp.dot(z1, w2, preferred_element_type=jnp.float32) + b2
        logits = jnp.dot(z2, w3, preferred_element_type=jnp.float32) + b3   # (B, VP)
        out_ref[t] = logits                                                 # lane-dense store

        # argmax over lanes (pad lanes carry -1e30 bias -> never selected)
        vmax = jnp.max(logits, axis=-1, keepdims=True)
        lane = jax.lax.broadcasted_iota(jnp.int32, (B, VP), 1)
        top1 = jnp.min(jnp.where(logits == vmax, lane, VP),
                       axis=-1, keepdims=True)                              # (B, 1) int32
        tops.append(top1)

        if t < T - 1:
            # teacher-forcing select (traced flag from SMEM, no recompiles)
            sel = (flags_ref[t - 1] > 0).astype(jnp.float32)
            onehot = (jax.lax.broadcasted_iota(jnp.int32, (B, V), 1)
                      == top1).astype(jnp.float32)
            greedy_emb = jnp.dot(onehot, cn_emb, preferred_element_type=jnp.float32)
            x_emb = sel * tgt_emb_ref[t] + (1.0 - sel) * greedy_emb

    preds_ref[...] = jnp.concatenate(tops, axis=1)


def decoder_pallas(params, tf_flags, tgt_emb_tbe, dec_h0):
    T, B, _ = tgt_emb_tbe.shape
    w3p = jnp.pad(params["w3"], ((0, 0), (0, VPAD - CN_VOCAB)))
    b3p = jnp.pad(params["b3"], ((0, 0), (0, VPAD - CN_VOCAB)),
                  constant_values=NEG_PAD)
    dec_args = []
    for l in range(N_LAYERS):
        p = params["dec"][l]
        dec_args += [p["w_ih"], p["w_hh"], p["b_ih"], p["b_hh"]]
    n_vmem_inputs = 3 + len(dec_args) + 6
    return pl.pallas_call(
        _decoder_kernel,
        out_shape=(jax.ShapeDtypeStruct((T, B, VPAD), jnp.float32),
                   jax.ShapeDtypeStruct((B, T - 1), jnp.int32)),
        in_specs=[_SMEM_SPEC] + [_VMEM_SPEC] * n_vmem_inputs,
        out_specs=(_VMEM_SPEC, _VMEM_SPEC),
    )(tf_flags, tgt_emb_tbe, params["cn_emb"], dec_h0, *dec_args,
      params["w1"], params["b1"], params["w2"], params["b2"], w3p, b3p)


# ------------------------ parameters (deterministic) --------------------------
def init_params(key):
    def nrm(k, shape, scale=0.1):
        return scale * jax.random.normal(k, shape, dtype=jnp.float32)

    keys = iter(jax.random.split(key, 64))
    params = {
        "en_emb": nrm(next(keys), (EN_VOCAB, EMB_DIM)),
        "cn_emb": nrm(next(keys), (CN_VOCAB, EMB_DIM)),
    }
    enc = []
    for l in range(N_LAYERS):
        in_dim = EMB_DIM if l == 0 else 2 * HID_DIM
        enc.append(dict(
            w_ih=nrm(next(keys), (2, in_dim, 3 * HID_DIM)),     # dirs stacked
            w_hh=nrm(next(keys), (2, HID_DIM, 3 * HID_DIM)),
            b_ih=nrm(next(keys), (2, 1, 3 * HID_DIM)),
            b_hh=nrm(next(keys), (2, 1, 3 * HID_DIM)),
        ))
    params["enc"] = enc

    dec = []
    for l in range(N_LAYERS):
        in_dim = EMB_DIM if l == 0 else DEC_HID
        dec.append(dict(
            w_ih=nrm(next(keys), (in_dim, 3 * DEC_HID)),
            w_hh=nrm(next(keys), (DEC_HID, 3 * DEC_HID)),
            b_ih=nrm(next(keys), (1, 3 * DEC_HID)),
            b_hh=nrm(next(keys), (1, 3 * DEC_HID)),
        ))
    params["dec"] = dec

    params["w1"] = nrm(next(keys), (DEC_HID, DEC_HID * 2))
    params["b1"] = nrm(next(keys), (1, DEC_HID * 2))
    params["w2"] = nrm(next(keys), (DEC_HID * 2, DEC_HID * 4))
    params["b2"] = nrm(next(keys), (1, DEC_HID * 4))
    params["w3"] = nrm(next(keys), (DEC_HID * 4, CN_VOCAB))
    params["b3"] = nrm(next(keys), (1, CN_VOCAB))
    return params


# ------------------------------ model glue ------------------------------------
def seq2seq_forward(params, src_ids, tgt_ids, tf_flags):
    """Mirrors Seq2Seq.forward: returns (outputs[B,T,V], preds[B,T-1])."""
    # token embedding gathers stay in XLA (one gather each), kernels get dense inputs
    src_emb = jnp.transpose(jnp.take(params["en_emb"], src_ids, axis=0), (1, 0, 2))  # (S,B,E)
    tgt_emb = jnp.transpose(jnp.take(params["cn_emb"], tgt_ids, axis=0), (1, 0, 2))  # (T,B,E)

    enc_out_sbh, dec_h0 = encoder_pallas(params, src_emb)
    # encoder_outputs (B,S,2H) is computed but unused by the isatt=False decoder
    _encoder_outputs = jnp.transpose(enc_out_sbh, (1, 0, 2))
    del _encoder_outputs

    out_tbv, preds = decoder_pallas(params, tf_flags, tgt_emb, dec_h0)
    outputs = jnp.transpose(out_tbv, (1, 0, 2))[:, :, :CN_VOCAB]
    return outputs, preds


# ------------------------- pure-JAX reference (check) --------------------------
def seq2seq_reference(params, src_ids, tgt_ids, tf_flags):
    B, S = src_ids.shape
    _, T = tgt_ids.shape
    x_bse = jnp.take(params["en_emb"], src_ids, axis=0)
    xs = [x_bse[:, t] for t in range(S)]
    dec_h = []
    for l in range(N_LAYERS):
        p = params["enc"][l]
        h = jnp.zeros((B, HID_DIM), jnp.float32)
        fwd = []
        for t in range(S):
            h = _gru_step(xs[t], h, p["w_ih"][0], p["w_hh"][0],
                          p["b_ih"][0], p["b_hh"][0], HID_DIM)
            fwd.append(h)
        hf = h
        h = jnp.zeros((B, HID_DIM), jnp.float32)
        bwd = [None] * S
        for t in reversed(range(S)):
            h = _gru_step(xs[t], h, p["w_ih"][1], p["w_hh"][1],
                          p["b_ih"][1], p["b_hh"][1], HID_DIM)
            bwd[t] = h
        hb = h
        xs = [jnp.concatenate([fwd[t], bwd[t]], -1) for t in range(S)]
        dec_h.append(jnp.concatenate([hf, hb], -1))

    outputs = jnp.zeros((B, T, CN_VOCAB), jnp.float32)
    x_emb = jnp.take(params["cn_emb"], tgt_ids[:, 0], axis=0)
    preds = []
    for t in range(1, T):
        x = x_emb
        for l in range(N_LAYERS):
            dp = params["dec"][l]
            dec_h[l] = _gru_step(x, dec_h[l], dp["w_ih"], dp["w_hh"],
                                 dp["b_ih"], dp["b_hh"], DEC_HID)
            x = dec_h[l]
        z = x @ params["w1"] + params["b1"]
        z = z @ params["w2"] + params["b2"]
        logits = z @ params["w3"] + params["b3"]
        outputs = outputs.at[:, t].set(logits)
        top1 = jnp.argmax(logits, axis=1).astype(jnp.int32)
        x_emb = jnp.where(tf_flags[t - 1] > 0,
                          jnp.take(params["cn_emb"], tgt_ids[:, t], axis=0),
                          jnp.take(params["cn_emb"], top1, axis=0))
        preds.append(top1[:, None])
    return outputs, jnp.concatenate(preds, axis=1)


# TODO(synk): Seq2Seq.inference (beam search with a host PriorityQueue and
# data-dependent early exit) is host control flow with no clean Pallas
# equivalent; only forward() (and the greedy compute path) is implemented.

if __name__ == "__main__":
    random.seed(0)
    teacher_forcing_ratio = 0.6  # mix of teacher-forced and greedy steps

    key = jax.random.PRNGKey(0)
    kp, ks, kt = jax.random.split(key, 3)
    params = init_params(kp)
    src = jax.random.randint(ks, (BATCH, SRC_LEN), 0, EN_VOCAB, dtype=jnp.int32)
    tgt = jax.random.randint(kt, (BATCH, TGT_LEN), 0, CN_VOCAB, dtype=jnp.int32)
    # host randomness per step, as in the PyTorch loop, but passed as a traced
    # array so changing flags never triggers a recompile
    tf_flags = jnp.array([1 if random.random() <= teacher_forcing_ratio else 0
                          for _ in range(TGT_LEN - 1)], dtype=jnp.int32)

    fwd = jax.jit(seq2seq_forward)
    outputs, preds = fwd(params, src, tgt, tf_flags)
    jax.block_until_ready((outputs, preds))

    assert outputs.shape == (BATCH, TGT_LEN, CN_VOCAB)
    assert outputs.dtype == jnp.float32
    assert preds.shape == (BATCH, TGT_LEN - 1)
    assert bool(jnp.all(outputs[:, 0] == 0.0))  # step 0 left as zeros, like PyTorch

    ref_out, ref_preds = jax.jit(seq2seq_reference)(params, src, tgt, tf_flags)
    jax.block_until_ready((ref_out, ref_preds))
    assert jnp.allclose(outputs, ref_out, atol=1e-4, rtol=1e-4), \
        float(jnp.max(jnp.abs(outputs - ref_out)))
    assert bool(jnp.all(preds == ref_preds))
    print("KERNEL_OK")
</pallas_src>

<mosaic_0001>
module attributes {stable_mosaic.version = 11 : i64} {
  func.func @_encoder_kernel(%arg0: memref<8x2x16xf32, #tpu.memory_space<vmem>>, %arg1: memref<2x16x48xf32, #tpu.memory_space<vmem>>, %arg2: memref<2x16x48xf32, #tpu.memory_space<vmem>>, %arg3: memref<2x1x48xf32, #tpu.memory_space<vmem>>, %arg4: memref<2x1x48xf32, #tpu.memory_space<vmem>>, %arg5: memref<2x32x48xf32, #tpu.memory_space<vmem>>, %arg6: memref<2x16x48xf32, #tpu.memory_space<vmem>>, %arg7: memref<2x1x48xf32, #tpu.memory_space<vmem>>, %arg8: memref<2x1x48xf32, #tpu.memory_space<vmem>>, %arg9: memref<8x2x32xf32, #tpu.memory_space<vmem>>, %arg10: memref<2x2x32xf32, #tpu.memory_space<vmem>>) attributes {dimension_semantics = [], scalar_prefetch = 0 : i64, scratch_operands = 0 : i64, tpu.core_type = #tpu.core_type<tc>} {
    %c0 = arith.constant 0 : index
    %c0_0 = arith.constant 0 : index
    %c0_1 = arith.constant 0 : index
    %0 = vector.load %arg0[%c0, %c0_0, %c0_1] : memref<8x2x16xf32, #tpu.memory_space<vmem>>, vector<1x2x16xf32>
    %1 = vector.shape_cast %0 : vector<1x2x16xf32> to vector<2x16xf32>
    %c1 = arith.constant 1 : index
    %c0_2 = arith.constant 0 : index
    %c0_3 = arith.constant 0 : index
    %2 = vector.load %arg0[%c1, %c0_2, %c0_3] : memref<8x2x16xf32, #tpu.memory_space<vmem>>, vector<1x2x16xf32>
    %3 = vector.shape_cast %2 : vector<1x2x16xf32> to vector<2x16xf32>
    %c2 = arith.constant 2 : index
    %c0_4 = arith.constant 0 : index
    %c0_5 = arith.constant 0 : index
    %4 = vector.load %arg0[%c2, %c0_4, %c0_5] : memref<8x2x16xf32, #tpu.memory_space<vmem>>, vector<1x2x16xf32>
    %5 = vector.shape_cast %4 : vector<1x2x16xf32> to vector<2x16xf32>
    %c3 = arith.constant 3 : index
    %c0_6 = arith.constant 0 : index
    %c0_7 = arith.constant 0 : index
    %6 = vector.load %arg0[%c3, %c0_6, %c0_7] : memref<8x2x16xf32, #tpu.memory_space<vmem>>, vector<1x2x16xf32>
    %7 = vector.shape_cast %6 : vector<1x2x16xf32> to vector<2x16xf32>
    %c4 = arith.constant 4 : index
    %c0_8 = arith.constant 0 : index
    %c0_9 = arith.constant 0 : index
    %8 = vector.load %arg0[%c4, %c0_8, %c0_9] : memref<8x2x16xf32, #tpu.memory_space<vmem>>, vector<1x2x16xf32>
    %9 = vector.shape_cast %8 : vector<1x2x16xf32> to vector<2x16xf32>
    %c5 = arith.constant 5 : index
    %c0_10 = arith.constant 0 : index
    %c0_11 = arith.constant 0 : index
    %10 = vector.load %arg0[%c5, %c0_10, %c0_11] : memref<8x2x16xf32, #tpu.memory_space<vmem>>, vector<1x2x16xf32>
    %11 = vector.shape_cast %10 : vector<1x2x16xf32> to vector<2x16xf32>
    %c6 = arith.constant 6 : index
    %c0_12 = arith.constant 0 : index
    %c0_13 = arith.constant 0 : index
    %12 = vector.load %arg0[%c6, %c0_12, %c0_13] : memref<8x2x16xf32, #tpu.memory_space<vmem>>, vector<1x2x16xf32>
    %13 = vector.shape_cast %12 : vector<1x2x16xf32> to vector<2x16xf32>
    %c7 = arith.constant 7 : index
    %c0_14 = arith.constant 0 : index
    %c0_15 = arith.constant 0 : index
    %14 = vector.load %arg0[%c7, %c0_14, %c0_15] : memref<8x2x16xf32, #tpu.memory_space<vmem>>, vector<1x2x16xf32>
    %15 = vector.shape_cast %14 : vector<1x2x16xf32> to vector<2x16xf32>
    %c0_16 = arith.constant 0 : index
    %c0_17 = arith.constant 0 : index
    %c0_18 = arith.constant 0 : index
    %16 = vector.load %arg1[%c0_16, %c0_17, %c0_18] : memref<2x16x48xf32, #tpu.memory_space<vmem>>, vector<1x16x48xf32>
    %17 = vector.shape_cast %16 : vector<1x16x48xf32> to vector<16x48xf32>
    %c0_19 = arith.constant 0 : index
    %c0_20 = arith.constant 0 : index
    %c0_21 = arith.constant 0 : index
    %18 = vector.load %arg2[%c0_19, %c0_20, %c0_21] : memref<2x16x48xf32, #tpu.memory_space<vmem>>, vector<1x16x48xf32>
    %19 = vector.shape_cast %18 : vector<1x16x48xf32> to vector<16x48xf32>
    %c0_22 = arith.constant 0 : index
    %c0_23 = arith.constant 0 : index
    %c0_24 = arith.constant 0 : index
    %20 = vector.load %arg3[%c0_22, %c0_23, %c0_24] : memref<2x1x48xf32, #tpu.memory_space<vmem>>, vector<1x1x48xf32>
    %21 = vector.shape_cast %20 : vector<1x1x48xf32> to vector<1x48xf32>
    %22 = vector.shape_cast %21 : vector<1x48xf32> to vector<1x48xf32>
    %23 = vector.broadcast %22 : vector<1x48xf32> to vector<2x48xf32>
    %c0_25 = arith.constant 0 : index
    %c0_26 = arith.constant 0 : index
    %c0_27 = arith.constant 0 : index
    %24 = vector.load %arg4[%c0_25, %c0_26, %c0_27] : memref<2x1x48xf32, #tpu.memory_space<vmem>>, vector<1x1x48xf32>
    %25 = vector.shape_cast %24 : vector<1x1x48xf32> to vector<1x48xf32>
    %26 = vector.shape_cast %25 : vector<1x48xf32> to vector<1x48xf32>
    %27 = vector.broadcast %26 : vector<1x48xf32> to vector<2x48xf32>
    %c1_28 = arith.constant 1 : index
    %c0_29 = arith.constant 0 : index
    %c0_30 = arith.constant 0 : index
    %28 = vector.load %arg1[%c1_28, %c0_29, %c0_30] : memref<2x16x48xf32, #tpu.memory_space<vmem>>, vector<1x16x48xf32>
    %29 = vector.shape_cast %28 : vector<1x16x48xf32> to vector<16x48xf32>
    %c1_31 = arith.constant 1 : index
    %c0_32 = arith.constant 0 : index
    %c0_33 = arith.constant 0 : index
    %30 = vector.load %arg2[%c1_31, %c0_32, %c0_33] : memref<2x16x48xf32, #tpu.memory_space<vmem>>, vector<1x16x48xf32>
    %31 = vector.shape_cast %30 : vector<1x16x48xf32> to vector<16x48xf32>
    %c1_34 = arith.constant 1 : index
    %c0_35 = arith.constant 0 : index
    %c0_36 = arith.constant 0 : index
    %32 = vector.load %arg3[%c1_34, %c0_35, %c0_36] : memref<2x1x48xf32, #tpu.memory_space<vmem>>, vector<1x1x48xf32>
    %33 = vector.shape_cast %32 : vector<1x1x48xf32> to vector<1x48xf32>
    %34 = vector.shape_cast %33 : vector<1x48xf32> to vector<1x48xf32>
    %35 = vector.broadcast %34 : vector<1x48xf32> to vector<2x48xf32>
    %c1_37 = arith.constant 1 : index
    %c0_38 = arith.constant 0 : index
    %c0_39 = arith.constant 0 : index
    %36 = vector.load %arg4[%c1_37, %c0_38, %c0_39] : memref<2x1x48xf32, #tpu.memory_space<vmem>>, vector<1x1x48xf32>
    %37 = vector.shape_cast %36 : vector<1x1x48xf32> to vector<1x48xf32>
    %38 = vector.shape_cast %37 : vector<1x48xf32> to vector<1x48xf32>
    %39 = vector.broadcast %38 : vector<1x48xf32> to vector<2x48xf32>
    %cst = arith.constant 0.000000e+00 : f32
    %40 = vector.broadcast %cst : f32 to vector<2x16xf32>
    %cst_40 = arith.constant dense<0.000000e+00> : vector<2x48xf32>
    %41 = tpu.matmul %1, %17, %cst_40 {dimension_numbers = #tpu.dot_dimension_numbers<[1], [0], [0], [1], [0, 0, 1, 1], [], []>} : vector<2x16xf32>, vector<16x48xf32>, vector<2x48xf32> -> vector<2x48xf32>
    %42 = arith.addf %41, %23 : vector<2x48xf32>
    %cst_41 = arith.constant dense<0.000000e+00> : vector<2x48xf32>
    %43 = tpu.matmul %40, %19, %cst_41 {dimension_numbers = #tpu.dot_dimension_numbers<[1], [0], [0], [1], [0, 0, 1, 1], [], []>} : vector<2x16xf32>, vector<16x48xf32>, vector<2x48xf32> -> vector<2x48xf32>
    %44 = arith.addf %43, %27 : vector<2x48xf32>
    %45 = vector.extract_strided_slice %42 {offsets = [0, 0], sizes = [2, 16], strides = [1, 1]} : vector<2x48xf32> to vector<2x16xf32>
    %46 = vector.extract_strided_slice %44 {offsets = [0, 0], sizes = [2, 16], strides = [1, 1]} : vector<2x48xf32> to vector<2x16xf32>
    %47 = arith.addf %45, %46 : vector<2x16xf32>
    %48 = arith.negf %47 : vector<2x16xf32>
    %49 = math.exp %48 : vector<2x16xf32>
    %cst_42 = arith.constant 1.000000e+00 : f32
    %50 = vector.broadcast %cst_42 : f32 to vector<2x16xf32>
    %51 = arith.addf %50, %49 : vector<2x16xf32>
    %52 = arith.divf %50, %51 : vector<2x16xf32>
    %53 = vector.extract_strided_slice %42 {offsets = [0, 16], sizes = [2, 16], strides = [1, 1]} : vector<2x48xf32> to vector<2x16xf32>
    %54 = vector.extract_strided_slice %44 {offsets = [0, 16], sizes = [2, 16], strides = [1, 1]} : vector<2x48xf32> to vector<2x16xf32>
    %55 = arith.addf %53, %54 : vector<2x16xf32>
    %56 = arith.negf %55 : vector<2x16xf32>
    %57 = math.exp %56 : vector<2x16xf32>
    %cst_43 = arith.constant 1.000000e+00 : f32
    %58 = vector.broadcast %cst_43 : f32 to vector<2x16xf32>
    %59 = arith.addf %58, %57 : vector<2x16xf32>
    %60 = arith.divf %58, %59 : vector<2x16xf32>
    %61 = vector.extract_strided_slice %42 {offsets = [0, 32], sizes = [2, 16], strides = [1, 1]} : vector<2x48xf32> to vector<2x16xf32>
    %62 = vector.extract_strided_slice %44 {offsets = [0, 32], sizes = [2, 16], strides = [1, 1]} : vector<2x48xf32> to vector<2x16xf32>
    %63 = arith.mulf %52, %62 : vector<2x16xf32>
    %64 = arith.addf %61, %63 : vector<2x16xf32>
    %65 = math.tanh %64 : vector<2x16xf32>
    %cst_44 = arith.constant 1.000000e+00 : f32
    %66 = vector.broadcast %cst_44 : f32 to vector<2x16xf32>
    %67 = arith.subf %66, %60 : vector<2x16xf32>
    %68 = arith.mulf %67, %65 : vector<2x16xf32>
    %69 = arith.mulf %60, %40 : vector<2x16xf32>
    %70 = arith.addf %68, %69 : vector<2x16xf32>
    %cst_45 = arith.constant dense<0.000000e+00> : vector<2x48xf32>
    %71 = tpu.matmul %3, %17, %cst_45 {dimension_numbers = #tpu.dot_dimension_numbers<[1], [0], [0], [1], [0, 0, 1, 1], [], []>} : vector<2x16xf32>, vector<16x48xf32>, vector<2x48xf32> -> vector<2x48xf32>
    %72 = arith.addf %71, %23 : vector<2x48xf32>
    %cst_46 = arith.constant dense<0.000000e+00> : vector<2x48xf32>
    %73 = tpu.matmul %70, %19, %cst_46 {dimension_numbers = #tpu.dot_dimension_numbers<[1], [0], [0], [1], [0, 0, 1, 1], [], []>} : vector<2x16xf32>, vector<16x48xf32>, vector<2x48xf32> -> vector<2x48xf32>
    %74 = arith.addf %73, %27 : vector<2x48xf32>
    %75 = vector.extract_strided_slice %72 {offsets = [0, 0], sizes = [2, 16], strides = [1, 1]} : vector<2x48xf32> to vector<2x16xf32>
    %76 = vector.extract_strided_slice %74 {offsets = [0, 0], sizes = [2, 16], strides = [1, 1]} : vector<2x48xf32> to vector<2x16xf32>
    %77 = arith.addf %75, %76 : vector<2x16xf32>
    %78 = arith.negf %77 : vector<2x16xf32>
    %79 = math.exp %78 : vector<2x16xf32>
    %cst_47 = arith.constant 1.000000e+00 : f32
    %80 = vector.broadcast %cst_47 : f32 to vector<2x16xf32>
    %81 = arith.addf %80, %79 : vector<2x16xf32>
    %82 = arith.divf %80, %81 : vector<2x16xf32>
    %83 = vector.extract_strided_slice %72 {offsets = [0, 16], sizes = [2, 16], strides = [1, 1]} : vector<2x48xf32> to vector<2x16xf32>
    %84 = vector.extract_strided_slice %74 {offsets = [0, 16], sizes = [2, 16], strides = [1, 1]} : vector<2x48xf32> to vector<2x16xf32>
    %85 = arith.addf %83, %84 : vector<2x16xf32>
    %86 = arith.negf %85 : vector<2x16xf32>
    %87 = math.exp %86 : vector<2x16xf32>
    %cst_48 = arith.constant 1.000000e+00 : f32
    %88 = vector.broadcast %cst_48 : f32 to vector<2x16xf32>
    %89 = arith.addf %88, %87 : vector<2x16xf32>
    %90 = arith.divf %88, %89 : vector<2x16xf32>
    %91 = vector.extract_strided_slice %72 {offsets = [0, 32], sizes = [2, 16], strides = [1, 1]} : vector<2x48xf32> to vector<2x16xf32>
    %92 = vector.extract_strided_slice %74 {offsets = [0, 32], sizes = [2, 16], strides = [1, 1]} : vector<2x48xf32> to vector<2x16xf32>
    %93 = arith.mulf %82, %92 : vector<2x16xf32>
    %94 = arith.addf %91, %93 : vector<2x16xf32>
    %95 = math.tanh %94 : vector<2x16xf32>
    %cst_49 = arith.constant 1.000000e+00 : f32
    %96 = vector.broadcast %cst_49 : f32 to vector<2x16xf32>
    %97 = arith.subf %96, %90 : vector<2x16xf32>
    %98 = arith.mulf %97, %95 : vector<2x16xf32>
    %99 = arith.mulf %90, %70 : vector<2x16xf32>
    %100 = arith.addf %98, %99 : vector<2x16xf32>
    %cst_50 = arith.constant dense<0.000000e+00> : vector<2x48xf32>
    %101 = tpu.matmul %5, %17, %cst_50 {dimension_numbers = #tpu.dot_dimension_numbers<[1], [0], [0], [1], [0, 0, 1, 1], [], []>} : vector<2x16xf32>, vector<16x48xf32>, vector<2x48xf32> -> vector<2x48xf32>
    %102 = arith.addf %101, %23 : vector<2x48xf32>
    %cst_51 = arith.constant dense<0.000000e+00> : vector<2x48xf32>
    %103 = tpu.matmul %100, %19, %cst_51 {dimension_numbers = #tpu.dot_dimension_numbers<[1], [0], [0], [1], [0, 0, 1, 1], [], []>} : vector<2x16xf32>, vector<16x48xf32>, vector<2x48xf32> -> vector<2x48xf32>
    %104 = arith.addf %103, %27 : vector<2x48xf32>
    %105 = vector.extract_strided_slice %102 {offsets = [0, 0], sizes = [2, 16], strides = [1, 1]} : vector<2x48xf32> to vector<2x16xf32>
    %106 = vector.extract_strided_slice %104 {offsets = [0, 0], sizes = [2, 16], strides = [1, 1]} : vector<2x48xf32> to vector<2x16xf32>
    %107 = arith.addf %105, %106 : vector<2x16xf32>
    %108 = arith.negf %107 : vector<2x16xf32>
    %109 = math.exp %108 : vector<2x16xf32>
    %cst_52 = arith.constant 1.000000e+00 : f32
    %110 = vector.broadcast %cst_52 : f32 to vector<2x16xf32>
    %111 = arith.addf %110, %109 : vector<2x16xf32>
    %112 = arith.divf %110, %111 : vector<2x16xf32>
    %113 = vector.extract_strided_slice %102 {offsets = [0, 16], sizes = [2, 16], strides = [1, 1]} : vector<2x48xf32> to vector<2x16xf32>
    %114 = vector.extract_strided_slice %104 {offsets = [0, 16], sizes = [2, 16], strides = [1, 1]} : vector<2x48xf32> to vector<2x16xf32>
    %115 = arith.addf %113, %114 : vector<2x16xf32>
    %116 = arith.negf %115 : vector<2x16xf32>
    %117 = math.exp %116 : vector<2x16xf32>
    %cst_53 = arith.constant 1.000000e+00 : f32
    %118 = vector.broadcast %cst_53 : f32 to vector<2x16xf32>
    %119 = arith.addf %118, %117 : vector<2x16xf32>
    %120 = arith.divf %118, %119 : vector<2x16xf32>
    %121 = vector.extract_strided_slice %102 {offsets = [0, 32], sizes = [2, 16], strides = [1, 1]} : vector<2x48xf32> to vector<2x16xf32>
    %122 = vector.extract_strided_slice %104 {offsets = [0, 32], sizes = [2, 16], strides = [1, 1]} : vector<2x48xf32> to vector<2x16xf32>
    %123 = arith.mulf %112, %122 : vector<2x16xf32>
    %124 = arith.addf %121, %123 : vector<2x16xf32>
    %125 = math.tanh %124 : vector<2x16xf32>
    %cst_54 = arith.constant 1.000000e+00 : f32
    %126 = vector.broadcast %cst_54 : f32 to vector<2x16xf32>
    %127 = arith.subf %126, %120 : vector<2x16xf32>
    %128 = arith.mulf %127, %125 : vector<2x16xf32>
    %129 = arith.mulf %120, %100 : vector<2x16xf32>
    %130 = arith.addf %128, %129 : vector<2x16xf32>
    %cst_55 = arith.constant dense<0.000000e+00> : vector<2x48xf32>
    %131 = tpu.matmul %7, %17, %cst_55 {dimension_numbers = #tpu.dot_dimension_numbers<[1], [0], [0], [1], [0, 0, 1, 1], [], []>} : vector<2x16xf32>, vector<16x48xf32>, vector<2x48xf32> -> vector<2x48xf32>
    %132 = arith.addf %131, %23 : vector<2x48xf32>
    %cst_56 = arith.constant dense<0.000000e+00> : vector<2x48xf32>
    %133 = tpu.matmul %130, %19, %cst_56 {dimension_numbers = #tpu.dot_dimension_numbers<[1], [0], [0], [1], [0, 0, 1, 1], [], []>} : vector<2x16xf32>, vector<16x48xf32>, vector<2x48xf32> -> vector<2x48xf32>
    %134 = arith.addf %133, %27 : vector<2x48xf32>
    %135 = vector.extract_strided_slice %132 {offsets = [0, 0], sizes = [2, 16], strides = [1, 1]} : vector<2x48xf32> to vector<2x16xf32>
    %136 = vector.extract_strided_slice %134 {offsets = [0, 0], sizes = [2, 16], strides = [1, 1]} : vector<2x48xf32> to vector<2x16xf32>
    %137 = arith.addf %135, %136 : vector<2x16xf32>
    %138 = arith.negf %137 : vector<2x16xf32>
    %139 = math.exp %138 : vector<2x16xf32>
    %cst_57 = arith.constant 1.000000e+00 : f32
    %140 = vector.broadcast %cst_57 : f32 to vector<2x16xf32>
    %141 = arith.addf %140, %139 : vector<2x16xf32>
    %142 = arith.divf %140, %141 : vector<2x16xf32>
    %143 = vector.extract_strided_slice %132 {offsets = [0, 16], sizes = [2, 16], strides = [1, 1]} : vector<2x48xf32> to vector<2x16xf32>
    %144 = vector.extract_strided_slice %134 {offsets = [0, 16], sizes = [2, 16], strides = [1, 1]} : vector<2x48xf32> to vector<2x16xf32>
    %145 = arith.addf %143, %144 : vector<2x16xf32>
    %146 = arith.negf %145 : vector<2x16xf32>
    %147 = math.exp %146 : vector<2x16xf32>
    %cst_58 = arith.constant 1.000000e+00 : f32
    %148 = vector.broadcast %cst_58 : f32 to vector<2x16xf32>
    %149 = arith.addf %148, %147 : vector<2x16xf32>
    %150 = arith.divf %148, %149 : vector<2x16xf32>
    %151 = vector.extract_strided_slice %132 {offsets = [0, 32], sizes = [2, 16], strides = [1, 1]} : vector<2x48xf32> to vector<2x16xf32>
    %152 = vector.extract_strided_slice %134 {offsets = [0, 32], sizes = [2, 16], strides = [1, 1]} : vector<2x48xf32> to vector<2x16xf32>
    %153 = arith.mulf %142, %152 : vector<2x16xf32>
    %154 = arith.addf %151, %153 : vector<2x16xf32>
    %155 = math.tanh %154 : vector<2x16xf32>
    %cst_59 = arith.constant 1.000000e+00 : f32
    %156 = vector.broadcast %cst_59 : f32 to vector<2x16xf32>
    %157 = arith.subf %156, %150 : vector<2x16xf32>
    %158 = arith.mulf %157, %155 : vector<2x16xf32>
    %159 = arith.mulf %150, %130 : vector<2x16xf32>
    %160 = arith.addf %158, %159 : vector<2x16xf32>
    %cst_60 = arith.constant dense<0.000000e+00> : vector<2x48xf32>
    %161 = tpu.matmul %9, %17, %cst_60 {dimension_numbers = #tpu.dot_dimension_numbers<[1], [0], [0], [1], [0, 0, 1, 1], [], []>} : vector<2x16xf32>, vector<16x48xf32>, vector<2x48xf32> -> vector<2x48xf32>
    %162 = arith.addf %161, %23 : vector<2x48xf32>
    %cst_61 = arith.constant dense<0.000000e+00> : vector<2x48xf32>
    %163 = tpu.matmul %160, %19, %cst_61 {dimension_numbers = #tpu.dot_dimension_numbers<[1], [0], [0], [1], [0, 0, 1, 1], [], []>} : vector<2x16xf32>, vector<16x48xf32>, vector<2x48xf32> -> vector<2x48xf32>
    %164 = arith.addf %163, %27 : vector<2x48xf32>
    %165 = vector.extract_strided_slice %162 {offsets = [0, 0], sizes = [2, 16], strides = [1, 1]} : vector<2x48xf32> to vector<2x16xf32>
    %166 = vector.extract_strided_slice %164 {offsets = [0, 0], sizes = [2, 16], strides = [1, 1]} : vector<2x48xf32> to vector<2x16xf32>
    %167 = arith.addf %165, %166 : vector<2x16xf32>
    %168 = arith.negf %167 : vector<2x16xf32>
    %169 = math.exp %168 : vector<2x16xf32>
    %cst_62 = arith.constant 1.000000e+00 : f32
    %170 = vector.broadcast %cst_62 : f32 to vector<2x16xf32>
    %171 = arith.addf %170, %169 : vector<2x16xf32>
    %172 = arith.divf %170, %171 : vector<2x16xf32>
    %173 = vector.extract_strided_slice %162 {offsets = [0, 16], sizes = [2, 16], strides = [1, 1]} : vector<2x48xf32> to vector<2x16xf32>
    %174 = vector.extract_strided_slice %164 {offsets = [0, 16], sizes = [2, 16], strides = [1, 1]} : vector<2x48xf32> to vector<2x16xf32>
    %175 = arith.addf %173, %174 : vector<2x16xf32>
    %176 = arith.negf %175 : vector<2x16xf32>
    %177 = math.exp %176 : vector<2x16xf32>
    %cst_63 = arith.constant 1.000000e+00 : f32
    %178 = vector.broadcast %cst_63 : f32 to vector<2x16xf32>
    %179 = arith.addf %178, %177 : vector<2x16xf32>
    %180 = arith.divf %178, %179 : vector<2x16xf32>
    %181 = vector.extract_strided_slice %162 {offsets = [0, 32], sizes = [2, 16], strides = [1, 1]} : vector<2x48xf32> to vector<2x16xf32>
    %182 = vector.extract_strided_slice %164 {offsets = [0, 32], sizes = [2, 16], strides = [1, 1]} : vector<2x48xf32> to vector<2x16xf32>
    %183 = arith.mulf %172, %182 : vector<2x16xf32>
    %184 = arith.addf %181, %183 : vector<2x16xf32>
    %185 = math.tanh %184 : vector<2x16xf32>
    %cst_64 = arith.constant 1.000000e+00 : f32
    %186 = vector.broadcast %cst_64 : f32 to vector<2x16xf32>
    %187 = arith.subf %186, %180 : vector<2x16xf32>
    %188 = arith.mulf %187, %185 : vector<2x16xf32>
    %189 = arith.mulf %180, %160 : vector<2x16xf32>
    %190 = arith.addf %188, %189 : vector<2x16xf32>
    %cst_65 = arith.constant dense<0.000000e+00> : vector<2x48xf32>
    %191 = tpu.matmul %11, %17, %cst_65 {dimension_numbers = #tpu.dot_dimension_numbers<[1], [0], [0], [1], [0, 0, 1, 1], [], []>} : vector<2x16xf32>, vector<16x48xf32>, vector<2x48xf32> -> vector<2x48xf32>
    %192 = arith.addf %191, %23 : vector<2x48xf32>
    %cst_66 = arith.constant dense<0.000000e+00> : vector<2x48xf32>
    %193 = tpu.matmul %190, %19, %cst_66 {dimension_numbers = #tpu.dot_dimension_numbers<[1], [0], [0], [1], [0, 0, 1, 1], [], []>} : vector<2x16xf32>, vector<16x48xf32>, vector<2x48xf32> -> vector<2x48xf32>
    %194 = arith.addf %193, %27 : vector<2x48xf32>
    %195 = vector.extract_strided_slice %192 {offsets = [0, 0], sizes = [2, 16], strides = [1, 1]} : vector<2x48xf32> to vector<2x16xf32>
    %196 = vector.extract_strided_slice %194 {offsets = [0, 0], sizes = [2, 16], strides = [1, 1]} : vector<2x48xf32> to vector<2x16xf32>
    %197 = arith.addf %195, %196 : vector<2x16xf32>
    %198 = arith.negf %197 : vector<2x16xf32>
    %199 = math.exp %198 : vector<2x16xf32>
    %cst_67 = arith.constant 1.000000e+00 : f32
    %200 = vector.broadcast %cst_67 : f32 to vector<2x16xf32>
    %201 = arith.addf %200, %199 : vector<2x16xf32>
    %202 = arith.divf %200, %201 : vector<2x16xf32>
    %203 = vector.extract_strided_slice %192 {offsets = [0, 16], sizes = [2, 16], strides = [1, 1]} : vector<2x48xf32> to vector<2x16xf32>
    %204 = vector.extract_strided_slice %194 {offsets = [0, 16], sizes = [2, 16], strides = [1, 1]} : vector<2x48xf32> to vector<2x16xf32>
    %205 = arith.addf %203, %204 : vector<2x16xf32>
    %206 = arith.negf %205 : vector<2x16xf32>
    %207 = math.exp %206 : vector<2x16xf32>
    %cst_68 = arith.constant 1.000000e+00 : f32
    %208 = vector.broadcast %cst_68 : f32 to vector<2x16xf32>
    %209 = arith.addf %208, %207 : vector<2x16xf32>
    %210 = arith.divf %208, %209 : vector<2x16xf32>
    %211 = vector.extract_strided_slice %192 {offsets = [0, 32], sizes = [2, 16], strides = [1, 1]} : vector<2x48xf32> to vector<2x16xf32>
    %212 = vector.extract_strided_slice %194 {offsets = [0, 32], sizes = [2, 16], strides = [1, 1]} : vector<2x48xf32> to vector<2x16xf32>
    %213 = arith.mulf %202, %212 : vector<2x16xf32>
    %214 = arith.addf %211, %213 : vector<2x16xf32>
    %215 = math.tanh %214 : vector<2x16xf32>
    %cst_69 = arith.constant 1.000000e+00 : f32
    %216 = vector.broadcast %cst_69 : f32 to vector<2x16xf32>
    %217 = arith.subf %216, %210 : vector<2x16xf32>
    %218 = arith.mulf %217, %215 : vector<2x16xf32>
    %219 = arith.mulf %210, %190 : vector<2x16xf32>
    %220 = arith.addf %218, %219 : vector<2x16xf32>
    %cst_70 = arith.constant dense<0.000000e+00> : vector<2x48xf32>
    %221 = tpu.matmul %13, %17, %cst_70 {dimension_numbers = #tpu.dot_dimension_numbers<[1], [0], [0], [1], [0, 0, 1, 1], [], []>} : vector<2x16xf32>, vector<16x48xf32>, vector<2x48xf32> -> vector<2x48xf32>
    %222 = arith.addf %221, %23 : vector<2x48xf32>
    %cst_71 = arith.constant dense<0.000000e+00> : vector<2x48xf32>
    %223 = tpu.matmul %220, %19, %cst_71 {dimension_numbers = #tpu.dot_dimension_numbers<[1], [0], [0], [1], [0, 0, 1, 1], [], []>} : vector<2x16xf32>, vector<16x48xf32>, vector<2x48xf32> -> vector<2x48xf32>
    %224 = arith.addf %223, %27 : vector<2x48xf32>
    %225 = vector.extract_strided_slice %222 {offsets = [0, 0], sizes = [2, 16], strides = [1, 1]} : vector<2x48xf32> to vector<2x16xf32>
    %226 = vector.extract_strided_slice %224 {offsets = [0, 0], sizes = [2, 16], strides = [1, 1]} : vector<2x48xf32> to vector<2x16xf32>
    %227 = arith.addf %225, %226 : vector<2x16xf32>
    %228 = arith.negf %227 : vector<2x16xf32>
    %229 = math.exp %228 : vector<2x16xf32>
    %cst_72 = arith.constant 1.000000e+00 : f32
    %230 = vector.broadcast %cst_72 : f32 to vector<2x16xf32>
    %231 = arith.addf %230, %229 : vector<2x16xf32>
    %232 = arith.divf %230, %231 : vector<2x16xf32>
    %233 = vector.extract_strided_slice %222 {offsets = [0, 16], sizes = [2, 16], strides = [1, 1]} : vector<2x48xf32> to vector<2x16xf32>
    %234 = vector.extract_strided_slice %224 {offsets = [0, 16], sizes = [2, 16], strides = [1, 1]} : vector<2x48xf32> to vector<2x16xf32>
    %235 = arith.addf %233, %234 : vector<2x16xf32>
    %236 = arith.negf %235 : vector<2x16xf32>
    %237 = math.exp %236 : vector<2x16xf32>
    %cst_73 = arith.constant 1.000000e+00 : f32
    %238 = vector.broadcast %cst_73 : f32 to vector<2x16xf32>
    %239 = arith.addf %238, %237 : vector<2x16xf32>
    %240 = arith.divf %238, %239 : vector<2x16xf32>
    %241 = vector.extract_strided_slice %222 {offsets = [0, 32], sizes = [2, 16], strides = [1, 1]} : vector<2x48xf32> to vector<2x16xf32>
    %242 = vector.extract_strided_slice %224 {offsets = [0, 32], sizes = [2, 16], strides = [1, 1]} : vector<2x48xf32> to vector<2x16xf32>
    %243 = arith.mulf %232, %242 : vector<2x16xf32>
    %244 = arith.addf %241, %243 : vector<2x16xf32>
    %245 = math.tanh %244 : vector<2x16xf32>
    %cst_74 = arith.constant 1.000000e+00 : f32
    %246 = vector.broadcast %cst_74 : f32 to vector<2x16xf32>
    %247 = arith.subf %246, %240 : vector<2x16xf32>
    %248 = arith.mulf %247, %245 : vector<2x16xf32>
    %249 = arith.mulf %240, %220 : vector<2x16xf32>
    %250 = arith.addf %248, %249 : vector<2x16xf32>
    %cst_75 = arith.constant dense<0.000000e+00> : vector<2x48xf32>
    %251 = tpu.matmul %15, %17, %cst_75 {dimension_numbers = #tpu.dot_dimension_numbers<[1], [0], [0], [1], [0, 0, 1, 1], [], []>} : vector<2x16xf32>, vector<16x48xf32>, vector<2x48xf32> -> vector<2x48xf32>
    %252 = arith.addf %251, %23 : vector<2x48xf32>
    %cst_76 = arith.constant dense<0.000000e+00> : vector<2x48xf32>
    %253 = tpu.matmul %250, %19, %cst_76 {dimension_numbers = #tpu.dot_dimension_numbers<[1], [0], [0], [1], [0, 0, 1, 1], [], []>} : vector<2x16xf32>, vector<16x48xf32>, vector<2x48xf32> -> vector<2x48xf32>
    %254 = arith.addf %253, %27 : vector<2x48xf32>
    %255 = vector.extract_strided_slice %252 {offsets = [0, 0], sizes = [2, 16], strides = [1, 1]} : vector<2x48xf32> to vector<2x16xf32>
    %256 = vector.extract_strided_slice %254 {offsets = [0, 0], sizes = [2, 16], strides = [1, 1]} : vector<2x48xf32> to vector<2x16xf32>
    %257 = arith.addf %255, %256 : vector<2x16xf32>
    %258 = arith.negf %257 : vector<2x16xf32>
    %259 = math.exp %258 : vector<2x16xf32>
    %cst_77 = arith.constant 1.000000e+00 : f32
    %260 = vector.broadcast %cst_77 : f32 to vector<2x16xf32>
    %261 = arith.addf %260, %259 : vector<2x16xf32>
    %262 = arith.divf %260, %261 : vector<2x16xf32>
    %263 = vector.extract_strided_slice %252 {offsets = [0, 16], sizes = [2, 16], strides = [1, 1]} : vector<2x48xf32> to vector<2x16xf32>
    %264 = vector.extract_strided_slice %254 {offsets = [0, 16], sizes = [2, 16], strides = [1, 1]} : vector<2x48xf32> to vector<2x16xf32>
    %265 = arith.addf %263, %264 : vector<2x16xf32>
    %266 = arith.negf %265 : vector<2x16xf32>
    %267 = math.exp %266 : vector<2x16xf32>
    %cst_78 = arith.constant 1.000000e+00 : f32
    %268 = vector.broadcast %cst_78 : f32 to vector<2x16xf32>
    %269 = arith.addf %268, %267 : vector<2x16xf32>
    %270 = arith.divf %268, %269 : vector<2x16xf32>
    %271 = vector.extract_strided_slice %252 {offsets = [0, 32], sizes = [2, 16], strides = [1, 1]} : vector<2x48xf32> to vector<2x16xf32>
    %272 = vector.extract_strided_slice %254 {offsets = [0, 32], sizes = [2, 16], strides = [1, 1]} : vector<2x48xf32> to vector<2x16xf32>
    %273 = arith.mulf %262, %272 : vector<2x16xf32>
    %274 = arith.addf %271, %273 : vector<2x16xf32>
    %275 = math.tanh %274 : vector<2x16xf32>
    %cst_79 = arith.constant 1.000000e+00 : f32
    %276 = vector.broadcast %cst_79 : f32 to vector<2x16xf32>
    %277 = arith.subf %276, %270 : vector<2x16xf32>
    %278 = arith.mulf %277, %275 : vector<2x16xf32>
    %279 = arith.mulf %270, %250 : vector<2x16xf32>
    %280 = arith.addf %278, %279 : vector<2x16xf32>
    %cst_80 = arith.constant 0.000000e+00 : f32
    %281 = vector.broadcast %cst_80 : f32 to vector<2x16xf32>
    %cst_81 = arith.constant dense<0.000000e+00> : vector<2x48xf32>
    %282 = tpu.matmul %15, %29, %cst_81 {dimension_numbers = #tpu.dot_dimension_numbers<[1], [0], [0], [1], [0, 0, 1, 1], [], []>} : vector<2x16xf32>, vector<16x48xf32>, vector<2x48xf32> -> vector<2x48xf32>
    %283 = arith.addf %282, %35 : vector<2x48xf32>
    %cst_82 = arith.constant dense<0.000000e+00> : vector<2x48xf32>
    %284 = tpu.matmul %281, %31, %cst_82 {dimension_numbers = #tpu.dot_dimension_numbers<[1], [0], [0], [1], [0, 0, 1, 1], [], []>} : vector<2x16xf32>, vector<16x48xf32>, vector<2x48xf32> -> vector<2x48xf32>
    %285 = arith.addf %284, %39 : vector<2x48xf32>
    %286 = vector.extract_strided_slice %283 {offsets = [0, 0], sizes = [2, 16], strides = [1, 1]} : vector<2x48xf32> to vector<2x16xf32>
    %287 = vector.extract_strided_slice %285 {offsets = [0, 0], sizes = [2, 16], strides = [1, 1]} : vector<2x48xf32> to vector<2x16xf32>
    %288 = arith.addf %286, %287 : vector<2x16xf32>
    %289 = arith.negf %288 : vector<2x16xf32>
    %290 = math.exp %289 : vector<2x16xf32>
    %cst_83 = arith.constant 1.000000e+00 : f32
    %291 = vector.broadcast %cst_83 : f32 to vector<2x16xf32>
    %292 = arith.addf %291, %290 : vector<2x16xf32>
    %293 = arith.divf %291, %292 : vector<2x16xf32>
    %294 = vector.extract_strided_slice %283 {offsets = [0, 16], sizes = [2, 16], strides = [1, 1]} : vector<2x48xf32> to vector<2x16xf32>
    %295 = vector.extract_strided_slice %285 {offsets = [0, 16], sizes = [2, 16], strides = [1, 1]} : vector<2x48xf32> to vector<2x16xf32>
    %296 = arith.addf %294, %295 : vector<2x16xf32>
    %297 = arith.negf %296 : vector<2x16xf32>
    %298 = math.exp %297 : vector<2x16xf32>
    %cst_84 = arith.constant 1.000000e+00 : f32
    %299 = vector.broadcast %cst_84 : f32 to vector<2x16xf32>
    %300 = arith.addf %299, %298 : vector<2x16xf32>
    %301 = arith.divf %299, %300 : vector<2x16xf32>
    %302 = vector.extract_strided_slice %283 {offsets = [0, 32], sizes = [2, 16], strides = [1, 1]} : vector<2x48xf32> to vector<2x16xf32>
    %303 = vector.extract_strided_slice %285 {offsets = [0, 32], sizes = [2, 16], strides = [1, 1]} : vector<2x48xf32> to vector<2x16xf32>
    %304 = arith.mulf %293, %303 : vector<2x16xf32>
    %305 = arith.addf %302, %304 : vector<2x16xf32>
    %306 = math.tanh %305 : vector<2x16xf32>
    %cst_85 = arith.constant 1.000000e+00 : f32
    %307 = vector.broadcast %cst_85 : f32 to vector<2x16xf32>
    %308 = arith.subf %307, %301 : vector<2x16xf32>
    %309 = arith.mulf %308, %306 : vector<2x16xf32>
    %310 = arith.mulf %301, %281 : vector<2x16xf32>
    %311 = arith.addf %309, %310 : vector<2x16xf32>
    %cst_86 = arith.constant dense<0.000000e+00> : vector<2x48xf32>
    %312 = tpu.matmul %13, %29, %cst_86 {dimension_numbers = #tpu.dot_dimension_numbers<[1], [0], [0], [1], [0, 0, 1, 1], [], []>} : vector<2x16xf32>, vector<16x48xf32>, vector<2x48xf32> -> vector<2x48xf32>
    %313 = arith.addf %312, %35 : vector<2x48xf32>
    %cst_87 = arith.constant dense<0.000000e+00> : vector<2x48xf32>
    %314 = tpu.matmul %311, %31, %cst_87 {dimension_numbers = #tpu.dot_dimension_numbers<[1], [0], [0], [1], [0, 0, 1, 1], [], []>} : vector<2x16xf32>, vector<16x48xf32>, vector<2x48xf32> -> vector<2x48xf32>
    %315 = arith.addf %314, %39 : vector<2x48xf32>
    %316 = vector.extract_strided_slice %313 {offsets = [0, 0], sizes = [2, 16], strides = [1, 1]} : vector<2x48xf32> to vector<2x16xf32>
    %317 = vector.extract_strided_slice %315 {offsets = [0, 0], sizes = [2, 16], strides = [1, 1]} : vector<2x48xf32> to vector<2x16xf32>
    %318 = arith.addf %316, %317 : vector<2x16xf32>
    %319 = arith.negf %318 : vector<2x16xf32>
    %320 = math.exp %319 : vector<2x16xf32>
    %cst_88 = arith.constant 1.000000e+00 : f32
    %321 = vector.broadcast %cst_88 : f32 to vector<2x16xf32>
    %322 = arith.addf %321, %320 : vector<2x16xf32>
    %323 = arith.divf %321, %322 : vector<2x16xf32>
    %324 = vector.extract_strided_slice %313 {offsets = [0, 16], sizes = [2, 16], strides = [1, 1]} : vector<2x48xf32> to vector<2x16xf32>
    %325 = vector.extract_strided_slice %315 {offsets = [0, 16], sizes = [2, 16], strides = [1, 1]} : vector<2x48xf32> to vector<2x16xf32>
    %326 = arith.addf %324, %325 : vector<2x16xf32>
    %327 = arith.negf %326 : vector<2x16xf32>
    %328 = math.exp %327 : vector<2x16xf32>
    %cst_89 = arith.constant 1.000000e+00 : f32
    %329 = vector.broadcast %cst_89 : f32 to vector<2x16xf32>
    %330 = arith.addf %329, %328 : vector<2x16xf32>
    %331 = arith.divf %329, %330 : vector<2x16xf32>
    %332 = vector.extract_strided_slice %313 {offsets = [0, 32], sizes = [2, 16], strides = [1, 1]} : vector<2x48xf32> to vector<2x16xf32>
    %333 = vector.extract_strided_slice %315 {offsets = [0, 32], sizes = [2, 16], strides = [1, 1]} : vector<2x48xf32> to vector<2x16xf32>
    %334 = arith.mulf %323, %333 : vector<2x16xf32>
    %335 = arith.addf %332, %334 : vector<2x16xf32>
    %336 = math.tanh %335 : vector<2x16xf32>
    %cst_90 = arith.constant 1.000000e+00 : f32
    %337 = vector.broadcast %cst_90 : f32 to vector<2x16xf32>
    %338 = arith.subf %337, %331 : vector<2x16xf32>
    %339 = arith.mulf %338, %336 : vector<2x16xf32>
    %340 = arith.mulf %331, %311 : vector<2x16xf32>
    %341 = arith.addf %339, %340 : vector<2x16xf32>
    %cst_91 = arith.constant dense<0.000000e+00> : vector<2x48xf32>
    %342 = tpu.matmul %11, %29, %cst_91 {dimension_numbers = #tpu.dot_dimension_numbers<[1], [0], [0], [1], [0, 0, 1, 1], [], []>} : vector<2x16xf32>, vector<16x48xf32>, vector<2x48xf32> -> vector<2x48xf32>
    %343 = arith.addf %342, %35 : vector<2x48xf32>
    %cst_92 = arith.constant dense<0.000000e+00> : vector<2x48xf32>
    %344 = tpu.matmul %341, %31, %cst_92 {dimension_numbers = #tpu.dot_dimension_numbers<[1], [0], [0], [1], [0, 0, 1, 1], [], []>} : vector<2x16xf32>, vector<16x48xf32>, vector<2x48xf32> -> vector<2x48xf32>
    %345 = arith.addf %344, %39 : vector<2x48xf32>
    %346 = vector.extract_strided_slice %343 {offsets = [0, 0], sizes = [2, 16], strides = [1, 1]} : vector<2x48xf32> to vector<2x16xf32>
    %347 = vector.extract_strided_slice %345 {offsets = [0, 0], sizes = [2, 16], strides = [1, 1]} : vector<2x48xf32> to vector<2x16xf32>
    %348 = arith.addf %346, %347 : vector<2x16xf32>
    %349 = arith.negf %348 : vector<2x16xf32>
    %350 = math.exp %349 : vector<2x16xf32>
    %cst_93 = arith.constant 1.000000e+00 : f32
    %351 = vector.broadcast %cst_93 : f32 to vector<2x16xf32>
    %352 = arith.addf %351, %350 : vector<2x16xf32>
    %353 = arith.divf %351, %352 : vector<2x16xf32>
    %354 = vector.extract_strided_slice %343 {offsets = [0, 16], sizes = [2, 16], strides = [1, 1]} : vector<2x48xf32> to vector<2x16xf32>
    %355 = vector.extract_strided_slice %345 {offsets = [0, 16], sizes = [2, 16], strides = [1, 1]} : vector<2x48xf32> to vector<2x16xf32>
    %356 = arith.addf %354, %355 : vector<2x16xf32>
    %357 = arith.negf %356 : vector<2x16xf32>
    %358 = math.exp %357 : vector<2x16xf32>
    %cst_94 = arith.constant 1.000000e+00 : f32
    %359 = vector.broadcast %cst_94 : f32 to vector<2x16xf32>
    %360 = arith.addf %359, %358 : vector<2x16xf32>
    %361 = arith.divf %359, %360 : vector<2x16xf32>
    %362 = vector.extract_strided_slice %343 {offsets = [0, 32], sizes = [2, 16], strides = [1, 1]} : vector<2x48xf32> to vector<2x16xf32>
    %363 = vector.extract_strided_slice %345 {offsets = [0, 32], sizes = [2, 16], strides = [1, 1]} : vector<2x48xf32> to vector<2x16xf32>
    %364 = arith.mulf %353, %363 : vector<2x16xf32>
    %365 = arith.addf %362, %364 : vector<2x16xf32>
    %366 = math.tanh %365 : vector<2x16xf32>
    %cst_95 = arith.constant 1.000000e+00 : f32
    %367 = vector.broadcast %cst_95 : f32 to vector<2x16xf32>
    %368 = arith.subf %367, %361 : vector<2x16xf32>
    %369 = arith.mulf %368, %366 : vector<2x16xf32>
    %370 = arith.mulf %361, %341 : vector<2x16xf32>
    %371 = arith.addf %369, %370 : vector<2x16xf32>
    %cst_96 = arith.constant dense<0.000000e+00> : vector<2x48xf32>
    %372 = tpu.matmul %9, %29, %cst_96 {dimension_numbers = #tpu.dot_dimension_numbers<[1], [0], [0], [1], [0, 0, 1, 1], [], []>} : vector<2x16xf32>, vector<16x48xf32>, vector<2x48xf32> -> vector<2x48xf32>
    %373 = arith.addf %372, %35 : vector<2x48xf32>
    %cst_97 = arith.constant dense<0.000000e+00> : vector<2x48xf32>
    %374 = tpu.matmul %371, %31, %cst_97 {dimension_numbers = #tpu.dot_dimension_numbers<[1], [0], [0], [1], [0, 0, 1, 1], [], []>} : vector<2x16xf32>, vector<16x48xf32>, vector<2x48xf32> -> vector<2x48xf32>
    %375 = arith.addf %374, %39 : vector<2x48xf32>
    %376 = vector.extract_strided_slice %373 {offsets = [0, 0], sizes = [2, 16], strides = [1, 1]} : vector<2x48xf32> to vector<2x16xf32>
    %377 = vector.extract_strided_slice %375 {offsets = [0, 0], sizes = [2, 16], strides = [1, 1]} : vector<2x48xf32> to vector<2x16xf32>
    %378 = arith.addf %376, %377 : vector<2x16xf32>
    %379 = arith.negf %378 : vector<2x16xf32>
    %380 = math.exp %379 : vector<2x16xf32>
    %cst_98 = arith.constant 1.000000e+00 : f32
    %381 = vector.broadcast %cst_98 : f32 to vector<2x16xf32>
    %382 = arith.addf %381, %380 : vector<2x16xf32>
    %383 = arith.divf %381, %382 : vector<2x16xf32>
    %384 = vector.extract_strided_slice %373 {offsets = [0, 16], sizes = [2, 16], strides = [1, 1]} : vector<2x48xf32> to vector<2x16xf32>
    %385 = vector.extract_strided_slice %375 {offsets = [0, 16], sizes = [2, 16], strides = [1, 1]} : vector<2x48xf32> to vector<2x16xf32>
    %386 = arith.addf %384, %385 : vector<2x16xf32>
    %387 = arith.negf %386 : vector<2x16xf32>
    %388 = math.exp %387 : vector<2x16xf32>
    %cst_99 = arith.constant 1.000000e+00 : f32
    %389 = vector.broadcast %cst_99 : f32 to vector<2x16xf32>
    %390 = arith.addf %389, %388 : vector<2x16xf32>
    %391 = arith.divf %389, %390 : vector<2x16xf32>
    %392 = vector.extract_strided_slice %373 {offsets = [0, 32], sizes = [2, 16], strides = [1, 1]} : vector<2x48xf32> to vector<2x16xf32>
    %393 = vector.extract_strided_slice %375 {offsets = [0, 32], sizes = [2, 16], strides = [1, 1]} : vector<2x48xf32> to vector<2x16xf32>
    %394 = arith.mulf %383, %393 : vector<2x16xf32>
    %395 = arith.addf %392, %394 : vector<2x16xf32>
    %396 = math.tanh %395 : vector<2x16xf32>
    %cst_100 = arith.constant 1.000000e+00 : f32
    %397 = vector.broadcast %cst_100 : f32 to vector<2x16xf32>
    %398 = arith.subf %397, %391 : vector<2x16xf32>
    %399 = arith.mulf %398, %396 : vector<2x16xf32>
    %400 = arith.mulf %391, %371 : vector<2x16xf32>
    %401 = arith.addf %399, %400 : vector<2x16xf32>
    %cst_101 = arith.constant dense<0.000000e+00> : vector<2x48xf32>
    %402 = tpu.matmul %7, %29, %cst_101 {dimension_numbers = #tpu.dot_dimension_numbers<[1], [0], [0], [1], [0, 0, 1, 1], [], []>} : vector<2x16xf32>, vector<16x48xf32>, vector<2x48xf32> -> vector<2x48xf32>
    %403 = arith.addf %402, %35 : vector<2x48xf32>
    %cst_102 = arith.constant dense<0.000000e+00> : vector<2x48xf32>
    %404 = tpu.matmul %401, %31, %cst_102 {dimension_numbers = #tpu.dot_dimension_numbers<[1], [0], [0], [1], [0, 0, 1, 1], [], []>} : vector<2x16xf32>, vector<16x48xf32>, vector<2x48xf32> -> vector<2x48xf32>
    %405 = arith.addf %404, %39 : vector<2x48xf32>
    %406 = vector.extract_strided_slice %403 {offsets = [0, 0], sizes = [2, 16], strides = [1, 1]} : vector<2x48xf32> to vector<2x16xf32>
    %407 = vector.extract_strided_slice %405 {offsets = [0, 0], sizes = [2, 16], strides = [1, 1]} : vector<2x48xf32> to vector<2x16xf32>
    %408 = arith.addf %406, %407 : vector<2x16xf32>
    %409 = arith.negf %408 : vector<2x16xf32>
    %410 = math.exp %409 : vector<2x16xf32>
    %cst_103 = arith.constant 1.000000e+00 : f32
    %411 = vector.broadcast %cst_103 : f32 to vector<2x16xf32>
    %412 = arith.addf %411, %410 : vector<2x16xf32>
    %413 = arith.divf %411, %412 : vector<2x16xf32>
    %414 = vector.extract_strided_slice %403 {offsets = [0, 16], sizes = [2, 16], strides = [1, 1]} : vector<2x48xf32> to vector<2x16xf32>
    %415 = vector.extract_strided_slice %405 {offsets = [0, 16], sizes = [2, 16], strides = [1, 1]} : vector<2x48xf32> to vector<2x16xf32>
    %416 = arith.addf %414, %415 : vector<2x16xf32>
    %417 = arith.negf %416 : vector<2x16xf32>
    %418 = math.exp %417 : vector<2x16xf32>
    %cst_104 = arith.constant 1.000000e+00 : f32
    %419 = vector.broadcast %cst_104 : f32 to vector<2x16xf32>
    %420 = arith.addf %419, %418 : vector<2x16xf32>
    %421 = arith.divf %419, %420 : vector<2x16xf32>
    %422 = vector.extract_strided_slice %403 {offsets = [0, 32], sizes = [2, 16], strides = [1, 1]} : vector<2x48xf32> to vector<2x16xf32>
    %423 = vector.extract_strided_slice %405 {offsets = [0, 32], sizes = [2, 16], strides = [1, 1]} : vector<2x48xf32> to vector<2x16xf32>
    %424 = arith.mulf %413, %423 : vector<2x16xf32>
    %425 = arith.addf %422, %424 : vector<2x16xf32>
    %426 = math.tanh %425 : vector<2x16xf32>
    %cst_105 = arith.constant 1.000000e+00 : f32
    %427 = vector.broadcast %cst_105 : f32 to vector<2x16xf32>
    %428 = arith.subf %427, %421 : vector<2x16xf32>
    %429 = arith.mulf %428, %426 : vector<2x16xf32>
    %430 = arith.mulf %421, %401 : vector<2x16xf32>
    %431 = arith.addf %429, %430 : vector<2x16xf32>
    %cst_106 = arith.constant dense<0.000000e+00> : vector<2x48xf32>
    %432 = tpu.matmul %5, %29, %cst_106 {dimension_numbers = #tpu.dot_dimension_numbers<[1], [0], [0], [1], [0, 0, 1, 1], [], []>} : vector<2x16xf32>, vector<16x48xf32>, vector<2x48xf32> -> vector<2x48xf32>
    %433 = arith.addf %432, %35 : vector<2x48xf32>
    %cst_107 = arith.constant dense<0.000000e+00> : vector<2x48xf32>
    %434 = tpu.matmul %431, %31, %cst_107 {dimension_numbers = #tpu.dot_dimension_numbers<[1], [0], [0], [1], [0, 0, 1, 1], [], []>} : vector<2x16xf32>, vector<16x48xf32>, vector<2x48xf32> -> vector<2x48xf32>
    %435 = arith.addf %434, %39 : vector<2x48xf32>
    %436 = vector.extract_strided_slice %433 {offsets = [0, 0], sizes = [2, 16], strides = [1, 1]} : vector<2x48xf32> to vector<2x16xf32>
    %437 = vector.extract_strided_slice %435 {offsets = [0, 0], sizes = [2, 16], strides = [1, 1]} : vector<2x48xf32> to vector<2x16xf32>
    %438 = arith.addf %436, %437 : vector<2x16xf32>
    %439 = arith.negf %438 : vector<2x16xf32>
    %440 = math.exp %439 : vector<2x16xf32>
    %cst_108 = arith.constant 1.000000e+00 : f32
    %441 = vector.broadcast %cst_108 : f32 to vector<2x16xf32>
    %442 = arith.addf %441, %440 : vector<2x16xf32>
    %443 = arith.divf %441, %442 : vector<2x16xf32>
    %444 = vector.extract_strided_slice %433 {offsets = [0, 16], sizes = [2, 16], strides = [1, 1]} : vector<2x48xf32> to vector<2x16xf32>
    %445 = vector.extract_strided_slice %435 {offsets = [0, 16], sizes = [2, 16], strides = [1, 1]} : vector<2x48xf32> to vector<2x16xf32>
    %446 = arith.addf %444, %445 : vector<2x16xf32>
    %447 = arith.negf %446 : vector<2x16xf32>
    %448 = math.exp %447 : vector<2x16xf32>
    %cst_109 = arith.constant 1.000000e+00 : f32
    %449 = vector.broadcast %cst_109 : f32 to vector<2x16xf32>
    %450 = arith.addf %449, %448 : vector<2x16xf32>
    %451 = arith.divf %449, %450 : vector<2x16xf32>
    %452 = vector.extract_strided_slice %433 {offsets = [0, 32], sizes = [2, 16], strides = [1, 1]} : vector<2x48xf32> to vector<2x16xf32>
    %453 = vector.extract_strided_slice %435 {offsets = [0, 32], sizes = [2, 16], strides = [1, 1]} : vector<2x48xf32> to vector<2x16xf32>
    %454 = arith.mulf %443, %453 : vector<2x16xf32>
    %455 = arith.addf %452, %454 : vector<2x16xf32>
    %456 = math.tanh %455 : vector<2x16xf32>
    %cst_110 = arith.constant 1.000000e+00 : f32
    %457 = vector.broadcast %cst_110 : f32 to vector<2x16xf32>
    %458 = arith.subf %457, %451 : vector<2x16xf32>
    %459 = arith.mulf %458, %456 : vector<2x16xf32>
    %460 = arith.mulf %451, %431 : vector<2x16xf32>
    %461 = arith.addf %459, %460 : vector<2x16xf32>
    %cst_111 = arith.constant dense<0.000000e+00> : vector<2x48xf32>
    %462 = tpu.matmul %3, %29, %cst_111 {dimension_numbers = #tpu.dot_dimension_numbers<[1], [0], [0], [1], [0, 0, 1, 1], [], []>} : vector<2x16xf32>, vector<16x48xf32>, vector<2x48xf32> -> vector<2x48xf32>
    %463 = arith.addf %462, %35 : vector<2x48xf32>
    %cst_112 = arith.constant dense<0.000000e+00> : vector<2x48xf32>
    %464 = tpu.matmul %461, %31, %cst_112 {dimension_numbers = #tpu.dot_dimension_numbers<[1], [0], [0], [1], [0, 0, 1, 1], [], []>} : vector<2x16xf32>, vector<16x48xf32>, vector<2x48xf32> -> vector<2x48xf32>
    %465 = arith.addf %464, %39 : vector<2x48xf32>
    %466 = vector.extract_strided_slice %463 {offsets = [0, 0], sizes = [2, 16], strides = [1, 1]} : vector<2x48xf32> to vector<2x16xf32>
    %467 = vector.extract_strided_slice %465 {offsets = [0, 0], sizes = [2, 16], strides = [1, 1]} : vector<2x48xf32> to vector<2x16xf32>
    %468 = arith.addf %466, %467 : vector<2x16xf32>
    %469 = arith.negf %468 : vector<2x16xf32>
    %470 = math.exp %469 : vector<2x16xf32>
    %cst_113 = arith.constant 1.000000e+00 : f32
    %471 = vector.broadcast %cst_113 : f32 to vector<2x16xf32>
    %472 = arith.addf %471, %470 : vector<2x16xf32>
    %473 = arith.divf %471, %472 : vector<2x16xf32>
    %474 = vector.extract_strided_slice %463 {offsets = [0, 16], sizes = [2, 16], strides = [1, 1]} : vector<2x48xf32> to vector<2x16xf32>
    %475 = vector.extract_strided_slice %465 {offsets = [0, 16], sizes = [2, 16], strides = [1, 1]} : vector<2x48xf32> to vector<2x16xf32>
    %476 = arith.addf %474, %475 : vector<2x16xf32>
    %477 = arith.negf %476 : vector<2x16xf32>
    %478 = math.exp %477 : vector<2x16xf32>
    %cst_114 = arith.constant 1.000000e+00 : f32
    %479 = vector.broadcast %cst_114 : f32 to vector<2x16xf32>
    %480 = arith.addf %479, %478 : vector<2x16xf32>
    %481 = arith.divf %479, %480 : vector<2x16xf32>
    %482 = vector.extract_strided_slice %463 {offsets = [0, 32], sizes = [2, 16], strides = [1, 1]} : vector<2x48xf32> to vector<2x16xf32>
    %483 = vector.extract_strided_slice %465 {offsets = [0, 32], sizes = [2, 16], strides = [1, 1]} : vector<2x48xf32> to vector<2x16xf32>
    %484 = arith.mulf %473, %483 : vector<2x16xf32>
    %485 = arith.addf %482, %484 : vector<2x16xf32>
    %486 = math.tanh %485 : vector<2x16xf32>
    %cst_115 = arith.constant 1.000000e+00 : f32
    %487 = vector.broadcast %cst_115 : f32 to vector<2x16xf32>
    %488 = arith.subf %487, %481 : vector<2x16xf32>
    %489 = arith.mulf %488, %486 : vector<2x16xf32>
    %490 = arith.mulf %481, %461 : vector<2x16xf32>
    %491 = arith.addf %489, %490 : vector<2x16xf32>
    %cst_116 = arith.constant dense<0.000000e+00> : vector<2x48xf32>
    %492 = tpu.matmul %1, %29, %cst_116 {dimension_numbers = #tpu.dot_dimension_numbers<[1], [0], [0], [1], [0, 0, 1, 1], [], []>} : vector<2x16xf32>, vector<16x48xf32>, vector<2x48xf32> -> vector<2x48xf32>
    %493 = arith.addf %492, %35 : vector<2x48xf32>
    %cst_117 = arith.constant dense<0.000000e+00> : vector<2x48xf32>
    %494 = tpu.matmul %491, %31, %cst_117 {dimension_numbers = #tpu.dot_dimension_numbers<[1], [0], [0], [1], [0, 0, 1, 1], [], []>} : vector<2x16xf32>, vector<16x48xf32>, vector<2x48xf32> -> vector<2x48xf32>
    %495 = arith.addf %494, %39 : vector<2x48xf32>
    %496 = vector.extract_strided_slice %493 {offsets = [0, 0], sizes = [2, 16], strides = [1, 1]} : vector<2x48xf32> to vector<2x16xf32>
    %497 = vector.extract_strided_slice %495 {offsets = [0, 0], sizes = [2, 16], strides = [1, 1]} : vector<2x48xf32> to vector<2x16xf32>
    %498 = arith.addf %496, %497 : vector<2x16xf32>
    %499 = arith.negf %498 : vector<2x16xf32>
    %500 = math.exp %499 : vector<2x16xf32>
    %cst_118 = arith.constant 1.000000e+00 : f32
    %501 = vector.broadcast %cst_118 : f32 to vector<2x16xf32>
    %502 = arith.addf %501, %500 : vector<2x16xf32>
    %503 = arith.divf %501, %502 : vector<2x16xf32>
    %504 = vector.extract_strided_slice %493 {offsets = [0, 16], sizes = [2, 16], strides = [1, 1]} : vector<2x48xf32> to vector<2x16xf32>
    %505 = vector.extract_strided_slice %495 {offsets = [0, 16], sizes = [2, 16], strides = [1, 1]} : vector<2x48xf32> to vector<2x16xf32>
    %506 = arith.addf %504, %505 : vector<2x16xf32>
    %507 = arith.negf %506 : vector<2x16xf32>
    %508 = math.exp %507 : vector<2x16xf32>
    %cst_119 = arith.constant 1.000000e+00 : f32
    %509 = vector.broadcast %cst_119 : f32 to vector<2x16xf32>
    %510 = arith.addf %509, %508 : vector<2x16xf32>
    %511 = arith.divf %509, %510 : vector<2x16xf32>
    %512 = vector.extract_strided_slice %493 {offsets = [0, 32], sizes = [2, 16], strides = [1, 1]} : vector<2x48xf32> to vector<2x16xf32>
    %513 = vector.extract_strided_slice %495 {offsets = [0, 32], sizes = [2, 16], strides = [1, 1]} : vector<2x48xf32> to vector<2x16xf32>
    %514 = arith.mulf %503, %513 : vector<2x16xf32>
    %515 = arith.addf %512, %514 : vector<2x16xf32>
    %516 = math.tanh %515 : vector<2x16xf32>
    %cst_120 = arith.constant 1.000000e+00 : f32
    %517 = vector.broadcast %cst_120 : f32 to vector<2x16xf32>
    %518 = arith.subf %517, %511 : vector<2x16xf32>
    %519 = arith.mulf %518, %516 : vector<2x16xf32>
    %520 = arith.mulf %511, %491 : vector<2x16xf32>
    %521 = arith.addf %519, %520 : vector<2x16xf32>
    %522 = tpu.concatenate %70, %521 in 1 : vector<2x16xf32>, vector<2x16xf32> -> vector<2x32xf32>
    %523 = tpu.concatenate %100, %491 in 1 : vector<2x16xf32>, vector<2x16xf32> -> vector<2x32xf32>
    %524 = tpu.concatenate %130, %461 in 1 : vector<2x16xf32>, vector<2x16xf32> -> vector<2x32xf32>
    %525 = tpu.concatenate %160, %431 in 1 : vector<2x16xf32>, vector<2x16xf32> -> vector<2x32xf32>
    %526 = tpu.concatenate %190, %401 in 1 : vector<2x16xf32>, vector<2x16xf32> -> vector<2x32xf32>
    %527 = tpu.concatenate %220, %371 in 1 : vector<2x16xf32>, vector<2x16xf32> -> vector<2x32xf32>
    %528 = tpu.concatenate %250, %341 in 1 : vector<2x16xf32>, vector<2x16xf32> -> vector<2x32xf32>
    %529 = tpu.concatenate %280, %311 in 1 : vector<2x16xf32>, vector<2x16xf32> -> vector<2x32xf32>
    %530 = tpu.concatenate %280, %521 in 1 : vector<2x16xf32>, vector<2x16xf32> -> vector<2x32xf32>
    %c0_121 = arith.constant 0 : index
    %c0_122 = arith.constant 0 : index
    %c0_123 = arith.constant 0 : index
    %531 = vector.load %arg10[%c0_121, %c0_122, %c0_123] : memref<2x2x32xf32, #tpu.memory_space<vmem>>, vector<1x2x32xf32>
    %532 = vector.shape_cast %531 : vector<1x2x32xf32> to vector<2x32xf32>
    %533 = vector.shape_cast %530 : vector<2x32xf32> to vector<1x2x32xf32>
    tpu.vector_store %arg10[%c0_121, %c0_122, %c0_123], %533 {strides = array<i32>} : memref<2x2x32xf32, #tpu.memory_space<vmem>>, vector<1x2x32xf32>,
    %c0_124 = arith.constant 0 : index
    %c0_125 = arith.constant 0 : index
    %c0_126 = arith.constant 0 : index
    %534 = vector.load %arg5[%c0_124, %c0_125, %c0_126] : memref<2x32x48xf32, #tpu.memory_space<vmem>>, vector<1x32x48xf32>
    %535 = vector.shape_cast %534 : vector<1x32x48xf32> to vector<32x48xf32>
    %c0_127 = arith.constant 0 : index
    %c0_128 = arith.constant 0 : index
    %c0_129 = arith.constant 0 : index
    %536 = vector.load %arg6[%c0_127, %c0_128, %c0_129] : memref<2x16x48xf32, #tpu.memory_space<vmem>>, vector<1x16x48xf32>
    %537 = vector.shape_cast %536 : vector<1x16x48xf32> to vector<16x48xf32>
    %c0_130 = arith.constant 0 : index
    %c0_131 = arith.constant 0 : index
    %c0_132 = arith.constant 0 : index
    %538 = vector.load %arg7[%c0_130, %c0_131, %c0_132] : memref<2x1x48xf32, #tpu.memory_space<vmem>>, vector<1x1x48xf32>
    %539 = vector.shape_cast %538 : vector<1x1x48xf32> to vector<1x48xf32>
    %540 = vector.shape_cast %539 : vector<1x48xf32> to vector<1x48xf32>
    %541 = vector.broadcast %540 : vector<1x48xf32> to vector<2x48xf32>
    %c0_133 = arith.constant 0 : index
    %c0_134 = arith.constant 0 : index
    %c0_135 = arith.constant 0 : index
    %542 = vector.load %arg8[%c0_133, %c0_134, %c0_135] : memref<2x1x48xf32, #tpu.memory_space<vmem>>, vector<1x1x48xf32>
    %543 = vector.shape_cast %542 : vector<1x1x48xf32> to vector<1x48xf32>
    %544 = vector.shape_cast %543 : vector<1x48xf32> to vector<1x48xf32>
    %545 = vector.broadcast %544 : vector<1x48xf32> to vector<2x48xf32>
    %c1_136 = arith.constant 1 : index
    %c0_137 = arith.constant 0 : index
    %c0_138 = arith.constant 0 : index
    %546 = vector.load %arg5[%c1_136, %c0_137, %c0_138] : memref<2x32x48xf32, #tpu.memory_space<vmem>>, vector<1x32x48xf32>
    %547 = vector.shape_cast %546 : vector<1x32x48xf32> to vector<32x48xf32>
    %c1_139 = arith.constant 1 : index
    %c0_140 = arith.constant 0 : index
    %c0_141 = arith.constant 0 : index
    %548 = vector.load %arg6[%c1_139, %c0_140, %c0_141] : memref<2x16x48xf32, #tpu.memory_space<vmem>>, vector<1x16x48xf32>
    %549 = vector.shape_cast %548 : vector<1x16x48xf32> to vector<16x48xf32>
    %c1_142 = arith.constant 1 : index
    %c0_143 = arith.constant 0 : index
    %c0_144 = arith.constant 0 : index
    %550 = vector.load %arg7[%c1_142, %c0_143, %c0_144] : memref<2x1x48xf32, #tpu.memory_space<vmem>>, vector<1x1x48xf32>
    %551 = vector.shape_cast %550 : vector<1x1x48xf32> to vector<1x48xf32>
    %552 = vector.shape_cast %551 : vector<1x48xf32> to vector<1x48xf32>
    %553 = vector.broadcast %552 : vector<1x48xf32> to vector<2x48xf32>
    %c1_145 = arith.constant 1 : index
    %c0_146 = arith.constant 0 : index
    %c0_147 = arith.constant 0 : index
    %554 = vector.load %arg8[%c1_145, %c0_146, %c0_147] : memref<2x1x48xf32, #tpu.memory_space<vmem>>, vector<1x1x48xf32>
    %555 = vector.shape_cast %554 : vector<1x1x48xf32> to vector<1x48xf32>
    %556 = vector.shape_cast %555 : vector<1x48xf32> to vector<1x48xf32>
    %557 = vector.broadcast %556 : vector<1x48xf32> to vector<2x48xf32>
    %cst_148 = arith.constant 0.000000e+00 : f32
    %558 = vector.broadcast %cst_148 : f32 to vector<2x16xf32>
    %cst_149 = arith.constant dense<0.000000e+00> : vector<2x48xf32>
    %559 = tpu.matmul %522, %535, %cst_149 {dimension_numbers = #tpu.dot_dimension_numbers<[1], [0], [0], [1], [0, 0, 1, 1], [], []>} : vector<2x32xf32>, vector<32x48xf32>, vector<2x48xf32> -> vector<2x48xf32>
    %560 = arith.addf %559, %541 : vector<2x48xf32>
    %cst_150 = arith.constant dense<0.000000e+00> : vector<2x48xf32>
    %561 = tpu.matmul %558, %537, %cst_150 {dimension_numbers = #tpu.dot_dimension_numbers<[1], [0], [0], [1], [0, 0, 1, 1], [], []>} : vector<2x16xf32>, vector<16x48xf32>, vector<2x48xf32> -> vector<2x48xf32>
    %562 = arith.addf %561, %545 : vector<2x48xf32>
    %563 = vector.extract_strided_slice %560 {offsets = [0, 0], sizes = [2, 16], strides = [1, 1]} : vector<2x48xf32> to vector<2x16xf32>
    %564 = vector.extract_strided_slice %562 {offsets = [0, 0], sizes = [2, 16], strides = [1, 1]} : vector<2x48xf32> to vector<2x16xf32>
    %565 = arith.addf %563, %564 : vector<2x16xf32>
    %566 = arith.negf %565 : vector<2x16xf32>
    %567 = math.exp %566 : vector<2x16xf32>
    %cst_151 = arith.constant 1.000000e+00 : f32
    %568 = vector.broadcast %cst_151 : f32 to vector<2x16xf32>
    %569 = arith.addf %568, %567 : vector<2x16xf32>
    %570 = arith.divf %568, %569 : vector<2x16xf32>
    %571 = vector.extract_strided_slice %560 {offsets = [0, 16], sizes = [2, 16], strides = [1, 1]} : vector<2x48xf32> to vector<2x16xf32>
    %572 = vector.extract_strided_slice %562 {offsets = [0, 16], sizes = [2, 16], strides = [1, 1]} : vector<2x48xf32> to vector<2x16xf32>
    %573 = arith.addf %571, %572 : vector<2x16xf32>
    %574 = arith.negf %573 : vector<2x16xf32>
    %575 = math.exp %574 : vector<2x16xf32>
    %cst_152 = arith.constant 1.000000e+00 : f32
    %576 = vector.broadcast %cst_152 : f32 to vector<2x16xf32>
    %577 = arith.addf %576, %575 : vector<2x16xf32>
    %578 = arith.divf %576, %577 : vector<2x16xf32>
    %579 = vector.extract_strided_slice %560 {offsets = [0, 32], sizes = [2, 16], strides = [1, 1]} : vector<2x48xf32> to vector<2x16xf32>
    %580 = vector.extract_strided_slice %562 {offsets = [0, 32], sizes = [2, 16], strides = [1, 1]} : vector<2x48xf32> to vector<2x16xf32>
    %581 = arith.mulf %570, %580 : vector<2x16xf32>
    %582 = arith.addf %579, %581 : vector<2x16xf32>
    %583 = math.tanh %582 : vector<2x16xf32>
    %cst_153 = arith.constant 1.000000e+00 : f32
    %584 = vector.broadcast %cst_153 : f32 to vector<2x16xf32>
    %585 = arith.subf %584, %578 : vector<2x16xf32>
    %586 = arith.mulf %585, %583 : vector<2x16xf32>
    %587 = arith.mulf %578, %558 : vector<2x16xf32>
    %588 = arith.addf %586, %587 : vector<2x16xf32>
    %cst_154 = arith.constant dense<0.000000e+00> : vector<2x48xf32>
    %589 = tpu.matmul %523, %535, %cst_154 {dimension_numbers = #tpu.dot_dimension_numbers<[1], [0], [0], [1], [0, 0, 1, 1], [], []>} : vector<2x32xf32>, vector<32x48xf32>, vector<2x48xf32> -> vector<2x48xf32>
    %590 = arith.addf %589, %541 : vector<2x48xf32>
    %cst_155 = arith.constant dense<0.000000e+00> : vector<2x48xf32>
    %591 = tpu.matmul %588, %537, %cst_155 {dimension_numbers = #tpu.dot_dimension_numbers<[1], [0], [0], [1], [0, 0, 1, 1], [], []>} : vector<2x16xf32>, vector<16x48xf32>, vector<2x48xf32> -> vector<2x48xf32>
    %592 = arith.addf %591, %545 : vector<2x48xf32>
    %593 = vector.extract_strided_slice %590 {offsets = [0, 0], sizes = [2, 16], strides = [1, 1]} : vector<2x48xf32> to vector<2x16xf32>
    %594 = vector.extract_strided_slice %592 {offsets = [0, 0], sizes = [2, 16], strides = [1, 1]} : vector<2x48xf32> to vector<2x16xf32>
    %595 = arith.addf %593, %594 : vector<2x16xf32>
    %596 = arith.negf %595 : vector<2x16xf32>
    %597 = math.exp %596 : vector<2x16xf32>
    %cst_156 = arith.constant 1.000000e+00 : f32
    %598 = vector.broadcast %cst_156 : f32 to vector<2x16xf32>
    %599 = arith.addf %598, %597 : vector<2x16xf32>
    %600 = arith.divf %598, %599 : vector<2x16xf32>
    %601 = vector.extract_strided_slice %590 {offsets = [0, 16], sizes = [2, 16], strides = [1, 1]} : vector<2x48xf32> to vector<2x16xf32>
    %602 = vector.extract_strided_slice %592 {offsets = [0, 16], sizes = [2, 16], strides = [1, 1]} : vector<2x48xf32> to vector<2x16xf32>
    %603 = arith.addf %601, %602 : vector<2x16xf32>
    %604 = arith.negf %603 : vector<2x16xf32>
    %605 = math.exp %604 : vector<2x16xf32>
    %cst_157 = arith.constant 1.000000e+00 : f32
    %606 = vector.broadcast %cst_157 : f32 to vector<2x16xf32>
    %607 = arith.addf %606, %605 : vector<2x16xf32>
    %608 = arith.divf %606, %607 : vector<2x16xf32>
    %609 = vector.extract_strided_slice %590 {offsets = [0, 32], sizes = [2, 16], strides = [1, 1]} : vector<2x48xf32> to vector<2x16xf32>
    %610 = vector.extract_strided_slice %592 {offsets = [0, 32], sizes = [2, 16], strides = [1, 1]} : vector<2x48xf32> to vector<2x16xf32>
    %611 = arith.mulf %600, %610 : vector<2x16xf32>
    %612 = arith.addf %609, %611 : vector<2x16xf32>
    %613 = math.tanh %612 : vector<2x16xf32>
    %cst_158 = arith.constant 1.000000e+00 : f32
    %614 = vector.broadcast %cst_158 : f32 to vector<2x16xf32>
    %615 = arith.subf %614, %608 : vector<2x16xf32>
    %616 = arith.mulf %615, %613 : vector<2x16xf32>
    %617 = arith.mulf %608, %588 : vector<2x16xf32>
    %618 = arith.addf %616, %617 : vector<2x16xf32>
    %cst_159 = arith.constant dense<0.000000e+00> : vector<2x48xf32>
    %619 = tpu.matmul %524, %535, %cst_159 {dimension_numbers = #tpu.dot_dimension_numbers<[1], [0], [0], [1], [0, 0, 1, 1], [], []>} : vector<2x32xf32>, vector<32x48xf32>, vector<2x48xf32> -> vector<2x48xf32>
    %620 = arith.addf %619, %541 : vector<2x48xf32>
    %cst_160 = arith.constant dense<0.000000e+00> : vector<2x48xf32>
    %621 = tpu.matmul %618, %537, %cst_160 {dimension_numbers = #tpu.dot_dimension_numbers<[1], [0], [0], [1], [0, 0, 1, 1], [], []>} : vector<2x16xf32>, vector<16x48xf32>, vector<2x48xf32> -> vector<2x48xf32>
    %622 = arith.addf %621, %545 : vector<2x48xf32>
    %623 = vector.extract_strided_slice %620 {offsets = [0, 0], sizes = [2, 16], strides = [1, 1]} : vector<2x48xf32> to vector<2x16xf32>
    %624 = vector.extract_strided_slice %622 {offsets = [0, 0], sizes = [2, 16], strides = [1, 1]} : vector<2x48xf32> to vector<2x16xf32>
    %625 = arith.addf %623, %624 : vector<2x16xf32>
    %626 = arith.negf %625 : vector<2x16xf32>
    %627 = math.exp %626 : vector<2x16xf32>
    %cst_161 = arith.constant 1.000000e+00 : f32
    %628 = vector.broadcast %cst_161 : f32 to vector<2x16xf32>
    %629 = arith.addf %628, %627 : vector<2x16xf32>
    %630 = arith.divf %628, %629 : vector<2x16xf32>
    %631 = vector.extract_strided_slice %620 {offsets = [0, 16], sizes = [2, 16], strides = [1, 1]} : vector<2x48xf32> to vector<2x16xf32>
    %632 = vector.extract_strided_slice %622 {offsets = [0, 16], sizes = [2, 16], strides = [1, 1]} : vector<2x48xf32> to vector<2x16xf32>
    %633 = arith.addf %631, %632 : vector<2x16xf32>
    %634 = arith.negf %633 : vector<2x16xf32>
    %635 = math.exp %634 : vector<2x16xf32>
    %cst_162 = arith.constant 1.000000e+00 : f32
    %636 = vector.broadcast %cst_162 : f32 to vector<2x16xf32>
    %637 = arith.addf %636, %635 : vector<2x16xf32>
    %638 = arith.divf %636, %637 : vector<2x16xf32>
    %639 = vector.extract_strided_slice %620 {offsets = [0, 32], sizes = [2, 16], strides = [1, 1]} : vector<2x48xf32> to vector<2x16xf32>
    %640 = vector.extract_strided_slice %622 {offsets = [0, 32], sizes = [2, 16], strides = [1, 1]} : vector<2x48xf32> to vector<2x16xf32>
    %641 = arith.mulf %630, %640 : vector<2x16xf32>
    %642 = arith.addf %639, %641 : vector<2x16xf32>
    %643 = math.tanh %642 : vector<2x16xf32>
    %cst_163 = arith.constant 1.000000e+00 : f32
    %644 = vector.broadcast %cst_163 : f32 to vector<2x16xf32>
    %645 = arith.subf %644, %638 : vector<2x16xf32>
    %646 = arith.mulf %645, %643 : vector<2x16xf32>
    %647 = arith.mulf %638, %618 : vector<2x16xf32>
    %648 = arith.addf %646, %647 : vector<2x16xf32>
    %cst_164 = arith.constant dense<0.000000e+00> : vector<2x48xf32>
    %649 = tpu.matmul %525, %535, %cst_164 {dimension_numbers = #tpu.dot_dimension_numbers<[1], [0], [0], [1], [0, 0, 1, 1], [], []>} : vector<2x32xf32>, vector<32x48xf32>, vector<2x48xf32> -> vector<2x48xf32>
    %650 = arith.addf %649, %541 : vector<2x48xf32>
    %cst_165 = arith.constant dense<0.000000e+00> : vector<2x48xf32>
    %651 = tpu.matmul %648, %537, %cst_165 {dimension_numbers = #tpu.dot_dimension_numbers<[1], [0], [0], [1], [0, 0, 1, 1], [], []>} : vector<2x16xf32>, vector<16x48xf32>, vector<2x48xf32> -> vector<2x48xf32>
    %652 = arith.addf %651, %545 : vector<2x48xf32>
    %653 = vector.extract_strided_slice %650 {offsets = [0, 0], sizes = [2, 16], strides = [1, 1]} : vector<2x48xf32> to vector<2x16xf32>
    %654 = vector.extract_strided_slice %652 {offsets = [0, 0], sizes = [2, 16], strides = [1, 1]} : vector<2x48xf32> to vector<2x16xf32>
    %655 = arith.addf %653, %654 : vector<2x16xf32>
    %656 = arith.negf %655 : vector<2x16xf32>
    %657 = math.exp %656 : vector<2x16xf32>
    %cst_166 = arith.constant 1.000000e+00 : f32
    %658 = vector.broadcast %cst_166 : f32 to vector<2x16xf32>
    %659 = arith.addf %658, %657 : vector<2x16xf32>
    %660 = arith.divf %658, %659 : vector<2x16xf32>
    %661 = vector.extract_strided_slice %650 {offsets = [0, 16], sizes = [2, 16], strides = [1, 1]} : vector<2x48xf32> to vector<2x16xf32>
    %662 = vector.extract_strided_slice %652 {offsets = [0, 16], sizes = [2, 16], strides = [1, 1]} : vector<2x48xf32> to vector<2x16xf32>
    %663 = arith.addf %661, %662 : vector<2x16xf32>
    %664 = arith.negf %663 : vector<2x16xf32>
    %665 = math.exp %664 : vector<2x16xf32>
    %cst_167 = arith.constant 1.000000e+00 : f32
    %666 = vector.broadcast %cst_167 : f32 to vector<2x16xf32>
    %667 = arith.addf %666, %665 : vector<2x16xf32>
    %668 = arith.divf %666, %667 : vector<2x16xf32>
    %669 = vector.extract_strided_slice %650 {offsets = [0, 32], sizes = [2, 16], strides = [1, 1]} : vector<2x48xf32> to vector<2x16xf32>
    %670 = vector.extract_strided_slice %652 {offsets = [0, 32], sizes = [2, 16], strides = [1, 1]} : vector<2x48xf32> to vector<2x16xf32>
    %671 = arith.mulf %660, %670 : vector<2x16xf32>
    %672 = arith.addf %669, %671 : vector<2x16xf32>
    %673 = math.tanh %672 : vector<2x16xf32>
    %cst_168 = arith.constant 1.000000e+00 : f32
    %674 = vector.broadcast %cst_168 : f32 to vector<2x16xf32>
    %675 = arith.subf %674, %668 : vector<2x16xf32>
    %676 = arith.mulf %675, %673 : vector<2x16xf32>
    %677 = arith.mulf %668, %648 : vector<2x16xf32>
    %678 = arith.addf %676, %677 : vector<2x16xf32>
    %cst_169 = arith.constant dense<0.000000e+00> : vector<2x48xf32>
    %679 = tpu.matmul %526, %535, %cst_169 {dimension_numbers = #tpu.dot_dimension_numbers<[1], [0], [0], [1], [0, 0, 1, 1], [], []>} : vector<2x32xf32>, vector<32x48xf32>, vector<2x48xf32> -> vector<2x48xf32>
    %680 = arith.addf %679, %541 : vector<2x48xf32>
    %cst_170 = arith.constant dense<0.000000e+00> : vector<2x48xf32>
    %681 = tpu.matmul %678, %537, %cst_170 {dimension_numbers = #tpu.dot_dimension_numbers<[1], [0], [0], [1], [0, 0, 1, 1], [], []>} : vector<2x16xf32>, vector<16x48xf32>, vector<2x48xf32> -> vector<2x48xf32>
    %682 = arith.addf %681, %545 : vector<2x48xf32>
    %683 = vector.extract_strided_slice %680 {offsets = [0, 0], sizes = [2, 16], strides = [1, 1]} : vector<2x48xf32> to vector<2x16xf32>
    %684 = vector.extract_strided_slice %682 {offsets = [0, 0], sizes = [2, 16], strides = [1, 1]} : vector<2x48xf32> to vector<2x16xf32>
    %685 = arith.addf %683, %684 : vector<2x16xf32>
    %686 = arith.negf %685 : vector<2x16xf32>
    %687 = math.exp %686 : vector<2x16xf32>
    %cst_171 = arith.constant 1.000000e+00 : f32
    %688 = vector.broadcast %cst_171 : f32 to vector<2x16xf32>
    %689 = arith.addf %688, %687 : vector<2x16xf32>
    %690 = arith.divf %688, %689 : vector<2x16xf32>
    %691 = vector.extract_strided_slice %680 {offsets = [0, 16], sizes = [2, 16], strides = [1, 1]} : vector<2x48xf32> to vector<2x16xf32>
    %692 = vector.extract_strided_slice %682 {offsets = [0, 16], sizes = [2, 16], strides = [1, 1]} : vector<2x48xf32> to vector<2x16xf32>
    %693 = arith.addf %691, %692 : vector<2x16xf32>
    %694 = arith.negf %693 : vector<2x16xf32>
    %695 = math.exp %694 : vector<2x16xf32>
    %cst_172 = arith.constant 1.000000e+00 : f32
    %696 = vector.broadcast %cst_172 : f32 to vector<2x16xf32>
    %697 = arith.addf %696, %695 : vector<2x16xf32>
    %698 = arith.divf %696, %697 : vector<2x16xf32>
    %699 = vector.extract_strided_slice %680 {offsets = [0, 32], sizes = [2, 16], strides = [1, 1]} : vector<2x48xf32> to vector<2x16xf32>
    %700 = vector.extract_strided_slice %682 {offsets = [0, 32], sizes = [2, 16], strides = [1, 1]} : vector<2x48xf32> to vector<2x16xf32>
    %701 = arith.mulf %690, %700 : vector<2x16xf32>
    %702 = arith.addf %699, %701 : vector<2x16xf32>
    %703 = math.tanh %702 : vector<2x16xf32>
    %cst_173 = arith.constant 1.000000e+00 : f32
    %704 = vector.broadcast %cst_173 : f32 to vector<2x16xf32>
    %705 = arith.subf %704, %698 : vector<2x16xf32>
    %706 = arith.mulf %705, %703 : vector<2x16xf32>
    %707 = arith.mulf %698, %678 : vector<2x16xf32>
    %708 = arith.addf %706, %707 : vector<2x16xf32>
    %cst_174 = arith.constant dense<0.000000e+00> : vector<2x48xf32>
    %709 = tpu.matmul %527, %535, %cst_174 {dimension_numbers = #tpu.dot_dimension_numbers<[1], [0], [0], [1], [0, 0, 1, 1], [], []>} : vector<2x32xf32>, vector<32x48xf32>, vector<2x48xf32> -> vector<2x48xf32>
    %710 = arith.addf %709, %541 : vector<2x48xf32>
    %cst_175 = arith.constant dense<0.000000e+00> : vector<2x48xf32>
    %711 = tpu.matmul %708, %537, %cst_175 {dimension_numbers = #tpu.dot_dimension_numbers<[1], [0], [0], [1], [0, 0, 1, 1], [], []>} : vector<2x16xf32>, vector<16x48xf32>, vector<2x48xf32> -> vector<2x48xf32>
    %712 = arith.addf %711, %545 : vector<2x48xf32>
    %713 = vector.extract_strided_slice %710 {offsets = [0, 0], sizes = [2, 16], strides = [1, 1]} : vector<2x48xf32> to vector<2x16xf32>
    %714 = vector.extract_strided_slice %712 {offsets = [0, 0], sizes = [2, 16], strides = [1, 1]} : vector<2x48xf32> to vector<2x16xf32>
    %715 = arith.addf %713, %714 : vector<2x16xf32>
    %716 = arith.negf %715 : vector<2x16xf32>
    %717 = math.exp %716 : vector<2x16xf32>
    %cst_176 = arith.constant 1.000000e+00 : f32
    %718 = vector.broadcast %cst_176 : f32 to vector<2x16xf32>
    %719 = arith.addf %718, %717 : vector<2x16xf32>
    %720 = arith.divf %718, %719 : vector<2x16xf32>
    %721 = vector.extract_strided_slice %710 {offsets = [0, 16], sizes = [2, 16], strides = [1, 1]} : vector<2x48xf32> to vector<2x16xf32>
    %722 = vector.extract_strided_slice %712 {offsets = [0, 16], sizes = [2, 16], strides = [1, 1]} : vector<2x48xf32> to vector<2x16xf32>
    %723 = arith.addf %721, %722 : vector<2x16xf32>
    %724 = arith.negf %723 : vector<2x16xf32>
    %725 = math.exp %724 : vector<2x16xf32>
    %cst_177 = arith.constant 1.000000e+00 : f32
    %726 = vector.broadcast %cst_177 : f32 to vector<2x16xf32>
    %727 = arith.addf %726, %725 : vector<2x16xf32>
    %728 = arith.divf %726, %727 : vector<2x16xf32>
    %729 = vector.extract_strided_slice %710 {offsets = [0, 32], sizes = [2, 16], strides = [1, 1]} : vector<2x48xf32> to vector<2x16xf32>
    %730 = vector.extract_strided_slice %712 {offsets = [0, 32], sizes = [2, 16], strides = [1, 1]} : vector<2x48xf32> to vector<2x16xf32>
    %731 = arith.mulf %720, %730 : vector<2x16xf32>
    %732 = arith.addf %729, %731 : vector<2x16xf32>
    %733 = math.tanh %732 : vector<2x16xf32>
    %cst_178 = arith.constant 1.000000e+00 : f32
    %734 = vector.broadcast %cst_178 : f32 to vector<2x16xf32>
    %735 = arith.subf %734, %728 : vector<2x16xf32>
    %736 = arith.mulf %735, %733 : vector<2x16xf32>
    %737 = arith.mulf %728, %708 : vector<2x16xf32>
    %738 = arith.addf %736, %737 : vector<2x16xf32>
    %cst_179 = arith.constant dense<0.000000e+00> : vector<2x48xf32>
    %739 = tpu.matmul %528, %535, %cst_179 {dimension_numbers = #tpu.dot_dimension_numbers<[1], [0], [0], [1], [0, 0, 1, 1], [], []>} : vector<2x32xf32>, vector<32x48xf32>, vector<2x48xf32> -> vector<2x48xf32>
    %740 = arith.addf %739, %541 : vector<2x48xf32>
    %cst_180 = arith.constant dense<0.000000e+00> : vector<2x48xf32>
    %741 = tpu.matmul %738, %537, %cst_180 {dimension_numbers = #tpu.dot_dimension_numbers<[1], [0], [0], [1], [0, 0, 1, 1], [], []>} : vector<2x16xf32>, vector<16x48xf32>, vector<2x48xf32> -> vector<2x48xf32>
    %742 = arith.addf %741, %545 : vector<2x48xf32>
    %743 = vector.extract_strided_slice %740 {offsets = [0, 0], sizes = [2, 16], strides = [1, 1]} : vector<2x48xf32> to vector<2x16xf32>
    %744 = vector.extract_strided_slice %742 {offsets = [0, 0], sizes = [2, 16], strides = [1, 1]} : vector<2x48xf32> to vector<2x16xf32>
    %745 = arith.addf %743, %744 : vector<2x16xf32>
    %746 = arith.negf %745 : vector<2x16xf32>
    %747 = math.exp %746 : vector<2x16xf32>
    %cst_181 = arith.constant 1.000000e+00 : f32
    %748 = vector.broadcast %cst_181 : f32 to vector<2x16xf32>
    %749 = arith.addf %748, %747 : vector<2x16xf32>
    %750 = arith.divf %748, %749 : vector<2x16xf32>
    %751 = vector.extract_strided_slice %740 {offsets = [0, 16], sizes = [2, 16], strides = [1, 1]} : vector<2x48xf32> to vector<2x16xf32>
    %752 = vector.extract_strided_slice %742 {offsets = [0, 16], sizes = [2, 16], strides = [1, 1]} : vector<2x48xf32> to vector<2x16xf32>
    %753 = arith.addf %751, %752 : vector<2x16xf32>
    %754 = arith.negf %753 : vector<2x16xf32>
    %755 = math.exp %754 : vector<2x16xf32>
    %cst_182 = arith.constant 1.000000e+00 : f32
    %756 = vector.broadcast %cst_182 : f32 to vector<2x16xf32>
    %757 = arith.addf %756, %755 : vector<2x16xf32>
    %758 = arith.divf %756, %757 : vector<2x16xf32>
    %759 = vector.extract_strided_slice %740 {offsets = [0, 32], sizes = [2, 16], strides = [1, 1]} : vector<2x48xf32> to vector<2x16xf32>
    %760 = vector.extract_strided_slice %742 {offsets = [0, 32], sizes = [2, 16], strides = [1, 1]} : vector<2x48xf32> to vector<2x16xf32>
    %761 = arith.mulf %750, %760 : vector<2x16xf32>
    %762 = arith.addf %759, %761 : vector<2x16xf32>
    %763 = math.tanh %762 : vector<2x16xf32>
    %cst_183 = arith.constant 1.000000e+00 : f32
    %764 = vector.broadcast %cst_183 : f32 to vector<2x16xf32>
    %765 = arith.subf %764, %758 : vector<2x16xf32>
    %766 = arith.mulf %765, %763 : vector<2x16xf32>
    %767 = arith.mulf %758, %738 : vector<2x16xf32>
    %768 = arith.addf %766, %767 : vector<2x16xf32>
    %cst_184 = arith.constant dense<0.000000e+00> : vector<2x48xf32>
    %769 = tpu.matmul %529, %535, %cst_184 {dimension_numbers = #tpu.dot_dimension_numbers<[1], [0], [0], [1], [0, 0, 1, 1], [], []>} : vector<2x32xf32>, vector<32x48xf32>, vector<2x48xf32> -> vector<2x48xf32>
    %770 = arith.addf %769, %541 : vector<2x48xf32>
    %cst_185 = arith.constant dense<0.000000e+00> : vector<2x48xf32>
    %771 = tpu.matmul %768, %537, %cst_185 {dimension_numbers = #tpu.dot_dimension_numbers<[1], [0], [0], [1], [0, 0, 1, 1], [], []>} : vector<2x16xf32>, vector<16x48xf32>, vector<2x48xf32> -> vector<2x48xf32>
    %772 = arith.addf %771, %545 : vector<2x48xf32>
    %773 = vector.extract_strided_slice %770 {offsets = [0, 0], sizes = [2, 16], strides = [1, 1]} : vector<2x48xf32> to vector<2x16xf32>
    %774 = vector.extract_strided_slice %772 {offsets = [0, 0], sizes = [2, 16], strides = [1, 1]} : vector<2x48xf32> to vector<2x16xf32>
    %775 = arith.addf %773, %774 : vector<2x16xf32>
    %776 = arith.negf %775 : vector<2x16xf32>
    %777 = math.exp %776 : vector<2x16xf32>
    %cst_186 = arith.constant 1.000000e+00 : f32
    %778 = vector.broadcast %cst_186 : f32 to vector<2x16xf32>
    %779 = arith.addf %778, %777 : vector<2x16xf32>
    %780 = arith.divf %778, %779 : vector<2x16xf32>
    %781 = vector.extract_strided_slice %770 {offsets = [0, 16], sizes = [2, 16], strides = [1, 1]} : vector<2x48xf32> to vector<2x16xf32>
    %782 = vector.extract_strided_slice %772 {offsets = [0, 16], sizes = [2, 16], strides = [1, 1]} : vector<2x48xf32> to vector<2x16xf32>
    %783 = arith.addf %781, %782 : vector<2x16xf32>
    %784 = arith.negf %783 : vector<2x16xf32>
    %785 = math.exp %784 : vector<2x16xf32>
    %cst_187 = arith.constant 1.000000e+00 : f32
    %786 = vector.broadcast %cst_187 : f32 to vector<2x16xf32>
    %787 = arith.addf %786, %785 : vector<2x16xf32>
    %788 = arith.divf %786, %787 : vector<2x16xf32>
    %789 = vector.extract_strided_slice %770 {offsets = [0, 32], sizes = [2, 16], strides = [1, 1]} : vector<2x48xf32> to vector<2x16xf32>
    %790 = vector.extract_strided_slice %772 {offsets = [0, 32], sizes = [2, 16], strides = [1, 1]} : vector<2x48xf32> to vector<2x16xf32>
    %791 = arith.mulf %780, %790 : vector<2x16xf32>
    %792 = arith.addf %789, %791 : vector<2x16xf32>
    %793 = math.tanh %792 : vector<2x16xf32>
    %cst_188 = arith.constant 1.000000e+00 : f32
    %794 = vector.broadcast %cst_188 : f32 to vector<2x16xf32>
    %795 = arith.subf %794, %788 : vector<2x16xf32>
    %796 = arith.mulf %795, %793 : vector<2x16xf32>
    %797 = arith.mulf %788, %768 : vector<2x16xf32>
    %798 = arith.addf %796, %797 : vector<2x16xf32>
    %cst_189 = arith.constant 0.000000e+00 : f32
    %799 = vector.broadcast %cst_189 : f32 to vector<2x16xf32>
    %cst_190 = arith.constant dense<0.000000e+00> : vector<2x48xf32>
    %800 = tpu.matmul %529, %547, %cst_190 {dimension_numbers = #tpu.dot_dimension_numbers<[1], [0], [0], [1], [0, 0, 1, 1], [], []>} : vector<2x32xf32>, vector<32x48xf32>, vector<2x48xf32> -> vector<2x48xf32>
    %801 = arith.addf %800, %553 : vector<2x48xf32>
    %cst_191 = arith.constant dense<0.000000e+00> : vector<2x48xf32>
    %802 = tpu.matmul %799, %549, %cst_191 {dimension_numbers = #tpu.dot_dimension_numbers<[1], [0], [0], [1], [0, 0, 1, 1], [], []>} : vector<2x16xf32>, vector<16x48xf32>, vector<2x48xf32> -> vector<2x48xf32>
    %803 = arith.addf %802, %557 : vector<2x48xf32>
    %804 = vector.extract_strided_slice %801 {offsets = [0, 0], sizes = [2, 16], strides = [1, 1]} : vector<2x48xf32> to vector<2x16xf32>
    %805 = vector.extract_strided_slice %803 {offsets = [0, 0], sizes = [2, 16], strides = [1, 1]} : vector<2x48xf32> to vector<2x16xf32>
    %806 = arith.addf %804, %805 : vector<2x16xf32>
    %807 = arith.negf %806 : vector<2x16xf32>
    %808 = math.exp %807 : vector<2x16xf32>
    %cst_192 = arith.constant 1.000000e+00 : f32
    %809 = vector.broadcast %cst_192 : f32 to vector<2x16xf32>
    %810 = arith.addf %809, %808 : vector<2x16xf32>
    %811 = arith.divf %809, %810 : vector<2x16xf32>
    %812 = vector.extract_strided_slice %801 {offsets = [0, 16], sizes = [2, 16], strides = [1, 1]} : vector<2x48xf32> to vector<2x16xf32>
    %813 = vector.extract_strided_slice %803 {offsets = [0, 16], sizes = [2, 16], strides = [1, 1]} : vector<2x48xf32> to vector<2x16xf32>
    %814 = arith.addf %812, %813 : vector<2x16xf32>
    %815 = arith.negf %814 : vector<2x16xf32>
    %816 = math.exp %815 : vector<2x16xf32>
    %cst_193 = arith.constant 1.000000e+00 : f32
    %817 = vector.broadcast %cst_193 : f32 to vector<2x16xf32>
    %818 = arith.addf %817, %816 : vector<2x16xf32>
    %819 = arith.divf %817, %818 : vector<2x16xf32>
    %820 = vector.extract_strided_slice %801 {offsets = [0, 32], sizes = [2, 16], strides = [1, 1]} : vector<2x48xf32> to vector<2x16xf32>
    %821 = vector.extract_strided_slice %803 {offsets = [0, 32], sizes = [2, 16], strides = [1, 1]} : vector<2x48xf32> to vector<2x16xf32>
    %822 = arith.mulf %811, %821 : vector<2x16xf32>
    %823 = arith.addf %820, %822 : vector<2x16xf32>
    %824 = math.tanh %823 : vector<2x16xf32>
    %cst_194 = arith.constant 1.000000e+00 : f32
    %825 = vector.broadcast %cst_194 : f32 to vector<2x16xf32>
    %826 = arith.subf %825, %819 : vector<2x16xf32>
    %827 = arith.mulf %826, %824 : vector<2x16xf32>
    %828 = arith.mulf %819, %799 : vector<2x16xf32>
    %829 = arith.addf %827, %828 : vector<2x16xf32>
    %cst_195 = arith.constant dense<0.000000e+00> : vector<2x48xf32>
    %830 = tpu.matmul %528, %547, %cst_195 {dimension_numbers = #tpu.dot_dimension_numbers<[1], [0], [0], [1], [0, 0, 1, 1], [], []>} : vector<2x32xf32>, vector<32x48xf32>, vector<2x48xf32> -> vector<2x48xf32>
    %831 = arith.addf %830, %553 : vector<2x48xf32>
    %cst_196 = arith.constant dense<0.000000e+00> : vector<2x48xf32>
    %832 = tpu.matmul %829, %549, %cst_196 {dimension_numbers = #tpu.dot_dimension_numbers<[1], [0], [0], [1], [0, 0, 1, 1], [], []>} : vector<2x16xf32>, vector<16x48xf32>, vector<2x48xf32> -> vector<2x48xf32>
    %833 = arith.addf %832, %557 : vector<2x48xf32>
    %834 = vector.extract_strided_slice %831 {offsets = [0, 0], sizes = [2, 16], strides = [1, 1]} : vector<2x48xf32> to vector<2x16xf32>
    %835 = vector.extract_strided_slice %833 {offsets = [0, 0], sizes = [2, 16], strides = [1, 1]} : vector<2x48xf32> to vector<2x16xf32>
    %836 = arith.addf %834, %835 : vector<2x16xf32>
    %837 = arith.negf %836 : vector<2x16xf32>
    %838 = math.exp %837 : vector<2x16xf32>
    %cst_197 = arith.constant 1.000000e+00 : f32
    %839 = vector.broadcast %cst_197 : f32 to vector<2x16xf32>
    %840 = arith.addf %839, %838 : vector<2x16xf32>
    %841 = arith.divf %839, %840 : vector<2x16xf32>
    %842 = vector.extract_strided_slice %831 {offsets = [0, 16], sizes = [2, 16], strides = [1, 1]} : vector<2x48xf32> to vector<2x16xf32>
    %843 = vector.extract_strided_slice %833 {offsets = [0, 16], sizes = [2, 16], strides = [1, 1]} : vector<2x48xf32> to vector<2x16xf32>
    %844 = arith.addf %842, %843 : vector<2x16xf32>
    %845 = arith.negf %844 : vector<2x16xf32>
    %846 = math.exp %845 : vector<2x16xf32>
    %cst_198 = arith.constant 1.000000e+00 : f32
    %847 = vector.broadcast %cst_198 : f32 to vector<2x16xf32>
    %848 = arith.addf %847, %846 : vector<2x16xf32>
    %849 = arith.divf %847, %848 : vector<2x16xf32>
    %850 = vector.extract_strided_slice %831 {offsets = [0, 32], sizes = [2, 16], strides = [1, 1]} : vector<2x48xf32> to vector<2x16xf32>
    %851 = vector.extract_strided_slice %833 {offsets = [0, 32], sizes = [2, 16], strides = [1, 1]} : vector<2x48xf32> to vector<2x16xf32>
    %852 = arith.mulf %841, %851 : vector<2x16xf32>
    %853 = arith.addf %850, %852 : vector<2x16xf32>
    %854 = math.tanh %853 : vector<2x16xf32>
    %cst_199 = arith.constant 1.000000e+00 : f32
    %855 = vector.broadcast %cst_199 : f32 to vector<2x16xf32>
    %856 = arith.subf %855, %849 : vector<2x16xf32>
    %857 = arith.mulf %856, %854 : vector<2x16xf32>
    %858 = arith.mulf %849, %829 : vector<2x16xf32>
    %859 = arith.addf %857, %858 : vector<2x16xf32>
    %cst_200 = arith.constant dense<0.000000e+00> : vector<2x48xf32>
    %860 = tpu.matmul %527, %547, %cst_200 {dimension_numbers = #tpu.dot_dimension_numbers<[1], [0], [0], [1], [0, 0, 1, 1], [], []>} : vector<2x32xf32>, vector<32x48xf32>, vector<2x48xf32> -> vector<2x48xf32>
    %861 = arith.addf %860, %553 : vector<2x48xf32>
    %cst_201 = arith.constant dense<0.000000e+00> : vector<2x48xf32>
    %862 = tpu.matmul %859, %549, %cst_201 {dimension_numbers = #tpu.dot_dimension_numbers<[1], [0], [0], [1], [0, 0, 1, 1], [], []>} : vector<2x16xf32>, vector<16x48xf32>, vector<2x48xf32> -> vector<2x48xf32>
    %863 = arith.addf %862, %557 : vector<2x48xf32>
    %864 = vector.extract_strided_slice %861 {offsets = [0, 0], sizes = [2, 16], strides = [1, 1]} : vector<2x48xf32> to vector<2x16xf32>
    %865 = vector.extract_strided_slice %863 {offsets = [0, 0], sizes = [2, 16], strides = [1, 1]} : vector<2x48xf32> to vector<2x16xf32>
    %866 = arith.addf %864, %865 : vector<2x16xf32>
    %867 = arith.negf %866 : vector<2x16xf32>
    %868 = math.exp %867 : vector<2x16xf32>
    %cst_202 = arith.constant 1.000000e+00 : f32
    %869 = vector.broadcast %cst_202 : f32 to vector<2x16xf32>
    %870 = arith.addf %869, %868 : vector<2x16xf32>
    %871 = arith.divf %869, %870 : vector<2x16xf32>
    %872 = vector.extract_strided_slice %861 {offsets = [0, 16], sizes = [2, 16], strides = [1, 1]} : vector<2x48xf32> to vector<2x16xf32>
    %873 = vector.extract_strided_slice %863 {offsets = [0, 16], sizes = [2, 16], strides = [1, 1]} : vector<2x48xf32> to vector<2x16xf32>
    %874 = arith.addf %872, %873 : vector<2x16xf32>
    %875 = arith.negf %874 : vector<2x16xf32>
    %876 = math.exp %875 : vector<2x16xf32>
    %cst_203 = arith.constant 1.000000e+00 : f32
    %877 = vector.broadcast %cst_203 : f32 to vector<2x16xf32>
    %878 = arith.addf %877, %876 : vector<2x16xf32>
    %879 = arith.divf %877, %878 : vector<2x16xf32>
    %880 = vector.extract_strided_slice %861 {offsets = [0, 32], sizes = [2, 16], strides = [1, 1]} : vector<2x48xf32> to vector<2x16xf32>
    %881 = vector.extract_strided_slice %863 {offsets = [0, 32], sizes = [2, 16], strides = [1, 1]} : vector<2x48xf32> to vector<2x16xf32>
    %882 = arith.mulf %871, %881 : vector<2x16xf32>
    %883 = arith.addf %880, %882 : vector<2x16xf32>
    %884 = math.tanh %883 : vector<2x16xf32>
    %cst_204 = arith.constant 1.000000e+00 : f32
    %885 = vector.broadcast %cst_204 : f32 to vector<2x16xf32>
    %886 = arith.subf %885, %879 : vector<2x16xf32>
    %887 = arith.mulf %886, %884 : vector<2x16xf32>
    %888 = arith.mulf %879, %859 : vector<2x16xf32>
    %889 = arith.addf %887, %888 : vector<2x16xf32>
    %cst_205 = arith.constant dense<0.000000e+00> : vector<2x48xf32>
    %890 = tpu.matmul %526, %547, %cst_205 {dimension_numbers = #tpu.dot_dimension_numbers<[1], [0], [0], [1], [0, 0, 1, 1], [], []>} : vector<2x32xf32>, vector<32x48xf32>, vector<2x48xf32> -> vector<2x48xf32>
    %891 = arith.addf %890, %553 : vector<2x48xf32>
    %cst_206 = arith.constant dense<0.000000e+00> : vector<2x48xf32>
    %892 = tpu.matmul %889, %549, %cst_206 {dimension_numbers = #tpu.dot_dimension_numbers<[1], [0], [0], [1], [0, 0, 1, 1], [], []>} : vector<2x16xf32>, vector<16x48xf32>, vector<2x48xf32> -> vector<2x48xf32>
    %893 = arith.addf %892, %557 : vector<2x48xf32>
    %894 = vector.extract_strided_slice %891 {offsets = [0, 0], sizes = [2, 16], strides = [1, 1]} : vector<2x48xf32> to vector<2x16xf32>
    %895 = vector.extract_strided_slice %893 {offsets = [0, 0], sizes = [2, 16], strides = [1, 1]} : vector<2x48xf32> to vector<2x16xf32>
    %896 = arith.addf %894, %895 : vector<2x16xf32>
    %897 = arith.negf %896 : vector<2x16xf32>
    %898 = math.exp %897 : vector<2x16xf32>
    %cst_207 = arith.constant 1.000000e+00 : f32
    %899 = vector.broadcast %cst_207 : f32 to vector<2x16xf32>
    %900 = arith.addf %899, %898 : vector<2x16xf32>
    %901 = arith.divf %899, %900 : vector<2x16xf32>
    %902 = vector.extract_strided_slice %891 {offsets = [0, 16], sizes = [2, 16], strides = [1, 1]} : vector<2x48xf32> to vector<2x16xf32>
    %903 = vector.extract_strided_slice %893 {offsets = [0, 16], sizes = [2, 16], strides = [1, 1]} : vector<2x48xf32> to vector<2x16xf32>
    %904 = arith.addf %902, %903 : vector<2x16xf32>
    %905 = arith.negf %904 : vector<2x16xf32>
    %906 = math.exp %905 : vector<2x16xf32>
    %cst_208 = arith.constant 1.000000e+00 : f32
    %907 = vector.broadcast %cst_208 : f32 to vector<2x16xf32>
    %908 = arith.addf %907, %906 : vector<2x16xf32>
    %909 = arith.divf %907, %908 : vector<2x16xf32>
    %910 = vector.extract_strided_slice %891 {offsets = [0, 32], sizes = [2, 16], strides = [1, 1]} : vector<2x48xf32> to vector<2x16xf32>
    %911 = vector.extract_strided_slice %893 {offsets = [0, 32], sizes = [2, 16], strides = [1, 1]} : vector<2x48xf32> to vector<2x16xf32>
    %912 = arith.mulf %901, %911 : vector<2x16xf32>
    %913 = arith.addf %910, %912 : vector<2x16xf32>
    %914 = math.tanh %913 : vector<2x16xf32>
    %cst_209 = arith.constant 1.000000e+00 : f32
    %915 = vector.broadcast %cst_209 : f32 to vector<2x16xf32>
    %916 = arith.subf %915, %909 : vector<2x16xf32>
    %917 = arith.mulf %916, %914 : vector<2x16xf32>
    %918 = arith.mulf %909, %889 : vector<2x16xf32>
    %919 = arith.addf %917, %918 : vector<2x16xf32>
    %cst_210 = arith.constant dense<0.000000e+00> : vector<2x48xf32>
    %920 = tpu.matmul %525, %547, %cst_210 {dimension_numbers = #tpu.dot_dimension_numbers<[1], [0], [0], [1], [0, 0, 1, 1], [], []>} : vector<2x32xf32>, vector<32x48xf32>, vector<2x48xf32> -> vector<2x48xf32>
    %921 = arith.addf %920, %553 : vector<2x48xf32>
    %cst_211 = arith.constant dense<0.000000e+00> : vector<2x48xf32>
    %922 = tpu.matmul %919, %549, %cst_211 {dimension_numbers = #tpu.dot_dimension_numbers<[1], [0], [0], [1], [0, 0, 1, 1], [], []>} : vector<2x16xf32>, vector<16x48xf32>, vector<2x48xf32> -> vector<2x48xf32>
    %923 = arith.addf %922, %557 : vector<2x48xf32>
    %924 = vector.extract_strided_slice %921 {offsets = [0, 0], sizes = [2, 16], strides = [1, 1]} : vector<2x48xf32> to vector<2x16xf32>
    %925 = vector.extract_strided_slice %923 {offsets = [0, 0], sizes = [2, 16], strides = [1, 1]} : vector<2x48xf32> to vector<2x16xf32>
    %926 = arith.addf %924, %925 : vector<2x16xf32>
    %927 = arith.negf %926 : vector<2x16xf32>
    %928 = math.exp %927 : vector<2x16xf32>
    %cst_212 = arith.constant 1.000000e+00 : f32
    %929 = vector.broadcast %cst_212 : f32 to vector<2x16xf32>
    %930 = arith.addf %929, %928 : vector<2x16xf32>
    %931 = arith.divf %929, %930 : vector<2x16xf32>
    %932 = vector.extract_strided_slice %921 {offsets = [0, 16], sizes = [2, 16], strides = [1, 1]} : vector<2x48xf32> to vector<2x16xf32>
    %933 = vector.extract_strided_slice %923 {offsets = [0, 16], sizes = [2, 16], strides = [1, 1]} : vector<2x48xf32> to vector<2x16xf32>
    %934 = arith.addf %932, %933 : vector<2x16xf32>
    %935 = arith.negf %934 : vector<2x16xf32>
    %936 = math.exp %935 : vector<2x16xf32>
    %cst_213 = arith.constant 1.000000e+00 : f32
    %937 = vector.broadcast %cst_213 : f32 to vector<2x16xf32>
    %938 = arith.addf %937, %936 : vector<2x16xf32>
    %939 = arith.divf %937, %938 : vector<2x16xf32>
    %940 = vector.extract_strided_slice %921 {offsets = [0, 32], sizes = [2, 16], strides = [1, 1]} : vector<2x48xf32> to vector<2x16xf32>
    %941 = vector.extract_strided_slice %923 {offsets = [0, 32], sizes = [2, 16], strides = [1, 1]} : vector<2x48xf32> to vector<2x16xf32>
    %942 = arith.mulf %931, %941 : vector<2x16xf32>
    %943 = arith.addf %940, %942 : vector<2x16xf32>
    %944 = math.tanh %943 : vector<2x16xf32>
    %cst_214 = arith.constant 1.000000e+00 : f32
    %945 = vector.broadcast %cst_214 : f32 to vector<2x16xf32>
    %946 = arith.subf %945, %939 : vector<2x16xf32>
    %947 = arith.mulf %946, %944 : vector<2x16xf32>
    %948 = arith.mulf %939, %919 : vector<2x16xf32>
    %949 = arith.addf %947, %948 : vector<2x16xf32>
    %cst_215 = arith.constant dense<0.000000e+00> : vector<2x48xf32>
    %950 = tpu.matmul %524, %547, %cst_215 {dimension_numbers = #tpu.dot_dimension_numbers<[1], [0], [0], [1], [0, 0, 1, 1], [], []>} : vector<2x32xf32>, vector<32x48xf32>, vector<2x48xf32> -> vector<2x48xf32>
    %951 = arith.addf %950, %553 : vector<2x48xf32>
    %cst_216 = arith.constant dense<0.000000e+00> : vector<2x48xf32>
    %952 = tpu.matmul %949, %549, %cst_216 {dimension_numbers = #tpu.dot_dimension_numbers<[1], [0], [0], [1], [0, 0, 1, 1], [], []>} : vector<2x16xf32>, vector<16x48xf32>, vector<2x48xf32> -> vector<2x48xf32>
    %953 = arith.addf %952, %557 : vector<2x48xf32>
    %954 = vector.extract_strided_slice %951 {offsets = [0, 0], sizes = [2, 16], strides = [1, 1]} : vector<2x48xf32> to vector<2x16xf32>
    %955 = vector.extract_strided_slice %953 {offsets = [0, 0], sizes = [2, 16], strides = [1, 1]} : vector<2x48xf32> to vector<2x16xf32>
    %956 = arith.addf %954, %955 : vector<2x16xf32>
    %957 = arith.negf %956 : vector<2x16xf32>
    %958 = math.exp %957 : vector<2x16xf32>
    %cst_217 = arith.constant 1.000000e+00 : f32
    %959 = vector.broadcast %cst_217 : f32 to vector<2x16xf32>
    %960 = arith.addf %959, %958 : vector<2x16xf32>
    %961 = arith.divf %959, %960 : vector<2x16xf32>
    %962 = vector.extract_strided_slice %951 {offsets = [0, 16], sizes = [2, 16], strides = [1, 1]} : vector<2x48xf32> to vector<2x16xf32>
    %963 = vector.extract_strided_slice %953 {offsets = [0, 16], sizes = [2, 16], strides = [1, 1]} : vector<2x48xf32> to vector<2x16xf32>
    %964 = arith.addf %962, %963 : vector<2x16xf32>
    %965 = arith.negf %964 : vector<2x16xf32>
    %966 = math.exp %965 : vector<2x16xf32>
    %cst_218 = arith.constant 1.000000e+00 : f32
    %967 = vector.broadcast %cst_218 : f32 to vector<2x16xf32>
    %968 = arith.addf %967, %966 : vector<2x16xf32>
    %969 = arith.divf %967, %968 : vector<2x16xf32>
    %970 = vector.extract_strided_slice %951 {offsets = [0, 32], sizes = [2, 16], strides = [1, 1]} : vector<2x48xf32> to vector<2x16xf32>
    %971 = vector.extract_strided_slice %953 {offsets = [0, 32], sizes = [2, 16], strides = [1, 1]} : vector<2x48xf32> to vector<2x16xf32>
    %972 = arith.mulf %961, %971 : vector<2x16xf32>
    %973 = arith.addf %970, %972 : vector<2x16xf32>
    %974 = math.tanh %973 : vector<2x16xf32>
    %cst_219 = arith.constant 1.000000e+00 : f32
    %975 = vector.broadcast %cst_219 : f32 to vector<2x16xf32>
    %976 = arith.subf %975, %969 : vector<2x16xf32>
    %977 = arith.mulf %976, %974 : vector<2x16xf32>
    %978 = arith.mulf %969, %949 : vector<2x16xf32>
    %979 = arith.addf %977, %978 : vector<2x16xf32>
    %cst_220 = arith.constant dense<0.000000e+00> : vector<2x48xf32>
    %980 = tpu.matmul %523, %547, %cst_220 {dimension_numbers = #tpu.dot_dimension_numbers<[1], [0], [0], [1], [0, 0, 1, 1], [], []>} : vector<2x32xf32>, vector<32x48xf32>, vector<2x48xf32> -> vector<2x48xf32>
    %981 = arith.addf %980, %553 : vector<2x48xf32>
    %cst_221 = arith.constant dense<0.000000e+00> : vector<2x48xf32>
    %982 = tpu.matmul %979, %549, %cst_221 {dimension_numbers = #tpu.dot_dimension_numbers<[1], [0], [0], [1], [0, 0, 1, 1], [], []>} : vector<2x16xf32>, vector<16x48xf32>, vector<2x48xf32> -> vector<2x48xf32>
    %983 = arith.addf %982, %557 : vector<2x48xf32>
    %984 = vector.extract_strided_slice %981 {offsets = [0, 0], sizes = [2, 16], strides = [1, 1]} : vector<2x48xf32> to vector<2x16xf32>
    %985 = vector.extract_strided_slice %983 {offsets = [0, 0], sizes = [2, 16], strides = [1, 1]} : vector<2x48xf32> to vector<2x16xf32>
    %986 = arith.addf %984, %985 : vector<2x16xf32>
    %987 = arith.negf %986 : vector<2x16xf32>
    %988 = math.exp %987 : vector<2x16xf32>
    %cst_222 = arith.constant 1.000000e+00 : f32
    %989 = vector.broadcast %cst_222 : f32 to vector<2x16xf32>
    %990 = arith.addf %989, %988 : vector<2x16xf32>
    %991 = arith.divf %989, %990 : vector<2x16xf32>
    %992 = vector.extract_strided_slice %981 {offsets = [0, 16], sizes = [2, 16], strides = [1, 1]} : vector<2x48xf32> to vector<2x16xf32>
    %993 = vector.extract_strided_slice %983 {offsets = [0, 16], sizes = [2, 16], strides = [1, 1]} : vector<2x48xf32> to vector<2x16xf32>
    %994 = arith.addf %992, %993 : vector<2x16xf32>
    %995 = arith.negf %994 : vector<2x16xf32>
    %996 = math.exp %995 : vector<2x16xf32>
    %cst_223 = arith.constant 1.000000e+00 : f32
    %997 = vector.broadcast %cst_223 : f32 to vector<2x16xf32>
    %998 = arith.addf %997, %996 : vector<2x16xf32>
    %999 = arith.divf %997, %998 : vector<2x16xf32>
    %1000 = vector.extract_strided_slice %981 {offsets = [0, 32], sizes = [2, 16], strides = [1, 1]} : vector<2x48xf32> to vector<2x16xf32>
    %1001 = vector.extract_strided_slice %983 {offsets = [0, 32], sizes = [2, 16], strides = [1, 1]} : vector<2x48xf32> to vector<2x16xf32>
    %1002 = arith.mulf %991, %1001 : vector<2x16xf32>
    %1003 = arith.addf %1000, %1002 : vector<2x16xf32>
    %1004 = math.tanh %1003 : vector<2x16xf32>
    %cst_224 = arith.constant 1.000000e+00 : f32
    %1005 = vector.broadcast %cst_224 : f32 to vector<2x16xf32>
    %1006 = arith.subf %1005, %999 : vector<2x16xf32>
    %1007 = arith.mulf %1006, %1004 : vector<2x16xf32>
    %1008 = arith.mulf %999, %979 : vector<2x16xf32>
    %1009 = arith.addf %1007, %1008 : vector<2x16xf32>
    %cst_225 = arith.constant dense<0.000000e+00> : vector<2x48xf32>
    %1010 = tpu.matmul %522, %547, %cst_225 {dimension_numbers = #tpu.dot_dimension_numbers<[1], [0], [0], [1], [0, 0, 1, 1], [], []>} : vector<2x32xf32>, vector<32x48xf32>, vector<2x48xf32> -> vector<2x48xf32>
    %1011 = arith.addf %1010, %553 : vector<2x48xf32>
    %cst_226 = arith.constant dense<0.000000e+00> : vector<2x48xf32>
    %1012 = tpu.matmul %1009, %549, %cst_226 {dimension_numbers = #tpu.dot_dimension_numbers<[1], [0], [0], [1], [0, 0, 1, 1], [], []>} : vector<2x16xf32>, vector<16x48xf32>, vector<2x48xf32> -> vector<2x48xf32>
    %1013 = arith.addf %1012, %557 : vector<2x48xf32>
    %1014 = vector.extract_strided_slice %1011 {offsets = [0, 0], sizes = [2, 16], strides = [1, 1]} : vector<2x48xf32> to vector<2x16xf32>
    %1015 = vector.extract_strided_slice %1013 {offsets = [0, 0], sizes = [2, 16], strides = [1, 1]} : vector<2x48xf32> to vector<2x16xf32>
    %1016 = arith.addf %1014, %1015 : vector<2x16xf32>
    %1017 = arith.negf %1016 : vector<2x16xf32>
    %1018 = math.exp %1017 : vector<2x16xf32>
    %cst_227 = arith.constant 1.000000e+00 : f32
    %1019 = vector.broadcast %cst_227 : f32 to vector<2x16xf32>
    %1020 = arith.addf %1019, %1018 : vector<2x16xf32>
    %1021 = arith.divf %1019, %1020 : vector<2x16xf32>
    %1022 = vector.extract_strided_slice %1011 {offsets = [0, 16], sizes = [2, 16], strides = [1, 1]} : vector<2x48xf32> to vector<2x16xf32>
    %1023 = vector.extract_strided_slice %1013 {offsets = [0, 16], sizes = [2, 16], strides = [1, 1]} : vector<2x48xf32> to vector<2x16xf32>
    %1024 = arith.addf %1022, %1023 : vector<2x16xf32>
    %1025 = arith.negf %1024 : vector<2x16xf32>
    %1026 = math.exp %1025 : vector<2x16xf32>
    %cst_228 = arith.constant 1.000000e+00 : f32
    %1027 = vector.broadcast %cst_228 : f32 to vector<2x16xf32>
    %1028 = arith.addf %1027, %1026 : vector<2x16xf32>
    %1029 = arith.divf %1027, %1028 : vector<2x16xf32>
    %1030 = vector.extract_strided_slice %1011 {offsets = [0, 32], sizes = [2, 16], strides = [1, 1]} : vector<2x48xf32> to vector<2x16xf32>
    %1031 = vector.extract_strided_slice %1013 {offsets = [0, 32], sizes = [2, 16], strides = [1, 1]} : vector<2x48xf32> to vector<2x16xf32>
    %1032 = arith.mulf %1021, %1031 : vector<2x16xf32>
    %1033 = arith.addf %1030, %1032 : vector<2x16xf32>
    %1034 = math.tanh %1033 : vector<2x16xf32>
    %cst_229 = arith.constant 1.000000e+00 : f32
    %1035 = vector.broadcast %cst_229 : f32 to vector<2x16xf32>
    %1036 = arith.subf %1035, %1029 : vector<2x16xf32>
    %1037 = arith.mulf %1036, %1034 : vector<2x16xf32>
    %1038 = arith.mulf %1029, %1009 : vector<2x16xf32>
    %1039 = arith.addf %1037, %1038 : vector<2x16xf32>
    %1040 = tpu.concatenate %588, %1039 in 1 : vector<2x16xf32>, vector<2x16xf32> -> vector<2x32xf32>
    %1041 = tpu.concatenate %618, %1009 in 1 : vector<2x16xf32>, vector<2x16xf32> -> vector<2x32xf32>
    %1042 = tpu.concatenate %648, %979 in 1 : vector<2x16xf32>, vector<2x16xf32> -> vector<2x32xf32>
    %1043 = tpu.concatenate %678, %949 in 1 : vector<2x16xf32>, vector<2x16xf32> -> vector<2x32xf32>
    %1044 = tpu.concatenate %708, %919 in 1 : vector<2x16xf32>, vector<2x16xf32> -> vector<2x32xf32>
    %1045 = tpu.concatenate %738, %889 in 1 : vector<2x16xf32>, vector<2x16xf32> -> vector<2x32xf32>
    %1046 = tpu.concatenate %768, %859 in 1 : vector<2x16xf32>, vector<2x16xf32> -> vector<2x32xf32>
    %1047 = tpu.concatenate %798, %829 in 1 : vector<2x16xf32>, vector<2x16xf32> -> vector<2x32xf32>
    %1048 = tpu.concatenate %798, %1039 in 1 : vector<2x16xf32>, vector<2x16xf32> -> vector<2x32xf32>
    %c1_230 = arith.constant 1 : index
    %c0_231 = arith.constant 0 : index
    %c0_232 = arith.constant 0 : index
    %1049 = vector.load %arg10[%c1_230, %c0_231, %c0_232] : memref<2x2x32xf32, #tpu.memory_space<vmem>>, vector<1x2x32xf32>
    %1050 = vector.shape_cast %1049 : vector<1x2x32xf32> to vector<2x32xf32>
    %1051 = vector.shape_cast %1048 : vector<2x32xf32> to vector<1x2x32xf32>
    tpu.vector_store %arg10[%c1_230, %c0_231, %c0_232], %1051 {strides = array<i32>} : memref<2x2x32xf32, #tpu.memory_space<vmem>>, vector<1x2x32xf32>,
    %c0_233 = arith.constant 0 : index
    %c0_234 = arith.constant 0 : index
    %c0_235 = arith.constant 0 : index
    %1052 = vector.load %arg9[%c0_233, %c0_234, %c0_235] : memref<8x2x32xf32, #tpu.memory_space<vmem>>, vector<1x2x32xf32>
    %1053 = vector.shape_cast %1052 : vector<1x2x32xf32> to vector<2x32xf32>
    %1054 = vector.shape_cast %1040 : vector<2x32xf32> to vector<1x2x32xf32>
    tpu.vector_store %arg9[%c0_233, %c0_234, %c0_235], %1054 {strides = array<i32>} : memref<8x2x32xf32, #tpu.memory_space<vmem>>, vector<1x2x32xf32>,
    %c1_236 = arith.constant 1 : index
    %c0_237 = arith.constant 0 : index
    %c0_238 = arith.constant 0 : index
    %1055 = vector.load %arg9[%c1_236, %c0_237, %c0_238] : memref<8x2x32xf32, #tpu.memory_space<vmem>>, vector<1x2x32xf32>
    %1056 = vector.shape_cast %1055 : vector<1x2x32xf32> to vector<2x32xf32>
    %1057 = vector.shape_cast %1041 : vector<2x32xf32> to vector<1x2x32xf32>
    tpu.vector_store %arg9[%c1_236, %c0_237, %c0_238], %1057 {strides = array<i32>} : memref<8x2x32xf32, #tpu.memory_space<vmem>>, vector<1x2x32xf32>,
    %c2_239 = arith.constant 2 : index
    %c0_240 = arith.constant 0 : index
    %c0_241 = arith.constant 0 : index
    %1058 = vector.load %arg9[%c2_239, %c0_240, %c0_241] : memref<8x2x32xf32, #tpu.memory_space<vmem>>, vector<1x2x32xf32>
    %1059 = vector.shape_cast %1058 : vector<1x2x32xf32> to vector<2x32xf32>
    %1060 = vector.shape_cast %1042 : vector<2x32xf32> to vector<1x2x32xf32>
    tpu.vector_store %arg9[%c2_239, %c0_240, %c0_241], %1060 {strides = array<i32>} : memref<8x2x32xf32, #tpu.memory_space<vmem>>, vector<1x2x32xf32>,
    %c3_242 = arith.constant 3 : index
    %c0_243 = arith.constant 0 : index
    %c0_244 = arith.constant 0 : index
    %1061 = vector.load %arg9[%c3_242, %c0_243, %c0_244] : memref<8x2x32xf32, #tpu.memory_space<vmem>>, vector<1x2x32xf32>
    %1062 = vector.shape_cast %1061 : vector<1x2x32xf32> to vector<2x32xf32>
    %1063 = vector.shape_cast %1043 : vector<2x32xf32> to vector<1x2x32xf32>
    tpu.vector_store %arg9[%c3_242, %c0_243, %c0_244], %1063 {strides = array<i32>} : memref<8x2x32xf32, #tpu.memory_space<vmem>>, vector<1x2x32xf32>,
    %c4_245 = arith.constant 4 : index
    %c0_246 = arith.constant 0 : index
    %c0_247 = arith.constant 0 : index
    %1064 = vector.load %arg9[%c4_245, %c0_246, %c0_247] : memref<8x2x32xf32, #tpu.memory_space<vmem>>, vector<1x2x32xf32>
    %1065 = vector.shape_cast %1064 : vector<1x2x32xf32> to vector<2x32xf32>
    %1066 = vector.shape_cast %1044 : vector<2x32xf32> to vector<1x2x32xf32>
    tpu.vector_store %arg9[%c4_245, %c0_246, %c0_247], %1066 {strides = array<i32>} : memref<8x2x32xf32, #tpu.memory_space<vmem>>, vector<1x2x32xf32>,
    %c5_248 = arith.constant 5 : index
    %c0_249 = arith.constant 0 : index
    %c0_250 = arith.constant 0 : index
    %1067 = vector.load %arg9[%c5_248, %c0_249, %c0_250] : memref<8x2x32xf32, #tpu.memory_space<vmem>>, vector<1x2x32xf32>
    %1068 = vector.shape_cast %1067 : vector<1x2x32xf32> to vector<2x32xf32>
    %1069 = vector.shape_cast %1045 : vector<2x32xf32> to vector<1x2x32xf32>
    tpu.vector_store %arg9[%c5_248, %c0_249, %c0_250], %1069 {strides = array<i32>} : memref<8x2x32xf32, #tpu.memory_space<vmem>>, vector<1x2x32xf32>,
    %c6_251 = arith.constant 6 : index
    %c0_252 = arith.constant 0 : index
    %c0_253 = arith.constant 0 : index
    %1070 = vector.load %arg9[%c6_251, %c0_252, %c0_253] : memref<8x2x32xf32, #tpu.memory_space<vmem>>, vector<1x2x32xf32>
    %1071 = vector.shape_cast %1070 : vector<1x2x32xf32> to vector<2x32xf32>
    %1072 = vector.shape_cast %1046 : vector<2x32xf32> to vector<1x2x32xf32>
    tpu.vector_store %arg9[%c6_251, %c0_252, %c0_253], %1072 {strides = array<i32>} : memref<8x2x32xf32, #tpu.memory_space<vmem>>, vector<1x2x32xf32>,
    %c7_254 = arith.constant 7 : index
    %c0_255 = arith.constant 0 : index
    %c0_256 = arith.constant 0 : index
    %1073 = vector.load %arg9[%c7_254, %c0_255, %c0_256] : memref<8x2x32xf32, #tpu.memory_space<vmem>>, vector<1x2x32xf32>
    %1074 = vector.shape_cast %1073 : vector<1x2x32xf32> to vector<2x32xf32>
    %1075 = vector.shape_cast %1047 : vector<2x32xf32> to vector<1x2x32xf32>
    tpu.vector_store %arg9[%c7_254, %c0_255, %c0_256], %1075 {strides = array<i32>} : memref<8x2x32xf32, #tpu.memory_space<vmem>>, vector<1x2x32xf32>,
    return
  }
}

module attributes {stable_mosaic.version = 11 : i64} {
  func.func @_decoder_kernel(%arg0: memref<5xi32, #tpu.memory_space<smem>>, %arg1: memref<6x2x16xf32, #tpu.memory_space<vmem>>, %arg2: memref<50x16xf32, #tpu.memory_space<vmem>>, %arg3: memref<2x2x32xf32, #tpu.memory_space<vmem>>, %arg4: memref<16x96xf32, #tpu.memory_space<vmem>>, %arg5: memref<32x96xf32, #tpu.memory_space<vmem>>, %arg6: memref<1x96xf32, #tpu.memory_space<vmem>>, %arg7: memref<1x96xf32, #tpu.memory_space<vmem>>, %arg8: memref<32x96xf32, #tpu.memory_space<vmem>>, %arg9: memref<32x96xf32, #tpu.memory_space<vmem>>, %arg10: memref<1x96xf32, #tpu.memory_space<vmem>>, %arg11: memref<1x96xf32, #tpu.memory_space<vmem>>, %arg12: memref<32x64xf32, #tpu.memory_space<vmem>>, %arg13: memref<1x64xf32, #tpu.memory_space<vmem>>, %arg14: memref<64x128xf32, #tpu.memory_space<vmem>>, %arg15: memref<1x128xf32, #tpu.memory_space<vmem>>, %arg16: memref<128x128xf32, #tpu.memory_space<vmem>>, %arg17: memref<1x128xf32, #tpu.memory_space<vmem>>, %arg18: memref<6x2x128xf32, #tpu.memory_space<vmem>>, %arg19: memref<2x5xi32, #tpu.memory_space<vmem>>) attributes {dimension_semantics = [], scalar_prefetch = 0 : i64, scratch_operands = 0 : i64, tpu.core_type = #tpu.core_type<tc>} {
    %c0 = arith.constant 0 : index
    %c0_0 = arith.constant 0 : index
    %0 = vector.load %arg4[%c0, %c0_0] : memref<16x96xf32, #tpu.memory_space<vmem>>, vector<16x96xf32>
    %c0_1 = arith.constant 0 : index
    %c0_2 = arith.constant 0 : index
    %1 = vector.load %arg5[%c0_1, %c0_2] : memref<32x96xf32, #tpu.memory_space<vmem>>, vector<32x96xf32>
    %c0_3 = arith.constant 0 : index
    %c0_4 = arith.constant 0 : index
    %2 = vector.load %arg6[%c0_3, %c0_4] : memref<1x96xf32, #tpu.memory_space<vmem>>, vector<1x96xf32>
    %3 = vector.shape_cast %2 : vector<1x96xf32> to vector<1x96xf32>
    %4 = vector.broadcast %3 : vector<1x96xf32> to vector<2x96xf32>
    %c0_5 = arith.constant 0 : index
    %c0_6 = arith.constant 0 : index
    %5 = vector.load %arg7[%c0_5, %c0_6] : memref<1x96xf32, #tpu.memory_space<vmem>>, vector<1x96xf32>
    %6 = vector.shape_cast %5 : vector<1x96xf32> to vector<1x96xf32>
    %7 = vector.broadcast %6 : vector<1x96xf32> to vector<2x96xf32>
    %c0_7 = arith.constant 0 : index
    %c0_8 = arith.constant 0 : index
    %8 = vector.load %arg8[%c0_7, %c0_8] : memref<32x96xf32, #tpu.memory_space<vmem>>, vector<32x96xf32>
    %c0_9 = arith.constant 0 : index
    %c0_10 = arith.constant 0 : index
    %9 = vector.load %arg9[%c0_9, %c0_10] : memref<32x96xf32, #tpu.memory_space<vmem>>, vector<32x96xf32>
    %c0_11 = arith.constant 0 : index
    %c0_12 = arith.constant 0 : index
    %10 = vector.load %arg10[%c0_11, %c0_12] : memref<1x96xf32, #tpu.memory_space<vmem>>, vector<1x96xf32>
    %11 = vector.shape_cast %10 : vector<1x96xf32> to vector<1x96xf32>
    %12 = vector.broadcast %11 : vector<1x96xf32> to vector<2x96xf32>
    %c0_13 = arith.constant 0 : index
    %c0_14 = arith.constant 0 : index
    %13 = vector.load %arg11[%c0_13, %c0_14] : memref<1x96xf32, #tpu.memory_space<vmem>>, vector<1x96xf32>
    %14 = vector.shape_cast %13 : vector<1x96xf32> to vector<1x96xf32>
    %15 = vector.broadcast %14 : vector<1x96xf32> to vector<2x96xf32>
    %c0_15 = arith.constant 0 : index
    %c0_16 = arith.constant 0 : index
    %16 = vector.load %arg12[%c0_15, %c0_16] : memref<32x64xf32, #tpu.memory_space<vmem>>, vector<32x64xf32>
    %c0_17 = arith.constant 0 : index
    %c0_18 = arith.constant 0 : index
    %17 = vector.load %arg13[%c0_17, %c0_18] : memref<1x64xf32, #tpu.memory_space<vmem>>, vector<1x64xf32>
    %18 = vector.shape_cast %17 : vector<1x64xf32> to vector<1x64xf32>
    %19 = vector.broadcast %18 : vector<1x64xf32> to vector<2x64xf32>
    %c0_19 = arith.constant 0 : index
    %c0_20 = arith.constant 0 : index
    %20 = vector.load %arg14[%c0_19, %c0_20] : memref<64x128xf32, #tpu.memory_space<vmem>>, vector<64x128xf32>
    %c0_21 = arith.constant 0 : index
    %c0_22 = arith.constant 0 : index
    %21 = vector.load %arg15[%c0_21, %c0_22] : memref<1x128xf32, #tpu.memory_space<vmem>>, vector<1x128xf32>
    %22 = vector.shape_cast %21 : vector<1x128xf32> to vector<1x128xf32>
    %23 = vector.broadcast %22 : vector<1x128xf32> to vector<2x128xf32>
    %c0_23 = arith.constant 0 : index
    %c0_24 = arith.constant 0 : index
    %24 = vector.load %arg16[%c0_23, %c0_24] : memref<128x128xf32, #tpu.memory_space<vmem>>, vector<128x128xf32>
    %c0_25 = arith.constant 0 : index
    %c0_26 = arith.constant 0 : index
    %25 = vector.load %arg17[%c0_25, %c0_26] : memref<1x128xf32, #tpu.memory_space<vmem>>, vector<1x128xf32>
    %26 = vector.shape_cast %25 : vector<1x128xf32> to vector<1x128xf32>
    %27 = vector.broadcast %26 : vector<1x128xf32> to vector<2x128xf32>
    %c0_27 = arith.constant 0 : index
    %c0_28 = arith.constant 0 : index
    %28 = vector.load %arg2[%c0_27, %c0_28] : memref<50x16xf32, #tpu.memory_space<vmem>>, vector<50x16xf32>
    %cst = arith.constant 0.000000e+00 : f32
    %29 = vector.broadcast %cst : f32 to vector<2x128xf32>
    %c0_29 = arith.constant 0 : index
    %c0_30 = arith.constant 0 : index
    %c0_31 = arith.constant 0 : index
    %30 = vector.load %arg18[%c0_29, %c0_30, %c0_31] : memref<6x2x128xf32, #tpu.memory_space<vmem>>, vector<1x2x128xf32>
    %31 = vector.shape_cast %30 : vector<1x2x128xf32> to vector<2x128xf32>
    %32 = vector.shape_cast %29 : vector<2x128xf32> to vector<1x2x128xf32>
    tpu.vector_store %arg18[%c0_29, %c0_30, %c0_31], %32 {strides = array<i32>} : memref<6x2x128xf32, #tpu.memory_space<vmem>>, vector<1x2x128xf32>,
    %c0_32 = arith.constant 0 : index
    %c0_33 = arith.constant 0 : index
    %c0_34 = arith.constant 0 : index
    %33 = vector.load %arg3[%c0_32, %c0_33, %c0_34] : memref<2x2x32xf32, #tpu.memory_space<vmem>>, vector<1x2x32xf32>
    %34 = vector.shape_cast %33 : vector<1x2x32xf32> to vector<2x32xf32>
    %c1 = arith.constant 1 : index
    %c0_35 = arith.constant 0 : index
    %c0_36 = arith.constant 0 : index
    %35 = vector.load %arg3[%c1, %c0_35, %c0_36] : memref<2x2x32xf32, #tpu.memory_space<vmem>>, vector<1x2x32xf32>
    %36 = vector.shape_cast %35 : vector<1x2x32xf32> to vector<2x32xf32>
    %c0_37 = arith.constant 0 : index
    %c0_38 = arith.constant 0 : index
    %c0_39 = arith.constant 0 : index
    %37 = vector.load %arg1[%c0_37, %c0_38, %c0_39] : memref<6x2x16xf32, #tpu.memory_space<vmem>>, vector<1x2x16xf32>
    %38 = vector.shape_cast %37 : vector<1x2x16xf32> to vector<2x16xf32>
    %cst_40 = arith.constant dense<0.000000e+00> : vector<2x96xf32>
    %39 = tpu.matmul %38, %0, %cst_40 {dimension_numbers = #tpu.dot_dimension_numbers<[1], [0], [0], [1], [0, 0, 1, 1], [], []>} : vector<2x16xf32>, vector<16x96xf32>, vector<2x96xf32> -> vector<2x96xf32>
    %40 = arith.addf %39, %4 : vector<2x96xf32>
    %cst_41 = arith.constant dense<0.000000e+00> : vector<2x96xf32>
    %41 = tpu.matmul %34, %1, %cst_41 {dimension_numbers = #tpu.dot_dimension_numbers<[1], [0], [0], [1], [0, 0, 1, 1], [], []>} : vector<2x32xf32>, vector<32x96xf32>, vector<2x96xf32> -> vector<2x96xf32>
    %42 = arith.addf %41, %7 : vector<2x96xf32>
    %43 = vector.extract_strided_slice %40 {offsets = [0, 0], sizes = [2, 32], strides = [1, 1]} : vector<2x96xf32> to vector<2x32xf32>
    %44 = vector.extract_strided_slice %42 {offsets = [0, 0], sizes = [2, 32], strides = [1, 1]} : vector<2x96xf32> to vector<2x32xf32>
    %45 = arith.addf %43, %44 : vector<2x32xf32>
    %46 = arith.negf %45 : vector<2x32xf32>
    %47 = math.exp %46 : vector<2x32xf32>
    %cst_42 = arith.constant 1.000000e+00 : f32
    %48 = vector.broadcast %cst_42 : f32 to vector<2x32xf32>
    %49 = arith.addf %48, %47 : vector<2x32xf32>
    %50 = arith.divf %48, %49 : vector<2x32xf32>
    %51 = vector.extract_strided_slice %40 {offsets = [0, 32], sizes = [2, 32], strides = [1, 1]} : vector<2x96xf32> to vector<2x32xf32>
    %52 = vector.extract_strided_slice %42 {offsets = [0, 32], sizes = [2, 32], strides = [1, 1]} : vector<2x96xf32> to vector<2x32xf32>
    %53 = arith.addf %51, %52 : vector<2x32xf32>
    %54 = arith.negf %53 : vector<2x32xf32>
    %55 = math.exp %54 : vector<2x32xf32>
    %cst_43 = arith.constant 1.000000e+00 : f32
    %56 = vector.broadcast %cst_43 : f32 to vector<2x32xf32>
    %57 = arith.addf %56, %55 : vector<2x32xf32>
    %58 = arith.divf %56, %57 : vector<2x32xf32>
    %59 = vector.extract_strided_slice %40 {offsets = [0, 64], sizes = [2, 32], strides = [1, 1]} : vector<2x96xf32> to vector<2x32xf32>
    %60 = vector.extract_strided_slice %42 {offsets = [0, 64], sizes = [2, 32], strides = [1, 1]} : vector<2x96xf32> to vector<2x32xf32>
    %61 = arith.mulf %50, %60 : vector<2x32xf32>
    %62 = arith.addf %59, %61 : vector<2x32xf32>
    %63 = math.tanh %62 : vector<2x32xf32>
    %cst_44 = arith.constant 1.000000e+00 : f32
    %64 = vector.broadcast %cst_44 : f32 to vector<2x32xf32>
    %65 = arith.subf %64, %58 : vector<2x32xf32>
    %66 = arith.mulf %65, %63 : vector<2x32xf32>
    %67 = arith.mulf %58, %34 : vector<2x32xf32>
    %68 = arith.addf %66, %67 : vector<2x32xf32>
    %cst_45 = arith.constant dense<0.000000e+00> : vector<2x96xf32>
    %69 = tpu.matmul %68, %8, %cst_45 {dimension_numbers = #tpu.dot_dimension_numbers<[1], [0], [0], [1], [0, 0, 1, 1], [], []>} : vector<2x32xf32>, vector<32x96xf32>, vector<2x96xf32> -> vector<2x96xf32>
    %70 = arith.addf %69, %12 : vector<2x96xf32>
    %cst_46 = arith.constant dense<0.000000e+00> : vector<2x96xf32>
    %71 = tpu.matmul %36, %9, %cst_46 {dimension_numbers = #tpu.dot_dimension_numbers<[1], [0], [0], [1], [0, 0, 1, 1], [], []>} : vector<2x32xf32>, vector<32x96xf32>, vector<2x96xf32> -> vector<2x96xf32>
    %72 = arith.addf %71, %15 : vector<2x96xf32>
    %73 = vector.extract_strided_slice %70 {offsets = [0, 0], sizes = [2, 32], strides = [1, 1]} : vector<2x96xf32> to vector<2x32xf32>
    %74 = vector.extract_strided_slice %72 {offsets = [0, 0], sizes = [2, 32], strides = [1, 1]} : vector<2x96xf32> to vector<2x32xf32>
    %75 = arith.addf %73, %74 : vector<2x32xf32>
    %76 = arith.negf %75 : vector<2x32xf32>
    %77 = math.exp %76 : vector<2x32xf32>
    %cst_47 = arith.constant 1.000000e+00 : f32
    %78 = vector.broadcast %cst_47 : f32 to vector<2x32xf32>
    %79 = arith.addf %78, %77 : vector<2x32xf32>
    %80 = arith.divf %78, %79 : vector<2x32xf32>
    %81 = vector.extract_strided_slice %70 {offsets = [0, 32], sizes = [2, 32], strides = [1, 1]} : vector<2x96xf32> to vector<2x32xf32>
    %82 = vector.extract_strided_slice %72 {offsets = [0, 32], sizes = [2, 32], strides = [1, 1]} : vector<2x96xf32> to vector<2x32xf32>
    %83 = arith.addf %81, %82 : vector<2x32xf32>
    %84 = arith.negf %83 : vector<2x32xf32>
    %85 = math.exp %84 : vector<2x32xf32>
    %cst_48 = arith.constant 1.000000e+00 : f32
    %86 = vector.broadcast %cst_48 : f32 to vector<2x32xf32>
    %87 = arith.addf %86, %85 : vector<2x32xf32>
    %88 = arith.divf %86, %87 : vector<2x32xf32>
    %89 = vector.extract_strided_slice %70 {offsets = [0, 64], sizes = [2, 32], strides = [1, 1]} : vector<2x96xf32> to vector<2x32xf32>
    %90 = vector.extract_strided_slice %72 {offsets = [0, 64], sizes = [2, 32], strides = [1, 1]} : vector<2x96xf32> to vector<2x32xf32>
    %91 = arith.mulf %80, %90 : vector<2x32xf32>
    %92 = arith.addf %89, %91 : vector<2x32xf32>
    %93 = math.tanh %92 : vector<2x32xf32>
    %cst_49 = arith.constant 1.000000e+00 : f32
    %94 = vector.broadcast %cst_49 : f32 to vector<2x32xf32>
    %95 = arith.subf %94, %88 : vector<2x32xf32>
    %96 = arith.mulf %95, %93 : vector<2x32xf32>
    %97 = arith.mulf %88, %36 : vector<2x32xf32>
    %98 = arith.addf %96, %97 : vector<2x32xf32>
    %cst_50 = arith.constant dense<0.000000e+00> : vector<2x64xf32>
    %99 = tpu.matmul %98, %16, %cst_50 {dimension_numbers = #tpu.dot_dimension_numbers<[1], [0], [0], [1], [0, 0, 1, 1], [], []>} : vector<2x32xf32>, vector<32x64xf32>, vector<2x64xf32> -> vector<2x64xf32>
    %100 = arith.addf %99, %19 : vector<2x64xf32>
    %cst_51 = arith.constant dense<0.000000e+00> : vector<2x128xf32>
    %101 = tpu.matmul %100, %20, %cst_51 {dimension_numbers = #tpu.dot_dimension_numbers<[1], [0], [0], [1], [0, 0, 1, 1], [], []>} : vector<2x64xf32>, vector<64x128xf32>, vector<2x128xf32> -> vector<2x128xf32>
    %102 = arith.addf %101, %23 : vector<2x128xf32>
    %cst_52 = arith.constant dense<0.000000e+00> : vector<2x128xf32>
    %103 = tpu.matmul %102, %24, %cst_52 {dimension_numbers = #tpu.dot_dimension_numbers<[1], [0], [0], [1], [0, 0, 1, 1], [], []>} : vector<2x128xf32>, vector<128x128xf32>, vector<2x128xf32> -> vector<2x128xf32>
    %104 = arith.addf %103, %27 : vector<2x128xf32>
    %c1_53 = arith.constant 1 : index
    %c0_54 = arith.constant 0 : index
    %c0_55 = arith.constant 0 : index
    %105 = vector.load %arg18[%c1_53, %c0_54, %c0_55] : memref<6x2x128xf32, #tpu.memory_space<vmem>>, vector<1x2x128xf32>
    %106 = vector.shape_cast %105 : vector<1x2x128xf32> to vector<2x128xf32>
    %107 = vector.shape_cast %104 : vector<2x128xf32> to vector<1x2x128xf32>
    tpu.vector_store %arg18[%c1_53, %c0_54, %c0_55], %107 {strides = array<i32>} : memref<6x2x128xf32, #tpu.memory_space<vmem>>, vector<1x2x128xf32>,
    %cst_56 = arith.constant dense<0xFF800000> : vector<2xf32>
    %108 = vector.multi_reduction <maximumf>, %104, %cst_56 [1] : vector<2x128xf32> to vector<2xf32>
    %109 = vector.shape_cast %108 : vector<2xf32> to vector<2x1xf32>
    %110 = tpu.iota {dimensions = array<i32: 1>} : vector<2x128xi32>
    %111 = vector.broadcast %109 : vector<2x1xf32> to vector<2x128xf32>
    %112 = arith.cmpf oeq, %104, %111 : vector<2x128xf32>
    %c128_i32 = arith.constant 128 : i32
    %113 = vector.broadcast %c128_i32 : i32 to vector<2x128xi32>
    %114 = arith.select %112, %110, %113 : vector<2x128xi1>, vector<2x128xi32>
    %cst_57 = arith.constant dense<2147483647> : vector<2xi32>
    %115 = vector.multi_reduction <minsi>, %114, %cst_57 [1] : vector<2x128xi32> to vector<2xi32>
    %116 = vector.shape_cast %115 : vector<2xi32> to vector<2x1xi32>
    %c0_58 = arith.constant 0 : index
    %117 = memref.load %arg0[%c0_58] : memref<5xi32, #tpu.memory_space<smem>>
    %c0_i32 = arith.constant 0 : i32
    %118 = arith.cmpi sgt, %117, %c0_i32 : i32
    %119 = arith.extui %118 : i1 to i32
    %120 = arith.sitofp %119 : i32 to f32
    %121 = tpu.iota {dimensions = array<i32: 1>} : vector<2x50xi32>
    %122 = vector.broadcast %116 : vector<2x1xi32> to vector<2x50xi32>
    %123 = arith.cmpi eq, %121, %122 : vector<2x50xi32>
    %124 = arith.extui %123 : vector<2x50xi1> to vector<2x50xi32>
    %125 = arith.sitofp %124 : vector<2x50xi32> to vector<2x50xf32>
    %cst_59 = arith.constant dense<0.000000e+00> : vector<2x16xf32>
    %126 = tpu.matmul %125, %28, %cst_59 {dimension_numbers = #tpu.dot_dimension_numbers<[1], [0], [0], [1], [0, 0, 1, 1], [], []>} : vector<2x50xf32>, vector<50x16xf32>, vector<2x16xf32> -> vector<2x16xf32>
    %c1_60 = arith.constant 1 : index
    %c0_61 = arith.constant 0 : index
    %c0_62 = arith.constant 0 : index
    %127 = vector.load %arg1[%c1_60, %c0_61, %c0_62] : memref<6x2x16xf32, #tpu.memory_space<vmem>>, vector<1x2x16xf32>
    %128 = vector.shape_cast %127 : vector<1x2x16xf32> to vector<2x16xf32>
    %129 = vector.broadcast %120 : f32 to vector<2x16xf32>
    %130 = arith.mulf %129, %128 : vector<2x16xf32>
    %cst_63 = arith.constant 1.000000e+00 : f32
    %131 = arith.subf %cst_63, %120 : f32
    %132 = vector.broadcast %131 : f32 to vector<2x16xf32>
    %133 = arith.mulf %132, %126 : vector<2x16xf32>
    %134 = arith.addf %130, %133 : vector<2x16xf32>
    %cst_64 = arith.constant dense<0.000000e+00> : vector<2x96xf32>
    %135 = tpu.matmul %134, %0, %cst_64 {dimension_numbers = #tpu.dot_dimension_numbers<[1], [0], [0], [1], [0, 0, 1, 1], [], []>} : vector<2x16xf32>, vector<16x96xf32>, vector<2x96xf32> -> vector<2x96xf32>
    %136 = arith.addf %135, %4 : vector<2x96xf32>
    %cst_65 = arith.constant dense<0.000000e+00> : vector<2x96xf32>
    %137 = tpu.matmul %68, %1, %cst_65 {dimension_numbers = #tpu.dot_dimension_numbers<[1], [0], [0], [1], [0, 0, 1, 1], [], []>} : vector<2x32xf32>, vector<32x96xf32>, vector<2x96xf32> -> vector<2x96xf32>
    %138 = arith.addf %137, %7 : vector<2x96xf32>
    %139 = vector.extract_strided_slice %136 {offsets = [0, 0], sizes = [2, 32], strides = [1, 1]} : vector<2x96xf32> to vector<2x32xf32>
    %140 = vector.extract_strided_slice %138 {offsets = [0, 0], sizes = [2, 32], strides = [1, 1]} : vector<2x96xf32> to vector<2x32xf32>
    %141 = arith.addf %139, %140 : vector<2x32xf32>
    %142 = arith.negf %141 : vector<2x32xf32>
    %143 = math.exp %142 : vector<2x32xf32>
    %cst_66 = arith.constant 1.000000e+00 : f32
    %144 = vector.broadcast %cst_66 : f32 to vector<2x32xf32>
    %145 = arith.addf %144, %143 : vector<2x32xf32>
    %146 = arith.divf %144, %145 : vector<2x32xf32>
    %147 = vector.extract_strided_slice %136 {offsets = [0, 32], sizes = [2, 32], strides = [1, 1]} : vector<2x96xf32> to vector<2x32xf32>
    %148 = vector.extract_strided_slice %138 {offsets = [0, 32], sizes = [2, 32], strides = [1, 1]} : vector<2x96xf32> to vector<2x32xf32>
    %149 = arith.addf %147, %148 : vector<2x32xf32>
    %150 = arith.negf %149 : vector<2x32xf32>
    %151 = math.exp %150 : vector<2x32xf32>
    %cst_67 = arith.constant 1.000000e+00 : f32
    %152 = vector.broadcast %cst_67 : f32 to vector<2x32xf32>
    %153 = arith.addf %152, %151 : vector<2x32xf32>
    %154 = arith.divf %152, %153 : vector<2x32xf32>
    %155 = vector.extract_strided_slice %136 {offsets = [0, 64], sizes = [2, 32], strides = [1, 1]} : vector<2x96xf32> to vector<2x32xf32>
    %156 = vector.extract_strided_slice %138 {offsets = [0, 64], sizes = [2, 32], strides = [1, 1]} : vector<2x96xf32> to vector<2x32xf32>
    %157 = arith.mulf %146, %156 : vector<2x32xf32>
    %158 = arith.addf %155, %157 : vector<2x32xf32>
    %159 = math.tanh %158 : vector<2x32xf32>
    %cst_68 = arith.constant 1.000000e+00 : f32
    %160 = vector.broadcast %cst_68 : f32 to vector<2x32xf32>
    %161 = arith.subf %160, %154 : vector<2x32xf32>
    %162 = arith.mulf %161, %159 : vector<2x32xf32>
    %163 = arith.mulf %154, %68 : vector<2x32xf32>
    %164 = arith.addf %162, %163 : vector<2x32xf32>
    %cst_69 = arith.constant dense<0.000000e+00> : vector<2x96xf32>
    %165 = tpu.matmul %164, %8, %cst_69 {dimension_numbers = #tpu.dot_dimension_numbers<[1], [0], [0], [1], [0, 0, 1, 1], [], []>} : vector<2x32xf32>, vector<32x96xf32>, vector<2x96xf32> -> vector<2x96xf32>
    %166 = arith.addf %165, %12 : vector<2x96xf32>
    %cst_70 = arith.constant dense<0.000000e+00> : vector<2x96xf32>
    %167 = tpu.matmul %98, %9, %cst_70 {dimension_numbers = #tpu.dot_dimension_numbers<[1], [0], [0], [1], [0, 0, 1, 1], [], []>} : vector<2x32xf32>, vector<32x96xf32>, vector<2x96xf32> -> vector<2x96xf32>
    %168 = arith.addf %167, %15 : vector<2x96xf32>
    %169 = vector.extract_strided_slice %166 {offsets = [0, 0], sizes = [2, 32], strides = [1, 1]} : vector<2x96xf32> to vector<2x32xf32>
    %170 = vector.extract_strided_slice %168 {offsets = [0, 0], sizes = [2, 32], strides = [1, 1]} : vector<2x96xf32> to vector<2x32xf32>
    %171 = arith.addf %169, %170 : vector<2x32xf32>
    %172 = arith.negf %171 : vector<2x32xf32>
    %173 = math.exp %172 : vector<2x32xf32>
    %cst_71 = arith.constant 1.000000e+00 : f32
    %174 = vector.broadcast %cst_71 : f32 to vector<2x32xf32>
    %175 = arith.addf %174, %173 : vector<2x32xf32>
    %176 = arith.divf %174, %175 : vector<2x32xf32>
    %177 = vector.extract_strided_slice %166 {offsets = [0, 32], sizes = [2, 32], strides = [1, 1]} : vector<2x96xf32> to vector<2x32xf32>
    %178 = vector.extract_strided_slice %168 {offsets = [0, 32], sizes = [2, 32], strides = [1, 1]} : vector<2x96xf32> to vector<2x32xf32>
    %179 = arith.addf %177, %178 : vector<2x32xf32>
    %180 = arith.negf %179 : vector<2x32xf32>
    %181 = math.exp %180 : vector<2x32xf32>
    %cst_72 = arith.constant 1.000000e+00 : f32
    %182 = vector.broadcast %cst_72 : f32 to vector<2x32xf32>
    %183 = arith.addf %182, %181 : vector<2x32xf32>
    %184 = arith.divf %182, %183 : vector<2x32xf32>
    %185 = vector.extract_strided_slice %166 {offsets = [0, 64], sizes = [2, 32], strides = [1, 1]} : vector<2x96xf32> to vector<2x32xf32>
    %186 = vector.extract_strided_slice %168 {offsets = [0, 64], sizes = [2, 32], strides = [1, 1]} : vector<2x96xf32> to vector<2x32xf32>
    %187 = arith.mulf %176, %186 : vector<2x32xf32>
    %188 = arith.addf %185, %187 : vector<2x32xf32>
    %189 = math.tanh %188 : vector<2x32xf32>
    %cst_73 = arith.constant 1.000000e+00 : f32
    %190 = vector.broadcast %cst_73 : f32 to vector<2x32xf32>
    %191 = arith.subf %190, %184 : vector<2x32xf32>
    %192 = arith.mulf %191, %189 : vector<2x32xf32>
    %193 = arith.mulf %184, %98 : vector<2x32xf32>
    %194 = arith.addf %192, %193 : vector<2x32xf32>
    %cst_74 = arith.constant dense<0.000000e+00> : vector<2x64xf32>
    %195 = tpu.matmul %194, %16, %cst_74 {dimension_numbers = #tpu.dot_dimension_numbers<[1], [0], [0], [1], [0, 0, 1, 1], [], []>} : vector<2x32xf32>, vector<32x64xf32>, vector<2x64xf32> -> vector<2x64xf32>
    %196 = arith.addf %195, %19 : vector<2x64xf32>
    %cst_75 = arith.constant dense<0.000000e+00> : vector<2x128xf32>
    %197 = tpu.matmul %196, %20, %cst_75 {dimension_numbers = #tpu.dot_dimension_numbers<[1], [0], [0], [1], [0, 0, 1, 1], [], []>} : vector<2x64xf32>, vector<64x128xf32>, vector<2x128xf32> -> vector<2x128xf32>
    %198 = arith.addf %197, %23 : vector<2x128xf32>
    %cst_76 = arith.constant dense<0.000000e+00> : vector<2x128xf32>
    %199 = tpu.matmul %198, %24, %cst_76 {dimension_numbers = #tpu.dot_dimension_numbers<[1], [0], [0], [1], [0, 0, 1, 1], [], []>} : vector<2x128xf32>, vector<128x128xf32>, vector<2x128xf32> -> vector<2x128xf32>
    %200 = arith.addf %199, %27 : vector<2x128xf32>
    %c2 = arith.constant 2 : index
    %c0_77 = arith.constant 0 : index
    %c0_78 = arith.constant 0 : index
    %201 = vector.load %arg18[%c2, %c0_77, %c0_78] : memref<6x2x128xf32, #tpu.memory_space<vmem>>, vector<1x2x128xf32>
    %202 = vector.shape_cast %201 : vector<1x2x128xf32> to vector<2x128xf32>
    %203 = vector.shape_cast %200 : vector<2x128xf32> to vector<1x2x128xf32>
    tpu.vector_store %arg18[%c2, %c0_77, %c0_78], %203 {strides = array<i32>} : memref<6x2x128xf32, #tpu.memory_space<vmem>>, vector<1x2x128xf32>,
    %cst_79 = arith.constant dense<0xFF800000> : vector<2xf32>
    %204 = vector.multi_reduction <maximumf>, %200, %cst_79 [1] : vector<2x128xf32> to vector<2xf32>
    %205 = vector.shape_cast %204 : vector<2xf32> to vector<2x1xf32>
    %206 = tpu.iota {dimensions = array<i32: 1>} : vector<2x128xi32>
    %207 = vector.broadcast %205 : vector<2x1xf32> to vector<2x128xf32>
    %208 = arith.cmpf oeq, %200, %207 : vector<2x128xf32>
    %c128_i32_80 = arith.constant 128 : i32
    %209 = vector.broadcast %c128_i32_80 : i32 to vector<2x128xi32>
    %210 = arith.select %208, %206, %209 : vector<2x128xi1>, vector<2x128xi32>
    %cst_81 = arith.constant dense<2147483647> : vector<2xi32>
    %211 = vector.multi_reduction <minsi>, %210, %cst_81 [1] : vector<2x128xi32> to vector<2xi32>
    %212 = vector.shape_cast %211 : vector<2xi32> to vector<2x1xi32>
    %c1_82 = arith.constant 1 : index
    %213 = memref.load %arg0[%c1_82] : memref<5xi32, #tpu.memory_space<smem>>
    %c0_i32_83 = arith.constant 0 : i32
    %214 = arith.cmpi sgt, %213, %c0_i32_83 : i32
    %215 = arith.extui %214 : i1 to i32
    %216 = arith.sitofp %215 : i32 to f32
    %217 = tpu.iota {dimensions = array<i32: 1>} : vector<2x50xi32>
    %218 = vector.broadcast %212 : vector<2x1xi32> to vector<2x50xi32>
    %219 = arith.cmpi eq, %217, %218 : vector<2x50xi32>
    %220 = arith.extui %219 : vector<2x50xi1> to vector<2x50xi32>
    %221 = arith.sitofp %220 : vector<2x50xi32> to vector<2x50xf32>
    %cst_84 = arith.constant dense<0.000000e+00> : vector<2x16xf32>
    %222 = tpu.matmul %221, %28, %cst_84 {dimension_numbers = #tpu.dot_dimension_numbers<[1], [0], [0], [1], [0, 0, 1, 1], [], []>} : vector<2x50xf32>, vector<50x16xf32>, vector<2x16xf32> -> vector<2x16xf32>
    %c2_85 = arith.constant 2 : index
    %c0_86 = arith.constant 0 : index
    %c0_87 = arith.constant 0 : index
    %223 = vector.load %arg1[%c2_85, %c0_86, %c0_87] : memref<6x2x16xf32, #tpu.memory_space<vmem>>, vector<1x2x16xf32>
    %224 = vector.shape_cast %223 : vector<1x2x16xf32> to vector<2x16xf32>
    %225 = vector.broadcast %216 : f32 to vector<2x16xf32>
    %226 = arith.mulf %225, %224 : vector<2x16xf32>
    %cst_88 = arith.constant 1.000000e+00 : f32
    %227 = arith.subf %cst_88, %216 : f32
    %228 = vector.broadcast %227 : f32 to vector<2x16xf32>
    %229 = arith.mulf %228, %222 : vector<2x16xf32>
    %230 = arith.addf %226, %229 : vector<2x16xf32>
    %cst_89 = arith.constant dense<0.000000e+00> : vector<2x96xf32>
    %231 = tpu.matmul %230, %0, %cst_89 {dimension_numbers = #tpu.dot_dimension_numbers<[1], [0], [0], [1], [0, 0, 1, 1], [], []>} : vector<2x16xf32>, vector<16x96xf32>, vector<2x96xf32> -> vector<2x96xf32>
    %232 = arith.addf %231, %4 : vector<2x96xf32>
    %cst_90 = arith.constant dense<0.000000e+00> : vector<2x96xf32>
    %233 = tpu.matmul %164, %1, %cst_90 {dimension_numbers = #tpu.dot_dimension_numbers<[1], [0], [0], [1], [0, 0, 1, 1], [], []>} : vector<2x32xf32>, vector<32x96xf32>, vector<2x96xf32> -> vector<2x96xf32>
    %234 = arith.addf %233, %7 : vector<2x96xf32>
    %235 = vector.extract_strided_slice %232 {offsets = [0, 0], sizes = [2, 32], strides = [1, 1]} : vector<2x96xf32> to vector<2x32xf32>
    %236 = vector.extract_strided_slice %234 {offsets = [0, 0], sizes = [2, 32], strides = [1, 1]} : vector<2x96xf32> to vector<2x32xf32>
    %237 = arith.addf %235, %236 : vector<2x32xf32>
    %238 = arith.negf %237 : vector<2x32xf32>
    %239 = math.exp %238 : vector<2x32xf32>
    %cst_91 = arith.constant 1.000000e+00 : f32
    %240 = vector.broadcast %cst_91 : f32 to vector<2x32xf32>
    %241 = arith.addf %240, %239 : vector<2x32xf32>
    %242 = arith.divf %240, %241 : vector<2x32xf32>
    %243 = vector.extract_strided_slice %232 {offsets = [0, 32], sizes = [2, 32], strides = [1, 1]} : vector<2x96xf32> to vector<2x32xf32>
    %244 = vector.extract_strided_slice %234 {offsets = [0, 32], sizes = [2, 32], strides = [1, 1]} : vector<2x96xf32> to vector<2x32xf32>
    %245 = arith.addf %243, %244 : vector<2x32xf32>
    %246 = arith.negf %245 : vector<2x32xf32>
    %247 = math.exp %246 : vector<2x32xf32>
    %cst_92 = arith.constant 1.000000e+00 : f32
    %248 = vector.broadcast %cst_92 : f32 to vector<2x32xf32>
    %249 = arith.addf %248, %247 : vector<2x32xf32>
    %250 = arith.divf %248, %249 : vector<2x32xf32>
    %251 = vector.extract_strided_slice %232 {offsets = [0, 64], sizes = [2, 32], strides = [1, 1]} : vector<2x96xf32> to vector<2x32xf32>
    %252 = vector.extract_strided_slice %234 {offsets = [0, 64], sizes = [2, 32], strides = [1, 1]} : vector<2x96xf32> to vector<2x32xf32>
    %253 = arith.mulf %242, %252 : vector<2x32xf32>
    %254 = arith.addf %251, %253 : vector<2x32xf32>
    %255 = math.tanh %254 : vector<2x32xf32>
    %cst_93 = arith.constant 1.000000e+00 : f32
    %256 = vector.broadcast %cst_93 : f32 to vector<2x32xf32>
    %257 = arith.subf %256, %250 : vector<2x32xf32>
    %258 = arith.mulf %257, %255 : vector<2x32xf32>
    %259 = arith.mulf %250, %164 : vector<2x32xf32>
    %260 = arith.addf %258, %259 : vector<2x32xf32>
    %cst_94 = arith.constant dense<0.000000e+00> : vector<2x96xf32>
    %261 = tpu.matmul %260, %8, %cst_94 {dimension_numbers = #tpu.dot_dimension_numbers<[1], [0], [0], [1], [0, 0, 1, 1], [], []>} : vector<2x32xf32>, vector<32x96xf32>, vector<2x96xf32> -> vector<2x96xf32>
    %262 = arith.addf %261, %12 : vector<2x96xf32>
    %cst_95 = arith.constant dense<0.000000e+00> : vector<2x96xf32>
    %263 = tpu.matmul %194, %9, %cst_95 {dimension_numbers = #tpu.dot_dimension_numbers<[1], [0], [0], [1], [0, 0, 1, 1], [], []>} : vector<2x32xf32>, vector<32x96xf32>, vector<2x96xf32> -> vector<2x96xf32>
    %264 = arith.addf %263, %15 : vector<2x96xf32>
    %265 = vector.extract_strided_slice %262 {offsets = [0, 0], sizes = [2, 32], strides = [1, 1]} : vector<2x96xf32> to vector<2x32xf32>
    %266 = vector.extract_strided_slice %264 {offsets = [0, 0], sizes = [2, 32], strides = [1, 1]} : vector<2x96xf32> to vector<2x32xf32>
    %267 = arith.addf %265, %266 : vector<2x32xf32>
    %268 = arith.negf %267 : vector<2x32xf32>
    %269 = math.exp %268 : vector<2x32xf32>
    %cst_96 = arith.constant 1.000000e+00 : f32
    %270 = vector.broadcast %cst_96 : f32 to vector<2x32xf32>
    %271 = arith.addf %270, %269 : vector<2x32xf32>
    %272 = arith.divf %270, %271 : vector<2x32xf32>
    %273 = vector.extract_strided_slice %262 {offsets = [0, 32], sizes = [2, 32], strides = [1, 1]} : vector<2x96xf32> to vector<2x32xf32>
    %274 = vector.extract_strided_slice %264 {offsets = [0, 32], sizes = [2, 32], strides = [1, 1]} : vector<2x96xf32> to vector<2x32xf32>
    %275 = arith.addf %273, %274 : vector<2x32xf32>
    %276 = arith.negf %275 : vector<2x32xf32>
    %277 = math.exp %276 : vector<2x32xf32>
    %cst_97 = arith.constant 1.000000e+00 : f32
    %278 = vector.broadcast %cst_97 : f32 to vector<2x32xf32>
    %279 = arith.addf %278, %277 : vector<2x32xf32>
    %280 = arith.divf %278, %279 : vector<2x32xf32>
    %281 = vector.extract_strided_slice %262 {offsets = [0, 64], sizes = [2, 32], strides = [1, 1]} : vector<2x96xf32> to vector<2x32xf32>
    %282 = vector.extract_strided_slice %264 {offsets = [0, 64], sizes = [2, 32], strides = [1, 1]} : vector<2x96xf32> to vector<2x32xf32>
    %283 = arith.mulf %272, %282 : vector<2x32xf32>
    %284 = arith.addf %281, %283 : vector<2x32xf32>
    %285 = math.tanh %284 : vector<2x32xf32>
    %cst_98 = arith.constant 1.000000e+00 : f32
    %286 = vector.broadcast %cst_98 : f32 to vector<2x32xf32>
    %287 = arith.subf %286, %280 : vector<2x32xf32>
    %288 = arith.mulf %287, %285 : vector<2x32xf32>
    %289 = arith.mulf %280, %194 : vector<2x32xf32>
    %290 = arith.addf %288, %289 : vector<2x32xf32>
    %cst_99 = arith.constant dense<0.000000e+00> : vector<2x64xf32>
    %291 = tpu.matmul %290, %16, %cst_99 {dimension_numbers = #tpu.dot_dimension_numbers<[1], [0], [0], [1], [0, 0, 1, 1], [], []>} : vector<2x32xf32>, vector<32x64xf32>, vector<2x64xf32> -> vector<2x64xf32>
    %292 = arith.addf %291, %19 : vector<2x64xf32>
    %cst_100 = arith.constant dense<0.000000e+00> : vector<2x128xf32>
    %293 = tpu.matmul %292, %20, %cst_100 {dimension_numbers = #tpu.dot_dimension_numbers<[1], [0], [0], [1], [0, 0, 1, 1], [], []>} : vector<2x64xf32>, vector<64x128xf32>, vector<2x128xf32> -> vector<2x128xf32>
    %294 = arith.addf %293, %23 : vector<2x128xf32>
    %cst_101 = arith.constant dense<0.000000e+00> : vector<2x128xf32>
    %295 = tpu.matmul %294, %24, %cst_101 {dimension_numbers = #tpu.dot_dimension_numbers<[1], [0], [0], [1], [0, 0, 1, 1], [], []>} : vector<2x128xf32>, vector<128x128xf32>, vector<2x128xf32> -> vector<2x128xf32>
    %296 = arith.addf %295, %27 : vector<2x128xf32>
    %c3 = arith.constant 3 : index
    %c0_102 = arith.constant 0 : index
    %c0_103 = arith.constant 0 : index
    %297 = vector.load %arg18[%c3, %c0_102, %c0_103] : memref<6x2x128xf32, #tpu.memory_space<vmem>>, vector<1x2x128xf32>
    %298 = vector.shape_cast %297 : vector<1x2x128xf32> to vector<2x128xf32>
    %299 = vector.shape_cast %296 : vector<2x128xf32> to vector<1x2x128xf32>
    tpu.vector_store %arg18[%c3, %c0_102, %c0_103], %299 {strides = array<i32>} : memref<6x2x128xf32, #tpu.memory_space<vmem>>, vector<1x2x128xf32>,
    %cst_104 = arith.constant dense<0xFF800000> : vector<2xf32>
    %300 = vector.multi_reduction <maximumf>, %296, %cst_104 [1] : vector<2x128xf32> to vector<2xf32>
    %301 = vector.shape_cast %300 : vector<2xf32> to vector<2x1xf32>
    %302 = tpu.iota {dimensions = array<i32: 1>} : vector<2x128xi32>
    %303 = vector.broadcast %301 : vector<2x1xf32> to vector<2x128xf32>
    %304 = arith.cmpf oeq, %296, %303 : vector<2x128xf32>
    %c128_i32_105 = arith.constant 128 : i32
    %305 = vector.broadcast %c128_i32_105 : i32 to vector<2x128xi32>
    %306 = arith.select %304, %302, %305 : vector<2x128xi1>, vector<2x128xi32>
    %cst_106 = arith.constant dense<2147483647> : vector<2xi32>
    %307 = vector.multi_reduction <minsi>, %306, %cst_106 [1] : vector<2x128xi32> to vector<2xi32>
    %308 = vector.shape_cast %307 : vector<2xi32> to vector<2x1xi32>
    %c2_107 = arith.constant 2 : index
    %309 = memref.load %arg0[%c2_107] : memref<5xi32, #tpu.memory_space<smem>>
    %c0_i32_108 = arith.constant 0 : i32
    %310 = arith.cmpi sgt, %309, %c0_i32_108 : i32
    %311 = arith.extui %310 : i1 to i32
    %312 = arith.sitofp %311 : i32 to f32
    %313 = tpu.iota {dimensions = array<i32: 1>} : vector<2x50xi32>
    %314 = vector.broadcast %308 : vector<2x1xi32> to vector<2x50xi32>
    %315 = arith.cmpi eq, %313, %314 : vector<2x50xi32>
    %316 = arith.extui %315 : vector<2x50xi1> to vector<2x50xi32>
    %317 = arith.sitofp %316 : vector<2x50xi32> to vector<2x50xf32>
    %cst_109 = arith.constant dense<0.000000e+00> : vector<2x16xf32>
    %318 = tpu.matmul %317, %28, %cst_109 {dimension_numbers = #tpu.dot_dimension_numbers<[1], [0], [0], [1], [0, 0, 1, 1], [], []>} : vector<2x50xf32>, vector<50x16xf32>, vector<2x16xf32> -> vector<2x16xf32>
    %c3_110 = arith.constant 3 : index
    %c0_111 = arith.constant 0 : index
    %c0_112 = arith.constant 0 : index
    %319 = vector.load %arg1[%c3_110, %c0_111, %c0_112] : memref<6x2x16xf32, #tpu.memory_space<vmem>>, vector<1x2x16xf32>
    %320 = vector.shape_cast %319 : vector<1x2x16xf32> to vector<2x16xf32>
    %321 = vector.broadcast %312 : f32 to vector<2x16xf32>
    %322 = arith.mulf %321, %320 : vector<2x16xf32>
    %cst_113 = arith.constant 1.000000e+00 : f32
    %323 = arith.subf %cst_113, %312 : f32
    %324 = vector.broadcast %323 : f32 to vector<2x16xf32>
    %325 = arith.mulf %324, %318 : vector<2x16xf32>
    %326 = arith.addf %322, %325 : vector<2x16xf32>
    %cst_114 = arith.constant dense<0.000000e+00> : vector<2x96xf32>
    %327 = tpu.matmul %326, %0, %cst_114 {dimension_numbers = #tpu.dot_dimension_numbers<[1], [0], [0], [1], [0, 0, 1, 1], [], []>} : vector<2x16xf32>, vector<16x96xf32>, vector<2x96xf32> -> vector<2x96xf32>
    %328 = arith.addf %327, %4 : vector<2x96xf32>
    %cst_115 = arith.constant dense<0.000000e+00> : vector<2x96xf32>
    %329 = tpu.matmul %260, %1, %cst_115 {dimension_numbers = #tpu.dot_dimension_numbers<[1], [0], [0], [1], [0, 0, 1, 1], [], []>} : vector<2x32xf32>, vector<32x96xf32>, vector<2x96xf32> -> vector<2x96xf32>
    %330 = arith.addf %329, %7 : vector<2x96xf32>
    %331 = vector.extract_strided_slice %328 {offsets = [0, 0], sizes = [2, 32], strides = [1, 1]} : vector<2x96xf32> to vector<2x32xf32>
    %332 = vector.extract_strided_slice %330 {offsets = [0, 0], sizes = [2, 32], strides = [1, 1]} : vector<2x96xf32> to vector<2x32xf32>
    %333 = arith.addf %331, %332 : vector<2x32xf32>
    %334 = arith.negf %333 : vector<2x32xf32>
    %335 = math.exp %334 : vector<2x32xf32>
    %cst_116 = arith.constant 1.000000e+00 : f32
    %336 = vector.broadcast %cst_116 : f32 to vector<2x32xf32>
    %337 = arith.addf %336, %335 : vector<2x32xf32>
    %338 = arith.divf %336, %337 : vector<2x32xf32>
    %339 = vector.extract_strided_slice %328 {offsets = [0, 32], sizes = [2, 32], strides = [1, 1]} : vector<2x96xf32> to vector<2x32xf32>
    %340 = vector.extract_strided_slice %330 {offsets = [0, 32], sizes = [2, 32], strides = [1, 1]} : vector<2x96xf32> to vector<2x32xf32>
    %341 = arith.addf %339, %340 : vector<2x32xf32>
    %342 = arith.negf %341 : vector<2x32xf32>
    %343 = math.exp %342 : vector<2x32xf32>
    %cst_117 = arith.constant 1.000000e+00 : f32
    %344 = vector.broadcast %cst_117 : f32 to vector<2x32xf32>
    %345 = arith.addf %344, %343 : vector<2x32xf32>
    %346 = arith.divf %344, %345 : vector<2x32xf32>
    %347 = vector.extract_strided_slice %328 {offsets = [0, 64], sizes = [2, 32], strides = [1, 1]} : vector<2x96xf32> to vector<2x32xf32>
    %348 = vector.extract_strided_slice %330 {offsets = [0, 64], sizes = [2, 32], strides = [1, 1]} : vector<2x96xf32> to vector<2x32xf32>
    %349 = arith.mulf %338, %348 : vector<2x32xf32>
    %350 = arith.addf %347, %349 : vector<2x32xf32>
    %351 = math.tanh %350 : vector<2x32xf32>
    %cst_118 = arith.constant 1.000000e+00 : f32
    %352 = vector.broadcast %cst_118 : f32 to vector<2x32xf32>
    %353 = arith.subf %352, %346 : vector<2x32xf32>
    %354 = arith.mulf %353, %351 : vector<2x32xf32>
    %355 = arith.mulf %346, %260 : vector<2x32xf32>
    %356 = arith.addf %354, %355 : vector<2x32xf32>
    %cst_119 = arith.constant dense<0.000000e+00> : vector<2x96xf32>
    %357 = tpu.matmul %356, %8, %cst_119 {dimension_numbers = #tpu.dot_dimension_numbers<[1], [0], [0], [1], [0, 0, 1, 1], [], []>} : vector<2x32xf32>, vector<32x96xf32>, vector<2x96xf32> -> vector<2x96xf32>
    %358 = arith.addf %357, %12 : vector<2x96xf32>
    %cst_120 = arith.constant dense<0.000000e+00> : vector<2x96xf32>
    %359 = tpu.matmul %290, %9, %cst_120 {dimension_numbers = #tpu.dot_dimension_numbers<[1], [0], [0], [1], [0, 0, 1, 1], [], []>} : vector<2x32xf32>, vector<32x96xf32>, vector<2x96xf32> -> vector<2x96xf32>
    %360 = arith.addf %359, %15 : vector<2x96xf32>
    %361 = vector.extract_strided_slice %358 {offsets = [0, 0], sizes = [2, 32], strides = [1, 1]} : vector<2x96xf32> to vector<2x32xf32>
    %362 = vector.extract_strided_slice %360 {offsets = [0, 0], sizes = [2, 32], strides = [1, 1]} : vector<2x96xf32> to vector<2x32xf32>
    %363 = arith.addf %361, %362 : vector<2x32xf32>
    %364 = arith.negf %363 : vector<2x32xf32>
    %365 = math.exp %364 : vector<2x32xf32>
    %cst_121 = arith.constant 1.000000e+00 : f32
    %366 = vector.broadcast %cst_121 : f32 to vector<2x32xf32>
    %367 = arith.addf %366, %365 : vector<2x32xf32>
    %368 = arith.divf %366, %367 : vector<2x32xf32>
    %369 = vector.extract_strided_slice %358 {offsets = [0, 32], sizes = [2, 32], strides = [1, 1]} : vector<2x96xf32> to vector<2x32xf32>
    %370 = vector.extract_strided_slice %360 {offsets = [0, 32], sizes = [2, 32], strides = [1, 1]} : vector<2x96xf32> to vector<2x32xf32>
    %371 = arith.addf %369, %370 : vector<2x32xf32>
    %372 = arith.negf %371 : vector<2x32xf32>
    %373 = math.exp %372 : vector<2x32xf32>
    %cst_122 = arith.constant 1.000000e+00 : f32
    %374 = vector.broadcast %cst_122 : f32 to vector<2x32xf32>
    %375 = arith.addf %374, %373 : vector<2x32xf32>
    %376 = arith.divf %374, %375 : vector<2x32xf32>
    %377 = vector.extract_strided_slice %358 {offsets = [0, 64], sizes = [2, 32], strides = [1, 1]} : vector<2x96xf32> to vector<2x32xf32>
    %378 = vector.extract_strided_slice %360 {offsets = [0, 64], sizes = [2, 32], strides = [1, 1]} : vector<2x96xf32> to vector<2x32xf32>
    %379 = arith.mulf %368, %378 : vector<2x32xf32>
    %380 = arith.addf %377, %379 : vector<2x32xf32>
    %381 = math.tanh %380 : vector<2x32xf32>
    %cst_123 = arith.constant 1.000000e+00 : f32
    %382 = vector.broadcast %cst_123 : f32 to vector<2x32xf32>
    %383 = arith.subf %382, %376 : vector<2x32xf32>
    %384 = arith.mulf %383, %381 : vector<2x32xf32>
    %385 = arith.mulf %376, %290 : vector<2x32xf32>
    %386 = arith.addf %384, %385 : vector<2x32xf32>
    %cst_124 = arith.constant dense<0.000000e+00> : vector<2x64xf32>
    %387 = tpu.matmul %386, %16, %cst_124 {dimension_numbers = #tpu.dot_dimension_numbers<[1], [0], [0], [1], [0, 0, 1, 1], [], []>} : vector<2x32xf32>, vector<32x64xf32>, vector<2x64xf32> -> vector<2x64xf32>
    %388 = arith.addf %387, %19 : vector<2x64xf32>
    %cst_125 = arith.constant dense<0.000000e+00> : vector<2x128xf32>
    %389 = tpu.matmul %388, %20, %cst_125 {dimension_numbers = #tpu.dot_dimension_numbers<[1], [0], [0], [1], [0, 0, 1, 1], [], []>} : vector<2x64xf32>, vector<64x128xf32>, vector<2x128xf32> -> vector<2x128xf32>
    %390 = arith.addf %389, %23 : vector<2x128xf32>
    %cst_126 = arith.constant dense<0.000000e+00> : vector<2x128xf32>
    %391 = tpu.matmul %390, %24, %cst_126 {dimension_numbers = #tpu.dot_dimension_numbers<[1], [0], [0], [1], [0, 0, 1, 1], [], []>} : vector<2x128xf32>, vector<128x128xf32>, vector<2x128xf32> -> vector<2x128xf32>
    %392 = arith.addf %391, %27 : vector<2x128xf32>
    %c4 = arith.constant 4 : index
    %c0_127 = arith.constant 0 : index
    %c0_128 = arith.constant 0 : index
    %393 = vector.load %arg18[%c4, %c0_127, %c0_128] : memref<6x2x128xf32, #tpu.memory_space<vmem>>, vector<1x2x128xf32>
    %394 = vector.shape_cast %393 : vector<1x2x128xf32> to vector<2x128xf32>
    %395 = vector.shape_cast %392 : vector<2x128xf32> to vector<1x2x128xf32>
    tpu.vector_store %arg18[%c4, %c0_127, %c0_128], %395 {strides = array<i32>} : memref<6x2x128xf32, #tpu.memory_space<vmem>>, vector<1x2x128xf32>,
    %cst_129 = arith.constant dense<0xFF800000> : vector<2xf32>
    %396 = vector.multi_reduction <maximumf>, %392, %cst_129 [1] : vector<2x128xf32> to vector<2xf32>
    %397 = vector.shape_cast %396 : vector<2xf32> to vector<2x1xf32>
    %398 = tpu.iota {dimensions = array<i32: 1>} : vector<2x128xi32>
    %399 = vector.broadcast %397 : vector<2x1xf32> to vector<2x128xf32>
    %400 = arith.cmpf oeq, %392, %399 : vector<2x128xf32>
    %c128_i32_130 = arith.constant 128 : i32
    %401 = vector.broadcast %c128_i32_130 : i32 to vector<2x128xi32>
    %402 = arith.select %400, %398, %401 : vector<2x128xi1>, vector<2x128xi32>
    %cst_131 = arith.constant dense<2147483647> : vector<2xi32>
    %403 = vector.multi_reduction <minsi>, %402, %cst_131 [1] : vector<2x128xi32> to vector<2xi32>
    %404 = vector.shape_cast %403 : vector<2xi32> to vector<2x1xi32>
    %c3_132 = arith.constant 3 : index
    %405 = memref.load %arg0[%c3_132] : memref<5xi32, #tpu.memory_space<smem>>
    %c0_i32_133 = arith.constant 0 : i32
    %406 = arith.cmpi sgt, %405, %c0_i32_133 : i32
    %407 = arith.extui %406 : i1 to i32
    %408 = arith.sitofp %407 : i32 to f32
    %409 = tpu.iota {dimensions = array<i32: 1>} : vector<2x50xi32>
    %410 = vector.broadcast %404 : vector<2x1xi32> to vector<2x50xi32>
    %411 = arith.cmpi eq, %409, %410 : vector<2x50xi32>
    %412 = arith.extui %411 : vector<2x50xi1> to vector<2x50xi32>
    %413 = arith.sitofp %412 : vector<2x50xi32> to vector<2x50xf32>
    %cst_134 = arith.constant dense<0.000000e+00> : vector<2x16xf32>
    %414 = tpu.matmul %413, %28, %cst_134 {dimension_numbers = #tpu.dot_dimension_numbers<[1], [0], [0], [1], [0, 0, 1, 1], [], []>} : vector<2x50xf32>, vector<50x16xf32>, vector<2x16xf32> -> vector<2x16xf32>
    %c4_135 = arith.constant 4 : index
    %c0_136 = arith.constant 0 : index
    %c0_137 = arith.constant 0 : index
    %415 = vector.load %arg1[%c4_135, %c0_136, %c0_137] : memref<6x2x16xf32, #tpu.memory_space<vmem>>, vector<1x2x16xf32>
    %416 = vector.shape_cast %415 : vector<1x2x16xf32> to vector<2x16xf32>
    %417 = vector.broadcast %408 : f32 to vector<2x16xf32>
    %418 = arith.mulf %417, %416 : vector<2x16xf32>
    %cst_138 = arith.constant 1.000000e+00 : f32
    %419 = arith.subf %cst_138, %408 : f32
    %420 = vector.broadcast %419 : f32 to vector<2x16xf32>
    %421 = arith.mulf %420, %414 : vector<2x16xf32>
    %422 = arith.addf %418, %421 : vector<2x16xf32>
    %cst_139 = arith.constant dense<0.000000e+00> : vector<2x96xf32>
    %423 = tpu.matmul %422, %0, %cst_139 {dimension_numbers = #tpu.dot_dimension_numbers<[1], [0], [0], [1], [0, 0, 1, 1], [], []>} : vector<2x16xf32>, vector<16x96xf32>, vector<2x96xf32> -> vector<2x96xf32>
    %424 = arith.addf %423, %4 : vector<2x96xf32>
    %cst_140 = arith.constant dense<0.000000e+00> : vector<2x96xf32>
    %425 = tpu.matmul %356, %1, %cst_140 {dimension_numbers = #tpu.dot_dimension_numbers<[1], [0], [0], [1], [0, 0, 1, 1], [], []>} : vector<2x32xf32>, vector<32x96xf32>, vector<2x96xf32> -> vector<2x96xf32>
    %426 = arith.addf %425, %7 : vector<2x96xf32>
    %427 = vector.extract_strided_slice %424 {offsets = [0, 0], sizes = [2, 32], strides = [1, 1]} : vector<2x96xf32> to vector<2x32xf32>
    %428 = vector.extract_strided_slice %426 {offsets = [0, 0], sizes = [2, 32], strides = [1, 1]} : vector<2x96xf32> to vector<2x32xf32>
    %429 = arith.addf %427, %428 : vector<2x32xf32>
    %430 = arith.negf %429 : vector<2x32xf32>
    %431 = math.exp %430 : vector<2x32xf32>
    %cst_141 = arith.constant 1.000000e+00 : f32
    %432 = vector.broadcast %cst_141 : f32 to vector<2x32xf32>
    %433 = arith.addf %432, %431 : vector<2x32xf32>
    %434 = arith.divf %432, %433 : vector<2x32xf32>
    %435 = vector.extract_strided_slice %424 {offsets = [0, 32], sizes = [2, 32], strides = [1, 1]} : vector<2x96xf32> to vector<2x32xf32>
    %436 = vector.extract_strided_slice %426 {offsets = [0, 32], sizes = [2, 32], strides = [1, 1]} : vector<2x96xf32> to vector<2x32xf32>
    %437 = arith.addf %435, %436 : vector<2x32xf32>
    %438 = arith.negf %437 : vector<2x32xf32>
    %439 = math.exp %438 : vector<2x32xf32>
    %cst_142 = arith.constant 1.000000e+00 : f32
    %440 = vector.broadcast %cst_142 : f32 to vector<2x32xf32>
    %441 = arith.addf %440, %439 : vector<2x32xf32>
    %442 = arith.divf %440, %441 : vector<2x32xf32>
    %443 = vector.extract_strided_slice %424 {offsets = [0, 64], sizes = [2, 32], strides = [1, 1]} : vector<2x96xf32> to vector<2x32xf32>
    %444 = vector.extract_strided_slice %426 {offsets = [0, 64], sizes = [2, 32], strides = [1, 1]} : vector<2x96xf32> to vector<2x32xf32>
    %445 = arith.mulf %434, %444 : vector<2x32xf32>
    %446 = arith.addf %443, %445 : vector<2x32xf32>
    %447 = math.tanh %446 : vector<2x32xf32>
    %cst_143 = arith.constant 1.000000e+00 : f32
    %448 = vector.broadcast %cst_143 : f32 to vector<2x32xf32>
    %449 = arith.subf %448, %442 : vector<2x32xf32>
    %450 = arith.mulf %449, %447 : vector<2x32xf32>
    %451 = arith.mulf %442, %356 : vector<2x32xf32>
    %452 = arith.addf %450, %451 : vector<2x32xf32>
    %cst_144 = arith.constant dense<0.000000e+00> : vector<2x96xf32>
    %453 = tpu.matmul %452, %8, %cst_144 {dimension_numbers = #tpu.dot_dimension_numbers<[1], [0], [0], [1], [0, 0, 1, 1], [], []>} : vector<2x32xf32>, vector<32x96xf32>, vector<2x96xf32> -> vector<2x96xf32>
    %454 = arith.addf %453, %12 : vector<2x96xf32>
    %cst_145 = arith.constant dense<0.000000e+00> : vector<2x96xf32>
    %455 = tpu.matmul %386, %9, %cst_145 {dimension_numbers = #tpu.dot_dimension_numbers<[1], [0], [0], [1], [0, 0, 1, 1], [], []>} : vector<2x32xf32>, vector<32x96xf32>, vector<2x96xf32> -> vector<2x96xf32>
    %456 = arith.addf %455, %15 : vector<2x96xf32>
    %457 = vector.extract_strided_slice %454 {offsets = [0, 0], sizes = [2, 32], strides = [1, 1]} : vector<2x96xf32> to vector<2x32xf32>
    %458 = vector.extract_strided_slice %456 {offsets = [0, 0], sizes = [2, 32], strides = [1, 1]} : vector<2x96xf32> to vector<2x32xf32>
    %459 = arith.addf %457, %458 : vector<2x32xf32>
    %460 = arith.negf %459 : vector<2x32xf32>
    %461 = math.exp %460 : vector<2x32xf32>
    %cst_146 = arith.constant 1.000000e+00 : f32
    %462 = vector.broadcast %cst_146 : f32 to vector<2x32xf32>
    %463 = arith.addf %462, %461 : vector<2x32xf32>
    %464 = arith.divf %462, %463 : vector<2x32xf32>
    %465 = vector.extract_strided_slice %454 {offsets = [0, 32], sizes = [2, 32], strides = [1, 1]} : vector<2x96xf32> to vector<2x32xf32>
    %466 = vector.extract_strided_slice %456 {offsets = [0, 32], sizes = [2, 32], strides = [1, 1]} : vector<2x96xf32> to vector<2x32xf32>
    %467 = arith.addf %465, %466 : vector<2x32xf32>
    %468 = arith.negf %467 : vector<2x32xf32>
    %469 = math.exp %468 : vector<2x32xf32>
    %cst_147 = arith.constant 1.000000e+00 : f32
    %470 = vector.broadcast %cst_147 : f32 to vector<2x32xf32>
    %471 = arith.addf %470, %469 : vector<2x32xf32>
    %472 = arith.divf %470, %471 : vector<2x32xf32>
    %473 = vector.extract_strided_slice %454 {offsets = [0, 64], sizes = [2, 32], strides = [1, 1]} : vector<2x96xf32> to vector<2x32xf32>
    %474 = vector.extract_strided_slice %456 {offsets = [0, 64], sizes = [2, 32], strides = [1, 1]} : vector<2x96xf32> to vector<2x32xf32>
    %475 = arith.mulf %464, %474 : vector<2x32xf32>
    %476 = arith.addf %473, %475 : vector<2x32xf32>
    %477 = math.tanh %476 : vector<2x32xf32>
    %cst_148 = arith.constant 1.000000e+00 : f32
    %478 = vector.broadcast %cst_148 : f32 to vector<2x32xf32>
    %479 = arith.subf %478, %472 : vector<2x32xf32>
    %480 = arith.mulf %479, %477 : vector<2x32xf32>
    %481 = arith.mulf %472, %386 : vector<2x32xf32>
    %482 = arith.addf %480, %481 : vector<2x32xf32>
    %cst_149 = arith.constant dense<0.000000e+00> : vector<2x64xf32>
    %483 = tpu.matmul %482, %16, %cst_149 {dimension_numbers = #tpu.dot_dimension_numbers<[1], [0], [0], [1], [0, 0, 1, 1], [], []>} : vector<2x32xf32>, vector<32x64xf32>, vector<2x64xf32> -> vector<2x64xf32>
    %484 = arith.addf %483, %19 : vector<2x64xf32>
    %cst_150 = arith.constant dense<0.000000e+00> : vector<2x128xf32>
    %485 = tpu.matmul %484, %20, %cst_150 {dimension_numbers = #tpu.dot_dimension_numbers<[1], [0], [0], [1], [0, 0, 1, 1], [], []>} : vector<2x64xf32>, vector<64x128xf32>, vector<2x128xf32> -> vector<2x128xf32>
    %486 = arith.addf %485, %23 : vector<2x128xf32>
    %cst_151 = arith.constant dense<0.000000e+00> : vector<2x128xf32>
    %487 = tpu.matmul %486, %24, %cst_151 {dimension_numbers = #tpu.dot_dimension_numbers<[1], [0], [0], [1], [0, 0, 1, 1], [], []>} : vector<2x128xf32>, vector<128x128xf32>, vector<2x128xf32> -> vector<2x128xf32>
    %488 = arith.addf %487, %27 : vector<2x128xf32>
    %c5 = arith.constant 5 : index
    %c0_152 = arith.constant 0 : index
    %c0_153 = arith.constant 0 : index
    %489 = vector.load %arg18[%c5, %c0_152, %c0_153] : memref<6x2x128xf32, #tpu.memory_space<vmem>>, vector<1x2x128xf32>
    %490 = vector.shape_cast %489 : vector<1x2x128xf32> to vector<2x128xf32>
    %491 = vector.shape_cast %488 : vector<2x128xf32> to vector<1x2x128xf32>
    tpu.vector_store %arg18[%c5, %c0_152, %c0_153], %491 {strides = array<i32>} : memref<6x2x128xf32, #tpu.memory_space<vmem>>, vector<1x2x128xf32>,
    %cst_154 = arith.constant dense<0xFF800000> : vector<2xf32>
    %492 = vector.multi_reduction <maximumf>, %488, %cst_154 [1] : vector<2x128xf32> to vector<2xf32>
    %493 = vector.shape_cast %492 : vector<2xf32> to vector<2x1xf32>
    %494 = tpu.iota {dimensions = array<i32: 1>} : vector<2x128xi32>
    %495 = vector.broadcast %493 : vector<2x1xf32> to vector<2x128xf32>
    %496 = arith.cmpf oeq, %488, %495 : vector<2x128xf32>
    %c128_i32_155 = arith.constant 128 : i32
    %497 = vector.broadcast %c128_i32_155 : i32 to vector<2x128xi32>
    %498 = arith.select %496, %494, %497 : vector<2x128xi1>, vector<2x128xi32>
    %cst_156 = arith.constant dense<2147483647> : vector<2xi32>
    %499 = vector.multi_reduction <minsi>, %498, %cst_156 [1] : vector<2x128xi32> to vector<2xi32>
    %500 = vector.shape_cast %499 : vector<2xi32> to vector<2x1xi32>
    %501 = tpu.concatenate %116, %212, %308, %404, %500 in 1 : vector<2x1xi32>, vector<2x1xi32>, vector<2x1xi32>, vector<2x1xi32>, vector<2x1xi32> -> vector<2x5xi32>
    %c0_157 = arith.constant 0 : index
    %c0_158 = arith.constant 0 : index
    %502 = vector.load %arg19[%c0_157, %c0_158] : memref<2x5xi32, #tpu.memory_space<vmem>>, vector<2x5xi32>
    tpu.vector_store %arg19[%c0_157, %c0_158], %501 {strides = array<i32>} : memref<2x5xi32, #tpu.memory_space<vmem>>, vector<2x5xi32>,
    return
  }
}

</mosaic_0001>

<llo_original>
// kernel: seq2seq_forward.3
$region0: #{seq2seq_forward.3}
  #allocation0 [shape = 'u32[]', space=smem, size = 0x4, offset = 0x4, fixed_abs, tag = 'smem constant byte address 0x4 - core index']
  #allocation1 [shape = 'u32[72,128]{1,0:T(1,128)}', space=vmem, size = 0x9000, scoped, tag = 'internal scratch']
  %s0 = inlined_call_operand.vmem [shape: s32[5], index: 0, kind: input, shape index: {}]
  %s1 = inlined_call_operand.vmem [shape: f32[6,2,16], index: 1, kind: input, shape index: {}]
  %s2 = inlined_call_operand.vmem [shape: f32[50,16], index: 2, kind: input, shape index: {}]
  %s3 = inlined_call_operand.vmem [shape: f32[2,2,32], index: 3, kind: input, shape index: {}]
  %s4 = inlined_call_operand.vmem [shape: f32[16,96], index: 4, kind: input, shape index: {}]
  %s5 = inlined_call_operand.vmem [shape: f32[32,96], index: 5, kind: input, shape index: {}]
  %s6 = inlined_call_operand.vmem [shape: f32[1,96], index: 6, kind: input, shape index: {}]
  %s7 = inlined_call_operand.vmem [shape: f32[1,96], index: 7, kind: input, shape index: {}]
  %s8 = inlined_call_operand.vmem [shape: f32[32,96], index: 8, kind: input, shape index: {}]
  %s9 = inlined_call_operand.vmem [shape: f32[32,96], index: 9, kind: input, shape index: {}]
  %s10 = inlined_call_operand.vmem [shape: f32[1,96], index: 10, kind: input, shape index: {}]
  %s11 = inlined_call_operand.vmem [shape: f32[1,96], index: 11, kind: input, shape index: {}]
  %s12 = inlined_call_operand.vmem [shape: f32[32,64], index: 12, kind: input, shape index: {}]
  %s13 = inlined_call_operand.vmem [shape: f32[1,64], index: 13, kind: input, shape index: {}]
  %s14 = inlined_call_operand.vmem [shape: f32[64,128], index: 14, kind: input, shape index: {}]
  %s15 = inlined_call_operand.vmem [shape: f32[1,128], index: 15, kind: input, shape index: {}]
  %s16 = inlined_call_operand.vmem [shape: f32[128,128], index: 16, kind: input, shape index: {}]
  %s17 = inlined_call_operand.vmem [shape: f32[1,128], index: 17, kind: input, shape index: {}]
  %s18 = inlined_call_operand.hbm [shape: f32[6,2,128], index: 18, kind: output, shape index: {0}]
  %s19 = inlined_call_operand.hbm [shape: s32[2,5], index: 19, kind: output, shape index: {1}]
  %20 = xla_tuple %s18, %s19
  %s21 = sld [smem:[#allocation0]]
  $region94: #{seq2seq_forward.3} parent=0
    _
  %s23 = ssub.s32 1, %s21
  %s24 = scalar_select 0, %s23, %s21
  $region1: #{seq2seq_forward.3} parent=0
    #allocation2 [shape = 'u8[512]{0}', space=smem, size = 0x200, scoped, tag = 'input window, operand 0, single buffered']
    #allocation3 [shape = 's32[1]{0}', space=sflag, size = 0x4, scoped, tag = 'scoped memory for seq2seq_forward.3']
    #allocation4 [shape = 's32[1]{0}', space=sflag, size = 0x4, scoped, tag = 'scoped memory for seq2seq_forward.3']
    #allocation5 [shape = 'u8[6144]{0}', space=vmem, size = 0x1800, scoped, tag = 'output window, operand 0, single buffered']
    #allocation6 [shape = 'u8[1024]{0}', space=vmem, size = 0x400, scoped, tag = 'output window, operand 1, single buffered']
    #allocation7 [shape = 's32[1]{0}', space=sflag, size = 0x4, scoped, tag = 'scoped memory for seq2seq_forward.3']
    %25 = vsyncpa [#allocation4], 0
    %26 = vsyncpa [#allocation3], 0
    %27 = vsyncpa [#allocation7], 0
    // Predicated region
    $region2: #{seq2seq_forward.3} parent=1 // pred_check
      _
    $region3: #{seq2seq_forward.3} parent=1 // pred_check_branch
      %29 = sbr.rel (0) target = $region5
    $region4: #{seq2seq_forward.3} parent=1 // pred_region
      %31 = vsyncadd [#allocation4], 0
      %s33 = sshll.u32 %s0, 4
      %s34 = int_to_ptr.vmem [resolvable:$true] %s33
      %36 = dma.vmem_to_smem %s34, 16, [#allocation2], [#allocation4]
    $region5: #{seq2seq_forward.3} parent=1 // pred_fallthru
      _
    // Predicated region
    $region6: #{seq2seq_forward.3} parent=1 // pred_check
      _
    $region7: #{seq2seq_forward.3} parent=1 // pred_check_branch
      %38 = sbr.rel (0) target = $region9
    $region8: #{seq2seq_forward.3} parent=1 // pred_region
      _
    $region9: #{seq2seq_forward.3} parent=1 // pred_fallthru
      _
    // Predicated region
    $region10: #{seq2seq_forward.3} parent=1 // pred_check
      _
    $region11: #{seq2seq_forward.3} parent=1 // pred_check_branch
      %40 = sbr.rel (0) target = $region13
    $region12: #{seq2seq_forward.3} parent=1 // pred_region
      _
    $region13: #{seq2seq_forward.3} parent=1 // pred_fallthru
      _
    // Predicated region
    $region14: #{seq2seq_forward.3} parent=1 // pred_check
      _
    $region15: #{seq2seq_forward.3} parent=1 // pred_check_branch
      %42 = sbr.rel (0) target = $region17
    $region16: #{seq2seq_forward.3} parent=1 // pred_region
      _
    $region17: #{seq2seq_forward.3} parent=1 // pred_fallthru
      _
    // Predicated region
    $region18: #{seq2seq_forward.3} parent=1 // pred_check
      _
    $region19: #{seq2seq_forward.3} parent=1 // pred_check_branch
      %44 = sbr.rel (0) target = $region21
    $region20: #{seq2seq_forward.3} parent=1 // pred_region
      _
    $region21: #{seq2seq_forward.3} parent=1 // pred_fallthru
      _
    // Predicated region
    $region22: #{seq2seq_forward.3} parent=1 // pred_check
      _
    $region23: #{seq2seq_forward.3} parent=1 // pred_check_branch
      %46 = sbr.rel (0) target = $region25
    $region24: #{seq2seq_forward.3} parent=1 // pred_region
      _
    $region25: #{seq2seq_forward.3} parent=1 // pred_fallthru
      _
    // Predicated region
    $region26: #{seq2seq_forward.3} parent=1 // pred_check
      _
    $region27: #{seq2seq_forward.3} parent=1 // pred_check_branch
      %48 = sbr.rel (0) target = $region29
    $region28: #{seq2seq_forward.3} parent=1 // pred_region
      _
    $region29: #{seq2seq_forward.3} parent=1 // pred_fallthru
      _
    // Predicated region
    $region30: #{seq2seq_forward.3} parent=1 // pred_check
      _
    $region31: #{seq2seq_forward.3} parent=1 // pred_check_branch
      %50 = sbr.rel (0) target = $region33
    $region32: #{seq2seq_forward.3} parent=1 // pred_region
      _
    $region33: #{seq2seq_forward.3} parent=1 // pred_fallthru
      _
    // Predicated region
    $region34: #{seq2seq_forward.3} parent=1 // pred_check
      _
    $region35: #{seq2seq_forward.3} parent=1 // pred_check_branch
      %52 = sbr.rel (0) target = $region37
    $region36: #{seq2seq_forward.3} parent=1 // pred_region
      _
    $region37: #{seq2seq_forward.3} parent=1 // pred_fallthru
      _
    // Predicated region
    $region38: #{seq2seq_forward.3} parent=1 // pred_check
      _
    $region39: #{seq2seq_forward.3} parent=1 // pred_check_branch
      %54 = sbr.rel (0) target = $region41
    $region40: #{seq2seq_forward.3} parent=1 // pred_region
      _
    $region41: #{seq2seq_forward.3} parent=1 // pred_fallthru
      _
    // Predicated region
    $region42: #{seq2seq_forward.3} parent=1 // pred_check
      _
    $region43: #{seq2seq_forward.3} parent=1 // pred_check_branch
      %56 = sbr.rel (0) target = $region45
    $region44: #{seq2seq_forward.3} parent=1 // pred_region
      _
    $region45: #{seq2seq_forward.3} parent=1 // pred_fallthru
      _
    // Predicated region
    $region46: #{seq2seq_forward.3} parent=1 // pred_check
      _
    $region47: #{seq2seq_forward.3} parent=1 // pred_check_branch
      %58 = sbr.rel (0) target = $region49
    $region48: #{seq2seq_forward.3} parent=1 // pred_region
      _
    $region49: #{seq2seq_forward.3} parent=1 // pred_fallthru
      _
    // Predicated region
    $region50: #{seq2seq_forward.3} parent=1 // pred_check
      _
    $region51: #{seq2seq_forward.3} parent=1 // pred_check_branch
      %60 = sbr.rel (0) target = $region53
    $region52: #{seq2seq_forward.3} parent=1 // pred_region
      _
    $region53: #{seq2seq_forward.3} parent=1 // pred_fallthru
      _
    // Predicated region
    $region54: #{seq2seq_forward.3} parent=1 // pred_check
      _
    $region55: #{seq2seq_forward.3} parent=1 // pred_check_branch
      %62 = sbr.rel (0) target = $region57
    $region56: #{seq2seq_forward.3} parent=1 // pred_region
      _
    $region57: #{seq2seq_forward.3} parent=1 // pred_fallthru
      _
    // Predicated region
    $region58: #{seq2seq_forward.3} parent=1 // pred_check
      _
    $region59: #{seq2seq_forward.3} parent=1 // pred_check_branch
      %64 = sbr.rel (0) target = $region61
    $region60: #{seq2seq_forward.3} parent=1 // pred_region
      _
    $region61: #{seq2seq_forward.3} parent=1 // pred_fallthru
      _
    // Predicated region
    $region62: #{seq2seq_forward.3} parent=1 // pred_check
      _
    $region63: #{seq2seq_forward.3} parent=1 // pred_check_branch
      %66 = sbr.rel (0) target = $region65
    $region64: #{seq2seq_forward.3} parent=1 // pred_region
      _
    $region65: #{seq2seq_forward.3} parent=1 // pred_fallthru
      _
    // Predicated region
    $region66: #{seq2seq_forward.3} parent=1 // pred_check
      _
    $region67: #{seq2seq_forward.3} parent=1 // pred_check_branch
      %68 = sbr.rel (0) target = $region69
    $region68: #{seq2seq_forward.3} parent=1 // pred_region
      _
    $region69: #{seq2seq_forward.3} parent=1 // pred_fallthru
      _
    // Predicated region
    $region70: #{seq2seq_forward.3} parent=1 // pred_check
      _
    $region71: #{seq2seq_forward.3} parent=1 // pred_check_branch
      %70 = sbr.rel (0) target = $region73
    $region72: #{seq2seq_forward.3} parent=1 // pred_region
      _
    $region73: #{seq2seq_forward.3} parent=1 // pred_fallthru
      _
    // Predicated region
    $region74: #{seq2seq_forward.3} parent=1 // pred_check
      _
    $region75: #{seq2seq_forward.3} parent=1 // pred_check_branch
      %72 = sbr.rel (0) target = $region77
    $region76: #{seq2seq_forward.3} parent=1 // pred_region
      %74 = dma.done [#allocation4], 16
    $region77: #{seq2seq_forward.3} parent=1 // pred_fallthru
      _
    %75 = sfence
    %v76 = vld [vmem:[%s4] sm:$0xff]
    %v77 = vld [vmem:[%s4 + $0x8] sm:$0xff]
    %v78 = vld [vmem:[%s5] sm:$0xff]
    %v79 = vld [vmem:[%s5 + $0x8] sm:$0xff]
    %v80 = vld [vmem:[%s5 + $0x10] sm:$0xff]
    %v81 = vld [vmem:[%s5 + $0x18] sm:$0xff]
    %v82 = vld [vmem:[%s6] sm:$0x1]
    %v84 = vperm.slane %v82, 0
    %v86 = vld [vmem:[%s7] sm:$0x1]
    %v88 = vperm.slane %v86, 0
    %v90 = vld [vmem:[%s8] sm:$0xff]
    %v91 = vld [vmem:[%s8 + $0x8] sm:$0xff]
    %v92 = vld [vmem:[%s8 + $0x10] sm:$0xff]
    %v93 = vld [vmem:[%s8 + $0x18] sm:$0xff]
    %v94 = vld [vmem:[%s9] sm:$0xff]
    %v95 = vld [vmem:[%s9 + $0x8] sm:$0xff]
    %v96 = vld [vmem:[%s9 + $0x10] sm:$0xff]
    %v97 = vld [vmem:[%s9 + $0x18] sm:$0xff]
    %v98 = vld [vmem:[%s10] sm:$0x1]
    %v100 = vperm.slane %v98, 0
    %v102 = vld [vmem:[%s11] sm:$0x1]
    %v104 = vperm.slane %v102, 0
    %v106 = vld [vmem:[%s12] sm:$0xff]
    %v107 = vld [vmem:[%s12 + $0x8] sm:$0xff]
    %v108 = vld [vmem:[%s12 + $0x10] sm:$0xff]
    %v109 = vld [vmem:[%s12 + $0x18] sm:$0xff]
    %v110 = vld [vmem:[%s13] sm:$0x1]
    %v112 = vperm.slane %v110, 0
    %v114 = vld [vmem:[%s14] sm:$0xff]
    %v115 = vld [vmem:[%s14 + $0x8] sm:$0xff]
    %v116 = vld [vmem:[%s14 + $0x10] sm:$0xff]
    %v117 = vld [vmem:[%s14 + $0x18] sm:$0xff]
    %v118 = vld [vmem:[%s14 + $0x20] sm:$0xff]
    %v119 = vld [vmem:[%s14 + $0x28] sm:$0xff]
    %v120 = vld [vmem:[%s14 + $0x30] sm:$0xff]
    %v121 = vld [vmem:[%s14 + $0x38] sm:$0xff]
    %v122 = vld [vmem:[%s15] sm:$0x1]
    %v124 = vperm.slane %v122, 0
    %v126 = vld [vmem:[%s16] sm:$0xff]
    %v127 = vld [vmem:[%s16 + $0x8] sm:$0xff]
    %v128 = vld [vmem:[%s16 + $0x10] sm:$0xff]
    %v129 = vld [vmem:[%s16 + $0x18] sm:$0xff]
    %v130 = vld [vmem:[%s16 + $0x20] sm:$0xff]
    %v131 = vld [vmem:[%s16 + $0x28] sm:$0xff]
    %v132 = vld [vmem:[%s16 + $0x30] sm:$0xff]
    %v133 = vld [vmem:[%s16 + $0x38] sm:$0xff]
    %v134 = vld [vmem:[%s16 + $0x40] sm:$0xff]
    %v135 = vld [vmem:[%s16 + $0x48] sm:$0xff]
    %v136 = vld [vmem:[%s16 + $0x50] sm:$0xff]
    %v137 = vld [vmem:[%s16 + $0x58] sm:$0xff]
    %v138 = vld [vmem:[%s16 + $0x60] sm:$0xff]
    %v139 = vld [vmem:[%s16 + $0x68] sm:$0xff]
    %v140 = vld [vmem:[%s16 + $0x70] sm:$0xff]
    %v141 = vld [vmem:[%s16 + $0x78] sm:$0xff]
    %v142 = vld [vmem:[%s17] sm:$0x1]
    %v144 = vperm.slane %v142, 0
    %v146 = vld [vmem:[%s2] sm:$0xff]
    %v147 = vld [vmem:[%s2 + $0x8] sm:$0xff]
    %v148 = vld [vmem:[%s2 + $0x10] sm:$0xff]
    %v149 = vld [vmem:[%s2 + $0x18] sm:$0xff]
    %v150 = vld [vmem:[%s2 + $0x20] sm:$0xff]
    %v151 = vld [vmem:[%s2 + $0x28] sm:$0xff]
    %v152 = vld [vmem:[%s2 + $0x30] sm:$0x3]
    %153 = vst [vmem:[#allocation5] sm:$0x3] 0.0
    %v154 = vld [vmem:[%s3] sm:$0x3]
    %s155 = scalar_lea.vmem %s3, 2
    %v156 = vld [vmem:[%s155] sm:$0x3]
    %v157 = vld [vmem:[%s1] sm:$0x3]
    %vm158 = vcmask 130048
    %v160 = vsel %vm158, %v157, 0
    %162 = vmatpush.msra.mxu0 0.0
    %163 = vmatpush.msra.mxu0 0.0
    %164 = vmatpush.msra.mxu0 0.0
    %165 = vmatpush.msra.mxu0 0.0
    %166 = vmatpush.msra.mxu0 0.0
    %167 = vmatpush.msra.mxu0 0.0
    %168 = vmatpush.msra.mxu0 0.0
    %169 = vmatpush.msra.mxu0 0.0
    %170 = vmatpush.msra.mxu0 0.0
    %171 = vmatpush.msra.mxu0 0.0
    %172 = vmatpush.msra.mxu0 0.0
    %173 = vmatpush.msra.mxu0 0.0
    %174 = vmatpush.msra.mxu0 0.0
    %175 = vmatpush.msra.mxu0 0.0
    %176 = vmatpush.msra.mxu0 %v77
    %177 = vmatpush.msra.mxu0 %v76
    %178 = vmatmul.f32.gmra.mxu0 %v160
    %v179 = vpop.f32.mrf.mxu0
    %v180 = vadd.f32 %v84, %v179
    %181 = vdwg.mxu0
    %vm182 = vcmask 261120
    %v184 = vsel %vm182, %v154, 0
    %186 = vmatpush.msra.mxu0 0.0
    %187 = vmatpush.msra.mxu0 0.0
    %188 = vmatpush.msra.mxu0 0.0
    %189 = vmatpush.msra.mxu0 0.0
    %190 = vmatpush.msra.mxu0 0.0
    %191 = vmatpush.msra.mxu0 0.0
    %192 = vmatpush.msra.mxu0 0.0
    %193 = vmatpush.msra.mxu0 0.0
    %194 = vmatpush.msra.mxu0 0.0
    %195 = vmatpush.msra.mxu0 0.0
    %196 = vmatpush.msra.mxu0 0.0
    %197 = vmatpush.msra.mxu0 0.0
    %198 = vmatpush.msra.mxu0 %v81
    %199 = vmatpush.msra.mxu0 %v80
    %200 = vmatpush.msra.mxu0 %v79
    %201 = vmatpush.msra.mxu0 %v78
    %202 = vmatmul.f32.gmra.mxu0 %v184
    %v203 = vpop.f32.mrf.mxu0
    %v204 = vadd.f32 %v88, %v203
    %205 = vdwg.mxu0
    %v206 = vadd.f32 %v180, %v204
    %v207 = vxor.u32 %v206, 2147483648
    %v208 = vmul.f32 %v207, 1.442695
    %v209 = vpow.pop %v208
    %v210 = vadd.f32 %v209, 1.0
    %v211 = vrcp.pop %v210
    %v212 = vmul.f32 %v210, %v211
    %v213 = vsub.f32 1.0, %v212
    %v214 = vmul.f32 %v211, %v213
    %v215 = vadd.f32 %v211, %v214
    %vm216 = vweird.f32 %v210
    %vm217 = vweird.f32 %v211
    %vm218 = vmor %vm216, %vm217
    %v219 = vsel %vm218, %v211, %v215
    %v220 = vand.u32 2147483647, %v210
    %vm221 = vcmp.eq.f32.partialorder %v220, 8.507059e+37
    %v222 = vand.u32 %v210, 2147483648
    %v223 = vor.u32 1.1754944e-38, %v222
    %v224 = vsel %vm221, %v223, %v219
    %v225 = vmul.f32 1.0, %v224
    %227 = vrot.lane.b32.xlu0 %v204, 64
    %v228 = vpop.permute.xlu0 %227
    %v230 = vmul.f32 %v225, %v228
    %232 = vrot.lane.b32.xlu0 %v230, 64
    %v233 = vpop.permute.xlu0 %232
    %v235 = vadd.f32 %v180, %v233
    %v236 = vtanh.pop %v235
    %v237 = vsub.f32 1.0, %v225
    %239 = vrot.lane.b32.xlu0 %v236, 96
    %v240 = vpop.permute.xlu0 %239
    %v242 = vmul.f32 %v237, %v240
    %243 = vrot.lane.b32.xlu0 %v154, 32
    %v244 = vpop.permute.xlu0 %243
    %v246 = vmul.f32 %v225, %v244
    %v247 = vadd.f32 %v242, %v246
    %249 = vrot.lane.b32.xlu0 %v247, 96
    %v250 = vpop.permute.xlu0 %249
    %v251 = vsel %vm182, %v250, 0
    %253 = vmatpush.msra.mxu0 0.0
    %254 = vmatpush.msra.mxu0 0.0
    %255 = vmatpush.msra.mxu0 0.0
    %256 = vmatpush.msra.mxu0 0.0
    %257 = vmatpush.msra.mxu0 0.0
    %258 = vmatpush.msra.mxu0 0.0
    %259 = vmatpush.msra.mxu0 0.0
    %260 = vmatpush.msra.mxu0 0.0
    %261 = vmatpush.msra.mxu0 0.0
    %262 = vmatpush.msra.mxu0 0.0
    %263 = vmatpush.msra.mxu0 0.0
    %264 = vmatpush.msra.mxu0 0.0
    %265 = vmatpush.msra.mxu0 %v93
    %266 = vmatpush.msra.mxu0 %v92
    %267 = vmatpush.msra.mxu0 %v91
    %268 = vmatpush.msra.mxu0 %v90
    %269 = vmatmul.f32.gmra.mxu0 %v251
    %v270 = vpop.f32.mrf.mxu0
    %v271 = vadd.f32 %v100, %v270
    %272 = vdwg.mxu0
    %v274 = vsel %vm182, %v156, 0
    %276 = vmatpush.msra.mxu0 0.0
    %277 = vmatpush.msra.mxu0 0.0
    %278 = vmatpush.msra.mxu0 0.0
    %279 = vmatpush.msra.mxu0 0.0
    %280 = vmatpush.msra.mxu0 0.0
    %281 = vmatpush.msra.mxu0 0.0
    %282 = vmatpush.msra.mxu0 0.0
    %283 = vmatpush.msra.mxu0 0.0
    %284 = vmatpush.msra.mxu0 0.0
    %285 = vmatpush.msra.mxu0 0.0
    %286 = vmatpush.msra.mxu0 0.0
    %287 = vmatpush.msra.mxu0 0.0
    %288 = vmatpush.msra.mxu0 %v97
    %289 = vmatpush.msra.mxu0 %v96
    %290 = vmatpush.msra.mxu0 %v95
    %291 = vmatpush.msra.mxu0 %v94
    %292 = vmatmul.f32.gmra.mxu0 %v274
    %v293 = vpop.f32.mrf.mxu0
    %v294 = vadd.f32 %v104, %v293
    %295 = vdwg.mxu0
    %v296 = vadd.f32 %v271, %v294
    %v297 = vxor.u32 %v296, 2147483648
    %v298 = vmul.f32 %v297, 1.442695
    %v299 = vpow.pop %v298
    %v300 = vadd.f32 %v299, 1.0
    %v301 = vrcp.pop %v300
    %v302 = vmul.f32 %v300, %v301
    %v303 = vsub.f32 1.0, %v302
    %v304 = vmul.f32 %v301, %v303
    %v305 = vadd.f32 %v301, %v304
    %vm306 = vweird.f32 %v300
    %vm307 = vweird.f32 %v301
    %vm308 = vmor %vm306, %vm307
    %v309 = vsel %vm308, %v301, %v305
    %v310 = vand.u32 2147483647, %v300
    %vm311 = vcmp.eq.f32.partialorder %v310, 8.507059e+37
    %v312 = vand.u32 %v300, 2147483648
    %v313 = vor.u32 1.1754944e-38, %v312
    %v314 = vsel %vm311, %v313, %v309
    %v315 = vmul.f32 1.0, %v314
    %317 = vrot.lane.b32.xlu0 %v294, 64
    %v318 = vpop.permute.xlu0 %317
    %v320 = vmul.f32 %v315, %v318
    %322 = vrot.lane.b32.xlu0 %v320, 64
    %v323 = vpop.permute.xlu0 %322
    %v325 = vadd.f32 %v271, %v323
    %v326 = vtanh.pop %v325
    %v327 = vsub.f32 1.0, %v315
    %329 = vrot.lane.b32.xlu0 %v326, 96
    %v330 = vpop.permute.xlu0 %329
    %v332 = vmul.f32 %v327, %v330
    %333 = vrot.lane.b32.xlu0 %v156, 32
    %v334 = vpop.permute.xlu0 %333
    %v336 = vmul.f32 %v315, %v334
    %v337 = vadd.f32 %v332, %v336
    %339 = vrot.lane.b32.xlu0 %v337, 96
    %v340 = vpop.permute.xlu0 %339
    %v341 = vsel %vm182, %v340, 0
    %343 = vmatpush.msra.mxu0 0.0
    %344 = vmatpush.msra.mxu0 0.0
    %345 = vmatpush.msra.mxu0 0.0
    %346 = vmatpush.msra.mxu0 0.0
    %347 = vmatpush.msra.mxu0 0.0
    %348 = vmatpush.msra.mxu0 0.0
    %349 = vmatpush.msra.mxu0 0.0
    %350 = vmatpush.msra.mxu0 0.0
    %351 = vmatpush.msra.mxu0 0.0
    %352 = vmatpush.msra.mxu0 0.0
    %353 = vmatpush.msra.mxu0 0.0
    %354 = vmatpush.msra.mxu0 0.0
    %355 = vmatpush.msra.mxu0 %v109
    %356 = vmatpush.msra.mxu0 %v108
    %357 = vmatpush.msra.mxu0 %v107
    %358 = vmatpush.msra.mxu0 %v106
    %359 = vmatmul.f32.gmra.mxu0 %v341
    %v360 = vpop.f32.mrf.mxu0
    %v361 = vadd.f32 %v112, %v360
    %362 = vdwg.mxu0
    %vm363 = vcmask 523264
    %v365 = vsel %vm363, %v361, 0
    %367 = vmatpush.msra.mxu0 0.0
    %368 = vmatpush.msra.mxu0 0.0
    %369 = vmatpush.msra.mxu0 0.0
    %370 = vmatpush.msra.mxu0 0.0
    %371 = vmatpush.msra.mxu0 0.0
    %372 = vmatpush.msra.mxu0 0.0
    %373 = vmatpush.msra.mxu0 0.0
    %374 = vmatpush.msra.mxu0 0.0
    %375 = vmatpush.msra.mxu0 %v121
    %376 = vmatpush.msra.mxu0 %v120
    %377 = vmatpush.msra.mxu0 %v119
    %378 = vmatpush.msra.mxu0 %v118
    %379 = vmatpush.msra.mxu0 %v117
    %380 = vmatpush.msra.mxu0 %v116
    %381 = vmatpush.msra.mxu0 %v115
    %382 = vmatpush.msra.mxu0 %v114
    %383 = vmatmul.f32.gmra.mxu0 %v365
    %v384 = vpop.f32.mrf.mxu0
    %v385 = vadd.f32 %v124, %v384
    %386 = vdwg.mxu0
    %387 = vmatpush.msra.mxu0 %v141
    %388 = vmatpush.msra.mxu0 %v140
    %389 = vmatpush.msra.mxu0 %v139
    %390 = vmatpush.msra.mxu0 %v138
    %391 = vmatpush.msra.mxu0 %v137
    %392 = vmatpush.msra.mxu0 %v136
    %393 = vmatpush.msra.mxu0 %v135
    %394 = vmatpush.msra.mxu0 %v134
    %395 = vmatpush.msra.mxu0 %v133
    %396 = vmatpush.msra.mxu0 %v132
    %397 = vmatpush.msra.mxu0 %v131
    %398 = vmatpush.msra.mxu0 %v130
    %399 = vmatpush.msra.mxu0 %v129
    %400 = vmatpush.msra.mxu0 %v128
    %401 = vmatpush.msra.mxu0 %v127
    %402 = vmatpush.msra.mxu0 %v126
    %403 = vmatmul.f32.gmra.mxu0 %v385
    %v404 = vpop.f32.mrf.mxu0
    %v405 = vadd.f32 %v144, %v404
    %406 = vdwg.mxu0
    %s407 = scalar_lea.vmem [#allocation5], 2
    %408 = vst [vmem:[%s407] sm:$0x3] %v405
    %vm409 = vcmask 1041408
    %v410 = vsel %vm409, %v405, -inf
    %411 = vmax.xlane.f32.xlu0 %v410
    %v412 = vpop.xlane.xlu0 %411
    %v413 = vlaneseq
    %v414 = vand.u32 %v413, 127
    %vm415 = vcmp.eq.f32.partialorder %v405, %v412
    %v416 = vsel %vm415, %v414, 128
    %v417 = vsel %vm409, %v416, 2147483647
    %v418 = vand.u32 %v417, 65535
    %v419 = vshra.s32 %v417, 16
    %v420 = vcvt.s32.f32 %v418
    %v421 = vcvt.s32.f32 %v419
    %422 = vmin.xlane.f32.xlu0 %v421
    %v423 = vpop.xlane.xlu0 %422
    %vm424 = vcmp.eq.f32.partialorder %v421, %v423
    %v425 = vsel %vm424, %v420, inf
    %426 = vmin.xlane.f32.xlu0 %v425
    %v427 = vpop.xlane.xlu0 %426
    %v428 = vcvt.f32.s32 %v427
    %v429 = vcvt.f32.s32 %v423
    %v430 = vshll.u32 %v429, 16
    %v431 = vadd.s32 %v430, %v428
    %s432 = sld [smem:[#allocation2]]
    %p433 = scmp.gt.s32.totalorder %s432, 0
    %s434 = scalar_select %p433, 1, 0
    %s435 = scvt.s32.f32 %s434
    %vm436 = vcmp.eq.s32.totalorder %v414, %v431
    %v437 = vsel %vm436, 1, 0
    %v438 = vcvt.s32.f32 %v437
    %vm439 = vcmask 408576
    %v441 = vsel %vm439, %v438, 0
    %v444 = vsel %vm409, %v152, 0
    %446 = vmatpush.msra.mxu0 0.0
    %447 = vmatpush.msra.mxu0 0.0
    %448 = vmatpush.msra.mxu0 0.0
    %449 = vmatpush.msra.mxu0 0.0
    %450 = vmatpush.msra.mxu0 0.0
    %451 = vmatpush.msra.mxu0 0.0
    %452 = vmatpush.msra.mxu0 0.0
    %453 = vmatpush.msra.mxu0 0.0
    %454 = vmatpush.msra.mxu0 0.0
    %455 = vmatpush.msra.mxu0 %v444
    %456 = vmatpush.msra.mxu0 %v151
    %457 = vmatpush.msra.mxu0 %v150
    %458 = vmatpush.msra.mxu0 %v149
    %459 = vmatpush.msra.mxu0 %v148
    %460 = vmatpush.msra.mxu0 %v147
    %461 = vmatpush.msra.mxu0 %v146
    %462 = vmatmul.f32.gmra.mxu0 %v441
    %v463 = vpop.f32.mrf.mxu0
    %v464 = vadd.f32 0.0, %v463
    %465 = vdwg.mxu0
    %s466 = scalar_lea.vmem %s1, 2
    %v467 = vld [vmem:[%s466] sm:$0x3]
    %v468 = vstv %s435
    %v469 = vmul.f32 %v468, %v467
    %s470 = ssub.f32 1.0, %s435
    %v471 = vstv %s470
    %v472 = vmul.f32 %v471, %v464
    %v473 = vadd.f32 %v469, %v472
    %v475 = vsel %vm158, %v473, 0
    %477 = vmatpush.msra.mxu0 0.0
    %478 = vmatpush.msra.mxu0 0.0
    %479 = vmatpush.msra.mxu0 0.0
    %480 = vmatpush.msra.mxu0 0.0
    %481 = vmatpush.msra.mxu0 0.0
    %482 = vmatpush.msra.mxu0 0.0
    %483 = vmatpush.msra.mxu0 0.0
    %484 = vmatpush.msra.mxu0 0.0
    %485 = vmatpush.msra.mxu0 0.0
    %486 = vmatpush.msra.mxu0 0.0
    %487 = vmatpush.msra.mxu0 0.0
    %488 = vmatpush.msra.mxu0 0.0
    %489 = vmatpush.msra.mxu0 0.0
    %490 = vmatpush.msra.mxu0 0.0
    %491 = vmatpush.msra.mxu0 %v77
    %492 = vmatpush.msra.mxu0 %v76
    %493 = vmatmul.f32.gmra.mxu0 %v475
    %v494 = vpop.f32.mrf.mxu0
    %v495 = vadd.f32 %v84, %v494
    %496 = vdwg.mxu0
    %497 = vmatpush.msra.mxu0 0.0
    %498 = vmatpush.msra.mxu0 0.0
    %499 = vmatpush.msra.mxu0 0.0
    %500 = vmatpush.msra.mxu0 0.0
    %501 = vmatpush.msra.mxu0 0.0
    %502 = vmatpush.msra.mxu0 0.0
    %503 = vmatpush.msra.mxu0 0.0
    %504 = vmatpush.msra.mxu0 0.0
    %505 = vmatpush.msra.mxu0 0.0
    %506 = vmatpush.msra.mxu0 0.0
    %507 = vmatpush.msra.mxu0 0.0
    %508 = vmatpush.msra.mxu0 0.0
    %509 = vmatpush.msra.mxu0 %v81
    %510 = vmatpush.msra.mxu0 %v80
    %511 = vmatpush.msra.mxu0 %v79
    %512 = vmatpush.msra.mxu0 %v78
    %513 = vmatmul.f32.gmra.mxu0 %v251
    %v514 = vpop.f32.mrf.mxu0
    %v515 = vadd.f32 %v88, %v514
    %516 = vdwg.mxu0
    %v517 = vadd.f32 %v495, %v515
    %v518 = vxor.u32 %v517, 2147483648
    %v519 = vmul.f32 %v518, 1.442695
    %v520 = vpow.pop %v519
    %v521 = vadd.f32 %v520, 1.0
    %v522 = vrcp.pop %v521
    %v523 = vmul.f32 %v521, %v522
    %v524 = vsub.f32 1.0, %v523
    %v525 = vmul.f32 %v522, %v524
    %v526 = vadd.f32 %v522, %v525
    %vm527 = vweird.f32 %v521
    %vm528 = vweird.f32 %v522
    %vm529 = vmor %vm527, %vm528
    %v530 = vsel %vm529, %v522, %v526
    %v531 = vand.u32 2147483647, %v521
    %vm532 = vcmp.eq.f32.partialorder %v531, 8.507059e+37
    %v533 = vand.u32 %v521, 2147483648
    %v534 = vor.u32 1.1754944e-38, %v533
    %v535 = vsel %vm532, %v534, %v530
    %v536 = vmul.f32 1.0, %v535
    %538 = vrot.lane.b32.xlu0 %v515, 64
    %v539 = vpop.permute.xlu0 %538
    %v541 = vmul.f32 %v536, %v539
    %543 = vrot.lane.b32.xlu0 %v541, 64
    %v544 = vpop.permute.xlu0 %543
    %v546 = vadd.f32 %v495, %v544
    %v547 = vtanh.pop %v546
    %v548 = vsub.f32 1.0, %v536
    %550 = vrot.lane.b32.xlu0 %v547, 96
    %v551 = vpop.permute.xlu0 %550
    %v553 = vmul.f32 %v548, %v551
    %v554 = vmul.f32 %v536, %v247
    %v555 = vadd.f32 %v553, %v554
    %557 = vrot.lane.b32.xlu0 %v555, 96
    %v558 = vpop.permute.xlu0 %557
    %v559 = vsel %vm182, %v558, 0
    %561 = vmatpush.msra.mxu0 0.0
    %562 = vmatpush.msra.mxu0 0.0
    %563 = vmatpush.msra.mxu0 0.0
    %564 = vmatpush.msra.mxu0 0.0
    %565 = vmatpush.msra.mxu0 0.0
    %566 = vmatpush.msra.mxu0 0.0
    %567 = vmatpush.msra.mxu0 0.0
    %568 = vmatpush.msra.mxu0 0.0
    %569 = vmatpush.msra.mxu0 0.0
    %570 = vmatpush.msra.mxu0 0.0
    %571 = vmatpush.msra.mxu0 0.0
    %572 = vmatpush.msra.mxu0 0.0
    %573 = vmatpush.msra.mxu0 %v93
    %574 = vmatpush.msra.mxu0 %v92
    %575 = vmatpush.msra.mxu0 %v91
    %576 = vmatpush.msra.mxu0 %v90
    %577 = vmatmul.f32.gmra.mxu0 %v559
    %v578 = vpop.f32.mrf.mxu0
    %v579 = vadd.f32 %v100, %v578
    %580 = vdwg.mxu0
    %581 = vmatpush.msra.mxu0 0.0
    %582 = vmatpush.msra.mxu0 0.0
    %583 = vmatpush.msra.mxu0 0.0
    %584 = vmatpush.msra.mxu0 0.0
    %585 = vmatpush.msra.mxu0 0.0
    %586 = vmatpush.msra.mxu0 0.0
    %587 = vmatpush.msra.mxu0 0.0
    %588 = vmatpush.msra.mxu0 0.0
    %589 = vmatpush.msra.mxu0 0.0
    %590 = vmatpush.msra.mxu0 0.0
    %591 = vmatpush.msra.mxu0 0.0
    %592 = vmatpush.msra.mxu0 0.0
    %593 = vmatpush.msra.mxu0 %v97
    %594 = vmatpush.msra.mxu0 %v96
    %595 = vmatpush.msra.mxu0 %v95
    %596 = vmatpush.msra.mxu0 %v94
    %597 = vmatmul.f32.gmra.mxu0 %v341
    %v598 = vpop.f32.mrf.mxu0
    %v599 = vadd.f32 %v104, %v598
    %600 = vdwg.mxu0
    %v601 = vadd.f32 %v579, %v599
    %v602 = vxor.u32 %v601, 2147483648
    %v603 = vmul.f32 %v602, 1.442695
    %v604 = vpow.pop %v603
    %v605 = vadd.f32 %v604, 1.0
    %v606 = vrcp.pop %v605
    %v607 = vmul.f32 %v605, %v606
    %v608 = vsub.f32 1.0, %v607
    %v609 = vmul.f32 %v606, %v608
    %v610 = vadd.f32 %v606, %v609
    %vm611 = vweird.f32 %v605
    %vm612 = vweird.f32 %v606
    %vm613 = vmor %vm611, %vm612
    %v614 = vsel %vm613, %v606, %v610
    %v615 = vand.u32 2147483647, %v605
    %vm616 = vcmp.eq.f32.partialorder %v615, 8.507059e+37
    %v617 = vand.u32 %v605, 2147483648
    %v618 = vor.u32 1.1754944e-38, %v617
    %v619 = vsel %vm616, %v618, %v614
    %v620 = vmul.f32 1.0, %v619
    %622 = vrot.lane.b32.xlu0 %v599, 64
    %v623 = vpop.permute.xlu0 %622
    %v625 = vmul.f32 %v620, %v623
    %627 = vrot.lane.b32.xlu0 %v625, 64
    %v628 = vpop.permute.xlu0 %627
    %v630 = vadd.f32 %v579, %v628
    %v631 = vtanh.pop %v630
    %v632 = vsub.f32 1.0, %v620
    %634 = vrot.lane.b32.xlu0 %v631, 96
    %v635 = vpop.permute.xlu0 %634
    %v637 = vmul.f32 %v632, %v635
    %v638 = vmul.f32 %v620, %v337
    %v639 = vadd.f32 %v637, %v638
    %641 = vrot.lane.b32.xlu0 %v639, 96
    %v642 = vpop.permute.xlu0 %641
    %v643 = vsel %vm182, %v642, 0
    %645 = vmatpush.msra.mxu0 0.0
    %646 = vmatpush.msra.mxu0 0.0
    %647 = vmatpush.msra.mxu0 0.0
    %648 = vmatpush.msra.mxu0 0.0
    %649 = vmatpush.msra.mxu0 0.0
    %650 = vmatpush.msra.mxu0 0.0
    %651 = vmatpush.msra.mxu0 0.0
    %652 = vmatpush.msra.mxu0 0.0
    %653 = vmatpush.msra.mxu0 0.0
    %654 = vmatpush.msra.mxu0 0.0
    %655 = vmatpush.msra.mxu0 0.0
    %656 = vmatpush.msra.mxu0 0.0
    %657 = vmatpush.msra.mxu0 %v109
    %658 = vmatpush.msra.mxu0 %v108
    %659 = vmatpush.msra.mxu0 %v107
    %660 = vmatpush.msra.mxu0 %v106
    %661 = vmatmul.f32.gmra.mxu0 %v643
    %v662 = vpop.f32.mrf.mxu0
    %v663 = vadd.f32 %v112, %v662
    %664 = vdwg.mxu0
    %v666 = vsel %vm363, %v663, 0
    %668 = vmatpush.msra.mxu0 0.0
    %669 = vmatpush.msra.mxu0 0.0
    %670 = vmatpush.msra.mxu0 0.0
    %671 = vmatpush.msra.mxu0 0.0
    %672 = vmatpush.msra.mxu0 0.0
    %673 = vmatpush.msra.mxu0 0.0
    %674 = vmatpush.msra.mxu0 0.0
    %675 = vmatpush.msra.mxu0 0.0
    %676 = vmatpush.msra.mxu0 %v121
    %677 = vmatpush.msra.mxu0 %v120
    %678 = vmatpush.msra.mxu0 %v119
    %679 = vmatpush.msra.mxu0 %v118
    %680 = vmatpush.msra.mxu0 %v117
    %681 = vmatpush.msra.mxu0 %v116
    %682 = vmatpush.msra.mxu0 %v115
    %683 = vmatpush.msra.mxu0 %v114
    %684 = vmatmul.f32.gmra.mxu0 %v666
    %v685 = vpop.f32.mrf.mxu0
    %v686 = vadd.f32 %v124, %v685
    %687 = vdwg.mxu0
    %688 = vmatpush.msra.mxu0 %v141
    %689 = vmatpush.msra.mxu0 %v140
    %690 = vmatpush.msra.mxu0 %v139
    %691 = vmatpush.msra.mxu0 %v138
    %692 = vmatpush.msra.mxu0 %v137
    %693 = vmatpush.msra.mxu0 %v136
    %694 = vmatpush.msra.mxu0 %v135
    %695 = vmatpush.msra.mxu0 %v134
    %696 = vmatpush.msra.mxu0 %v133
    %697 = vmatpush.msra.mxu0 %v132
    %698 = vmatpush.msra.mxu0 %v131
    %699 = vmatpush.msra.mxu0 %v130
    %700 = vmatpush.msra.mxu0 %v129
    %701 = vmatpush.msra.mxu0 %v128
    %702 = vmatpush.msra.mxu0 %v127
    %703 = vmatpush.msra.mxu0 %v126
    %704 = vmatmul.f32.gmra.mxu0 %v686
    %v705 = vpop.f32.mrf.mxu0
    %v706 = vadd.f32 %v144, %v705
    %707 = vdwg.mxu0
    %s708 = scalar_lea.vmem [#allocation5], 4
    %709 = vst [vmem:[%s708] sm:$0x3] %v706
    %v710 = vsel %vm409, %v706, -inf
    %711 = vmax.xlane.f32.xlu0 %v710
    %v712 = vpop.xlane.xlu0 %711
    %vm713 = vcmp.eq.f32.partialorder %v706, %v712
    %v714 = vsel %vm713, %v414, 128
    %v715 = vsel %vm409, %v714, 2147483647
    %v716 = vand.u32 %v715, 65535
    %v717 = vshra.s32 %v715, 16
    %v718 = vcvt.s32.f32 %v716
    %v719 = vcvt.s32.f32 %v717
    %720 = vmin.xlane.f32.xlu0 %v719
    %v721 = vpop.xlane.xlu0 %720
    %vm722 = vcmp.eq.f32.partialorder %v719, %v721
    %v723 = vsel %vm722, %v718, inf
    %724 = vmin.xlane.f32.xlu0 %v723
    %v725 = vpop.xlane.xlu0 %724
    %v726 = vcvt.f32.s32 %v725
    %v727 = vcvt.f32.s32 %v721
    %v728 = vshll.u32 %v727, 16
    %v729 = vadd.s32 %v728, %v726
    %s730 = sld [smem:[#allocation2 + $0x1]]
    %p731 = scmp.gt.s32.totalorder %s730, 0
    %s732 = scalar_select %p731, 1, 0
    %s733 = scvt.s32.f32 %s732
    %vm734 = vcmp.eq.s32.totalorder %v414, %v729
    %v735 = vsel %vm734, 1, 0
    %v736 = vcvt.s32.f32 %v735
    %v738 = vsel %vm439, %v736, 0
    %740 = vmatpush.msra.mxu0 0.0
    %741 = vmatpush.msra.mxu0 0.0
    %742 = vmatpush.msra.mxu0 0.0
    %743 = vmatpush.msra.mxu0 0.0
    %744 = vmatpush.msra.mxu0 0.0
    %745 = vmatpush.msra.mxu0 0.0
    %746 = vmatpush.msra.mxu0 0.0
    %747 = vmatpush.msra.mxu0 0.0
    %748 = vmatpush.msra.mxu0 0.0
    %749 = vmatpush.msra.mxu0 %v444
    %750 = vmatpush.msra.mxu0 %v151
    %751 = vmatpush.msra.mxu0 %v150
    %752 = vmatpush.msra.mxu0 %v149
    %753 = vmatpush.msra.mxu0 %v148
    %754 = vmatpush.msra.mxu0 %v147
    %755 = vmatpush.msra.mxu0 %v146
    %756 = vmatmul.f32.gmra.mxu0 %v738
    %v757 = vpop.f32.mrf.mxu0
    %v758 = vadd.f32 0.0, %v757
    %759 = vdwg.mxu0
    %s760 = scalar_lea.vmem %s1, 4
    %v761 = vld [vmem:[%s760] sm:$0x3]
    %v762 = vstv %s733
    %v763 = vmul.f32 %v762, %v761
    %s764 = ssub.f32 1.0, %s733
    %v765 = vstv %s764
    %v766 = vmul.f32 %v765, %v758
    %v767 = vadd.f32 %v763, %v766
    %v769 = vsel %vm158, %v767, 0
    %771 = vmatpush.msra.mxu0 0.0
    %772 = vmatpush.msra.mxu0 0.0
    %773 = vmatpush.msra.mxu0 0.0
    %774 = vmatpush.msra.mxu0 0.0
    %775 = vmatpush.msra.mxu0 0.0
    %776 = vmatpush.msra.mxu0 0.0
    %777 = vmatpush.msra.mxu0 0.0
    %778 = vmatpush.msra.mxu0 0.0
    %779 = vmatpush.msra.mxu0 0.0
    %780 = vmatpush.msra.mxu0 0.0
    %781 = vmatpush.msra.mxu0 0.0
    %782 = vmatpush.msra.mxu0 0.0
    %783 = vmatpush.msra.mxu0 0.0
    %784 = vmatpush.msra.mxu0 0.0
    %785 = vmatpush.msra.mxu0 %v77
    %786 = vmatpush.msra.mxu0 %v76
    %787 = vmatmul.f32.gmra.mxu0 %v769
    %v788 = vpop.f32.mrf.mxu0
    %v789 = vadd.f32 %v84, %v788
    %790 = vdwg.mxu0
    %791 = vmatpush.msra.mxu0 0.0
    %792 = vmatpush.msra.mxu0 0.0
    %793 = vmatpush.msra.mxu0 0.0
    %794 = vmatpush.msra.mxu0 0.0
    %795 = vmatpush.msra.mxu0 0.0
    %796 = vmatpush.msra.mxu0 0.0
    %797 = vmatpush.msra.mxu0 0.0
    %798 = vmatpush.msra.mxu0 0.0
    %799 = vmatpush.msra.mxu0 0.0
    %800 = vmatpush.msra.mxu0 0.0
    %801 = vmatpush.msra.mxu0 0.0
    %802 = vmatpush.msra.mxu0 0.0
    %803 = vmatpush.msra.mxu0 %v81
    %804 = vmatpush.msra.mxu0 %v80
    %805 = vmatpush.msra.mxu0 %v79
    %806 = vmatpush.msra.mxu0 %v78
    %807 = vmatmul.f32.gmra.mxu0 %v559
    %v808 = vpop.f32.mrf.mxu0
    %v809 = vadd.f32 %v88, %v808
    %810 = vdwg.mxu0
    %v811 = vadd.f32 %v789, %v809
    %v812 = vxor.u32 %v811, 2147483648
    %v813 = vmul.f32 %v812, 1.442695
    %v814 = vpow.pop %v813
    %v815 = vadd.f32 %v814, 1.0
    %v816 = vrcp.pop %v815
    %v817 = vmul.f32 %v815, %v816
    %v818 = vsub.f32 1.0, %v817
    %v819 = vmul.f32 %v816, %v818
    %v820 = vadd.f32 %v816, %v819
    %vm821 = vweird.f32 %v815
    %vm822 = vweird.f32 %v816
    %vm823 = vmor %vm821, %vm822
    %v824 = vsel %vm823, %v816, %v820
    %v825 = vand.u32 2147483647, %v815
    %vm826 = vcmp.eq.f32.partialorder %v825, 8.507059e+37
    %v827 = vand.u32 %v815, 2147483648
    %v828 = vor.u32 1.1754944e-38, %v827
    %v829 = vsel %vm826, %v828, %v824
    %v830 = vmul.f32 1.0, %v829
    %832 = vrot.lane.b32.xlu0 %v809, 64
    %v833 = vpop.permute.xlu0 %832
    %v835 = vmul.f32 %v830, %v833
    %837 = vrot.lane.b32.xlu0 %v835, 64
    %v838 = vpop.permute.xlu0 %837
    %v840 = vadd.f32 %v789, %v838
    %v841 = vtanh.pop %v840
    %v842 = vsub.f32 1.0, %v830
    %844 = vrot.lane.b32.xlu0 %v841, 96
    %v845 = vpop.permute.xlu0 %844
    %v847 = vmul.f32 %v842, %v845
    %v848 = vmul.f32 %v830, %v555
    %v849 = vadd.f32 %v847, %v848
    %851 = vrot.lane.b32.xlu0 %v849, 96
    %v852 = vpop.permute.xlu0 %851
    %v853 = vsel %vm182, %v852, 0
    %855 = vmatpush.msra.mxu0 0.0
    %856 = vmatpush.msra.mxu0 0.0
    %857 = vmatpush.msra.mxu0 0.0
    %858 = vmatpush.msra.mxu0 0.0
    %859 = vmatpush.msra.mxu0 0.0
    %860 = vmatpush.msra.mxu0 0.0
    %861 = vmatpush.msra.mxu0 0.0
    %862 = vmatpush.msra.mxu0 0.0
    %863 = vmatpush.msra.mxu0 0.0
    %864 = vmatpush.msra.mxu0 0.0
    %865 = vmatpush.msra.mxu0 0.0
    %866 = vmatpush.msra.mxu0 0.0
    %867 = vmatpush.msra.mxu0 %v93
    %868 = vmatpush.msra.mxu0 %v92
    %869 = vmatpush.msra.mxu0 %v91
    %870 = vmatpush.msra.mxu0 %v90
    %871 = vmatmul.f32.gmra.mxu0 %v853
    %v872 = vpop.f32.mrf.mxu0
    %v873 = vadd.f32 %v100, %v872
    %874 = vdwg.mxu0
    %875 = vmatpush.msra.mxu0 0.0
    %876 = vmatpush.msra.mxu0 0.0
    %877 = vmatpush.msra.mxu0 0.0
    %878 = vmatpush.msra.mxu0 0.0
    %879 = vmatpush.msra.mxu0 0.0
    %880 = vmatpush.msra.mxu0 0.0
    %881 = vmatpush.msra.mxu0 0.0
    %882 = vmatpush.msra.mxu0 0.0
    %883 = vmatpush.msra.mxu0 0.0
    %884 = vmatpush.msra.mxu0 0.0
    %885 = vmatpush.msra.mxu0 0.0
    %886 = vmatpush.msra.mxu0 0.0
    %887 = vmatpush.msra.mxu0 %v97
    %888 = vmatpush.msra.mxu0 %v96
    %889 = vmatpush.msra.mxu0 %v95
    %890 = vmatpush.msra.mxu0 %v94
    %891 = vmatmul.f32.gmra.mxu0 %v643
    %v892 = vpop.f32.mrf.mxu0
    %v893 = vadd.f32 %v104, %v892
    %894 = vdwg.mxu0
    %v895 = vadd.f32 %v873, %v893
    %v896 = vxor.u32 %v895, 2147483648
    %v897 = vmul.f32 %v896, 1.442695
    %v898 = vpow.pop %v897
    %v899 = vadd.f32 %v898, 1.0
    %v900 = vrcp.pop %v899
    %v901 = vmul.f32 %v899, %v900
    %v902 = vsub.f32 1.0, %v901
    %v903 = vmul.f32 %v900, %v902
    %v904 = vadd.f32 %v900, %v903
    %vm905 = vweird.f32 %v899
    %vm906 = vweird.f32 %v900
    %vm907 = vmor %vm905, %vm906
    %v908 = vsel %vm907, %v900, %v904
    %v909 = vand.u32 2147483647, %v899
    %vm910 = vcmp.eq.f32.partialorder %v909, 8.507059e+37
    %v911 = vand.u32 %v899, 2147483648
    %v912 = vor.u32 1.1754944e-38, %v911
    %v913 = vsel %vm910, %v912, %v908
    %v914 = vmul.f32 1.0, %v913
    %916 = vrot.lane.b32.xlu0 %v893, 64
    %v917 = vpop.permute.xlu0 %916
    %v919 = vmul.f32 %v914, %v917
    %921 = vrot.lane.b32.xlu0 %v919, 64
    %v922 = vpop.permute.xlu0 %921
    %v924 = vadd.f32 %v873, %v922
    %v925 = vtanh.pop %v924
    %v926 = vsub.f32 1.0, %v914
    %928 = vrot.lane.b32.xlu0 %v925, 96
    %v929 = vpop.permute.xlu0 %928
    %v931 = vmul.f32 %v926, %v929
    %v932 = vmul.f32 %v914, %v639
    %v933 = vadd.f32 %v931, %v932
    %935 = vrot.lane.b32.xlu0 %v933, 96
    %v936 = vpop.permute.xlu0 %935
    %v937 = vsel %vm182, %v936, 0
    %939 = vmatpush.msra.mxu0 0.0
    %940 = vmatpush.msra.mxu0 0.0
    %941 = vmatpush.msra.mxu0 0.0
    %942 = vmatpush.msra.mxu0 0.0
    %943 = vmatpush.msra.mxu0 0.0
    %944 = vmatpush.msra.mxu0 0.0
    %945 = vmatpush.msra.mxu0 0.0
    %946 = vmatpush.msra.mxu0 0.0
    %947 = vmatpush.msra.mxu0 0.0
    %948 = vmatpush.msra.mxu0 0.0
    %949 = vmatpush.msra.mxu0 0.0
    %950 = vmatpush.msra.mxu0 0.0
    %951 = vmatpush.msra.mxu0 %v109
    %952 = vmatpush.msra.mxu0 %v108
    %953 = vmatpush.msra.mxu0 %v107
    %954 = vmatpush.msra.mxu0 %v106
    %955 = vmatmul.f32.gmra.mxu0 %v937
    %v956 = vpop.f32.mrf.mxu0
    %v957 = vadd.f32 %v112, %v956
    %958 = vdwg.mxu0
    %v960 = vsel %vm363, %v957, 0
    %962 = vmatpush.msra.mxu0 0.0
    %963 = vmatpush.msra.mxu0 0.0
    %964 = vmatpush.msra.mxu0 0.0
    %965 = vmatpush.msra.mxu0 0.0
    %966 = vmatpush.msra.mxu0 0.0
    %967 = vmatpush.msra.mxu0 0.0
    %968 = vmatpush.msra.mxu0 0.0
    %969 = vmatpush.msra.mxu0 0.0
    %970 = vmatpush.msra.mxu0 %v121
    %971 = vmatpush.msra.mxu0 %v120
    %972 = vmatpush.msra.mxu0 %v119
    %973 = vmatpush.msra.mxu0 %v118
    %974 = vmatpush.msra.mxu0 %v117
    %975 = vmatpush.msra.mxu0 %v116
    %976 = vmatpush.msra.mxu0 %v115
    %977 = vmatpush.msra.mxu0 %v114
    %978 = vmatmul.f32.gmra.mxu0 %v960
    %v979 = vpop.f32.mrf.mxu0
    %v980 = vadd.f32 %v124, %v979
    %981 = vdwg.mxu0
    %982 = vmatpush.msra.mxu0 %v141
    %983 = vmatpush.msra.mxu0 %v140
    %984 = vmatpush.msra.mxu0 %v139
    %985 = vmatpush.msra.mxu0 %v138
    %986 = vmatpush.msra.mxu0 %v137
    %987 = vmatpush.msra.mxu0 %v136
    %988 = vmatpush.msra.mxu0 %v135
    %989 = vmatpush.msra.mxu0 %v134
    %990 = vmatpush.msra.mxu0 %v133
    %991 = vmatpush.msra.mxu0 %v132
    %992 = vmatpush.msra.mxu0 %v131
    %993 = vmatpush.msra.mxu0 %v130
    %994 = vmatpush.msra.mxu0 %v129
    %995 = vmatpush.msra.mxu0 %v128
    %996 = vmatpush.msra.mxu0 %v127
    %997 = vmatpush.msra.mxu0 %v126
    %998 = vmatmul.f32.gmra.mxu0 %v980
    %v999 = vpop.f32.mrf.mxu0
    %v1000 = vadd.f32 %v144, %v999
    %1001 = vdwg.mxu0
    %s1002 = scalar_lea.vmem [#allocation5], 6
    %1003 = vst [vmem:[%s1002] sm:$0x3] %v1000
    %v1004 = vsel %vm409, %v1000, -inf
    %1005 = vmax.xlane.f32.xlu0 %v1004
    %v1006 = vpop.xlane.xlu0 %1005
    %vm1007 = vcmp.eq.f32.partialorder %v1000, %v1006
    %v1008 = vsel %vm1007, %v414, 128
    %v1009 = vsel %vm409, %v1008, 2147483647
    %v1010 = vand.u32 %v1009, 65535
    %v1011 = vshra.s32 %v1009, 16
    %v1012 = vcvt.s32.f32 %v1010
    %v1013 = vcvt.s32.f32 %v1011
    %1014 = vmin.xlane.f32.xlu0 %v1013
    %v1015 = vpop.xlane.xlu0 %1014
    %vm1016 = vcmp.eq.f32.partialorder %v1013, %v1015
    %v1017 = vsel %vm1016, %v1012, inf
    %1018 = vmin.xlane.f32.xlu0 %v1017
    %v1019 = vpop.xlane.xlu0 %1018
    %v1020 = vcvt.f32.s32 %v1019
    %v1021 = vcvt.f32.s32 %v1015
    %v1022 = vshll.u32 %v1021, 16
    %v1023 = vadd.s32 %v1022, %v1020
    %s1024 = sld [smem:[#allocation2 + $0x2]]
    %p1025 = scmp.gt.s32.totalorder %s1024, 0
    %s1026 = scalar_select %p1025, 1, 0
    %s1027 = scvt.s32.f32 %s1026
    %vm1028 = vcmp.eq.s32.totalorder %v414, %v1023
    %v1029 = vsel %vm1028, 1, 0
    %v1030 = vcvt.s32.f32 %v1029
    %v1032 = vsel %vm439, %v1030, 0
    %1034 = vmatpush.msra.mxu0 0.0
    %1035 = vmatpush.msra.mxu0 0.0
    %1036 = vmatpush.msra.mxu0 0.0
    %1037 = vmatpush.msra.mxu0 0.0
    %1038 = vmatpush.msra.mxu0 0.0
    %1039 = vmatpush.msra.mxu0 0.0
    %1040 = vmatpush.msra.mxu0 0.0
    %1041 = vmatpush.msra.mxu0 0.0
    %1042 = vmatpush.msra.mxu0 0.0
    %1043 = vmatpush.msra.mxu0 %v444
    %1044 = vmatpush.msra.mxu0 %v151
    %1045 = vmatpush.msra.mxu0 %v150
    %1046 = vmatpush.msra.mxu0 %v149
    %1047 = vmatpush.msra.mxu0 %v148
    %1048 = vmatpush.msra.mxu0 %v147
    %1049 = vmatpush.msra.mxu0 %v146
    %1050 = vmatmul.f32.gmra.mxu0 %v1032
    %v1051 = vpop.f32.mrf.mxu0
    %v1052 = vadd.f32 0.0, %v1051
    %1053 = vdwg.mxu0
    %s1054 = scalar_lea.vmem %s1, 6
    %v1055 = vld [vmem:[%s1054] sm:$0x3]
    %v1056 = vstv %s1027
    %v1057 = vmul.f32 %v1056, %v1055
    %s1058 = ssub.f32 1.0, %s1027
    %v1059 = vstv %s1058
    %v1060 = vmul.f32 %v1059, %v1052
    %v1061 = vadd.f32 %v1057, %v1060
    %v1063 = vsel %vm158, %v1061, 0
    %1065 = vmatpush.msra.mxu0 0.0
    %1066 = vmatpush.msra.mxu0 0.0
    %1067 = vmatpush.msra.mxu0 0.0
    %1068 = vmatpush.msra.mxu0 0.0
    %1069 = vmatpush.msra.mxu0 0.0
    %1070 = vmatpush.msra.mxu0 0.0
    %1071 = vmatpush.msra.mxu0 0.0
    %1072 = vmatpush.msra.mxu0 0.0
    %1073 = vmatpush.msra.mxu0 0.0
    %1074 = vmatpush.msra.mxu0 0.0
    %1075 = vmatpush.msra.mxu0 0.0
    %1076 = vmatpush.msra.mxu0 0.0
    %1077 = vmatpush.msra.mxu0 0.0
    %1078 = vmatpush.msra.mxu0 0.0
    %1079 = vmatpush.msra.mxu0 %v77
    %1080 = vmatpush.msra.mxu0 %v76
    %1081 = vmatmul.f32.gmra.mxu0 %v1063
    %v1082 = vpop.f32.mrf.mxu0
    %v1083 = vadd.f32 %v84, %v1082
    %1084 = vdwg.mxu0
    %1085 = vmatpush.msra.mxu0 0.0
    %1086 = vmatpush.msra.mxu0 0.0
    %1087 = vmatpush.msra.mxu0 0.0
    %1088 = vmatpush.msra.mxu0 0.0
    %1089 = vmatpush.msra.mxu0 0.0
    %1090 = vmatpush.msra.mxu0 0.0
    %1091 = vmatpush.msra.mxu0 0.0
    %1092 = vmatpush.msra.mxu0 0.0
    %1093 = vmatpush.msra.mxu0 0.0
    %1094 = vmatpush.msra.mxu0 0.0
    %1095 = vmatpush.msra.mxu0 0.0
    %1096 = vmatpush.msra.mxu0 0.0
    %1097 = vmatpush.msra.mxu0 %v81
    %1098 = vmatpush.msra.mxu0 %v80
    %1099 = vmatpush.msra.mxu0 %v79
    %1100 = vmatpush.msra.mxu0 %v78
    %1101 = vmatmul.f32.gmra.mxu0 %v853
    %v1102 = vpop.f32.mrf.mxu0
    %v1103 = vadd.f32 %v88, %v1102
    %1104 = vdwg.mxu0
    %v1105 = vadd.f32 %v1083, %v1103
    %v1106 = vxor.u32 %v1105, 2147483648
    %v1107 = vmul.f32 %v1106, 1.442695
    %v1108 = vpow.pop %v1107
    %v1109 = vadd.f32 %v1108, 1.0
    %v1110 = vrcp.pop %v1109
    %v1111 = vmul.f32 %v1109, %v1110
    %v1112 = vsub.f32 1.0, %v1111
    %v1113 = vmul.f32 %v1110, %v1112
    %v1114 = vadd.f32 %v1110, %v1113
    %vm1115 = vweird.f32 %v1109
    %vm1116 = vweird.f32 %v1110
    %vm1117 = vmor %vm1115, %vm1116
    %v1118 = vsel %vm1117, %v1110, %v1114
    %v1119 = vand.u32 2147483647, %v1109
    %vm1120 = vcmp.eq.f32.partialorder %v1119, 8.507059e+37
    %v1121 = vand.u32 %v1109, 2147483648
    %v1122 = vor.u32 1.1754944e-38, %v1121
    %v1123 = vsel %vm1120, %v1122, %v1118
    %v1124 = vmul.f32 1.0, %v1123
    %1126 = vrot.lane.b32.xlu0 %v1103, 64
    %v1127 = vpop.permute.xlu0 %1126
    %v1129 = vmul.f32 %v1124, %v1127
    %1131 = vrot.lane.b32.xlu0 %v1129, 64
    %v1132 = vpop.permute.xlu0 %1131
    %v1134 = vadd.f32 %v1083, %v1132
    %v1135 = vtanh.pop %v1134
    %v1136 = vsub.f32 1.0, %v1124
    %1138 = vrot.lane.b32.xlu0 %v1135, 96
    %v1139 = vpop.permute.xlu0 %1138
    %v1141 = vmul.f32 %v1136, %v1139
    %v1142 = vmul.f32 %v1124, %v849
    %v1143 = vadd.f32 %v1141, %v1142
    %1145 = vrot.lane.b32.xlu0 %v1143, 96
    %v1146 = vpop.permute.xlu0 %1145
    %v1147 = vsel %vm182, %v1146, 0
    %1149 = vmatpush.msra.mxu0 0.0
    %1150 = vmatpush.msra.mxu0 0.0
    %1151 = vmatpush.msra.mxu0 0.0
    %1152 = vmatpush.msra.mxu0 0.0
    %1153 = vmatpush.msra.mxu0 0.0
    %1154 = vmatpush.msra.mxu0 0.0
    %1155 = vmatpush.msra.mxu0 0.0
    %1156 = vmatpush.msra.mxu0 0.0
    %1157 = vmatpush.msra.mxu0 0.0
    %1158 = vmatpush.msra.mxu0 0.0
    %1159 = vmatpush.msra.mxu0 0.0
    %1160 = vmatpush.msra.mxu0 0.0
    %1161 = vmatpush.msra.mxu0 %v93
    %1162 = vmatpush.msra.mxu0 %v92
    %1163 = vmatpush.msra.mxu0 %v91
    %1164 = vmatpush.msra.mxu0 %v90
    %1165 = vmatmul.f32.gmra.mxu0 %v1147
    %v1166 = vpop.f32.mrf.mxu0
    %v1167 = vadd.f32 %v100, %v1166
    %1168 = vdwg.mxu0
    %1169 = vmatpush.msra.mxu0 0.0
    %1170 = vmatpush.msra.mxu0 0.0
    %1171 = vmatpush.msra.mxu0 0.0
    %1172 = vmatpush.msra.mxu0 0.0
    %1173 = vmatpush.msra.mxu0 0.0
    %1174 = vmatpush.msra.mxu0 0.0
    %1175 = vmatpush.msra.mxu0 0.0
    %1176 = vmatpush.msra.mxu0 0.0
    %1177 = vmatpush.msra.mxu0 0.0
    %1178 = vmatpush.msra.mxu0 0.0
    %1179 = vmatpush.msra.mxu0 0.0
    %1180 = vmatpush.msra.mxu0 0.0
    %1181 = vmatpush.msra.mxu0 %v97
    %1182 = vmatpush.msra.mxu0 %v96
    %1183 = vmatpush.msra.mxu0 %v95
    %1184 = vmatpush.msra.mxu0 %v94
    %1185 = vmatmul.f32.gmra.mxu0 %v937
    %v1186 = vpop.f32.mrf.mxu0
    %v1187 = vadd.f32 %v104, %v1186
    %1188 = vdwg.mxu0
    %v1189 = vadd.f32 %v1167, %v1187
    %v1190 = vxor.u32 %v1189, 2147483648
    %v1191 = vmul.f32 %v1190, 1.442695
    %v1192 = vpow.pop %v1191
    %v1193 = vadd.f32 %v1192, 1.0
    %v1194 = vrcp.pop %v1193
    %v1195 = vmul.f32 %v1193, %v1194
    %v1196 = vsub.f32 1.0, %v1195
    %v1197 = vmul.f32 %v1194, %v1196
    %v1198 = vadd.f32 %v1194, %v1197
    %vm1199 = vweird.f32 %v1193
    %vm1200 = vweird.f32 %v1194
    %vm1201 = vmor %vm1199, %vm1200
    %v1202 = vsel %vm1201, %v1194, %v1198
    %v1203 = vand.u32 2147483647, %v1193
    %vm1204 = vcmp.eq.f32.partialorder %v1203, 8.507059e+37
    %v1205 = vand.u32 %v1193, 2147483648
    %v1206 = vor.u32 1.1754944e-38, %v1205
    %v1207 = vsel %vm1204, %v1206, %v1202
    %v1208 = vmul.f32 1.0, %v1207
    %1210 = vrot.lane.b32.xlu0 %v1187, 64
    %v1211 = vpop.permute.xlu0 %1210
    %v1213 = vmul.f32 %v1208, %v1211
    %1215 = vrot.lane.b32.xlu0 %v1213, 64
    %v1216 = vpop.permute.xlu0 %1215
    %v1218 = vadd.f32 %v1167, %v1216
    %v1219 = vtanh.pop %v1218
    %v1220 = vsub.f32 1.0, %v1208
    %1222 = vrot.lane.b32.xlu0 %v1219, 96
    %v1223 = vpop.permute.xlu0 %1222
    %v1225 = vmul.f32 %v1220, %v1223
    %v1226 = vmul.f32 %v1208, %v933
    %v1227 = vadd.f32 %v1225, %v1226
    %1229 = vrot.lane.b32.xlu0 %v1227, 96
    %v1230 = vpop.permute.xlu0 %1229
    %v1231 = vsel %vm182, %v1230, 0
    %1233 = vmatpush.msra.mxu0 0.0
    %1234 = vmatpush.msra.mxu0 0.0
    %1235 = vmatpush.msra.mxu0 0.0
    %1236 = vmatpush.msra.mxu0 0.0
    %1237 = vmatpush.msra.mxu0 0.0
    %1238 = vmatpush.msra.mxu0 0.0
    %1239 = vmatpush.msra.mxu0 0.0
    %1240 = vmatpush.msra.mxu0 0.0
    %1241 = vmatpush.msra.mxu0 0.0
    %1242 = vmatpush.msra.mxu0 0.0
    %1243 = vmatpush.msra.mxu0 0.0
    %1244 = vmatpush.msra.mxu0 0.0
    %1245 = vmatpush.msra.mxu0 %v109
    %1246 = vmatpush.msra.mxu0 %v108
    %1247 = vmatpush.msra.mxu0 %v107
    %1248 = vmatpush.msra.mxu0 %v106
    %1249 = vmatmul.f32.gmra.mxu0 %v1231
    %v1250 = vpop.f32.mrf.mxu0
    %v1251 = vadd.f32 %v112, %v1250
    %1252 = vdwg.mxu0
    %v1254 = vsel %vm363, %v1251, 0
    %1256 = vmatpush.msra.mxu0 0.0
    %1257 = vmatpush.msra.mxu0 0.0
    %1258 = vmatpush.msra.mxu0 0.0
    %1259 = vmatpush.msra.mxu0 0.0
    %1260 = vmatpush.msra.mxu0 0.0
    %1261 = vmatpush.msra.mxu0 0.0
    %1262 = vmatpush.msra.mxu0 0.0
    %1263 = vmatpush.msra.mxu0 0.0
    %1264 = vmatpush.msra.mxu0 %v121
    %1265 = vmatpush.msra.mxu0 %v120
    %1266 = vmatpush.msra.mxu0 %v119
    %1267 = vmatpush.msra.mxu0 %v118
    %1268 = vmatpush.msra.mxu0 %v117
    %1269 = vmatpush.msra.mxu0 %v116
    %1270 = vmatpush.msra.mxu0 %v115
    %1271 = vmatpush.msra.mxu0 %v114
    %1272 = vmatmul.f32.gmra.mxu0 %v1254
    %v1273 = vpop.f32.mrf.mxu0
    %v1274 = vadd.f32 %v124, %v1273
    %1275 = vdwg.mxu0
    %1276 = vmatpush.msra.mxu0 %v141
    %1277 = vmatpush.msra.mxu0 %v140
    %1278 = vmatpush.msra.mxu0 %v139
    %1279 = vmatpush.msra.mxu0 %v138
    %1280 = vmatpush.msra.mxu0 %v137
    %1281 = vmatpush.msra.mxu0 %v136
    %1282 = vmatpush.msra.mxu0 %v135
    %1283 = vmatpush.msra.mxu0 %v134
    %1284 = vmatpush.msra.mxu0 %v133
    %1285 = vmatpush.msra.mxu0 %v132
    %1286 = vmatpush.msra.mxu0 %v131
    %1287 = vmatpush.msra.mxu0 %v130
    %1288 = vmatpush.msra.mxu0 %v129
    %1289 = vmatpush.msra.mxu0 %v128
    %1290 = vmatpush.msra.mxu0 %v127
    %1291 = vmatpush.msra.mxu0 %v126
    %1292 = vmatmul.f32.gmra.mxu0 %v1274
    %v1293 = vpop.f32.mrf.mxu0
    %v1294 = vadd.f32 %v144, %v1293
    %1295 = vdwg.mxu0
    %s1296 = scalar_lea.vmem [#allocation5], 8
    %1297 = vst [vmem:[%s1296] sm:$0x3] %v1294
    %v1298 = vsel %vm409, %v1294, -inf
    %1299 = vmax.xlane.f32.xlu0 %v1298
    %v1300 = vpop.xlane.xlu0 %1299
    %vm1301 = vcmp.eq.f32.partialorder %v1294, %v1300
    %v1302 = vsel %vm1301, %v414, 128
    %v1303 = vsel %vm409, %v1302, 2147483647
    %v1304 = vand.u32 %v1303, 65535
    %v1305 = vshra.s32 %v1303, 16
    %v1306 = vcvt.s32.f32 %v1304
    %v1307 = vcvt.s32.f32 %v1305
    %1308 = vmin.xlane.f32.xlu0 %v1307
    %v1309 = vpop.xlane.xlu0 %1308
    %vm1310 = vcmp.eq.f32.partialorder %v1307, %v1309
    %v1311 = vsel %vm1310, %v1306, inf
    %1312 = vmin.xlane.f32.xlu0 %v1311
    %v1313 = vpop.xlane.xlu0 %1312
    %v1314 = vcvt.f32.s32 %v1313
    %v1315 = vcvt.f32.s32 %v1309
    %v1316 = vshll.u32 %v1315, 16
    %v1317 = vadd.s32 %v1316, %v1314
    %s1318 = sld [smem:[#allocation2 + $0x3]]
    %p1319 = scmp.gt.s32.totalorder %s1318, 0
    %s1320 = scalar_select %p1319, 1, 0
    %s1321 = scvt.s32.f32 %s1320
    %vm1322 = vcmp.eq.s32.totalorder %v414, %v1317
    %v1323 = vsel %vm1322, 1, 0
    %v1324 = vcvt.s32.f32 %v1323
    %v1326 = vsel %vm439, %v1324, 0
    %1328 = vmatpush.msra.mxu0 0.0
    %1329 = vmatpush.msra.mxu0 0.0
    %1330 = vmatpush.msra.mxu0 0.0
    %1331 = vmatpush.msra.mxu0 0.0
    %1332 = vmatpush.msra.mxu0 0.0
    %1333 = vmatpush.msra.mxu0 0.0
    %1334 = vmatpush.msra.mxu0 0.0
    %1335 = vmatpush.msra.mxu0 0.0
    %1336 = vmatpush.msra.mxu0 0.0
    %1337 = vmatpush.msra.mxu0 %v444
    %1338 = vmatpush.msra.mxu0 %v151
    %1339 = vmatpush.msra.mxu0 %v150
    %1340 = vmatpush.msra.mxu0 %v149
    %1341 = vmatpush.msra.mxu0 %v148
    %1342 = vmatpush.msra.mxu0 %v147
    %1343 = vmatpush.msra.mxu0 %v146
    %1344 = vmatmul.f32.gmra.mxu0 %v1326
    %v1345 = vpop.f32.mrf.mxu0
    %v1346 = vadd.f32 0.0, %v1345
    %1347 = vdwg.mxu0
    %s1348 = scalar_lea.vmem %s1, 8
    %v1349 = vld [vmem:[%s1348] sm:$0x3]
    %v1350 = vstv %s1321
    %v1351 = vmul.f32 %v1350, %v1349
    %s1352 = ssub.f32 1.0, %s1321
    %v1353 = vstv %s1352
    %v1354 = vmul.f32 %v1353, %v1346
    %v1355 = vadd.f32 %v1351, %v1354
    %v1357 = vsel %vm158, %v1355, 0
    %1359 = vmatpush.msra.mxu0 0.0
    %1360 = vmatpush.msra.mxu0 0.0
    %1361 = vmatpush.msra.mxu0 0.0
    %1362 = vmatpush.msra.mxu0 0.0
    %1363 = vmatpush.msra.mxu0 0.0
    %1364 = vmatpush.msra.mxu0 0.0
    %1365 = vmatpush.msra.mxu0 0.0
    %1366 = vmatpush.msra.mxu0 0.0
    %1367 = vmatpush.msra.mxu0 0.0
    %1368 = vmatpush.msra.mxu0 0.0
    %1369 = vmatpush.msra.mxu0 0.0
    %1370 = vmatpush.msra.mxu0 0.0
    %1371 = vmatpush.msra.mxu0 0.0
    %1372 = vmatpush.msra.mxu0 0.0
    %1373 = vmatpush.msra.mxu0 %v77
    %1374 = vmatpush.msra.mxu0 %v76
    %1375 = vmatmul.f32.gmra.mxu0 %v1357
    %v1376 = vpop.f32.mrf.mxu0
    %v1377 = vadd.f32 %v84, %v1376
    %1378 = vdwg.mxu0
    %1379 = vmatpush.msra.mxu0 0.0
    %1380 = vmatpush.msra.mxu0 0.0
    %1381 = vmatpush.msra.mxu0 0.0
    %1382 = vmatpush.msra.mxu0 0.0
    %1383 = vmatpush.msra.mxu0 0.0
    %1384 = vmatpush.msra.mxu0 0.0
    %1385 = vmatpush.msra.mxu0 0.0
    %1386 = vmatpush.msra.mxu0 0.0
    %1387 = vmatpush.msra.mxu0 0.0
    %1388 = vmatpush.msra.mxu0 0.0
    %1389 = vmatpush.msra.mxu0 0.0
    %1390 = vmatpush.msra.mxu0 0.0
    %1391 = vmatpush.msra.mxu0 %v81
    %1392 = vmatpush.msra.mxu0 %v80
    %1393 = vmatpush.msra.mxu0 %v79
    %1394 = vmatpush.msra.mxu0 %v78
    %1395 = vmatmul.f32.gmra.mxu0 %v1147
    %v1396 = vpop.f32.mrf.mxu0
    %v1397 = vadd.f32 %v88, %v1396
    %1398 = vdwg.mxu0
    %v1399 = vadd.f32 %v1377, %v1397
    %v1400 = vxor.u32 %v1399, 2147483648
    %v1401 = vmul.f32 %v1400, 1.442695
    %v1402 = vpow.pop %v1401
    %v1403 = vadd.f32 %v1402, 1.0
    %v1404 = vrcp.pop %v1403
    %v1405 = vmul.f32 %v1403, %v1404
    %v1406 = vsub.f32 1.0, %v1405
    %v1407 = vmul.f32 %v1404, %v1406
    %v1408 = vadd.f32 %v1404, %v1407
    %vm1409 = vweird.f32 %v1403
    %vm1410 = vweird.f32 %v1404
    %vm1411 = vmor %vm1409, %vm1410
    %v1412 = vsel %vm1411, %v1404, %v1408
    %v1413 = vand.u32 2147483647, %v1403
    %vm1414 = vcmp.eq.f32.partialorder %v1413, 8.507059e+37
    %v1415 = vand.u32 %v1403, 2147483648
    %v1416 = vor.u32 1.1754944e-38, %v1415
    %v1417 = vsel %vm1414, %v1416, %v1412
    %v1418 = vmul.f32 1.0, %v1417
    %1420 = vrot.lane.b32.xlu0 %v1397, 64
    %v1421 = vpop.permute.xlu0 %1420
    %v1423 = vmul.f32 %v1418, %v1421
    %1425 = vrot.lane.b32.xlu0 %v1423, 64
    %v1426 = vpop.permute.xlu0 %1425
    %v1428 = vadd.f32 %v1377, %v1426
    %v1429 = vtanh.pop %v1428
    %v1430 = vsub.f32 1.0, %v1418
    %1432 = vrot.lane.b32.xlu0 %v1429, 96
    %v1433 = vpop.permute.xlu0 %1432
    %v1435 = vmul.f32 %v1430, %v1433
    %v1436 = vmul.f32 %v1418, %v1143
    %v1437 = vadd.f32 %v1435, %v1436
    %1439 = vrot.lane.b32.xlu0 %v1437, 96
    %v1440 = vpop.permute.xlu0 %1439
    %v1441 = vsel %vm182, %v1440, 0
    %1443 = vmatpush.msra.mxu0 0.0
    %1444 = vmatpush.msra.mxu0 0.0
    %1445 = vmatpush.msra.mxu0 0.0
    %1446 = vmatpush.msra.mxu0 0.0
    %1447 = vmatpush.msra.mxu0 0.0
    %1448 = vmatpush.msra.mxu0 0.0
    %1449 = vmatpush.msra.mxu0 0.0
    %1450 = vmatpush.msra.mxu0 0.0
    %1451 = vmatpush.msra.mxu0 0.0
    %1452 = vmatpush.msra.mxu0 0.0
    %1453 = vmatpush.msra.mxu0 0.0
    %1454 = vmatpush.msra.mxu0 0.0
    %1455 = vmatpush.msra.mxu0 %v93
    %1456 = vmatpush.msra.mxu0 %v92
    %1457 = vmatpush.msra.mxu0 %v91
    %1458 = vmatpush.msra.mxu0 %v90
    %1459 = vmatmul.f32.gmra.mxu0 %v1441
    %v1460 = vpop.f32.mrf.mxu0
    %v1461 = vadd.f32 %v100, %v1460
    %1462 = vdwg.mxu0
    %1463 = vmatpush.msra.mxu0 0.0
    %1464 = vmatpush.msra.mxu0 0.0
    %1465 = vmatpush.msra.mxu0 0.0
    %1466 = vmatpush.msra.mxu0 0.0
    %1467 = vmatpush.msra.mxu0 0.0
    %1468 = vmatpush.msra.mxu0 0.0
    %1469 = vmatpush.msra.mxu0 0.0
    %1470 = vmatpush.msra.mxu0 0.0
    %1471 = vmatpush.msra.mxu0 0.0
    %1472 = vmatpush.msra.mxu0 0.0
    %1473 = vmatpush.msra.mxu0 0.0
    %1474 = vmatpush.msra.mxu0 0.0
    %1475 = vmatpush.msra.mxu0 %v97
    %1476 = vmatpush.msra.mxu0 %v96
    %1477 = vmatpush.msra.mxu0 %v95
    %1478 = vmatpush.msra.mxu0 %v94
    %1479 = vmatmul.f32.gmra.mxu0 %v1231
    %v1480 = vpop.f32.mrf.mxu0
    %v1481 = vadd.f32 %v104, %v1480
    %1482 = vdwg.mxu0
    %v1483 = vadd.f32 %v1461, %v1481
    %v1484 = vxor.u32 %v1483, 2147483648
    %v1485 = vmul.f32 %v1484, 1.442695
    %v1486 = vpow.pop %v1485
    %v1487 = vadd.f32 %v1486, 1.0
    %v1488 = vrcp.pop %v1487
    %v1489 = vmul.f32 %v1487, %v1488
    %v1490 = vsub.f32 1.0, %v1489
    %v1491 = vmul.f32 %v1488, %v1490
    %v1492 = vadd.f32 %v1488, %v1491
    %vm1493 = vweird.f32 %v1487
    %vm1494 = vweird.f32 %v1488
    %vm1495 = vmor %vm1493, %vm1494
    %v1496 = vsel %vm1495, %v1488, %v1492
    %v1497 = vand.u32 2147483647, %v1487
    %vm1498 = vcmp.eq.f32.partialorder %v1497, 8.507059e+37
    %v1499 = vand.u32 %v1487, 2147483648
    %v1500 = vor.u32 1.1754944e-38, %v1499
    %v1501 = vsel %vm1498, %v1500, %v1496
    %v1502 = vmul.f32 1.0, %v1501
    %1504 = vrot.lane.b32.xlu0 %v1481, 64
    %v1505 = vpop.permute.xlu0 %1504
    %v1507 = vmul.f32 %v1502, %v1505
    %1509 = vrot.lane.b32.xlu0 %v1507, 64
    %v1510 = vpop.permute.xlu0 %1509
    %v1512 = vadd.f32 %v1461, %v1510
    %v1513 = vtanh.pop %v1512
    %v1514 = vsub.f32 1.0, %v1502
    %1516 = vrot.lane.b32.xlu0 %v1513, 96
    %v1517 = vpop.permute.xlu0 %1516
    %v1519 = vmul.f32 %v1514, %v1517
    %v1520 = vmul.f32 %v1502, %v1227
    %v1521 = vadd.f32 %v1519, %v1520
    %1523 = vrot.lane.b32.xlu0 %v1521, 96
    %v1524 = vpop.permute.xlu0 %1523
    %v1525 = vsel %vm182, %v1524, 0
    %1527 = vmatpush.msra.mxu0 0.0
    %1528 = vmatpush.msra.mxu0 0.0
    %1529 = vmatpush.msra.mxu0 0.0
    %1530 = vmatpush.msra.mxu0 0.0
    %1531 = vmatpush.msra.mxu0 0.0
    %1532 = vmatpush.msra.mxu0 0.0
    %1533 = vmatpush.msra.mxu0 0.0
    %1534 = vmatpush.msra.mxu0 0.0
    %1535 = vmatpush.msra.mxu0 0.0
    %1536 = vmatpush.msra.mxu0 0.0
    %1537 = vmatpush.msra.mxu0 0.0
    %1538 = vmatpush.msra.mxu0 0.0
    %1539 = vmatpush.msra.mxu0 %v109
    %1540 = vmatpush.msra.mxu0 %v108
    %1541 = vmatpush.msra.mxu0 %v107
    %1542 = vmatpush.msra.mxu0 %v106
    %1543 = vmatmul.f32.gmra.mxu0 %v1525
    %v1544 = vpop.f32.mrf.mxu0
    %v1545 = vadd.f32 %v112, %v1544
    %1546 = vdwg.mxu0
    %v1548 = vsel %vm363, %v1545, 0
    %1550 = vmatpush.msra.mxu0 0.0
    %1551 = vmatpush.msra.mxu0 0.0
    %1552 = vmatpush.msra.mxu0 0.0
    %1553 = vmatpush.msra.mxu0 0.0
    %1554 = vmatpush.msra.mxu0 0.0
    %1555 = vmatpush.msra.mxu0 0.0
    %1556 = vmatpush.msra.mxu0 0.0
    %1557 = vmatpush.msra.mxu0 0.0
    %1558 = vmatpush.msra.mxu0 %v121
    %1559 = vmatpush.msra.mxu0 %v120
    %1560 = vmatpush.msra.mxu0 %v119
    %1561 = vmatpush.msra.mxu0 %v118
    %1562 = vmatpush.msra.mxu0 %v117
    %1563 = vmatpush.msra.mxu0 %v116
    %1564 = vmatpush.msra.mxu0 %v115
    %1565 = vmatpush.msra.mxu0 %v114
    %1566 = vmatmul.f32.gmra.mxu0 %v1548
    %v1567 = vpop.f32.mrf.mxu0
    %v1568 = vadd.f32 %v124, %v1567
    %1569 = vdwg.mxu0
    %1570 = vmatpush.msra.mxu0 %v141
    %1571 = vmatpush.msra.mxu0 %v140
    %1572 = vmatpush.msra.mxu0 %v139
    %1573 = vmatpush.msra.mxu0 %v138
    %1574 = vmatpush.msra.mxu0 %v137
    %1575 = vmatpush.msra.mxu0 %v136
    %1576 = vmatpush.msra.mxu0 %v135
    %1577 = vmatpush.msra.mxu0 %v134
    %1578 = vmatpush.msra.mxu0 %v133
    %1579 = vmatpush.msra.mxu0 %v132
    %1580 = vmatpush.msra.mxu0 %v131
    %1581 = vmatpush.msra.mxu0 %v130
    %1582 = vmatpush.msra.mxu0 %v129
    %1583 = vmatpush.msra.mxu0 %v128
    %1584 = vmatpush.msra.mxu0 %v127
    %1585 = vmatpush.msra.mxu0 %v126
    %1586 = vmatmul.f32.gmra.mxu0 %v1568
    %v1587 = vpop.f32.mrf.mxu0
    %v1588 = vadd.f32 %v144, %v1587
    %1589 = vdwg.mxu0
    %s1590 = scalar_lea.vmem [#allocation5], 10
    %1591 = vst [vmem:[%s1590] sm:$0x3] %v1588
    %v1592 = vsel %vm409, %v1588, -inf
    %1593 = vmax.xlane.f32.xlu0 %v1592
    %v1594 = vpop.xlane.xlu0 %1593
    %vm1595 = vcmp.eq.f32.partialorder %v1588, %v1594
    %v1596 = vsel %vm1595, %v414, 128
    %v1597 = vsel %vm409, %v1596, 2147483647
    %v1598 = vand.u32 %v1597, 65535
    %v1599 = vshra.s32 %v1597, 16
    %v1600 = vcvt.s32.f32 %v1598
    %v1601 = vcvt.s32.f32 %v1599
    %1602 = vmin.xlane.f32.xlu0 %v1601
    %v1603 = vpop.xlane.xlu0 %1602
    %vm1604 = vcmp.eq.f32.partialorder %v1601, %v1603
    %v1605 = vsel %vm1604, %v1600, inf
    %1606 = vmin.xlane.f32.xlu0 %v1605
    %v1607 = vpop.xlane.xlu0 %1606
    %v1608 = vcvt.f32.s32 %v1607
    %v1609 = vcvt.f32.s32 %v1603
    %v1610 = vshll.u32 %v1609, 16
    %v1611 = vadd.s32 %v1610, %v1608
    %vm1612 = vcmask 7168
    %v1613 = vsel %vm1612, %v431, %v729
    %vm1614 = vcmask 15360
    %v1615 = vsel %vm1614, %v1613, %v1023
    %vm1616 = vcmask 23552
    %v1617 = vsel %vm1616, %v1615, %v1317
    %vm1618 = vcmask 31744
    %v1619 = vsel %vm1618, %v1617, %v1611
    %vm1620 = vcmask 33792
    %1621 = vst.msk [vmem:[#allocation6] sm:$0x3] %vm1620, %v1619
    // Predicated region
    $region78: #{seq2seq_forward.3} parent=1 // pred_check
      _
    $region79: #{seq2seq_forward.3} parent=1 // pred_check_branch
      %1623 = sbr.rel (0) target = $region81
    $region80: #{seq2seq_forward.3} parent=1 // pred_region
      %1625 = vsyncadd [#allocation3], 0
      %s1626 = sshll.u32 [#allocation5], 4
      %s1627 = int_to_ptr.vmem [resolvable:$true] %s1626
      %s1628 = sshll.u32 %s18, 4
      %s1629 = int_to_ptr.hbm [resolvable:$true] %s1628
      %1634 = dma.vmem_to_hbm [thread:$0]  %s1627, 192, %s1629, [#allocation3], 32, 32, 2
    $region81: #{seq2seq_forward.3} parent=1 // pred_fallthru
      _
    // Predicated region
    $region82: #{seq2seq_forward.3} parent=1 // pred_check
      _
    $region83: #{seq2seq_forward.3} parent=1 // pred_check_branch
      %1636 = sbr.rel (0) target = $region85
    $region84: #{seq2seq_forward.3} parent=1 // pred_region
      %1638 = vsyncadd [#allocation7], 0
      %s1640 = sshll.u32 [#allocation6], 4
      %s1641 = int_to_ptr.vmem [resolvable:$true] %s1640
      %s1642 = sshll.u32 %s19, 4
      %s1643 = int_to_ptr.hbm [resolvable:$true] %s1642
      %1645 = dma.vmem_to_hbm [thread:$0]  %s1641, 32, %s1643, [#allocation7]
    $region85: #{seq2seq_forward.3} parent=1 // pred_fallthru
      _
    // Predicated region
    $region86: #{seq2seq_forward.3} parent=1 // pred_check
      _
    $region87: #{seq2seq_forward.3} parent=1 // pred_check_branch
      %1647 = sbr.rel (0) target = $region89
    $region88: #{seq2seq_forward.3} parent=1 // pred_region
      %1649 = dma.done [#allocation3], 192
    $region89: #{seq2seq_forward.3} parent=1 // pred_fallthru
      _
    // Predicated region
    $region90: #{seq2seq_forward.3} parent=1 // pred_check
      _
    $region91: #{seq2seq_forward.3} parent=1 // pred_check_branch
      %1651 = sbr.rel (0) target = $region93
    $region92: #{seq2seq_forward.3} parent=1 // pred_region
      %1653 = dma.done [#allocation7], 32
    $region93: #{seq2seq_forward.3} parent=1 // pred_fallthru
      _
    %1654 = vsyncpa [#allocation3], 1
    %1655 = vsyncpa [#allocation7], 1
    %1656 = vsyncpa [#allocation4], 1

// kernel: seq2seq_forward.2
$region0: #{seq2seq_forward.2}
  #allocation0 [shape = 'u32[]', space=smem, size = 0x4, offset = 0x4, fixed_abs, tag = 'smem constant byte address 0x4 - core index']
  #allocation1 [shape = 'u32[72,128]{1,0:T(1,128)}', space=vmem, size = 0x9000, scoped, tag = 'internal scratch']
  %s0 = inlined_call_operand.vmem [shape: f32[8,2,16], index: 0, kind: input, shape index: {}]
  %s1 = inlined_call_operand.vmem [shape: f32[2,16,48], index: 1, kind: input, shape index: {}]
  %s2 = inlined_call_operand.vmem [shape: f32[2,16,48], index: 2, kind: input, shape index: {}]
  %s3 = inlined_call_operand.vmem [shape: f32[2,1,48], index: 3, kind: input, shape index: {}]
  %s4 = inlined_call_operand.vmem [shape: f32[2,1,48], index: 4, kind: input, shape index: {}]
  %s5 = inlined_call_operand.vmem [shape: f32[2,32,48], index: 5, kind: input, shape index: {}]
  %s6 = inlined_call_operand.vmem [shape: f32[2,16,48], index: 6, kind: input, shape index: {}]
  %s7 = inlined_call_operand.vmem [shape: f32[2,1,48], index: 7, kind: input, shape index: {}]
  %s8 = inlined_call_operand.vmem [shape: f32[2,1,48], index: 8, kind: input, shape index: {}]
  %s9 = inlined_call_operand.hbm [shape: f32[8,2,32], index: 9, kind: output, shape index: {0}]
  %s10 = inlined_call_operand.vmem [shape: f32[2,2,32], index: 10, kind: output, shape index: {1}]
  %11 = xla_tuple %s9, %s10
  %s12 = sld [smem:[#allocation0]]
  $region54: #{seq2seq_forward.2} parent=0
    _
  %s14 = ssub.s32 1, %s12
  %s15 = scalar_select 0, %s14, %s12
  $region1: #{seq2seq_forward.2} parent=0
    #allocation2 [shape = 'u8[8192]{0}', space=vmem, size = 0x2000, scoped, tag = 'output window, operand 0, single buffered']
    #allocation3 [shape = 's32[1]{0}', space=sflag, size = 0x4, scoped, tag = 'scoped memory for seq2seq_forward.2']
    %16 = vsyncpa [#allocation3], 0
    // Predicated region
    $region2: #{seq2seq_forward.2} parent=1 // pred_check
      _
    $region3: #{seq2seq_forward.2} parent=1 // pred_check_branch
      %18 = sbr.rel (0) target = $region5
    $region4: #{seq2seq_forward.2} parent=1 // pred_region
      _
    $region5: #{seq2seq_forward.2} parent=1 // pred_fallthru
      _
    // Predicated region
    $region6: #{seq2seq_forward.2} parent=1 // pred_check
      _
    $region7: #{seq2seq_forward.2} parent=1 // pred_check_branch
      %20 = sbr.rel (0) target = $region9
    $region8: #{seq2seq_forward.2} parent=1 // pred_region
      _
    $region9: #{seq2seq_forward.2} parent=1 // pred_fallthru
      _
    // Predicated region
    $region10: #{seq2seq_forward.2} parent=1 // pred_check
      _
    $region11: #{seq2seq_forward.2} parent=1 // pred_check_branch
      %22 = sbr.rel (0) target = $region13
    $region12: #{seq2seq_forward.2} parent=1 // pred_region
      _
    $region13: #{seq2seq_forward.2} parent=1 // pred_fallthru
      _
    // Predicated region
    $region14: #{seq2seq_forward.2} parent=1 // pred_check
      _
    $region15: #{seq2seq_forward.2} parent=1 // pred_check_branch
      %24 = sbr.rel (0) target = $region17
    $region16: #{seq2seq_forward.2} parent=1 // pred_region
      _
    $region17: #{seq2seq_forward.2} parent=1 // pred_fallthru
      _
    // Predicated region
    $region18: #{seq2seq_forward.2} parent=1 // pred_check
      _
    $region19: #{seq2seq_forward.2} parent=1 // pred_check_branch
      %26 = sbr.rel (0) target = $region21
    $region20: #{seq2seq_forward.2} parent=1 // pred_region
      _
    $region21: #{seq2seq_forward.2} parent=1 // pred_fallthru
      _
    // Predicated region
    $region22: #{seq2seq_forward.2} parent=1 // pred_check
      _
    $region23: #{seq2seq_forward.2} parent=1 // pred_check_branch
      %28 = sbr.rel (0) target = $region25
    $region24: #{seq2seq_forward.2} parent=1 // pred_region
      _
    $region25: #{seq2seq_forward.2} parent=1 // pred_fallthru
      _
    // Predicated region
    $region26: #{seq2seq_forward.2} parent=1 // pred_check
      _
    $region27: #{seq2seq_forward.2} parent=1 // pred_check_branch
      %30 = sbr.rel (0) target = $region29
    $region28: #{seq2seq_forward.2} parent=1 // pred_region
      _
    $region29: #{seq2seq_forward.2} parent=1 // pred_fallthru
      _
    // Predicated region
    $region30: #{seq2seq_forward.2} parent=1 // pred_check
      _
    $region31: #{seq2seq_forward.2} parent=1 // pred_check_branch
      %32 = sbr.rel (0) target = $region33
    $region32: #{seq2seq_forward.2} parent=1 // pred_region
      _
    $region33: #{seq2seq_forward.2} parent=1 // pred_fallthru
      _
    // Predicated region
    $region34: #{seq2seq_forward.2} parent=1 // pred_check
      _
    $region35: #{seq2seq_forward.2} parent=1 // pred_check_branch
      %34 = sbr.rel (0) target = $region37
    $region36: #{seq2seq_forward.2} parent=1 // pred_region
      _
    $region37: #{seq2seq_forward.2} parent=1 // pred_fallthru
      _
    %v35 = vld [vmem:[%s0] sm:$0x3]
    %s36 = scalar_lea.vmem %s0, 2
    %v37 = vld [vmem:[%s36] sm:$0x3]
    %s38 = scalar_lea.vmem %s0, 4
    %v39 = vld [vmem:[%s38] sm:$0x3]
    %s40 = scalar_lea.vmem %s0, 6
    %v41 = vld [vmem:[%s40] sm:$0x3]
    %s42 = scalar_lea.vmem %s0, 8
    %v43 = vld [vmem:[%s42] sm:$0x3]
    %s44 = scalar_lea.vmem %s0, 10
    %v45 = vld [vmem:[%s44] sm:$0x3]
    %s46 = scalar_lea.vmem %s0, 12
    %v47 = vld [vmem:[%s46] sm:$0x3]
    %s48 = scalar_lea.vmem %s0, 14
    %v49 = vld [vmem:[%s48] sm:$0x3]
    %v50 = vld [vmem:[%s1] sm:$0xff]
    %v51 = vld [vmem:[%s1 + $0x8] sm:$0xff]
    %v52 = vld [vmem:[%s2] sm:$0xff]
    %v53 = vld [vmem:[%s2 + $0x8] sm:$0xff]
    %v54 = vld [vmem:[%s3] sm:$0x1]
    %v56 = vperm.slane %v54, 0
    %v58 = vld [vmem:[%s4] sm:$0x1]
    %v60 = vperm.slane %v58, 0
    %s62 = scalar_lea.vmem %s1, 16
    %v63 = vld [vmem:[%s62] sm:$0xff]
    %v64 = vld [vmem:[%s62 + $0x8] sm:$0xff]
    %s65 = scalar_lea.vmem %s2, 16
    %v66 = vld [vmem:[%s65] sm:$0xff]
    %v67 = vld [vmem:[%s65 + $0x8] sm:$0xff]
    %s68 = scalar_lea.vmem %s3, 1
    %v69 = vld [vmem:[%s68] sm:$0x1]
    %v71 = vperm.slane %v69, 0
    %s73 = scalar_lea.vmem %s4, 1
    %v74 = vld [vmem:[%s73] sm:$0x1]
    %v76 = vperm.slane %v74, 0
    %vm78 = vcmask 130048
    %v80 = vsel %vm78, %v35, 0
    %82 = vmatpush.msra.mxu0 0.0
    %83 = vmatpush.msra.mxu0 0.0
    %84 = vmatpush.msra.mxu0 0.0
    %85 = vmatpush.msra.mxu0 0.0
    %86 = vmatpush.msra.mxu0 0.0
    %87 = vmatpush.msra.mxu0 0.0
    %88 = vmatpush.msra.mxu0 0.0
    %89 = vmatpush.msra.mxu0 0.0
    %90 = vmatpush.msra.mxu0 0.0
    %91 = vmatpush.msra.mxu0 0.0
    %92 = vmatpush.msra.mxu0 0.0
    %93 = vmatpush.msra.mxu0 0.0
    %94 = vmatpush.msra.mxu0 0.0
    %95 = vmatpush.msra.mxu0 0.0
    %96 = vmatpush.msra.mxu0 %v51
    %97 = vmatpush.msra.mxu0 %v50
    %98 = vmatmul.f32.gmra.mxu0 %v80
    %v99 = vpop.f32.mrf.mxu0
    %v100 = vadd.f32 %v56, %v99
    %101 = vdwg.mxu0
    %v103 = vsel %vm78, 0.0, 0
    %105 = vmatpush.msra.mxu0 0.0
    %106 = vmatpush.msra.mxu0 0.0
    %107 = vmatpush.msra.mxu0 0.0
    %108 = vmatpush.msra.mxu0 0.0
    %109 = vmatpush.msra.mxu0 0.0
    %110 = vmatpush.msra.mxu0 0.0
    %111 = vmatpush.msra.mxu0 0.0
    %112 = vmatpush.msra.mxu0 0.0
    %113 = vmatpush.msra.mxu0 0.0
    %114 = vmatpush.msra.mxu0 0.0
    %115 = vmatpush.msra.mxu0 0.0
    %116 = vmatpush.msra.mxu0 0.0
    %117 = vmatpush.msra.mxu0 0.0
    %118 = vmatpush.msra.mxu0 0.0
    %119 = vmatpush.msra.mxu0 %v53
    %120 = vmatpush.msra.mxu0 %v52
    %121 = vmatmul.f32.gmra.mxu0 %v103
    %v122 = vpop.f32.mrf.mxu0
    %v123 = vadd.f32 %v60, %v122
    %124 = vdwg.mxu0
    %v125 = vadd.f32 %v100, %v123
    %v126 = vxor.u32 %v125, 2147483648
    %v127 = vmul.f32 %v126, 1.442695
    %v128 = vpow.pop %v127
    %v129 = vadd.f32 %v128, 1.0
    %v130 = vrcp.pop %v129
    %v131 = vmul.f32 %v129, %v130
    %v132 = vsub.f32 1.0, %v131
    %v133 = vmul.f32 %v130, %v132
    %v134 = vadd.f32 %v130, %v133
    %vm135 = vweird.f32 %v129
    %vm136 = vweird.f32 %v130
    %vm137 = vmor %vm135, %vm136
    %v138 = vsel %vm137, %v130, %v134
    %v139 = vand.u32 2147483647, %v129
    %vm140 = vcmp.eq.f32.partialorder %v139, 8.507059e+37
    %v141 = vand.u32 %v129, 2147483648
    %v142 = vor.u32 1.1754944e-38, %v141
    %v143 = vsel %vm140, %v142, %v138
    %v144 = vmul.f32 1.0, %v143
    %146 = vrot.lane.b32.xlu0 %v123, 96
    %v147 = vpop.permute.xlu0 %146
    %v149 = vmul.f32 %v144, %v147
    %151 = vrot.lane.b32.xlu0 %v149, 32
    %v152 = vpop.permute.xlu0 %151
    %v154 = vadd.f32 %v100, %v152
    %v155 = vtanh.pop %v154
    %v156 = vsub.f32 1.0, %v144
    %158 = vrot.lane.b32.xlu0 %v155, 112
    %v159 = vpop.permute.xlu0 %158
    %v161 = vmul.f32 %v156, %v159
    %v162 = vmul.f32 %v144, 0.0
    %v163 = vadd.f32 %v161, %v162
    %v165 = vsel %vm78, %v37, 0
    %167 = vmatpush.msra.mxu0 0.0
    %168 = vmatpush.msra.mxu0 0.0
    %169 = vmatpush.msra.mxu0 0.0
    %170 = vmatpush.msra.mxu0 0.0
    %171 = vmatpush.msra.mxu0 0.0
    %172 = vmatpush.msra.mxu0 0.0
    %173 = vmatpush.msra.mxu0 0.0
    %174 = vmatpush.msra.mxu0 0.0
    %175 = vmatpush.msra.mxu0 0.0
    %176 = vmatpush.msra.mxu0 0.0
    %177 = vmatpush.msra.mxu0 0.0
    %178 = vmatpush.msra.mxu0 0.0
    %179 = vmatpush.msra.mxu0 0.0
    %180 = vmatpush.msra.mxu0 0.0
    %181 = vmatpush.msra.mxu0 %v51
    %182 = vmatpush.msra.mxu0 %v50
    %183 = vmatmul.f32.gmra.mxu0 %v165
    %v184 = vpop.f32.mrf.mxu0
    %v185 = vadd.f32 %v56, %v184
    %186 = vdwg.mxu0
    %188 = vrot.lane.b32.xlu0 %v163, 112
    %v189 = vpop.permute.xlu0 %188
    %v190 = vsel %vm78, %v189, 0
    %192 = vmatpush.msra.mxu0 0.0
    %193 = vmatpush.msra.mxu0 0.0
    %194 = vmatpush.msra.mxu0 0.0
    %195 = vmatpush.msra.mxu0 0.0
    %196 = vmatpush.msra.mxu0 0.0
    %197 = vmatpush.msra.mxu0 0.0
    %198 = vmatpush.msra.mxu0 0.0
    %199 = vmatpush.msra.mxu0 0.0
    %200 = vmatpush.msra.mxu0 0.0
    %201 = vmatpush.msra.mxu0 0.0
    %202 = vmatpush.msra.mxu0 0.0
    %203 = vmatpush.msra.mxu0 0.0
    %204 = vmatpush.msra.mxu0 0.0
    %205 = vmatpush.msra.mxu0 0.0
    %206 = vmatpush.msra.mxu0 %v53
    %207 = vmatpush.msra.mxu0 %v52
    %208 = vmatmul.f32.gmra.mxu0 %v190
    %v209 = vpop.f32.mrf.mxu0
    %v210 = vadd.f32 %v60, %v209
    %211 = vdwg.mxu0
    %v212 = vadd.f32 %v185, %v210
    %v213 = vxor.u32 %v212, 2147483648
    %v214 = vmul.f32 %v213, 1.442695
    %v215 = vpow.pop %v214
    %v216 = vadd.f32 %v215, 1.0
    %v217 = vrcp.pop %v216
    %v218 = vmul.f32 %v216, %v217
    %v219 = vsub.f32 1.0, %v218
    %v220 = vmul.f32 %v217, %v219
    %v221 = vadd.f32 %v217, %v220
    %vm222 = vweird.f32 %v216
    %vm223 = vweird.f32 %v217
    %vm224 = vmor %vm222, %vm223
    %v225 = vsel %vm224, %v217, %v221
    %v226 = vand.u32 2147483647, %v216
    %vm227 = vcmp.eq.f32.partialorder %v226, 8.507059e+37
    %v228 = vand.u32 %v216, 2147483648
    %v229 = vor.u32 1.1754944e-38, %v228
    %v230 = vsel %vm227, %v229, %v225
    %v231 = vmul.f32 1.0, %v230
    %233 = vrot.lane.b32.xlu0 %v210, 96
    %v234 = vpop.permute.xlu0 %233
    %v236 = vmul.f32 %v231, %v234
    %238 = vrot.lane.b32.xlu0 %v236, 32
    %v239 = vpop.permute.xlu0 %238
    %v241 = vadd.f32 %v185, %v239
    %v242 = vtanh.pop %v241
    %v243 = vsub.f32 1.0, %v231
    %245 = vrot.lane.b32.xlu0 %v242, 112
    %v246 = vpop.permute.xlu0 %245
    %v248 = vmul.f32 %v243, %v246
    %v249 = vmul.f32 %v231, %v163
    %v250 = vadd.f32 %v248, %v249
    %v252 = vsel %vm78, %v39, 0
    %254 = vmatpush.msra.mxu0 0.0
    %255 = vmatpush.msra.mxu0 0.0
    %256 = vmatpush.msra.mxu0 0.0
    %257 = vmatpush.msra.mxu0 0.0
    %258 = vmatpush.msra.mxu0 0.0
    %259 = vmatpush.msra.mxu0 0.0
    %260 = vmatpush.msra.mxu0 0.0
    %261 = vmatpush.msra.mxu0 0.0
    %262 = vmatpush.msra.mxu0 0.0
    %263 = vmatpush.msra.mxu0 0.0
    %264 = vmatpush.msra.mxu0 0.0
    %265 = vmatpush.msra.mxu0 0.0
    %266 = vmatpush.msra.mxu0 0.0
    %267 = vmatpush.msra.mxu0 0.0
    %268 = vmatpush.msra.mxu0 %v51
    %269 = vmatpush.msra.mxu0 %v50
    %270 = vmatmul.f32.gmra.mxu0 %v252
    %v271 = vpop.f32.mrf.mxu0
    %v272 = vadd.f32 %v56, %v271
    %273 = vdwg.mxu0
    %275 = vrot.lane.b32.xlu0 %v250, 112
    %v276 = vpop.permute.xlu0 %275
    %v277 = vsel %vm78, %v276, 0
    %279 = vmatpush.msra.mxu0 0.0
    %280 = vmatpush.msra.mxu0 0.0
    %281 = vmatpush.msra.mxu0 0.0
    %282 = vmatpush.msra.mxu0 0.0
    %283 = vmatpush.msra.mxu0 0.0
    %284 = vmatpush.msra.mxu0 0.0
    %285 = vmatpush.msra.mxu0 0.0
    %286 = vmatpush.msra.mxu0 0.0
    %287 = vmatpush.msra.mxu0 0.0
    %288 = vmatpush.msra.mxu0 0.0
    %289 = vmatpush.msra.mxu0 0.0
    %290 = vmatpush.msra.mxu0 0.0
    %291 = vmatpush.msra.mxu0 0.0
    %292 = vmatpush.msra.mxu0 0.0
    %293 = vmatpush.msra.mxu0 %v53
    %294 = vmatpush.msra.mxu0 %v52
    %295 = vmatmul.f32.gmra.mxu0 %v277
    %v296 = vpop.f32.mrf.mxu0
    %v297 = vadd.f32 %v60, %v296
    %298 = vdwg.mxu0
    %v299 = vadd.f32 %v272, %v297
    %v300 = vxor.u32 %v299, 2147483648
    %v301 = vmul.f32 %v300, 1.442695
    %v302 = vpow.pop %v301
    %v303 = vadd.f32 %v302, 1.0
    %v304 = vrcp.pop %v303
    %v305 = vmul.f32 %v303, %v304
    %v306 = vsub.f32 1.0, %v305
    %v307 = vmul.f32 %v304, %v306
    %v308 = vadd.f32 %v304, %v307
    %vm309 = vweird.f32 %v303
    %vm310 = vweird.f32 %v304
    %vm311 = vmor %vm309, %vm310
    %v312 = vsel %vm311, %v304, %v308
    %v313 = vand.u32 2147483647, %v303
    %vm314 = vcmp.eq.f32.partialorder %v313, 8.507059e+37
    %v315 = vand.u32 %v303, 2147483648
    %v316 = vor.u32 1.1754944e-38, %v315
    %v317 = vsel %vm314, %v316, %v312
    %v318 = vmul.f32 1.0, %v317
    %320 = vrot.lane.b32.xlu0 %v297, 96
    %v321 = vpop.permute.xlu0 %320
    %v323 = vmul.f32 %v318, %v321
    %325 = vrot.lane.b32.xlu0 %v323, 32
    %v326 = vpop.permute.xlu0 %325
    %v328 = vadd.f32 %v272, %v326
    %v329 = vtanh.pop %v328
    %v330 = vsub.f32 1.0, %v318
    %332 = vrot.lane.b32.xlu0 %v329, 112
    %v333 = vpop.permute.xlu0 %332
    %v335 = vmul.f32 %v330, %v333
    %v336 = vmul.f32 %v318, %v250
    %v337 = vadd.f32 %v335, %v336
    %v339 = vsel %vm78, %v41, 0
    %341 = vmatpush.msra.mxu0 0.0
    %342 = vmatpush.msra.mxu0 0.0
    %343 = vmatpush.msra.mxu0 0.0
    %344 = vmatpush.msra.mxu0 0.0
    %345 = vmatpush.msra.mxu0 0.0
    %346 = vmatpush.msra.mxu0 0.0
    %347 = vmatpush.msra.mxu0 0.0
    %348 = vmatpush.msra.mxu0 0.0
    %349 = vmatpush.msra.mxu0 0.0
    %350 = vmatpush.msra.mxu0 0.0
    %351 = vmatpush.msra.mxu0 0.0
    %352 = vmatpush.msra.mxu0 0.0
    %353 = vmatpush.msra.mxu0 0.0
    %354 = vmatpush.msra.mxu0 0.0
    %355 = vmatpush.msra.mxu0 %v51
    %356 = vmatpush.msra.mxu0 %v50
    %357 = vmatmul.f32.gmra.mxu0 %v339
    %v358 = vpop.f32.mrf.mxu0
    %v359 = vadd.f32 %v56, %v358
    %360 = vdwg.mxu0
    %362 = vrot.lane.b32.xlu0 %v337, 112
    %v363 = vpop.permute.xlu0 %362
    %v364 = vsel %vm78, %v363, 0
    %366 = vmatpush.msra.mxu0 0.0
    %367 = vmatpush.msra.mxu0 0.0
    %368 = vmatpush.msra.mxu0 0.0
    %369 = vmatpush.msra.mxu0 0.0
    %370 = vmatpush.msra.mxu0 0.0
    %371 = vmatpush.msra.mxu0 0.0
    %372 = vmatpush.msra.mxu0 0.0
    %373 = vmatpush.msra.mxu0 0.0
    %374 = vmatpush.msra.mxu0 0.0
    %375 = vmatpush.msra.mxu0 0.0
    %376 = vmatpush.msra.mxu0 0.0
    %377 = vmatpush.msra.mxu0 0.0
    %378 = vmatpush.msra.mxu0 0.0
    %379 = vmatpush.msra.mxu0 0.0
    %380 = vmatpush.msra.mxu0 %v53
    %381 = vmatpush.msra.mxu0 %v52
    %382 = vmatmul.f32.gmra.mxu0 %v364
    %v383 = vpop.f32.mrf.mxu0
    %v384 = vadd.f32 %v60, %v383
    %385 = vdwg.mxu0
    %v386 = vadd.f32 %v359, %v384
    %v387 = vxor.u32 %v386, 2147483648
    %v388 = vmul.f32 %v387, 1.442695
    %v389 = vpow.pop %v388
    %v390 = vadd.f32 %v389, 1.0
    %v391 = vrcp.pop %v390
    %v392 = vmul.f32 %v390, %v391
    %v393 = vsub.f32 1.0, %v392
    %v394 = vmul.f32 %v391, %v393
    %v395 = vadd.f32 %v391, %v394
    %vm396 = vweird.f32 %v390
    %vm397 = vweird.f32 %v391
    %vm398 = vmor %vm396, %vm397
    %v399 = vsel %vm398, %v391, %v395
    %v400 = vand.u32 2147483647, %v390
    %vm401 = vcmp.eq.f32.partialorder %v400, 8.507059e+37
    %v402 = vand.u32 %v390, 2147483648
    %v403 = vor.u32 1.1754944e-38, %v402
    %v404 = vsel %vm401, %v403, %v399
    %v405 = vmul.f32 1.0, %v404
    %407 = vrot.lane.b32.xlu0 %v384, 96
    %v408 = vpop.permute.xlu0 %407
    %v410 = vmul.f32 %v405, %v408
    %412 = vrot.lane.b32.xlu0 %v410, 32
    %v413 = vpop.permute.xlu0 %412
    %v415 = vadd.f32 %v359, %v413
    %v416 = vtanh.pop %v415
    %v417 = vsub.f32 1.0, %v405
    %419 = vrot.lane.b32.xlu0 %v416, 112
    %v420 = vpop.permute.xlu0 %419
    %v422 = vmul.f32 %v417, %v420
    %v423 = vmul.f32 %v405, %v337
    %v424 = vadd.f32 %v422, %v423
    %v426 = vsel %vm78, %v43, 0
    %428 = vmatpush.msra.mxu0 0.0
    %429 = vmatpush.msra.mxu0 0.0
    %430 = vmatpush.msra.mxu0 0.0
    %431 = vmatpush.msra.mxu0 0.0
    %432 = vmatpush.msra.mxu0 0.0
    %433 = vmatpush.msra.mxu0 0.0
    %434 = vmatpush.msra.mxu0 0.0
    %435 = vmatpush.msra.mxu0 0.0
    %436 = vmatpush.msra.mxu0 0.0
    %437 = vmatpush.msra.mxu0 0.0
    %438 = vmatpush.msra.mxu0 0.0
    %439 = vmatpush.msra.mxu0 0.0
    %440 = vmatpush.msra.mxu0 0.0
    %441 = vmatpush.msra.mxu0 0.0
    %442 = vmatpush.msra.mxu0 %v51
    %443 = vmatpush.msra.mxu0 %v50
    %444 = vmatmul.f32.gmra.mxu0 %v426
    %v445 = vpop.f32.mrf.mxu0
    %v446 = vadd.f32 %v56, %v445
    %447 = vdwg.mxu0
    %449 = vrot.lane.b32.xlu0 %v424, 112
    %v450 = vpop.permute.xlu0 %449
    %v451 = vsel %vm78, %v450, 0
    %453 = vmatpush.msra.mxu0 0.0
    %454 = vmatpush.msra.mxu0 0.0
    %455 = vmatpush.msra.mxu0 0.0
    %456 = vmatpush.msra.mxu0 0.0
    %457 = vmatpush.msra.mxu0 0.0
    %458 = vmatpush.msra.mxu0 0.0
    %459 = vmatpush.msra.mxu0 0.0
    %460 = vmatpush.msra.mxu0 0.0
    %461 = vmatpush.msra.mxu0 0.0
    %462 = vmatpush.msra.mxu0 0.0
    %463 = vmatpush.msra.mxu0 0.0
    %464 = vmatpush.msra.mxu0 0.0
    %465 = vmatpush.msra.mxu0 0.0
    %466 = vmatpush.msra.mxu0 0.0
    %467 = vmatpush.msra.mxu0 %v53
    %468 = vmatpush.msra.mxu0 %v52
    %469 = vmatmul.f32.gmra.mxu0 %v451
    %v470 = vpop.f32.mrf.mxu0
    %v471 = vadd.f32 %v60, %v470
    %472 = vdwg.mxu0
    %v473 = vadd.f32 %v446, %v471
    %v474 = vxor.u32 %v473, 2147483648
    %v475 = vmul.f32 %v474, 1.442695
    %v476 = vpow.pop %v475
    %v477 = vadd.f32 %v476, 1.0
    %v478 = vrcp.pop %v477
    %v479 = vmul.f32 %v477, %v478
    %v480 = vsub.f32 1.0, %v479
    %v481 = vmul.f32 %v478, %v480
    %v482 = vadd.f32 %v478, %v481
    %vm483 = vweird.f32 %v477
    %vm484 = vweird.f32 %v478
    %vm485 = vmor %vm483, %vm484
    %v486 = vsel %vm485, %v478, %v482
    %v487 = vand.u32 2147483647, %v477
    %vm488 = vcmp.eq.f32.partialorder %v487, 8.507059e+37
    %v489 = vand.u32 %v477, 2147483648
    %v490 = vor.u32 1.1754944e-38, %v489
    %v491 = vsel %vm488, %v490, %v486
    %v492 = vmul.f32 1.0, %v491
    %494 = vrot.lane.b32.xlu0 %v471, 96
    %v495 = vpop.permute.xlu0 %494
    %v497 = vmul.f32 %v492, %v495
    %499 = vrot.lane.b32.xlu0 %v497, 32
    %v500 = vpop.permute.xlu0 %499
    %v502 = vadd.f32 %v446, %v500
    %v503 = vtanh.pop %v502
    %v504 = vsub.f32 1.0, %v492
    %506 = vrot.lane.b32.xlu0 %v503, 112
    %v507 = vpop.permute.xlu0 %506
    %v509 = vmul.f32 %v504, %v507
    %v510 = vmul.f32 %v492, %v424
    %v511 = vadd.f32 %v509, %v510
    %v513 = vsel %vm78, %v45, 0
    %515 = vmatpush.msra.mxu0 0.0
    %516 = vmatpush.msra.mxu0 0.0
    %517 = vmatpush.msra.mxu0 0.0
    %518 = vmatpush.msra.mxu0 0.0
    %519 = vmatpush.msra.mxu0 0.0
    %520 = vmatpush.msra.mxu0 0.0
    %521 = vmatpush.msra.mxu0 0.0
    %522 = vmatpush.msra.mxu0 0.0
    %523 = vmatpush.msra.mxu0 0.0
    %524 = vmatpush.msra.mxu0 0.0
    %525 = vmatpush.msra.mxu0 0.0
    %526 = vmatpush.msra.mxu0 0.0
    %527 = vmatpush.msra.mxu0 0.0
    %528 = vmatpush.msra.mxu0 0.0
    %529 = vmatpush.msra.mxu0 %v51
    %530 = vmatpush.msra.mxu0 %v50
    %531 = vmatmul.f32.gmra.mxu0 %v513
    %v532 = vpop.f32.mrf.mxu0
    %v533 = vadd.f32 %v56, %v532
    %534 = vdwg.mxu0
    %536 = vrot.lane.b32.xlu0 %v511, 112
    %v537 = vpop.permute.xlu0 %536
    %v538 = vsel %vm78, %v537, 0
    %540 = vmatpush.msra.mxu0 0.0
    %541 = vmatpush.msra.mxu0 0.0
    %542 = vmatpush.msra.mxu0 0.0
    %543 = vmatpush.msra.mxu0 0.0
    %544 = vmatpush.msra.mxu0 0.0
    %545 = vmatpush.msra.mxu0 0.0
    %546 = vmatpush.msra.mxu0 0.0
    %547 = vmatpush.msra.mxu0 0.0
    %548 = vmatpush.msra.mxu0 0.0
    %549 = vmatpush.msra.mxu0 0.0
    %550 = vmatpush.msra.mxu0 0.0
    %551 = vmatpush.msra.mxu0 0.0
    %552 = vmatpush.msra.mxu0 0.0
    %553 = vmatpush.msra.mxu0 0.0
    %554 = vmatpush.msra.mxu0 %v53
    %555 = vmatpush.msra.mxu0 %v52
    %556 = vmatmul.f32.gmra.mxu0 %v538
    %v557 = vpop.f32.mrf.mxu0
    %v558 = vadd.f32 %v60, %v557
    %559 = vdwg.mxu0
    %v560 = vadd.f32 %v533, %v558
    %v561 = vxor.u32 %v560, 2147483648
    %v562 = vmul.f32 %v561, 1.442695
    %v563 = vpow.pop %v562
    %v564 = vadd.f32 %v563, 1.0
    %v565 = vrcp.pop %v564
    %v566 = vmul.f32 %v564, %v565
    %v567 = vsub.f32 1.0, %v566
    %v568 = vmul.f32 %v565, %v567
    %v569 = vadd.f32 %v565, %v568
    %vm570 = vweird.f32 %v564
    %vm571 = vweird.f32 %v565
    %vm572 = vmor %vm570, %vm571
    %v573 = vsel %vm572, %v565, %v569
    %v574 = vand.u32 2147483647, %v564
    %vm575 = vcmp.eq.f32.partialorder %v574, 8.507059e+37
    %v576 = vand.u32 %v564, 2147483648
    %v577 = vor.u32 1.1754944e-38, %v576
    %v578 = vsel %vm575, %v577, %v573
    %v579 = vmul.f32 1.0, %v578
    %581 = vrot.lane.b32.xlu0 %v558, 96
    %v582 = vpop.permute.xlu0 %581
    %v584 = vmul.f32 %v579, %v582
    %586 = vrot.lane.b32.xlu0 %v584, 32
    %v587 = vpop.permute.xlu0 %586
    %v589 = vadd.f32 %v533, %v587
    %v590 = vtanh.pop %v589
    %v591 = vsub.f32 1.0, %v579
    %593 = vrot.lane.b32.xlu0 %v590, 112
    %v594 = vpop.permute.xlu0 %593
    %v596 = vmul.f32 %v591, %v594
    %v597 = vmul.f32 %v579, %v511
    %v598 = vadd.f32 %v596, %v597
    %v600 = vsel %vm78, %v47, 0
    %602 = vmatpush.msra.mxu0 0.0
    %603 = vmatpush.msra.mxu0 0.0
    %604 = vmatpush.msra.mxu0 0.0
    %605 = vmatpush.msra.mxu0 0.0
    %606 = vmatpush.msra.mxu0 0.0
    %607 = vmatpush.msra.mxu0 0.0
    %608 = vmatpush.msra.mxu0 0.0
    %609 = vmatpush.msra.mxu0 0.0
    %610 = vmatpush.msra.mxu0 0.0
    %611 = vmatpush.msra.mxu0 0.0
    %612 = vmatpush.msra.mxu0 0.0
    %613 = vmatpush.msra.mxu0 0.0
    %614 = vmatpush.msra.mxu0 0.0
    %615 = vmatpush.msra.mxu0 0.0
    %616 = vmatpush.msra.mxu0 %v51
    %617 = vmatpush.msra.mxu0 %v50
    %618 = vmatmul.f32.gmra.mxu0 %v600
    %v619 = vpop.f32.mrf.mxu0
    %v620 = vadd.f32 %v56, %v619
    %621 = vdwg.mxu0
    %623 = vrot.lane.b32.xlu0 %v598, 112
    %v624 = vpop.permute.xlu0 %623
    %v625 = vsel %vm78, %v624, 0
    %627 = vmatpush.msra.mxu0 0.0
    %628 = vmatpush.msra.mxu0 0.0
    %629 = vmatpush.msra.mxu0 0.0
    %630 = vmatpush.msra.mxu0 0.0
    %631 = vmatpush.msra.mxu0 0.0
    %632 = vmatpush.msra.mxu0 0.0
    %633 = vmatpush.msra.mxu0 0.0
    %634 = vmatpush.msra.mxu0 0.0
    %635 = vmatpush.msra.mxu0 0.0
    %636 = vmatpush.msra.mxu0 0.0
    %637 = vmatpush.msra.mxu0 0.0
    %638 = vmatpush.msra.mxu0 0.0
    %639 = vmatpush.msra.mxu0 0.0
    %640 = vmatpush.msra.mxu0 0.0
    %641 = vmatpush.msra.mxu0 %v53
    %642 = vmatpush.msra.mxu0 %v52
    %643 = vmatmul.f32.gmra.mxu0 %v625
    %v644 = vpop.f32.mrf.mxu0
    %v645 = vadd.f32 %v60, %v644
    %646 = vdwg.mxu0
    %v647 = vadd.f32 %v620, %v645
    %v648 = vxor.u32 %v647, 2147483648
    %v649 = vmul.f32 %v648, 1.442695
    %v650 = vpow.pop %v649
    %v651 = vadd.f32 %v650, 1.0
    %v652 = vrcp.pop %v651
    %v653 = vmul.f32 %v651, %v652
    %v654 = vsub.f32 1.0, %v653
    %v655 = vmul.f32 %v652, %v654
    %v656 = vadd.f32 %v652, %v655
    %vm657 = vweird.f32 %v651
    %vm658 = vweird.f32 %v652
    %vm659 = vmor %vm657, %vm658
    %v660 = vsel %vm659, %v652, %v656
    %v661 = vand.u32 2147483647, %v651
    %vm662 = vcmp.eq.f32.partialorder %v661, 8.507059e+37
    %v663 = vand.u32 %v651, 2147483648
    %v664 = vor.u32 1.1754944e-38, %v663
    %v665 = vsel %vm662, %v664, %v660
    %v666 = vmul.f32 1.0, %v665
    %668 = vrot.lane.b32.xlu0 %v645, 96
    %v669 = vpop.permute.xlu0 %668
    %v671 = vmul.f32 %v666, %v669
    %673 = vrot.lane.b32.xlu0 %v671, 32
    %v674 = vpop.permute.xlu0 %673
    %v676 = vadd.f32 %v620, %v674
    %v677 = vtanh.pop %v676
    %v678 = vsub.f32 1.0, %v666
    %680 = vrot.lane.b32.xlu0 %v677, 112
    %v681 = vpop.permute.xlu0 %680
    %v683 = vmul.f32 %v678, %v681
    %v684 = vmul.f32 %v666, %v598
    %v685 = vadd.f32 %v683, %v684
    %v687 = vsel %vm78, %v49, 0
    %689 = vmatpush.msra.mxu0 0.0
    %690 = vmatpush.msra.mxu0 0.0
    %691 = vmatpush.msra.mxu0 0.0
    %692 = vmatpush.msra.mxu0 0.0
    %693 = vmatpush.msra.mxu0 0.0
    %694 = vmatpush.msra.mxu0 0.0
    %695 = vmatpush.msra.mxu0 0.0
    %696 = vmatpush.msra.mxu0 0.0
    %697 = vmatpush.msra.mxu0 0.0
    %698 = vmatpush.msra.mxu0 0.0
    %699 = vmatpush.msra.mxu0 0.0
    %700 = vmatpush.msra.mxu0 0.0
    %701 = vmatpush.msra.mxu0 0.0
    %702 = vmatpush.msra.mxu0 0.0
    %703 = vmatpush.msra.mxu0 %v51
    %704 = vmatpush.msra.mxu0 %v50
    %705 = vmatmul.f32.gmra.mxu0 %v687
    %v706 = vpop.f32.mrf.mxu0
    %v707 = vadd.f32 %v56, %v706
    %708 = vdwg.mxu0
    %710 = vrot.lane.b32.xlu0 %v685, 112
    %v711 = vpop.permute.xlu0 %710
    %v712 = vsel %vm78, %v711, 0
    %714 = vmatpush.msra.mxu0 0.0
    %715 = vmatpush.msra.mxu0 0.0
    %716 = vmatpush.msra.mxu0 0.0
    %717 = vmatpush.msra.mxu0 0.0
    %718 = vmatpush.msra.mxu0 0.0
    %719 = vmatpush.msra.mxu0 0.0
    %720 = vmatpush.msra.mxu0 0.0
    %721 = vmatpush.msra.mxu0 0.0
    %722 = vmatpush.msra.mxu0 0.0
    %723 = vmatpush.msra.mxu0 0.0
    %724 = vmatpush.msra.mxu0 0.0
    %725 = vmatpush.msra.mxu0 0.0
    %726 = vmatpush.msra.mxu0 0.0
    %727 = vmatpush.msra.mxu0 0.0
    %728 = vmatpush.msra.mxu0 %v53
    %729 = vmatpush.msra.mxu0 %v52
    %730 = vmatmul.f32.gmra.mxu0 %v712
    %v731 = vpop.f32.mrf.mxu0
    %v732 = vadd.f32 %v60, %v731
    %733 = vdwg.mxu0
    %v734 = vadd.f32 %v707, %v732
    %v735 = vxor.u32 %v734, 2147483648
    %v736 = vmul.f32 %v735, 1.442695
    %v737 = vpow.pop %v736
    %v738 = vadd.f32 %v737, 1.0
    %v739 = vrcp.pop %v738
    %v740 = vmul.f32 %v738, %v739
    %v741 = vsub.f32 1.0, %v740
    %v742 = vmul.f32 %v739, %v741
    %v743 = vadd.f32 %v739, %v742
    %vm744 = vweird.f32 %v738
    %vm745 = vweird.f32 %v739
    %vm746 = vmor %vm744, %vm745
    %v747 = vsel %vm746, %v739, %v743
    %v748 = vand.u32 2147483647, %v738
    %vm749 = vcmp.eq.f32.partialorder %v748, 8.507059e+37
    %v750 = vand.u32 %v738, 2147483648
    %v751 = vor.u32 1.1754944e-38, %v750
    %v752 = vsel %vm749, %v751, %v747
    %v753 = vmul.f32 1.0, %v752
    %755 = vrot.lane.b32.xlu0 %v732, 96
    %v756 = vpop.permute.xlu0 %755
    %v758 = vmul.f32 %v753, %v756
    %760 = vrot.lane.b32.xlu0 %v758, 32
    %v761 = vpop.permute.xlu0 %760
    %v763 = vadd.f32 %v707, %v761
    %v764 = vtanh.pop %v763
    %v765 = vsub.f32 1.0, %v753
    %767 = vrot.lane.b32.xlu0 %v764, 112
    %v768 = vpop.permute.xlu0 %767
    %v770 = vmul.f32 %v765, %v768
    %v771 = vmul.f32 %v753, %v685
    %v772 = vadd.f32 %v770, %v771
    %773 = vmatpush.msra.mxu0 0.0
    %774 = vmatpush.msra.mxu0 0.0
    %775 = vmatpush.msra.mxu0 0.0
    %776 = vmatpush.msra.mxu0 0.0
    %777 = vmatpush.msra.mxu0 0.0
    %778 = vmatpush.msra.mxu0 0.0
    %779 = vmatpush.msra.mxu0 0.0
    %780 = vmatpush.msra.mxu0 0.0
    %781 = vmatpush.msra.mxu0 0.0
    %782 = vmatpush.msra.mxu0 0.0
    %783 = vmatpush.msra.mxu0 0.0
    %784 = vmatpush.msra.mxu0 0.0
    %785 = vmatpush.msra.mxu0 0.0
    %786 = vmatpush.msra.mxu0 0.0
    %787 = vmatpush.msra.mxu0 %v64
    %788 = vmatpush.msra.mxu0 %v63
    %789 = vmatmul.f32.gmra.mxu0 %v687
    %v790 = vpop.f32.mrf.mxu0
    %v791 = vadd.f32 %v71, %v790
    %792 = vdwg.mxu0
    %793 = vmatpush.msra.mxu0 0.0
    %794 = vmatpush.msra.mxu0 0.0
    %795 = vmatpush.msra.mxu0 0.0
    %796 = vmatpush.msra.mxu0 0.0
    %797 = vmatpush.msra.mxu0 0.0
    %798 = vmatpush.msra.mxu0 0.0
    %799 = vmatpush.msra.mxu0 0.0
    %800 = vmatpush.msra.mxu0 0.0
    %801 = vmatpush.msra.mxu0 0.0
    %802 = vmatpush.msra.mxu0 0.0
    %803 = vmatpush.msra.mxu0 0.0
    %804 = vmatpush.msra.mxu0 0.0
    %805 = vmatpush.msra.mxu0 0.0
    %806 = vmatpush.msra.mxu0 0.0
    %807 = vmatpush.msra.mxu0 %v67
    %808 = vmatpush.msra.mxu0 %v66
    %809 = vmatmul.f32.gmra.mxu0 %v103
    %v810 = vpop.f32.mrf.mxu0
    %v811 = vadd.f32 %v76, %v810
    %812 = vdwg.mxu0
    %v813 = vadd.f32 %v791, %v811
    %v814 = vxor.u32 %v813, 2147483648
    %v815 = vmul.f32 %v814, 1.442695
    %v816 = vpow.pop %v815
    %v817 = vadd.f32 %v816, 1.0
    %v818 = vrcp.pop %v817
    %v819 = vmul.f32 %v817, %v818
    %v820 = vsub.f32 1.0, %v819
    %v821 = vmul.f32 %v818, %v820
    %v822 = vadd.f32 %v818, %v821
    %vm823 = vweird.f32 %v817
    %vm824 = vweird.f32 %v818
    %vm825 = vmor %vm823, %vm824
    %v826 = vsel %vm825, %v818, %v822
    %v827 = vand.u32 2147483647, %v817
    %vm828 = vcmp.eq.f32.partialorder %v827, 8.507059e+37
    %v829 = vand.u32 %v817, 2147483648
    %v830 = vor.u32 1.1754944e-38, %v829
    %v831 = vsel %vm828, %v830, %v826
    %v832 = vmul.f32 1.0, %v831
    %834 = vrot.lane.b32.xlu0 %v811, 96
    %v835 = vpop.permute.xlu0 %834
    %v837 = vmul.f32 %v832, %v835
    %839 = vrot.lane.b32.xlu0 %v837, 32
    %v840 = vpop.permute.xlu0 %839
    %v842 = vadd.f32 %v791, %v840
    %v843 = vtanh.pop %v842
    %v844 = vsub.f32 1.0, %v832
    %846 = vrot.lane.b32.xlu0 %v843, 112
    %v847 = vpop.permute.xlu0 %846
    %v849 = vmul.f32 %v844, %v847
    %v850 = vmul.f32 %v832, 0.0
    %v851 = vadd.f32 %v849, %v850
    %852 = vmatpush.msra.mxu0 0.0
    %853 = vmatpush.msra.mxu0 0.0
    %854 = vmatpush.msra.mxu0 0.0
    %855 = vmatpush.msra.mxu0 0.0
    %856 = vmatpush.msra.mxu0 0.0
    %857 = vmatpush.msra.mxu0 0.0
    %858 = vmatpush.msra.mxu0 0.0
    %859 = vmatpush.msra.mxu0 0.0
    %860 = vmatpush.msra.mxu0 0.0
    %861 = vmatpush.msra.mxu0 0.0
    %862 = vmatpush.msra.mxu0 0.0
    %863 = vmatpush.msra.mxu0 0.0
    %864 = vmatpush.msra.mxu0 0.0
    %865 = vmatpush.msra.mxu0 0.0
    %866 = vmatpush.msra.mxu0 %v64
    %867 = vmatpush.msra.mxu0 %v63
    %868 = vmatmul.f32.gmra.mxu0 %v600
    %v869 = vpop.f32.mrf.mxu0
    %v870 = vadd.f32 %v71, %v869
    %871 = vdwg.mxu0
    %873 = vrot.lane.b32.xlu0 %v851, 112
    %v874 = vpop.permute.xlu0 %873
    %v875 = vsel %vm78, %v874, 0
    %877 = vmatpush.msra.mxu0 0.0
    %878 = vmatpush.msra.mxu0 0.0
    %879 = vmatpush.msra.mxu0 0.0
    %880 = vmatpush.msra.mxu0 0.0
    %881 = vmatpush.msra.mxu0 0.0
    %882 = vmatpush.msra.mxu0 0.0
    %883 = vmatpush.msra.mxu0 0.0
    %884 = vmatpush.msra.mxu0 0.0
    %885 = vmatpush.msra.mxu0 0.0
    %886 = vmatpush.msra.mxu0 0.0
    %887 = vmatpush.msra.mxu0 0.0
    %888 = vmatpush.msra.mxu0 0.0
    %889 = vmatpush.msra.mxu0 0.0
    %890 = vmatpush.msra.mxu0 0.0
    %891 = vmatpush.msra.mxu0 %v67
    %892 = vmatpush.msra.mxu0 %v66
    %893 = vmatmul.f32.gmra.mxu0 %v875
    %v894 = vpop.f32.mrf.mxu0
    %v895 = vadd.f32 %v76, %v894
    %896 = vdwg.mxu0
    %v897 = vadd.f32 %v870, %v895
    %v898 = vxor.u32 %v897, 2147483648
    %v899 = vmul.f32 %v898, 1.442695
    %v900 = vpow.pop %v899
    %v901 = vadd.f32 %v900, 1.0
    %v902 = vrcp.pop %v901
    %v903 = vmul.f32 %v901, %v902
    %v904 = vsub.f32 1.0, %v903
    %v905 = vmul.f32 %v902, %v904
    %v906 = vadd.f32 %v902, %v905
    %vm907 = vweird.f32 %v901
    %vm908 = vweird.f32 %v902
    %vm909 = vmor %vm907, %vm908
    %v910 = vsel %vm909, %v902, %v906
    %v911 = vand.u32 2147483647, %v901
    %vm912 = vcmp.eq.f32.partialorder %v911, 8.507059e+37
    %v913 = vand.u32 %v901, 2147483648
    %v914 = vor.u32 1.1754944e-38, %v913
    %v915 = vsel %vm912, %v914, %v910
    %v916 = vmul.f32 1.0, %v915
    %918 = vrot.lane.b32.xlu0 %v895, 96
    %v919 = vpop.permute.xlu0 %918
    %v921 = vmul.f32 %v916, %v919
    %923 = vrot.lane.b32.xlu0 %v921, 32
    %v924 = vpop.permute.xlu0 %923
    %v926 = vadd.f32 %v870, %v924
    %v927 = vtanh.pop %v926
    %v928 = vsub.f32 1.0, %v916
    %930 = vrot.lane.b32.xlu0 %v927, 112
    %v931 = vpop.permute.xlu0 %930
    %v933 = vmul.f32 %v928, %v931
    %v934 = vmul.f32 %v916, %v851
    %v935 = vadd.f32 %v933, %v934
    %936 = vmatpush.msra.mxu0 0.0
    %937 = vmatpush.msra.mxu0 0.0
    %938 = vmatpush.msra.mxu0 0.0
    %939 = vmatpush.msra.mxu0 0.0
    %940 = vmatpush.msra.mxu0 0.0
    %941 = vmatpush.msra.mxu0 0.0
    %942 = vmatpush.msra.mxu0 0.0
    %943 = vmatpush.msra.mxu0 0.0
    %944 = vmatpush.msra.mxu0 0.0
    %945 = vmatpush.msra.mxu0 0.0
    %946 = vmatpush.msra.mxu0 0.0
    %947 = vmatpush.msra.mxu0 0.0
    %948 = vmatpush.msra.mxu0 0.0
    %949 = vmatpush.msra.mxu0 0.0
    %950 = vmatpush.msra.mxu0 %v64
    %951 = vmatpush.msra.mxu0 %v63
    %952 = vmatmul.f32.gmra.mxu0 %v513
    %v953 = vpop.f32.mrf.mxu0
    %v954 = vadd.f32 %v71, %v953
    %955 = vdwg.mxu0
    %957 = vrot.lane.b32.xlu0 %v935, 112
    %v958 = vpop.permute.xlu0 %957
    %v959 = vsel %vm78, %v958, 0
    %961 = vmatpush.msra.mxu0 0.0
    %962 = vmatpush.msra.mxu0 0.0
    %963 = vmatpush.msra.mxu0 0.0
    %964 = vmatpush.msra.mxu0 0.0
    %965 = vmatpush.msra.mxu0 0.0
    %966 = vmatpush.msra.mxu0 0.0
    %967 = vmatpush.msra.mxu0 0.0
    %968 = vmatpush.msra.mxu0 0.0
    %969 = vmatpush.msra.mxu0 0.0
    %970 = vmatpush.msra.mxu0 0.0
    %971 = vmatpush.msra.mxu0 0.0
    %972 = vmatpush.msra.mxu0 0.0
    %973 = vmatpush.msra.mxu0 0.0
    %974 = vmatpush.msra.mxu0 0.0
    %975 = vmatpush.msra.mxu0 %v67
    %976 = vmatpush.msra.mxu0 %v66
    %977 = vmatmul.f32.gmra.mxu0 %v959
    %v978 = vpop.f32.mrf.mxu0
    %v979 = vadd.f32 %v76, %v978
    %980 = vdwg.mxu0
    %v981 = vadd.f32 %v954, %v979
    %v982 = vxor.u32 %v981, 2147483648
    %v983 = vmul.f32 %v982, 1.442695
    %v984 = vpow.pop %v983
    %v985 = vadd.f32 %v984, 1.0
    %v986 = vrcp.pop %v985
    %v987 = vmul.f32 %v985, %v986
    %v988 = vsub.f32 1.0, %v987
    %v989 = vmul.f32 %v986, %v988
    %v990 = vadd.f32 %v986, %v989
    %vm991 = vweird.f32 %v985
    %vm992 = vweird.f32 %v986
    %vm993 = vmor %vm991, %vm992
    %v994 = vsel %vm993, %v986, %v990
    %v995 = vand.u32 2147483647, %v985
    %vm996 = vcmp.eq.f32.partialorder %v995, 8.507059e+37
    %v997 = vand.u32 %v985, 2147483648
    %v998 = vor.u32 1.1754944e-38, %v997
    %v999 = vsel %vm996, %v998, %v994
    %v1000 = vmul.f32 1.0, %v999
    %1002 = vrot.lane.b32.xlu0 %v979, 96
    %v1003 = vpop.permute.xlu0 %1002
    %v1005 = vmul.f32 %v1000, %v1003
    %1007 = vrot.lane.b32.xlu0 %v1005, 32
    %v1008 = vpop.permute.xlu0 %1007
    %v1010 = vadd.f32 %v954, %v1008
    %v1011 = vtanh.pop %v1010
    %v1012 = vsub.f32 1.0, %v1000
    %1014 = vrot.lane.b32.xlu0 %v1011, 112
    %v1015 = vpop.permute.xlu0 %1014
    %v1017 = vmul.f32 %v1012, %v1015
    %v1018 = vmul.f32 %v1000, %v935
    %v1019 = vadd.f32 %v1017, %v1018
    %1020 = vmatpush.msra.mxu0 0.0
    %1021 = vmatpush.msra.mxu0 0.0
    %1022 = vmatpush.msra.mxu0 0.0
    %1023 = vmatpush.msra.mxu0 0.0
    %1024 = vmatpush.msra.mxu0 0.0
    %1025 = vmatpush.msra.mxu0 0.0
    %1026 = vmatpush.msra.mxu0 0.0
    %1027 = vmatpush.msra.mxu0 0.0
    %1028 = vmatpush.msra.mxu0 0.0
    %1029 = vmatpush.msra.mxu0 0.0
    %1030 = vmatpush.msra.mxu0 0.0
    %1031 = vmatpush.msra.mxu0 0.0
    %1032 = vmatpush.msra.mxu0 0.0
    %1033 = vmatpush.msra.mxu0 0.0
    %1034 = vmatpush.msra.mxu0 %v64
    %1035 = vmatpush.msra.mxu0 %v63
    %1036 = vmatmul.f32.gmra.mxu0 %v426
    %v1037 = vpop.f32.mrf.mxu0
    %v1038 = vadd.f32 %v71, %v1037
    %1039 = vdwg.mxu0
    %1041 = vrot.lane.b32.xlu0 %v1019, 112
    %v1042 = vpop.permute.xlu0 %1041
    %v1043 = vsel %vm78, %v1042, 0
    %1045 = vmatpush.msra.mxu0 0.0
    %1046 = vmatpush.msra.mxu0 0.0
    %1047 = vmatpush.msra.mxu0 0.0
    %1048 = vmatpush.msra.mxu0 0.0
    %1049 = vmatpush.msra.mxu0 0.0
    %1050 = vmatpush.msra.mxu0 0.0
    %1051 = vmatpush.msra.mxu0 0.0
    %1052 = vmatpush.msra.mxu0 0.0
    %1053 = vmatpush.msra.mxu0 0.0
    %1054 = vmatpush.msra.mxu0 0.0
    %1055 = vmatpush.msra.mxu0 0.0
    %1056 = vmatpush.msra.mxu0 0.0
    %1057 = vmatpush.msra.mxu0 0.0
    %1058 = vmatpush.msra.mxu0 0.0
    %1059 = vmatpush.msra.mxu0 %v67
    %1060 = vmatpush.msra.mxu0 %v66
    %1061 = vmatmul.f32.gmra.mxu0 %v1043
    %v1062 = vpop.f32.mrf.mxu0
    %v1063 = vadd.f32 %v76, %v1062
    %1064 = vdwg.mxu0
    %v1065 = vadd.f32 %v1038, %v1063
    %v1066 = vxor.u32 %v1065, 2147483648
    %v1067 = vmul.f32 %v1066, 1.442695
    %v1068 = vpow.pop %v1067
    %v1069 = vadd.f32 %v1068, 1.0
    %v1070 = vrcp.pop %v1069
    %v1071 = vmul.f32 %v1069, %v1070
    %v1072 = vsub.f32 1.0, %v1071
    %v1073 = vmul.f32 %v1070, %v1072
    %v1074 = vadd.f32 %v1070, %v1073
    %vm1075 = vweird.f32 %v1069
    %vm1076 = vweird.f32 %v1070
    %vm1077 = vmor %vm1075, %vm1076
    %v1078 = vsel %vm1077, %v1070, %v1074
    %v1079 = vand.u32 2147483647, %v1069
    %vm1080 = vcmp.eq.f32.partialorder %v1079, 8.507059e+37
    %v1081 = vand.u32 %v1069, 2147483648
    %v1082 = vor.u32 1.1754944e-38, %v1081
    %v1083 = vsel %vm1080, %v1082, %v1078
    %v1084 = vmul.f32 1.0, %v1083
    %1086 = vrot.lane.b32.xlu0 %v1063, 96
    %v1087 = vpop.permute.xlu0 %1086
    %v1089 = vmul.f32 %v1084, %v1087
    %1091 = vrot.lane.b32.xlu0 %v1089, 32
    %v1092 = vpop.permute.xlu0 %1091
    %v1094 = vadd.f32 %v1038, %v1092
    %v1095 = vtanh.pop %v1094
    %v1096 = vsub.f32 1.0, %v1084
    %1098 = vrot.lane.b32.xlu0 %v1095, 112
    %v1099 = vpop.permute.xlu0 %1098
    %v1101 = vmul.f32 %v1096, %v1099
    %v1102 = vmul.f32 %v1084, %v1019
    %v1103 = vadd.f32 %v1101, %v1102
    %1104 = vmatpush.msra.mxu0 0.0
    %1105 = vmatpush.msra.mxu0 0.0
    %1106 = vmatpush.msra.mxu0 0.0
    %1107 = vmatpush.msra.mxu0 0.0
    %1108 = vmatpush.msra.mxu0 0.0
    %1109 = vmatpush.msra.mxu0 0.0
    %1110 = vmatpush.msra.mxu0 0.0
    %1111 = vmatpush.msra.mxu0 0.0
    %1112 = vmatpush.msra.mxu0 0.0
    %1113 = vmatpush.msra.mxu0 0.0
    %1114 = vmatpush.msra.mxu0 0.0
    %1115 = vmatpush.msra.mxu0 0.0
    %1116 = vmatpush.msra.mxu0 0.0
    %1117 = vmatpush.msra.mxu0 0.0
    %1118 = vmatpush.msra.mxu0 %v64
    %1119 = vmatpush.msra.mxu0 %v63
    %1120 = vmatmul.f32.gmra.mxu0 %v339
    %v1121 = vpop.f32.mrf.mxu0
    %v1122 = vadd.f32 %v71, %v1121
    %1123 = vdwg.mxu0
    %1125 = vrot.lane.b32.xlu0 %v1103, 112
    %v1126 = vpop.permute.xlu0 %1125
    %v1127 = vsel %vm78, %v1126, 0
    %1129 = vmatpush.msra.mxu0 0.0
    %1130 = vmatpush.msra.mxu0 0.0
    %1131 = vmatpush.msra.mxu0 0.0
    %1132 = vmatpush.msra.mxu0 0.0
    %1133 = vmatpush.msra.mxu0 0.0
    %1134 = vmatpush.msra.mxu0 0.0
    %1135 = vmatpush.msra.mxu0 0.0
    %1136 = vmatpush.msra.mxu0 0.0
    %1137 = vmatpush.msra.mxu0 0.0
    %1138 = vmatpush.msra.mxu0 0.0
    %1139 = vmatpush.msra.mxu0 0.0
    %1140 = vmatpush.msra.mxu0 0.0
    %1141 = vmatpush.msra.mxu0 0.0
    %1142 = vmatpush.msra.mxu0 0.0
    %1143 = vmatpush.msra.mxu0 %v67
    %1144 = vmatpush.msra.mxu0 %v66
    %1145 = vmatmul.f32.gmra.mxu0 %v1127
    %v1146 = vpop.f32.mrf.mxu0
    %v1147 = vadd.f32 %v76, %v1146
    %1148 = vdwg.mxu0
    %v1149 = vadd.f32 %v1122, %v1147
    %v1150 = vxor.u32 %v1149, 2147483648
    %v1151 = vmul.f32 %v1150, 1.442695
    %v1152 = vpow.pop %v1151
    %v1153 = vadd.f32 %v1152, 1.0
    %v1154 = vrcp.pop %v1153
    %v1155 = vmul.f32 %v1153, %v1154
    %v1156 = vsub.f32 1.0, %v1155
    %v1157 = vmul.f32 %v1154, %v1156
    %v1158 = vadd.f32 %v1154, %v1157
    %vm1159 = vweird.f32 %v1153
    %vm1160 = vweird.f32 %v1154
    %vm1161 = vmor %vm1159, %vm1160
    %v1162 = vsel %vm1161, %v1154, %v1158
    %v1163 = vand.u32 2147483647, %v1153
    %vm1164 = vcmp.eq.f32.partialorder %v1163, 8.507059e+37
    %v1165 = vand.u32 %v1153, 2147483648
    %v1166 = vor.u32 1.1754944e-38, %v1165
    %v1167 = vsel %vm1164, %v1166, %v1162
    %v1168 = vmul.f32 1.0, %v1167
    %1170 = vrot.lane.b32.xlu0 %v1147, 96
    %v1171 = vpop.permute.xlu0 %1170
    %v1173 = vmul.f32 %v1168, %v1171
    %1175 = vrot.lane.b32.xlu0 %v1173, 32
    %v1176 = vpop.permute.xlu0 %1175
    %v1178 = vadd.f32 %v1122, %v1176
    %v1179 = vtanh.pop %v1178
    %v1180 = vsub.f32 1.0, %v1168
    %1182 = vrot.lane.b32.xlu0 %v1179, 112
    %v1183 = vpop.permute.xlu0 %1182
    %v1185 = vmul.f32 %v1180, %v1183
    %v1186 = vmul.f32 %v1168, %v1103
    %v1187 = vadd.f32 %v1185, %v1186
    %1188 = vmatpush.msra.mxu0 0.0
    %1189 = vmatpush.msra.mxu0 0.0
    %1190 = vmatpush.msra.mxu0 0.0
    %1191 = vmatpush.msra.mxu0 0.0
    %1192 = vmatpush.msra.mxu0 0.0
    %1193 = vmatpush.msra.mxu0 0.0
    %1194 = vmatpush.msra.mxu0 0.0
    %1195 = vmatpush.msra.mxu0 0.0
    %1196 = vmatpush.msra.mxu0 0.0
    %1197 = vmatpush.msra.mxu0 0.0
    %1198 = vmatpush.msra.mxu0 0.0
    %1199 = vmatpush.msra.mxu0 0.0
    %1200 = vmatpush.msra.mxu0 0.0
    %1201 = vmatpush.msra.mxu0 0.0
    %1202 = vmatpush.msra.mxu0 %v64
    %1203 = vmatpush.msra.mxu0 %v63
    %1204 = vmatmul.f32.gmra.mxu0 %v252
    %v1205 = vpop.f32.mrf.mxu0
    %v1206 = vadd.f32 %v71, %v1205
    %1207 = vdwg.mxu0
    %1209 = vrot.lane.b32.xlu0 %v1187, 112
    %v1210 = vpop.permute.xlu0 %1209
    %v1211 = vsel %vm78, %v1210, 0
    %1213 = vmatpush.msra.mxu0 0.0
    %1214 = vmatpush.msra.mxu0 0.0
    %1215 = vmatpush.msra.mxu0 0.0
    %1216 = vmatpush.msra.mxu0 0.0
    %1217 = vmatpush.msra.mxu0 0.0
    %1218 = vmatpush.msra.mxu0 0.0
    %1219 = vmatpush.msra.mxu0 0.0
    %1220 = vmatpush.msra.mxu0 0.0
    %1221 = vmatpush.msra.mxu0 0.0
    %1222 = vmatpush.msra.mxu0 0.0
    %1223 = vmatpush.msra.mxu0 0.0
    %1224 = vmatpush.msra.mxu0 0.0
    %1225 = vmatpush.msra.mxu0 0.0
    %1226 = vmatpush.msra.mxu0 0.0
    %1227 = vmatpush.msra.mxu0 %v67
    %1228 = vmatpush.msra.mxu0 %v66
    %1229 = vmatmul.f32.gmra.mxu0 %v1211
    %v1230 = vpop.f32.mrf.mxu0
    %v1231 = vadd.f32 %v76, %v1230
    %1232 = vdwg.mxu0
    %v1233 = vadd.f32 %v1206, %v1231
    %v1234 = vxor.u32 %v1233, 2147483648
    %v1235 = vmul.f32 %v1234, 1.442695
    %v1236 = vpow.pop %v1235
    %v1237 = vadd.f32 %v1236, 1.0
    %v1238 = vrcp.pop %v1237
    %v1239 = vmul.f32 %v1237, %v1238
    %v1240 = vsub.f32 1.0, %v1239
    %v1241 = vmul.f32 %v1238, %v1240
    %v1242 = vadd.f32 %v1238, %v1241
    %vm1243 = vweird.f32 %v1237
    %vm1244 = vweird.f32 %v1238
    %vm1245 = vmor %vm1243, %vm1244
    %v1246 = vsel %vm1245, %v1238, %v1242
    %v1247 = vand.u32 2147483647, %v1237
    %vm1248 = vcmp.eq.f32.partialorder %v1247, 8.507059e+37
    %v1249 = vand.u32 %v1237, 2147483648
    %v1250 = vor.u32 1.1754944e-38, %v1249
    %v1251 = vsel %vm1248, %v1250, %v1246
    %v1252 = vmul.f32 1.0, %v1251
    %1254 = vrot.lane.b32.xlu0 %v1231, 96
    %v1255 = vpop.permute.xlu0 %1254
    %v1257 = vmul.f32 %v1252, %v1255
    %1259 = vrot.lane.b32.xlu0 %v1257, 32
    %v1260 = vpop.permute.xlu0 %1259
    %v1262 = vadd.f32 %v1206, %v1260
    %v1263 = vtanh.pop %v1262
    %v1264 = vsub.f32 1.0, %v1252
    %1266 = vrot.lane.b32.xlu0 %v1263, 112
    %v1267 = vpop.permute.xlu0 %1266
    %v1269 = vmul.f32 %v1264, %v1267
    %v1270 = vmul.f32 %v1252, %v1187
    %v1271 = vadd.f32 %v1269, %v1270
    %1272 = vmatpush.msra.mxu0 0.0
    %1273 = vmatpush.msra.mxu0 0.0
    %1274 = vmatpush.msra.mxu0 0.0
    %1275 = vmatpush.msra.mxu0 0.0
    %1276 = vmatpush.msra.mxu0 0.0
    %1277 = vmatpush.msra.mxu0 0.0
    %1278 = vmatpush.msra.mxu0 0.0
    %1279 = vmatpush.msra.mxu0 0.0
    %1280 = vmatpush.msra.mxu0 0.0
    %1281 = vmatpush.msra.mxu0 0.0
    %1282 = vmatpush.msra.mxu0 0.0
    %1283 = vmatpush.msra.mxu0 0.0
    %1284 = vmatpush.msra.mxu0 0.0
    %1285 = vmatpush.msra.mxu0 0.0
    %1286 = vmatpush.msra.mxu0 %v64
    %1287 = vmatpush.msra.mxu0 %v63
    %1288 = vmatmul.f32.gmra.mxu0 %v165
    %v1289 = vpop.f32.mrf.mxu0
    %v1290 = vadd.f32 %v71, %v1289
    %1291 = vdwg.mxu0
    %1293 = vrot.lane.b32.xlu0 %v1271, 112
    %v1294 = vpop.permute.xlu0 %1293
    %v1295 = vsel %vm78, %v1294, 0
    %1297 = vmatpush.msra.mxu0 0.0
    %1298 = vmatpush.msra.mxu0 0.0
    %1299 = vmatpush.msra.mxu0 0.0
    %1300 = vmatpush.msra.mxu0 0.0
    %1301 = vmatpush.msra.mxu0 0.0
    %1302 = vmatpush.msra.mxu0 0.0
    %1303 = vmatpush.msra.mxu0 0.0
    %1304 = vmatpush.msra.mxu0 0.0
    %1305 = vmatpush.msra.mxu0 0.0
    %1306 = vmatpush.msra.mxu0 0.0
    %1307 = vmatpush.msra.mxu0 0.0
    %1308 = vmatpush.msra.mxu0 0.0
    %1309 = vmatpush.msra.mxu0 0.0
    %1310 = vmatpush.msra.mxu0 0.0
    %1311 = vmatpush.msra.mxu0 %v67
    %1312 = vmatpush.msra.mxu0 %v66
    %1313 = vmatmul.f32.gmra.mxu0 %v1295
    %v1314 = vpop.f32.mrf.mxu0
    %v1315 = vadd.f32 %v76, %v1314
    %1316 = vdwg.mxu0
    %v1317 = vadd.f32 %v1290, %v1315
    %v1318 = vxor.u32 %v1317, 2147483648
    %v1319 = vmul.f32 %v1318, 1.442695
    %v1320 = vpow.pop %v1319
    %v1321 = vadd.f32 %v1320, 1.0
    %v1322 = vrcp.pop %v1321
    %v1323 = vmul.f32 %v1321, %v1322
    %v1324 = vsub.f32 1.0, %v1323
    %v1325 = vmul.f32 %v1322, %v1324
    %v1326 = vadd.f32 %v1322, %v1325
    %vm1327 = vweird.f32 %v1321
    %vm1328 = vweird.f32 %v1322
    %vm1329 = vmor %vm1327, %vm1328
    %v1330 = vsel %vm1329, %v1322, %v1326
    %v1331 = vand.u32 2147483647, %v1321
    %vm1332 = vcmp.eq.f32.partialorder %v1331, 8.507059e+37
    %v1333 = vand.u32 %v1321, 2147483648
    %v1334 = vor.u32 1.1754944e-38, %v1333
    %v1335 = vsel %vm1332, %v1334, %v1330
    %v1336 = vmul.f32 1.0, %v1335
    %1338 = vrot.lane.b32.xlu0 %v1315, 96
    %v1339 = vpop.permute.xlu0 %1338
    %v1341 = vmul.f32 %v1336, %v1339
    %1343 = vrot.lane.b32.xlu0 %v1341, 32
    %v1344 = vpop.permute.xlu0 %1343
    %v1346 = vadd.f32 %v1290, %v1344
    %v1347 = vtanh.pop %v1346
    %v1348 = vsub.f32 1.0, %v1336
    %1350 = vrot.lane.b32.xlu0 %v1347, 112
    %v1351 = vpop.permute.xlu0 %1350
    %v1353 = vmul.f32 %v1348, %v1351
    %v1354 = vmul.f32 %v1336, %v1271
    %v1355 = vadd.f32 %v1353, %v1354
    %1356 = vmatpush.msra.mxu0 0.0
    %1357 = vmatpush.msra.mxu0 0.0
    %1358 = vmatpush.msra.mxu0 0.0
    %1359 = vmatpush.msra.mxu0 0.0
    %1360 = vmatpush.msra.mxu0 0.0
    %1361 = vmatpush.msra.mxu0 0.0
    %1362 = vmatpush.msra.mxu0 0.0
    %1363 = vmatpush.msra.mxu0 0.0
    %1364 = vmatpush.msra.mxu0 0.0
    %1365 = vmatpush.msra.mxu0 0.0
    %1366 = vmatpush.msra.mxu0 0.0
    %1367 = vmatpush.msra.mxu0 0.0
    %1368 = vmatpush.msra.mxu0 0.0
    %1369 = vmatpush.msra.mxu0 0.0
    %1370 = vmatpush.msra.mxu0 %v64
    %1371 = vmatpush.msra.mxu0 %v63
    %1372 = vmatmul.f32.gmra.mxu0 %v80
    %v1373 = vpop.f32.mrf.mxu0
    %v1374 = vadd.f32 %v71, %v1373
    %1375 = vdwg.mxu0
    %1377 = vrot.lane.b32.xlu0 %v1355, 112
    %v1378 = vpop.permute.xlu0 %1377
    %v1379 = vsel %vm78, %v1378, 0
    %1381 = vmatpush.msra.mxu0 0.0
    %1382 = vmatpush.msra.mxu0 0.0
    %1383 = vmatpush.msra.mxu0 0.0
    %1384 = vmatpush.msra.mxu0 0.0
    %1385 = vmatpush.msra.mxu0 0.0
    %1386 = vmatpush.msra.mxu0 0.0
    %1387 = vmatpush.msra.mxu0 0.0
    %1388 = vmatpush.msra.mxu0 0.0
    %1389 = vmatpush.msra.mxu0 0.0
    %1390 = vmatpush.msra.mxu0 0.0
    %1391 = vmatpush.msra.mxu0 0.0
    %1392 = vmatpush.msra.mxu0 0.0
    %1393 = vmatpush.msra.mxu0 0.0
    %1394 = vmatpush.msra.mxu0 0.0
    %1395 = vmatpush.msra.mxu0 %v67
    %1396 = vmatpush.msra.mxu0 %v66
    %1397 = vmatmul.f32.gmra.mxu0 %v1379
    %v1398 = vpop.f32.mrf.mxu0
    %v1399 = vadd.f32 %v76, %v1398
    %1400 = vdwg.mxu0
    %v1401 = vadd.f32 %v1374, %v1399
    %v1402 = vxor.u32 %v1401, 2147483648
    %v1403 = vmul.f32 %v1402, 1.442695
    %v1404 = vpow.pop %v1403
    %v1405 = vadd.f32 %v1404, 1.0
    %v1406 = vrcp.pop %v1405
    %v1407 = vmul.f32 %v1405, %v1406
    %v1408 = vsub.f32 1.0, %v1407
    %v1409 = vmul.f32 %v1406, %v1408
    %v1410 = vadd.f32 %v1406, %v1409
    %vm1411 = vweird.f32 %v1405
    %vm1412 = vweird.f32 %v1406
    %vm1413 = vmor %vm1411, %vm1412
    %v1414 = vsel %vm1413, %v1406, %v1410
    %v1415 = vand.u32 2147483647, %v1405
    %vm1416 = vcmp.eq.f32.partialorder %v1415, 8.507059e+37
    %v1417 = vand.u32 %v1405, 2147483648
    %v1418 = vor.u32 1.1754944e-38, %v1417
    %v1419 = vsel %vm1416, %v1418, %v1414
    %v1420 = vmul.f32 1.0, %v1419
    %1422 = vrot.lane.b32.xlu0 %v1399, 96
    %v1423 = vpop.permute.xlu0 %1422
    %v1425 = vmul.f32 %v1420, %v1423
    %1427 = vrot.lane.b32.xlu0 %v1425, 32
    %v1428 = vpop.permute.xlu0 %1427
    %v1430 = vadd.f32 %v1374, %v1428
    %v1431 = vtanh.pop %v1430
    %v1432 = vsub.f32 1.0, %v1420
    %1434 = vrot.lane.b32.xlu0 %v1431, 112
    %v1435 = vpop.permute.xlu0 %1434
    %v1437 = vmul.f32 %v1432, %v1435
    %v1438 = vmul.f32 %v1420, %v1355
    %v1439 = vadd.f32 %v1437, %v1438
    %v1441 = vsel %vm78, %v189, %v1439
    %v1443 = vsel %vm78, %v276, %v1355
    %v1445 = vsel %vm78, %v363, %v1271
    %v1447 = vsel %vm78, %v450, %v1187
    %v1449 = vsel %vm78, %v537, %v1103
    %v1451 = vsel %vm78, %v624, %v1019
    %v1453 = vsel %vm78, %v711, %v935
    %1455 = vrot.lane.b32.xlu0 %v772, 112
    %v1456 = vpop.permute.xlu0 %1455
    %v1458 = vsel %vm78, %v1456, %v851
    %v1459 = vsel %vm78, %v1456, %v1439
    %vm1460 = vcmask 254976
    %1461 = vst.msk [vmem:[%s10] sm:$0x3] %vm1460, %v1459
    %v1462 = vld [vmem:[%s5] sm:$0xff]
    %v1463 = vld [vmem:[%s5 + $0x8] sm:$0xff]
    %v1464 = vld [vmem:[%s5 + $0x10] sm:$0xff]
    %v1465 = vld [vmem:[%s5 + $0x18] sm:$0xff]
    %v1466 = vld [vmem:[%s6] sm:$0xff]
    %v1467 = vld [vmem:[%s6 + $0x8] sm:$0xff]
    %v1468 = vld [vmem:[%s7] sm:$0x1]
    %v1470 = vperm.slane %v1468, 0
    %v1472 = vld [vmem:[%s8] sm:$0x1]
    %v1474 = vperm.slane %v1472, 0
    %s1476 = scalar_lea.vmem %s5, 32
    %v1477 = vld [vmem:[%s1476] sm:$0xff]
    %v1478 = vld [vmem:[%s1476 + $0x8] sm:$0xff]
    %v1479 = vld [vmem:[%s1476 + $0x10] sm:$0xff]
    %v1480 = vld [vmem:[%s1476 + $0x18] sm:$0xff]
    %s1481 = scalar_lea.vmem %s6, 16
    %v1482 = vld [vmem:[%s1481] sm:$0xff]
    %v1483 = vld [vmem:[%s1481 + $0x8] sm:$0xff]
    %s1484 = scalar_lea.vmem %s7, 1
    %v1485 = vld [vmem:[%s1484] sm:$0x1]
    %v1487 = vperm.slane %v1485, 0
    %s1489 = scalar_lea.vmem %s8, 1
    %v1490 = vld [vmem:[%s1489] sm:$0x1]
    %v1492 = vperm.slane %v1490, 0
    %vm1494 = vcmask 261120
    %v1496 = vsel %vm1494, %v1441, 0
    %1498 = vmatpush.msra.mxu0 0.0
    %1499 = vmatpush.msra.mxu0 0.0
    %1500 = vmatpush.msra.mxu0 0.0
    %1501 = vmatpush.msra.mxu0 0.0
    %1502 = vmatpush.msra.mxu0 0.0
    %1503 = vmatpush.msra.mxu0 0.0
    %1504 = vmatpush.msra.mxu0 0.0
    %1505 = vmatpush.msra.mxu0 0.0
    %1506 = vmatpush.msra.mxu0 0.0
    %1507 = vmatpush.msra.mxu0 0.0
    %1508 = vmatpush.msra.mxu0 0.0
    %1509 = vmatpush.msra.mxu0 0.0
    %1510 = vmatpush.msra.mxu0 %v1465
    %1511 = vmatpush.msra.mxu0 %v1464
    %1512 = vmatpush.msra.mxu0 %v1463
    %1513 = vmatpush.msra.mxu0 %v1462
    %1514 = vmatmul.f32.gmra.mxu0 %v1496
    %v1515 = vpop.f32.mrf.mxu0
    %v1516 = vadd.f32 %v1470, %v1515
    %1517 = vdwg.mxu0
    %1518 = vmatpush.msra.mxu0 0.0
    %1519 = vmatpush.msra.mxu0 0.0
    %1520 = vmatpush.msra.mxu0 0.0
    %1521 = vmatpush.msra.mxu0 0.0
    %1522 = vmatpush.msra.mxu0 0.0
    %1523 = vmatpush.msra.mxu0 0.0
    %1524 = vmatpush.msra.mxu0 0.0
    %1525 = vmatpush.msra.mxu0 0.0
    %1526 = vmatpush.msra.mxu0 0.0
    %1527 = vmatpush.msra.mxu0 0.0
    %1528 = vmatpush.msra.mxu0 0.0
    %1529 = vmatpush.msra.mxu0 0.0
    %1530 = vmatpush.msra.mxu0 0.0
    %1531 = vmatpush.msra.mxu0 0.0
    %1532 = vmatpush.msra.mxu0 %v1467
    %1533 = vmatpush.msra.mxu0 %v1466
    %1534 = vmatmul.f32.gmra.mxu0 %v103
    %v1535 = vpop.f32.mrf.mxu0
    %v1536 = vadd.f32 %v1474, %v1535
    %1537 = vdwg.mxu0
    %v1538 = vadd.f32 %v1516, %v1536
    %v1539 = vxor.u32 %v1538, 2147483648
    %v1540 = vmul.f32 %v1539, 1.442695
    %v1541 = vpow.pop %v1540
    %v1542 = vadd.f32 %v1541, 1.0
    %v1543 = vrcp.pop %v1542
    %v1544 = vmul.f32 %v1542, %v1543
    %v1545 = vsub.f32 1.0, %v1544
    %v1546 = vmul.f32 %v1543, %v1545
    %v1547 = vadd.f32 %v1543, %v1546
    %vm1548 = vweird.f32 %v1542
    %vm1549 = vweird.f32 %v1543
    %vm1550 = vmor %vm1548, %vm1549
    %v1551 = vsel %vm1550, %v1543, %v1547
    %v1552 = vand.u32 2147483647, %v1542
    %vm1553 = vcmp.eq.f32.partialorder %v1552, 8.507059e+37
    %v1554 = vand.u32 %v1542, 2147483648
    %v1555 = vor.u32 1.1754944e-38, %v1554
    %v1556 = vsel %vm1553, %v1555, %v1551
    %v1557 = vmul.f32 1.0, %v1556
    %1559 = vrot.lane.b32.xlu0 %v1536, 96
    %v1560 = vpop.permute.xlu0 %1559
    %v1562 = vmul.f32 %v1557, %v1560
    %1564 = vrot.lane.b32.xlu0 %v1562, 32
    %v1565 = vpop.permute.xlu0 %1564
    %v1567 = vadd.f32 %v1516, %v1565
    %v1568 = vtanh.pop %v1567
    %v1569 = vsub.f32 1.0, %v1557
    %1571 = vrot.lane.b32.xlu0 %v1568, 112
    %v1572 = vpop.permute.xlu0 %1571
    %v1574 = vmul.f32 %v1569, %v1572
    %v1575 = vmul.f32 %v1557, 0.0
    %v1576 = vadd.f32 %v1574, %v1575
    %v1578 = vsel %vm1494, %v1443, 0
    %1580 = vmatpush.msra.mxu0 0.0
    %1581 = vmatpush.msra.mxu0 0.0
    %1582 = vmatpush.msra.mxu0 0.0
    %1583 = vmatpush.msra.mxu0 0.0
    %1584 = vmatpush.msra.mxu0 0.0
    %1585 = vmatpush.msra.mxu0 0.0
    %1586 = vmatpush.msra.mxu0 0.0
    %1587 = vmatpush.msra.mxu0 0.0
    %1588 = vmatpush.msra.mxu0 0.0
    %1589 = vmatpush.msra.mxu0 0.0
    %1590 = vmatpush.msra.mxu0 0.0
    %1591 = vmatpush.msra.mxu0 0.0
    %1592 = vmatpush.msra.mxu0 %v1465
    %1593 = vmatpush.msra.mxu0 %v1464
    %1594 = vmatpush.msra.mxu0 %v1463
    %1595 = vmatpush.msra.mxu0 %v1462
    %1596 = vmatmul.f32.gmra.mxu0 %v1578
    %v1597 = vpop.f32.mrf.mxu0
    %v1598 = vadd.f32 %v1470, %v1597
    %1599 = vdwg.mxu0
    %1601 = vrot.lane.b32.xlu0 %v1576, 112
    %v1602 = vpop.permute.xlu0 %1601
    %v1603 = vsel %vm78, %v1602, 0
    %1605 = vmatpush.msra.mxu0 0.0
    %1606 = vmatpush.msra.mxu0 0.0
    %1607 = vmatpush.msra.mxu0 0.0
    %1608 = vmatpush.msra.mxu0 0.0
    %1609 = vmatpush.msra.mxu0 0.0
    %1610 = vmatpush.msra.mxu0 0.0
    %1611 = vmatpush.msra.mxu0 0.0
    %1612 = vmatpush.msra.mxu0 0.0
    %1613 = vmatpush.msra.mxu0 0.0
    %1614 = vmatpush.msra.mxu0 0.0
    %1615 = vmatpush.msra.mxu0 0.0
    %1616 = vmatpush.msra.mxu0 0.0
    %1617 = vmatpush.msra.mxu0 0.0
    %1618 = vmatpush.msra.mxu0 0.0
    %1619 = vmatpush.msra.mxu0 %v1467
    %1620 = vmatpush.msra.mxu0 %v1466
    %1621 = vmatmul.f32.gmra.mxu0 %v1603
    %v1622 = vpop.f32.mrf.mxu0
    %v1623 = vadd.f32 %v1474, %v1622
    %1624 = vdwg.mxu0
    %v1625 = vadd.f32 %v1598, %v1623
    %v1626 = vxor.u32 %v1625, 2147483648
    %v1627 = vmul.f32 %v1626, 1.442695
    %v1628 = vpow.pop %v1627
    %v1629 = vadd.f32 %v1628, 1.0
    %v1630 = vrcp.pop %v1629
    %v1631 = vmul.f32 %v1629, %v1630
    %v1632 = vsub.f32 1.0, %v1631
    %v1633 = vmul.f32 %v1630, %v1632
    %v1634 = vadd.f32 %v1630, %v1633
    %vm1635 = vweird.f32 %v1629
    %vm1636 = vweird.f32 %v1630
    %vm1637 = vmor %vm1635, %vm1636
    %v1638 = vsel %vm1637, %v1630, %v1634
    %v1639 = vand.u32 2147483647, %v1629
    %vm1640 = vcmp.eq.f32.partialorder %v1639, 8.507059e+37
    %v1641 = vand.u32 %v1629, 2147483648
    %v1642 = vor.u32 1.1754944e-38, %v1641
    %v1643 = vsel %vm1640, %v1642, %v1638
    %v1644 = vmul.f32 1.0, %v1643
    %1646 = vrot.lane.b32.xlu0 %v1623, 96
    %v1647 = vpop.permute.xlu0 %1646
    %v1649 = vmul.f32 %v1644, %v1647
    %1651 = vrot.lane.b32.xlu0 %v1649, 32
    %v1652 = vpop.permute.xlu0 %1651
    %v1654 = vadd.f32 %v1598, %v1652
    %v1655 = vtanh.pop %v1654
    %v1656 = vsub.f32 1.0, %v1644
    %1658 = vrot.lane.b32.xlu0 %v1655, 112
    %v1659 = vpop.permute.xlu0 %1658
    %v1661 = vmul.f32 %v1656, %v1659
    %v1662 = vmul.f32 %v1644, %v1576
    %v1663 = vadd.f32 %v1661, %v1662
    %v1665 = vsel %vm1494, %v1445, 0
    %1667 = vmatpush.msra.mxu0 0.0
    %1668 = vmatpush.msra.mxu0 0.0
    %1669 = vmatpush.msra.mxu0 0.0
    %1670 = vmatpush.msra.mxu0 0.0
    %1671 = vmatpush.msra.mxu0 0.0
    %1672 = vmatpush.msra.mxu0 0.0
    %1673 = vmatpush.msra.mxu0 0.0
    %1674 = vmatpush.msra.mxu0 0.0
    %1675 = vmatpush.msra.mxu0 0.0
    %1676 = vmatpush.msra.mxu0 0.0
    %1677 = vmatpush.msra.mxu0 0.0
    %1678 = vmatpush.msra.mxu0 0.0
    %1679 = vmatpush.msra.mxu0 %v1465
    %1680 = vmatpush.msra.mxu0 %v1464
    %1681 = vmatpush.msra.mxu0 %v1463
    %1682 = vmatpush.msra.mxu0 %v1462
    %1683 = vmatmul.f32.gmra.mxu0 %v1665
    %v1684 = vpop.f32.mrf.mxu0
    %v1685 = vadd.f32 %v1470, %v1684
    %1686 = vdwg.mxu0
    %1688 = vrot.lane.b32.xlu0 %v1663, 112
    %v1689 = vpop.permute.xlu0 %1688
    %v1690 = vsel %vm78, %v1689, 0
    %1692 = vmatpush.msra.mxu0 0.0
    %1693 = vmatpush.msra.mxu0 0.0
    %1694 = vmatpush.msra.mxu0 0.0
    %1695 = vmatpush.msra.mxu0 0.0
    %1696 = vmatpush.msra.mxu0 0.0
    %1697 = vmatpush.msra.mxu0 0.0
    %1698 = vmatpush.msra.mxu0 0.0
    %1699 = vmatpush.msra.mxu0 0.0
    %1700 = vmatpush.msra.mxu0 0.0
    %1701 = vmatpush.msra.mxu0 0.0
    %1702 = vmatpush.msra.mxu0 0.0
    %1703 = vmatpush.msra.mxu0 0.0
    %1704 = vmatpush.msra.mxu0 0.0
    %1705 = vmatpush.msra.mxu0 0.0
    %1706 = vmatpush.msra.mxu0 %v1467
    %1707 = vmatpush.msra.mxu0 %v1466
    %1708 = vmatmul.f32.gmra.mxu0 %v1690
    %v1709 = vpop.f32.mrf.mxu0
    %v1710 = vadd.f32 %v1474, %v1709
    %1711 = vdwg.mxu0
    %v1712 = vadd.f32 %v1685, %v1710
    %v1713 = vxor.u32 %v1712, 2147483648
    %v1714 = vmul.f32 %v1713, 1.442695
    %v1715 = vpow.pop %v1714
    %v1716 = vadd.f32 %v1715, 1.0
    %v1717 = vrcp.pop %v1716
    %v1718 = vmul.f32 %v1716, %v1717
    %v1719 = vsub.f32 1.0, %v1718
    %v1720 = vmul.f32 %v1717, %v1719
    %v1721 = vadd.f32 %v1717, %v1720
    %vm1722 = vweird.f32 %v1716
    %vm1723 = vweird.f32 %v1717
    %vm1724 = vmor %vm1722, %vm1723
    %v1725 = vsel %vm1724, %v1717, %v1721
    %v1726 = vand.u32 2147483647, %v1716
    %vm1727 = vcmp.eq.f32.partialorder %v1726, 8.507059e+37
    %v1728 = vand.u32 %v1716, 2147483648
    %v1729 = vor.u32 1.1754944e-38, %v1728
    %v1730 = vsel %vm1727, %v1729, %v1725
    %v1731 = vmul.f32 1.0, %v1730
    %1733 = vrot.lane.b32.xlu0 %v1710, 96
    %v1734 = vpop.permute.xlu0 %1733
    %v1736 = vmul.f32 %v1731, %v1734
    %1738 = vrot.lane.b32.xlu0 %v1736, 32
    %v1739 = vpop.permute.xlu0 %1738
    %v1741 = vadd.f32 %v1685, %v1739
    %v1742 = vtanh.pop %v1741
    %v1743 = vsub.f32 1.0, %v1731
    %1745 = vrot.lane.b32.xlu0 %v1742, 112
    %v1746 = vpop.permute.xlu0 %1745
    %v1748 = vmul.f32 %v1743, %v1746
    %v1749 = vmul.f32 %v1731, %v1663
    %v1750 = vadd.f32 %v1748, %v1749
    %v1752 = vsel %vm1494, %v1447, 0
    %1754 = vmatpush.msra.mxu0 0.0
    %1755 = vmatpush.msra.mxu0 0.0
    %1756 = vmatpush.msra.mxu0 0.0
    %1757 = vmatpush.msra.mxu0 0.0
    %1758 = vmatpush.msra.mxu0 0.0
    %1759 = vmatpush.msra.mxu0 0.0
    %1760 = vmatpush.msra.mxu0 0.0
    %1761 = vmatpush.msra.mxu0 0.0
    %1762 = vmatpush.msra.mxu0 0.0
    %1763 = vmatpush.msra.mxu0 0.0
    %1764 = vmatpush.msra.mxu0 0.0
    %1765 = vmatpush.msra.mxu0 0.0
    %1766 = vmatpush.msra.mxu0 %v1465
    %1767 = vmatpush.msra.mxu0 %v1464
    %1768 = vmatpush.msra.mxu0 %v1463
    %1769 = vmatpush.msra.mxu0 %v1462
    %1770 = vmatmul.f32.gmra.mxu0 %v1752
    %v1771 = vpop.f32.mrf.mxu0
    %v1772 = vadd.f32 %v1470, %v1771
    %1773 = vdwg.mxu0
    %1775 = vrot.lane.b32.xlu0 %v1750, 112
    %v1776 = vpop.permute.xlu0 %1775
    %v1777 = vsel %vm78, %v1776, 0
    %1779 = vmatpush.msra.mxu0 0.0
    %1780 = vmatpush.msra.mxu0 0.0
    %1781 = vmatpush.msra.mxu0 0.0
    %1782 = vmatpush.msra.mxu0 0.0
    %1783 = vmatpush.msra.mxu0 0.0
    %1784 = vmatpush.msra.mxu0 0.0
    %1785 = vmatpush.msra.mxu0 0.0
    %1786 = vmatpush.msra.mxu0 0.0
    %1787 = vmatpush.msra.mxu0 0.0
    %1788 = vmatpush.msra.mxu0 0.0
    %1789 = vmatpush.msra.mxu0 0.0
    %1790 = vmatpush.msra.mxu0 0.0
    %1791 = vmatpush.msra.mxu0 0.0
    %1792 = vmatpush.msra.mxu0 0.0
    %1793 = vmatpush.msra.mxu0 %v1467
    %1794 = vmatpush.msra.mxu0 %v1466
    %1795 = vmatmul.f32.gmra.mxu0 %v1777
    %v1796 = vpop.f32.mrf.mxu0
    %v1797 = vadd.f32 %v1474, %v1796
    %1798 = vdwg.mxu0
    %v1799 = vadd.f32 %v1772, %v1797
    %v1800 = vxor.u32 %v1799, 2147483648
    %v1801 = vmul.f32 %v1800, 1.442695
    %v1802 = vpow.pop %v1801
    %v1803 = vadd.f32 %v1802, 1.0
    %v1804 = vrcp.pop %v1803
    %v1805 = vmul.f32 %v1803, %v1804
    %v1806 = vsub.f32 1.0, %v1805
    %v1807 = vmul.f32 %v1804, %v1806
    %v1808 = vadd.f32 %v1804, %v1807
    %vm1809 = vweird.f32 %v1803
    %vm1810 = vweird.f32 %v1804
    %vm1811 = vmor %vm1809, %vm1810
    %v1812 = vsel %vm1811, %v1804, %v1808
    %v1813 = vand.u32 2147483647, %v1803
    %vm1814 = vcmp.eq.f32.partialorder %v1813, 8.507059e+37
    %v1815 = vand.u32 %v1803, 2147483648
    %v1816 = vor.u32 1.1754944e-38, %v1815
    %v1817 = vsel %vm1814, %v1816, %v1812
    %v1818 = vmul.f32 1.0, %v1817
    %1820 = vrot.lane.b32.xlu0 %v1797, 96
    %v1821 = vpop.permute.xlu0 %1820
    %v1823 = vmul.f32 %v1818, %v1821
    %1825 = vrot.lane.b32.xlu0 %v1823, 32
    %v1826 = vpop.permute.xlu0 %1825
    %v1828 = vadd.f32 %v1772, %v1826
    %v1829 = vtanh.pop %v1828
    %v1830 = vsub.f32 1.0, %v1818
    %1832 = vrot.lane.b32.xlu0 %v1829, 112
    %v1833 = vpop.permute.xlu0 %1832
    %v1835 = vmul.f32 %v1830, %v1833
    %v1836 = vmul.f32 %v1818, %v1750
    %v1837 = vadd.f32 %v1835, %v1836
    %v1839 = vsel %vm1494, %v1449, 0
    %1841 = vmatpush.msra.mxu0 0.0
    %1842 = vmatpush.msra.mxu0 0.0
    %1843 = vmatpush.msra.mxu0 0.0
    %1844 = vmatpush.msra.mxu0 0.0
    %1845 = vmatpush.msra.mxu0 0.0
    %1846 = vmatpush.msra.mxu0 0.0
    %1847 = vmatpush.msra.mxu0 0.0
    %1848 = vmatpush.msra.mxu0 0.0
    %1849 = vmatpush.msra.mxu0 0.0
    %1850 = vmatpush.msra.mxu0 0.0
    %1851 = vmatpush.msra.mxu0 0.0
    %1852 = vmatpush.msra.mxu0 0.0
    %1853 = vmatpush.msra.mxu0 %v1465
    %1854 = vmatpush.msra.mxu0 %v1464
    %1855 = vmatpush.msra.mxu0 %v1463
    %1856 = vmatpush.msra.mxu0 %v1462
    %1857 = vmatmul.f32.gmra.mxu0 %v1839
    %v1858 = vpop.f32.mrf.mxu0
    %v1859 = vadd.f32 %v1470, %v1858
    %1860 = vdwg.mxu0
    %1862 = vrot.lane.b32.xlu0 %v1837, 112
    %v1863 = vpop.permute.xlu0 %1862
    %v1864 = vsel %vm78, %v1863, 0
    %1866 = vmatpush.msra.mxu0 0.0
    %1867 = vmatpush.msra.mxu0 0.0
    %1868 = vmatpush.msra.mxu0 0.0
    %1869 = vmatpush.msra.mxu0 0.0
    %1870 = vmatpush.msra.mxu0 0.0
    %1871 = vmatpush.msra.mxu0 0.0
    %1872 = vmatpush.msra.mxu0 0.0
    %1873 = vmatpush.msra.mxu0 0.0
    %1874 = vmatpush.msra.mxu0 0.0
    %1875 = vmatpush.msra.mxu0 0.0
    %1876 = vmatpush.msra.mxu0 0.0
    %1877 = vmatpush.msra.mxu0 0.0
    %1878 = vmatpush.msra.mxu0 0.0
    %1879 = vmatpush.msra.mxu0 0.0
    %1880 = vmatpush.msra.mxu0 %v1467
    %1881 = vmatpush.msra.mxu0 %v1466
    %1882 = vmatmul.f32.gmra.mxu0 %v1864
    %v1883 = vpop.f32.mrf.mxu0
    %v1884 = vadd.f32 %v1474, %v1883
    %1885 = vdwg.mxu0
    %v1886 = vadd.f32 %v1859, %v1884
    %v1887 = vxor.u32 %v1886, 2147483648
    %v1888 = vmul.f32 %v1887, 1.442695
    %v1889 = vpow.pop %v1888
    %v1890 = vadd.f32 %v1889, 1.0
    %v1891 = vrcp.pop %v1890
    %v1892 = vmul.f32 %v1890, %v1891
    %v1893 = vsub.f32 1.0, %v1892
    %v1894 = vmul.f32 %v1891, %v1893
    %v1895 = vadd.f32 %v1891, %v1894
    %vm1896 = vweird.f32 %v1890
    %vm1897 = vweird.f32 %v1891
    %vm1898 = vmor %vm1896, %vm1897
    %v1899 = vsel %vm1898, %v1891, %v1895
    %v1900 = vand.u32 2147483647, %v1890
    %vm1901 = vcmp.eq.f32.partialorder %v1900, 8.507059e+37
    %v1902 = vand.u32 %v1890, 2147483648
    %v1903 = vor.u32 1.1754944e-38, %v1902
    %v1904 = vsel %vm1901, %v1903, %v1899
    %v1905 = vmul.f32 1.0, %v1904
    %1907 = vrot.lane.b32.xlu0 %v1884, 96
    %v1908 = vpop.permute.xlu0 %1907
    %v1910 = vmul.f32 %v1905, %v1908
    %1912 = vrot.lane.b32.xlu0 %v1910, 32
    %v1913 = vpop.permute.xlu0 %1912
    %v1915 = vadd.f32 %v1859, %v1913
    %v1916 = vtanh.pop %v1915
    %v1917 = vsub.f32 1.0, %v1905
    %1919 = vrot.lane.b32.xlu0 %v1916, 112
    %v1920 = vpop.permute.xlu0 %1919
    %v1922 = vmul.f32 %v1917, %v1920
    %v1923 = vmul.f32 %v1905, %v1837
    %v1924 = vadd.f32 %v1922, %v1923
    %v1926 = vsel %vm1494, %v1451, 0
    %1928 = vmatpush.msra.mxu0 0.0
    %1929 = vmatpush.msra.mxu0 0.0
    %1930 = vmatpush.msra.mxu0 0.0
    %1931 = vmatpush.msra.mxu0 0.0
    %1932 = vmatpush.msra.mxu0 0.0
    %1933 = vmatpush.msra.mxu0 0.0
    %1934 = vmatpush.msra.mxu0 0.0
    %1935 = vmatpush.msra.mxu0 0.0
    %1936 = vmatpush.msra.mxu0 0.0
    %1937 = vmatpush.msra.mxu0 0.0
    %1938 = vmatpush.msra.mxu0 0.0
    %1939 = vmatpush.msra.mxu0 0.0
    %1940 = vmatpush.msra.mxu0 %v1465
    %1941 = vmatpush.msra.mxu0 %v1464
    %1942 = vmatpush.msra.mxu0 %v1463
    %1943 = vmatpush.msra.mxu0 %v1462
    %1944 = vmatmul.f32.gmra.mxu0 %v1926
    %v1945 = vpop.f32.mrf.mxu0
    %v1946 = vadd.f32 %v1470, %v1945
    %1947 = vdwg.mxu0
    %1949 = vrot.lane.b32.xlu0 %v1924, 112
    %v1950 = vpop.permute.xlu0 %1949
    %v1951 = vsel %vm78, %v1950, 0
    %1953 = vmatpush.msra.mxu0 0.0
    %1954 = vmatpush.msra.mxu0 0.0
    %1955 = vmatpush.msra.mxu0 0.0
    %1956 = vmatpush.msra.mxu0 0.0
    %1957 = vmatpush.msra.mxu0 0.0
    %1958 = vmatpush.msra.mxu0 0.0
    %1959 = vmatpush.msra.mxu0 0.0
    %1960 = vmatpush.msra.mxu0 0.0
    %1961 = vmatpush.msra.mxu0 0.0
    %1962 = vmatpush.msra.mxu0 0.0
    %1963 = vmatpush.msra.mxu0 0.0
    %1964 = vmatpush.msra.mxu0 0.0
    %1965 = vmatpush.msra.mxu0 0.0
    %1966 = vmatpush.msra.mxu0 0.0
    %1967 = vmatpush.msra.mxu0 %v1467
    %1968 = vmatpush.msra.mxu0 %v1466
    %1969 = vmatmul.f32.gmra.mxu0 %v1951
    %v1970 = vpop.f32.mrf.mxu0
    %v1971 = vadd.f32 %v1474, %v1970
    %1972 = vdwg.mxu0
    %v1973 = vadd.f32 %v1946, %v1971
    %v1974 = vxor.u32 %v1973, 2147483648
    %v1975 = vmul.f32 %v1974, 1.442695
    %v1976 = vpow.pop %v1975
    %v1977 = vadd.f32 %v1976, 1.0
    %v1978 = vrcp.pop %v1977
    %v1979 = vmul.f32 %v1977, %v1978
    %v1980 = vsub.f32 1.0, %v1979
    %v1981 = vmul.f32 %v1978, %v1980
    %v1982 = vadd.f32 %v1978, %v1981
    %vm1983 = vweird.f32 %v1977
    %vm1984 = vweird.f32 %v1978
    %vm1985 = vmor %vm1983, %vm1984
    %v1986 = vsel %vm1985, %v1978, %v1982
    %v1987 = vand.u32 2147483647, %v1977
    %vm1988 = vcmp.eq.f32.partialorder %v1987, 8.507059e+37
    %v1989 = vand.u32 %v1977, 2147483648
    %v1990 = vor.u32 1.1754944e-38, %v1989
    %v1991 = vsel %vm1988, %v1990, %v1986
    %v1992 = vmul.f32 1.0, %v1991
    %1994 = vrot.lane.b32.xlu0 %v1971, 96
    %v1995 = vpop.permute.xlu0 %1994
    %v1997 = vmul.f32 %v1992, %v1995
    %1999 = vrot.lane.b32.xlu0 %v1997, 32
    %v2000 = vpop.permute.xlu0 %1999
    %v2002 = vadd.f32 %v1946, %v2000
    %v2003 = vtanh.pop %v2002
    %v2004 = vsub.f32 1.0, %v1992
    %2006 = vrot.lane.b32.xlu0 %v2003, 112
    %v2007 = vpop.permute.xlu0 %2006
    %v2009 = vmul.f32 %v2004, %v2007
    %v2010 = vmul.f32 %v1992, %v1924
    %v2011 = vadd.f32 %v2009, %v2010
    %v2013 = vsel %vm1494, %v1453, 0
    %2015 = vmatpush.msra.mxu0 0.0
    %2016 = vmatpush.msra.mxu0 0.0
    %2017 = vmatpush.msra.mxu0 0.0
    %2018 = vmatpush.msra.mxu0 0.0
    %2019 = vmatpush.msra.mxu0 0.0
    %2020 = vmatpush.msra.mxu0 0.0
    %2021 = vmatpush.msra.mxu0 0.0
    %2022 = vmatpush.msra.mxu0 0.0
    %2023 = vmatpush.msra.mxu0 0.0
    %2024 = vmatpush.msra.mxu0 0.0
    %2025 = vmatpush.msra.mxu0 0.0
    %2026 = vmatpush.msra.mxu0 0.0
    %2027 = vmatpush.msra.mxu0 %v1465
    %2028 = vmatpush.msra.mxu0 %v1464
    %2029 = vmatpush.msra.mxu0 %v1463
    %2030 = vmatpush.msra.mxu0 %v1462
    %2031 = vmatmul.f32.gmra.mxu0 %v2013
    %v2032 = vpop.f32.mrf.mxu0
    %v2033 = vadd.f32 %v1470, %v2032
    %2034 = vdwg.mxu0
    %2036 = vrot.lane.b32.xlu0 %v2011, 112
    %v2037 = vpop.permute.xlu0 %2036
    %v2038 = vsel %vm78, %v2037, 0
    %2040 = vmatpush.msra.mxu0 0.0
    %2041 = vmatpush.msra.mxu0 0.0
    %2042 = vmatpush.msra.mxu0 0.0
    %2043 = vmatpush.msra.mxu0 0.0
    %2044 = vmatpush.msra.mxu0 0.0
    %2045 = vmatpush.msra.mxu0 0.0
    %2046 = vmatpush.msra.mxu0 0.0
    %2047 = vmatpush.msra.mxu0 0.0
    %2048 = vmatpush.msra.mxu0 0.0
    %2049 = vmatpush.msra.mxu0 0.0
    %2050 = vmatpush.msra.mxu0 0.0
    %2051 = vmatpush.msra.mxu0 0.0
    %2052 = vmatpush.msra.mxu0 0.0
    %2053 = vmatpush.msra.mxu0 0.0
    %2054 = vmatpush.msra.mxu0 %v1467
    %2055 = vmatpush.msra.mxu0 %v1466
    %2056 = vmatmul.f32.gmra.mxu0 %v2038
    %v2057 = vpop.f32.mrf.mxu0
    %v2058 = vadd.f32 %v1474, %v2057
    %2059 = vdwg.mxu0
    %v2060 = vadd.f32 %v2033, %v2058
    %v2061 = vxor.u32 %v2060, 2147483648
    %v2062 = vmul.f32 %v2061, 1.442695
    %v2063 = vpow.pop %v2062
    %v2064 = vadd.f32 %v2063, 1.0
    %v2065 = vrcp.pop %v2064
    %v2066 = vmul.f32 %v2064, %v2065
    %v2067 = vsub.f32 1.0, %v2066
    %v2068 = vmul.f32 %v2065, %v2067
    %v2069 = vadd.f32 %v2065, %v2068
    %vm2070 = vweird.f32 %v2064
    %vm2071 = vweird.f32 %v2065
    %vm2072 = vmor %vm2070, %vm2071
    %v2073 = vsel %vm2072, %v2065, %v2069
    %v2074 = vand.u32 2147483647, %v2064
    %vm2075 = vcmp.eq.f32.partialorder %v2074, 8.507059e+37
    %v2076 = vand.u32 %v2064, 2147483648
    %v2077 = vor.u32 1.1754944e-38, %v2076
    %v2078 = vsel %vm2075, %v2077, %v2073
    %v2079 = vmul.f32 1.0, %v2078
    %2081 = vrot.lane.b32.xlu0 %v2058, 96
    %v2082 = vpop.permute.xlu0 %2081
    %v2084 = vmul.f32 %v2079, %v2082
    %2086 = vrot.lane.b32.xlu0 %v2084, 32
    %v2087 = vpop.permute.xlu0 %2086
    %v2089 = vadd.f32 %v2033, %v2087
    %v2090 = vtanh.pop %v2089
    %v2091 = vsub.f32 1.0, %v2079
    %2093 = vrot.lane.b32.xlu0 %v2090, 112
    %v2094 = vpop.permute.xlu0 %2093
    %v2096 = vmul.f32 %v2091, %v2094
    %v2097 = vmul.f32 %v2079, %v2011
    %v2098 = vadd.f32 %v2096, %v2097
    %v2100 = vsel %vm1494, %v1458, 0
    %2102 = vmatpush.msra.mxu0 0.0
    %2103 = vmatpush.msra.mxu0 0.0
    %2104 = vmatpush.msra.mxu0 0.0
    %2105 = vmatpush.msra.mxu0 0.0
    %2106 = vmatpush.msra.mxu0 0.0
    %2107 = vmatpush.msra.mxu0 0.0
    %2108 = vmatpush.msra.mxu0 0.0
    %2109 = vmatpush.msra.mxu0 0.0
    %2110 = vmatpush.msra.mxu0 0.0
    %2111 = vmatpush.msra.mxu0 0.0
    %2112 = vmatpush.msra.mxu0 0.0
    %2113 = vmatpush.msra.mxu0 0.0
    %2114 = vmatpush.msra.mxu0 %v1465
    %2115 = vmatpush.msra.mxu0 %v1464
    %2116 = vmatpush.msra.mxu0 %v1463
    %2117 = vmatpush.msra.mxu0 %v1462
    %2118 = vmatmul.f32.gmra.mxu0 %v2100
    %v2119 = vpop.f32.mrf.mxu0
    %v2120 = vadd.f32 %v1470, %v2119
    %2121 = vdwg.mxu0
    %2123 = vrot.lane.b32.xlu0 %v2098, 112
    %v2124 = vpop.permute.xlu0 %2123
    %v2125 = vsel %vm78, %v2124, 0
    %2127 = vmatpush.msra.mxu0 0.0
    %2128 = vmatpush.msra.mxu0 0.0
    %2129 = vmatpush.msra.mxu0 0.0
    %2130 = vmatpush.msra.mxu0 0.0
    %2131 = vmatpush.msra.mxu0 0.0
    %2132 = vmatpush.msra.mxu0 0.0
    %2133 = vmatpush.msra.mxu0 0.0
    %2134 = vmatpush.msra.mxu0 0.0
    %2135 = vmatpush.msra.mxu0 0.0
    %2136 = vmatpush.msra.mxu0 0.0
    %2137 = vmatpush.msra.mxu0 0.0
    %2138 = vmatpush.msra.mxu0 0.0
    %2139 = vmatpush.msra.mxu0 0.0
    %2140 = vmatpush.msra.mxu0 0.0
    %2141 = vmatpush.msra.mxu0 %v1467
    %2142 = vmatpush.msra.mxu0 %v1466
    %2143 = vmatmul.f32.gmra.mxu0 %v2125
    %v2144 = vpop.f32.mrf.mxu0
    %v2145 = vadd.f32 %v1474, %v2144
    %2146 = vdwg.mxu0
    %v2147 = vadd.f32 %v2120, %v2145
    %v2148 = vxor.u32 %v2147, 2147483648
    %v2149 = vmul.f32 %v2148, 1.442695
    %v2150 = vpow.pop %v2149
    %v2151 = vadd.f32 %v2150, 1.0
    %v2152 = vrcp.pop %v2151
    %v2153 = vmul.f32 %v2151, %v2152
    %v2154 = vsub.f32 1.0, %v2153
    %v2155 = vmul.f32 %v2152, %v2154
    %v2156 = vadd.f32 %v2152, %v2155
    %vm2157 = vweird.f32 %v2151
    %vm2158 = vweird.f32 %v2152
    %vm2159 = vmor %vm2157, %vm2158
    %v2160 = vsel %vm2159, %v2152, %v2156
    %v2161 = vand.u32 2147483647, %v2151
    %vm2162 = vcmp.eq.f32.partialorder %v2161, 8.507059e+37
    %v2163 = vand.u32 %v2151, 2147483648
    %v2164 = vor.u32 1.1754944e-38, %v2163
    %v2165 = vsel %vm2162, %v2164, %v2160
    %v2166 = vmul.f32 1.0, %v2165
    %2168 = vrot.lane.b32.xlu0 %v2145, 96
    %v2169 = vpop.permute.xlu0 %2168
    %v2171 = vmul.f32 %v2166, %v2169
    %2173 = vrot.lane.b32.xlu0 %v2171, 32
    %v2174 = vpop.permute.xlu0 %2173
    %v2176 = vadd.f32 %v2120, %v2174
    %v2177 = vtanh.pop %v2176
    %v2178 = vsub.f32 1.0, %v2166
    %2180 = vrot.lane.b32.xlu0 %v2177, 112
    %v2181 = vpop.permute.xlu0 %2180
    %v2183 = vmul.f32 %v2178, %v2181
    %v2184 = vmul.f32 %v2166, %v2098
    %v2185 = vadd.f32 %v2183, %v2184
    %2186 = vmatpush.msra.mxu0 0.0
    %2187 = vmatpush.msra.mxu0 0.0
    %2188 = vmatpush.msra.mxu0 0.0
    %2189 = vmatpush.msra.mxu0 0.0
    %2190 = vmatpush.msra.mxu0 0.0
    %2191 = vmatpush.msra.mxu0 0.0
    %2192 = vmatpush.msra.mxu0 0.0
    %2193 = vmatpush.msra.mxu0 0.0
    %2194 = vmatpush.msra.mxu0 0.0
    %2195 = vmatpush.msra.mxu0 0.0
    %2196 = vmatpush.msra.mxu0 0.0
    %2197 = vmatpush.msra.mxu0 0.0
    %2198 = vmatpush.msra.mxu0 %v1480
    %2199 = vmatpush.msra.mxu0 %v1479
    %2200 = vmatpush.msra.mxu0 %v1478
    %2201 = vmatpush.msra.mxu0 %v1477
    %2202 = vmatmul.f32.gmra.mxu0 %v2100
    %v2203 = vpop.f32.mrf.mxu0
    %v2204 = vadd.f32 %v1487, %v2203
    %2205 = vdwg.mxu0
    %2206 = vmatpush.msra.mxu0 0.0
    %2207 = vmatpush.msra.mxu0 0.0
    %2208 = vmatpush.msra.mxu0 0.0
    %2209 = vmatpush.msra.mxu0 0.0
    %2210 = vmatpush.msra.mxu0 0.0
    %2211 = vmatpush.msra.mxu0 0.0
    %2212 = vmatpush.msra.mxu0 0.0
    %2213 = vmatpush.msra.mxu0 0.0
    %2214 = vmatpush.msra.mxu0 0.0
    %2215 = vmatpush.msra.mxu0 0.0
    %2216 = vmatpush.msra.mxu0 0.0
    %2217 = vmatpush.msra.mxu0 0.0
    %2218 = vmatpush.msra.mxu0 0.0
    %2219 = vmatpush.msra.mxu0 0.0
    %2220 = vmatpush.msra.mxu0 %v1483
    %2221 = vmatpush.msra.mxu0 %v1482
    %2222 = vmatmul.f32.gmra.mxu0 %v103
    %v2223 = vpop.f32.mrf.mxu0
    %v2224 = vadd.f32 %v1492, %v2223
    %2225 = vdwg.mxu0
    %v2226 = vadd.f32 %v2204, %v2224
    %v2227 = vxor.u32 %v2226, 2147483648
    %v2228 = vmul.f32 %v2227, 1.442695
    %v2229 = vpow.pop %v2228
    %v2230 = vadd.f32 %v2229, 1.0
    %v2231 = vrcp.pop %v2230
    %v2232 = vmul.f32 %v2230, %v2231
    %v2233 = vsub.f32 1.0, %v2232
    %v2234 = vmul.f32 %v2231, %v2233
    %v2235 = vadd.f32 %v2231, %v2234
    %vm2236 = vweird.f32 %v2230
    %vm2237 = vweird.f32 %v2231
    %vm2238 = vmor %vm2236, %vm2237
    %v2239 = vsel %vm2238, %v2231, %v2235
    %v2240 = vand.u32 2147483647, %v2230
    %vm2241 = vcmp.eq.f32.partialorder %v2240, 8.507059e+37
    %v2242 = vand.u32 %v2230, 2147483648
    %v2243 = vor.u32 1.1754944e-38, %v2242
    %v2244 = vsel %vm2241, %v2243, %v2239
    %v2245 = vmul.f32 1.0, %v2244
    %2247 = vrot.lane.b32.xlu0 %v2224, 96
    %v2248 = vpop.permute.xlu0 %2247
    %v2250 = vmul.f32 %v2245, %v2248
    %2252 = vrot.lane.b32.xlu0 %v2250, 32
    %v2253 = vpop.permute.xlu0 %2252
    %v2255 = vadd.f32 %v2204, %v2253
    %v2256 = vtanh.pop %v2255
    %v2257 = vsub.f32 1.0, %v2245
    %2259 = vrot.lane.b32.xlu0 %v2256, 112
    %v2260 = vpop.permute.xlu0 %2259
    %v2262 = vmul.f32 %v2257, %v2260
    %v2263 = vmul.f32 %v2245, 0.0
    %v2264 = vadd.f32 %v2262, %v2263
    %2265 = vmatpush.msra.mxu0 0.0
    %2266 = vmatpush.msra.mxu0 0.0
    %2267 = vmatpush.msra.mxu0 0.0
    %2268 = vmatpush.msra.mxu0 0.0
    %2269 = vmatpush.msra.mxu0 0.0
    %2270 = vmatpush.msra.mxu0 0.0
    %2271 = vmatpush.msra.mxu0 0.0
    %2272 = vmatpush.msra.mxu0 0.0
    %2273 = vmatpush.msra.mxu0 0.0
    %2274 = vmatpush.msra.mxu0 0.0
    %2275 = vmatpush.msra.mxu0 0.0
    %2276 = vmatpush.msra.mxu0 0.0
    %2277 = vmatpush.msra.mxu0 %v1480
    %2278 = vmatpush.msra.mxu0 %v1479
    %2279 = vmatpush.msra.mxu0 %v1478
    %2280 = vmatpush.msra.mxu0 %v1477
    %2281 = vmatmul.f32.gmra.mxu0 %v2013
    %v2282 = vpop.f32.mrf.mxu0
    %v2283 = vadd.f32 %v1487, %v2282
    %2284 = vdwg.mxu0
    %2286 = vrot.lane.b32.xlu0 %v2264, 112
    %v2287 = vpop.permute.xlu0 %2286
    %v2288 = vsel %vm78, %v2287, 0
    %2290 = vmatpush.msra.mxu0 0.0
    %2291 = vmatpush.msra.mxu0 0.0
    %2292 = vmatpush.msra.mxu0 0.0
    %2293 = vmatpush.msra.mxu0 0.0
    %2294 = vmatpush.msra.mxu0 0.0
    %2295 = vmatpush.msra.mxu0 0.0
    %2296 = vmatpush.msra.mxu0 0.0
    %2297 = vmatpush.msra.mxu0 0.0
    %2298 = vmatpush.msra.mxu0 0.0
    %2299 = vmatpush.msra.mxu0 0.0
    %2300 = vmatpush.msra.mxu0 0.0
    %2301 = vmatpush.msra.mxu0 0.0
    %2302 = vmatpush.msra.mxu0 0.0
    %2303 = vmatpush.msra.mxu0 0.0
    %2304 = vmatpush.msra.mxu0 %v1483
    %2305 = vmatpush.msra.mxu0 %v1482
    %2306 = vmatmul.f32.gmra.mxu0 %v2288
    %v2307 = vpop.f32.mrf.mxu0
    %v2308 = vadd.f32 %v1492, %v2307
    %2309 = vdwg.mxu0
    %v2310 = vadd.f32 %v2283, %v2308
    %v2311 = vxor.u32 %v2310, 2147483648
    %v2312 = vmul.f32 %v2311, 1.442695
    %v2313 = vpow.pop %v2312
    %v2314 = vadd.f32 %v2313, 1.0
    %v2315 = vrcp.pop %v2314
    %v2316 = vmul.f32 %v2314, %v2315
    %v2317 = vsub.f32 1.0, %v2316
    %v2318 = vmul.f32 %v2315, %v2317
    %v2319 = vadd.f32 %v2315, %v2318
    %vm2320 = vweird.f32 %v2314
    %vm2321 = vweird.f32 %v2315
    %vm2322 = vmor %vm2320, %vm2321
    %v2323 = vsel %vm2322, %v2315, %v2319
    %v2324 = vand.u32 2147483647, %v2314
    %vm2325 = vcmp.eq.f32.partialorder %v2324, 8.507059e+37
    %v2326 = vand.u32 %v2314, 2147483648
    %v2327 = vor.u32 1.1754944e-38, %v2326
    %v2328 = vsel %vm2325, %v2327, %v2323
    %v2329 = vmul.f32 1.0, %v2328
    %2331 = vrot.lane.b32.xlu0 %v2308, 96
    %v2332 = vpop.permute.xlu0 %2331
    %v2334 = vmul.f32 %v2329, %v2332
    %2336 = vrot.lane.b32.xlu0 %v2334, 32
    %v2337 = vpop.permute.xlu0 %2336
    %v2339 = vadd.f32 %v2283, %v2337
    %v2340 = vtanh.pop %v2339
    %v2341 = vsub.f32 1.0, %v2329
    %2343 = vrot.lane.b32.xlu0 %v2340, 112
    %v2344 = vpop.permute.xlu0 %2343
    %v2346 = vmul.f32 %v2341, %v2344
    %v2347 = vmul.f32 %v2329, %v2264
    %v2348 = vadd.f32 %v2346, %v2347
    %2349 = vmatpush.msra.mxu0 0.0
    %2350 = vmatpush.msra.mxu0 0.0
    %2351 = vmatpush.msra.mxu0 0.0
    %2352 = vmatpush.msra.mxu0 0.0
    %2353 = vmatpush.msra.mxu0 0.0
    %2354 = vmatpush.msra.mxu0 0.0
    %2355 = vmatpush.msra.mxu0 0.0
    %2356 = vmatpush.msra.mxu0 0.0
    %2357 = vmatpush.msra.mxu0 0.0
    %2358 = vmatpush.msra.mxu0 0.0
    %2359 = vmatpush.msra.mxu0 0.0
    %2360 = vmatpush.msra.mxu0 0.0
    %2361 = vmatpush.msra.mxu0 %v1480
    %2362 = vmatpush.msra.mxu0 %v1479
    %2363 = vmatpush.msra.mxu0 %v1478
    %2364 = vmatpush.msra.mxu0 %v1477
    %2365 = vmatmul.f32.gmra.mxu0 %v1926
    %v2366 = vpop.f32.mrf.mxu0
    %v2367 = vadd.f32 %v1487, %v2366
    %2368 = vdwg.mxu0
    %2370 = vrot.lane.b32.xlu0 %v2348, 112
    %v2371 = vpop.permute.xlu0 %2370
    %v2372 = vsel %vm78, %v2371, 0
    %2374 = vmatpush.msra.mxu0 0.0
    %2375 = vmatpush.msra.mxu0 0.0
    %2376 = vmatpush.msra.mxu0 0.0
    %2377 = vmatpush.msra.mxu0 0.0
    %2378 = vmatpush.msra.mxu0 0.0
    %2379 = vmatpush.msra.mxu0 0.0
    %2380 = vmatpush.msra.mxu0 0.0
    %2381 = vmatpush.msra.mxu0 0.0
    %2382 = vmatpush.msra.mxu0 0.0
    %2383 = vmatpush.msra.mxu0 0.0
    %2384 = vmatpush.msra.mxu0 0.0
    %2385 = vmatpush.msra.mxu0 0.0
    %2386 = vmatpush.msra.mxu0 0.0
    %2387 = vmatpush.msra.mxu0 0.0
    %2388 = vmatpush.msra.mxu0 %v1483
    %2389 = vmatpush.msra.mxu0 %v1482
    %2390 = vmatmul.f32.gmra.mxu0 %v2372
    %v2391 = vpop.f32.mrf.mxu0
    %v2392 = vadd.f32 %v1492, %v2391
    %2393 = vdwg.mxu0
    %v2394 = vadd.f32 %v2367, %v2392
    %v2395 = vxor.u32 %v2394, 2147483648
    %v2396 = vmul.f32 %v2395, 1.442695
    %v2397 = vpow.pop %v2396
    %v2398 = vadd.f32 %v2397, 1.0
    %v2399 = vrcp.pop %v2398
    %v2400 = vmul.f32 %v2398, %v2399
    %v2401 = vsub.f32 1.0, %v2400
    %v2402 = vmul.f32 %v2399, %v2401
    %v2403 = vadd.f32 %v2399, %v2402
    %vm2404 = vweird.f32 %v2398
    %vm2405 = vweird.f32 %v2399
    %vm2406 = vmor %vm2404, %vm2405
    %v2407 = vsel %vm2406, %v2399, %v2403
    %v2408 = vand.u32 2147483647, %v2398
    %vm2409 = vcmp.eq.f32.partialorder %v2408, 8.507059e+37
    %v2410 = vand.u32 %v2398, 2147483648
    %v2411 = vor.u32 1.1754944e-38, %v2410
    %v2412 = vsel %vm2409, %v2411, %v2407
    %v2413 = vmul.f32 1.0, %v2412
    %2415 = vrot.lane.b32.xlu0 %v2392, 96
    %v2416 = vpop.permute.xlu0 %2415
    %v2418 = vmul.f32 %v2413, %v2416
    %2420 = vrot.lane.b32.xlu0 %v2418, 32
    %v2421 = vpop.permute.xlu0 %2420
    %v2423 = vadd.f32 %v2367, %v2421
    %v2424 = vtanh.pop %v2423
    %v2425 = vsub.f32 1.0, %v2413
    %2427 = vrot.lane.b32.xlu0 %v2424, 112
    %v2428 = vpop.permute.xlu0 %2427
    %v2430 = vmul.f32 %v2425, %v2428
    %v2431 = vmul.f32 %v2413, %v2348
    %v2432 = vadd.f32 %v2430, %v2431
    %2433 = vmatpush.msra.mxu0 0.0
    %2434 = vmatpush.msra.mxu0 0.0
    %2435 = vmatpush.msra.mxu0 0.0
    %2436 = vmatpush.msra.mxu0 0.0
    %2437 = vmatpush.msra.mxu0 0.0
    %2438 = vmatpush.msra.mxu0 0.0
    %2439 = vmatpush.msra.mxu0 0.0
    %2440 = vmatpush.msra.mxu0 0.0
    %2441 = vmatpush.msra.mxu0 0.0
    %2442 = vmatpush.msra.mxu0 0.0
    %2443 = vmatpush.msra.mxu0 0.0
    %2444 = vmatpush.msra.mxu0 0.0
    %2445 = vmatpush.msra.mxu0 %v1480
    %2446 = vmatpush.msra.mxu0 %v1479
    %2447 = vmatpush.msra.mxu0 %v1478
    %2448 = vmatpush.msra.mxu0 %v1477
    %2449 = vmatmul.f32.gmra.mxu0 %v1839
    %v2450 = vpop.f32.mrf.mxu0
    %v2451 = vadd.f32 %v1487, %v2450
    %2452 = vdwg.mxu0
    %2454 = vrot.lane.b32.xlu0 %v2432, 112
    %v2455 = vpop.permute.xlu0 %2454
    %v2456 = vsel %vm78, %v2455, 0
    %2458 = vmatpush.msra.mxu0 0.0
    %2459 = vmatpush.msra.mxu0 0.0
    %2460 = vmatpush.msra.mxu0 0.0
    %2461 = vmatpush.msra.mxu0 0.0
    %2462 = vmatpush.msra.mxu0 0.0
    %2463 = vmatpush.msra.mxu0 0.0
    %2464 = vmatpush.msra.mxu0 0.0
    %2465 = vmatpush.msra.mxu0 0.0
    %2466 = vmatpush.msra.mxu0 0.0
    %2467 = vmatpush.msra.mxu0 0.0
    %2468 = vmatpush.msra.mxu0 0.0
    %2469 = vmatpush.msra.mxu0 0.0
    %2470 = vmatpush.msra.mxu0 0.0
    %2471 = vmatpush.msra.mxu0 0.0
    %2472 = vmatpush.msra.mxu0 %v1483
    %2473 = vmatpush.msra.mxu0 %v1482
    %2474 = vmatmul.f32.gmra.mxu0 %v2456
    %v2475 = vpop.f32.mrf.mxu0
    %v2476 = vadd.f32 %v1492, %v2475
    %2477 = vdwg.mxu0
    %v2478 = vadd.f32 %v2451, %v2476
    %v2479 = vxor.u32 %v2478, 2147483648
    %v2480 = vmul.f32 %v2479, 1.442695
    %v2481 = vpow.pop %v2480
    %v2482 = vadd.f32 %v2481, 1.0
    %v2483 = vrcp.pop %v2482
    %v2484 = vmul.f32 %v2482, %v2483
    %v2485 = vsub.f32 1.0, %v2484
    %v2486 = vmul.f32 %v2483, %v2485
    %v2487 = vadd.f32 %v2483, %v2486
    %vm2488 = vweird.f32 %v2482
    %vm2489 = vweird.f32 %v2483
    %vm2490 = vmor %vm2488, %vm2489
    %v2491 = vsel %vm2490, %v2483, %v2487
    %v2492 = vand.u32 2147483647, %v2482
    %vm2493 = vcmp.eq.f32.partialorder %v2492, 8.507059e+37
    %v2494 = vand.u32 %v2482, 2147483648
    %v2495 = vor.u32 1.1754944e-38, %v2494
    %v2496 = vsel %vm2493, %v2495, %v2491
    %v2497 = vmul.f32 1.0, %v2496
    %2499 = vrot.lane.b32.xlu0 %v2476, 96
    %v2500 = vpop.permute.xlu0 %2499
    %v2502 = vmul.f32 %v2497, %v2500
    %2504 = vrot.lane.b32.xlu0 %v2502, 32
    %v2505 = vpop.permute.xlu0 %2504
    %v2507 = vadd.f32 %v2451, %v2505
    %v2508 = vtanh.pop %v2507
    %v2509 = vsub.f32 1.0, %v2497
    %2511 = vrot.lane.b32.xlu0 %v2508, 112
    %v2512 = vpop.permute.xlu0 %2511
    %v2514 = vmul.f32 %v2509, %v2512
    %v2515 = vmul.f32 %v2497, %v2432
    %v2516 = vadd.f32 %v2514, %v2515
    %2517 = vmatpush.msra.mxu0 0.0
    %2518 = vmatpush.msra.mxu0 0.0
    %2519 = vmatpush.msra.mxu0 0.0
    %2520 = vmatpush.msra.mxu0 0.0
    %2521 = vmatpush.msra.mxu0 0.0
    %2522 = vmatpush.msra.mxu0 0.0
    %2523 = vmatpush.msra.mxu0 0.0
    %2524 = vmatpush.msra.mxu0 0.0
    %2525 = vmatpush.msra.mxu0 0.0
    %2526 = vmatpush.msra.mxu0 0.0
    %2527 = vmatpush.msra.mxu0 0.0
    %2528 = vmatpush.msra.mxu0 0.0
    %2529 = vmatpush.msra.mxu0 %v1480
    %2530 = vmatpush.msra.mxu0 %v1479
    %2531 = vmatpush.msra.mxu0 %v1478
    %2532 = vmatpush.msra.mxu0 %v1477
    %2533 = vmatmul.f32.gmra.mxu0 %v1752
    %v2534 = vpop.f32.mrf.mxu0
    %v2535 = vadd.f32 %v1487, %v2534
    %2536 = vdwg.mxu0
    %2538 = vrot.lane.b32.xlu0 %v2516, 112
    %v2539 = vpop.permute.xlu0 %2538
    %v2540 = vsel %vm78, %v2539, 0
    %2542 = vmatpush.msra.mxu0 0.0
    %2543 = vmatpush.msra.mxu0 0.0
    %2544 = vmatpush.msra.mxu0 0.0
    %2545 = vmatpush.msra.mxu0 0.0
    %2546 = vmatpush.msra.mxu0 0.0
    %2547 = vmatpush.msra.mxu0 0.0
    %2548 = vmatpush.msra.mxu0 0.0
    %2549 = vmatpush.msra.mxu0 0.0
    %2550 = vmatpush.msra.mxu0 0.0
    %2551 = vmatpush.msra.mxu0 0.0
    %2552 = vmatpush.msra.mxu0 0.0
    %2553 = vmatpush.msra.mxu0 0.0
    %2554 = vmatpush.msra.mxu0 0.0
    %2555 = vmatpush.msra.mxu0 0.0
    %2556 = vmatpush.msra.mxu0 %v1483
    %2557 = vmatpush.msra.mxu0 %v1482
    %2558 = vmatmul.f32.gmra.mxu0 %v2540
    %v2559 = vpop.f32.mrf.mxu0
    %v2560 = vadd.f32 %v1492, %v2559
    %2561 = vdwg.mxu0
    %v2562 = vadd.f32 %v2535, %v2560
    %v2563 = vxor.u32 %v2562, 2147483648
    %v2564 = vmul.f32 %v2563, 1.442695
    %v2565 = vpow.pop %v2564
    %v2566 = vadd.f32 %v2565, 1.0
    %v2567 = vrcp.pop %v2566
    %v2568 = vmul.f32 %v2566, %v2567
    %v2569 = vsub.f32 1.0, %v2568
    %v2570 = vmul.f32 %v2567, %v2569
    %v2571 = vadd.f32 %v2567, %v2570
    %vm2572 = vweird.f32 %v2566
    %vm2573 = vweird.f32 %v2567
    %vm2574 = vmor %vm2572, %vm2573
    %v2575 = vsel %vm2574, %v2567, %v2571
    %v2576 = vand.u32 2147483647, %v2566
    %vm2577 = vcmp.eq.f32.partialorder %v2576, 8.507059e+37
    %v2578 = vand.u32 %v2566, 2147483648
    %v2579 = vor.u32 1.1754944e-38, %v2578
    %v2580 = vsel %vm2577, %v2579, %v2575
    %v2581 = vmul.f32 1.0, %v2580
    %2583 = vrot.lane.b32.xlu0 %v2560, 96
    %v2584 = vpop.permute.xlu0 %2583
    %v2586 = vmul.f32 %v2581, %v2584
    %2588 = vrot.lane.b32.xlu0 %v2586, 32
    %v2589 = vpop.permute.xlu0 %2588
    %v2591 = vadd.f32 %v2535, %v2589
    %v2592 = vtanh.pop %v2591
    %v2593 = vsub.f32 1.0, %v2581
    %2595 = vrot.lane.b32.xlu0 %v2592, 112
    %v2596 = vpop.permute.xlu0 %2595
    %v2598 = vmul.f32 %v2593, %v2596
    %v2599 = vmul.f32 %v2581, %v2516
    %v2600 = vadd.f32 %v2598, %v2599
    %2601 = vmatpush.msra.mxu0 0.0
    %2602 = vmatpush.msra.mxu0 0.0
    %2603 = vmatpush.msra.mxu0 0.0
    %2604 = vmatpush.msra.mxu0 0.0
    %2605 = vmatpush.msra.mxu0 0.0
    %2606 = vmatpush.msra.mxu0 0.0
    %2607 = vmatpush.msra.mxu0 0.0
    %2608 = vmatpush.msra.mxu0 0.0
    %2609 = vmatpush.msra.mxu0 0.0
    %2610 = vmatpush.msra.mxu0 0.0
    %2611 = vmatpush.msra.mxu0 0.0
    %2612 = vmatpush.msra.mxu0 0.0
    %2613 = vmatpush.msra.mxu0 %v1480
    %2614 = vmatpush.msra.mxu0 %v1479
    %2615 = vmatpush.msra.mxu0 %v1478
    %2616 = vmatpush.msra.mxu0 %v1477
    %2617 = vmatmul.f32.gmra.mxu0 %v1665
    %v2618 = vpop.f32.mrf.mxu0
    %v2619 = vadd.f32 %v1487, %v2618
    %2620 = vdwg.mxu0
    %2622 = vrot.lane.b32.xlu0 %v2600, 112
    %v2623 = vpop.permute.xlu0 %2622
    %v2624 = vsel %vm78, %v2623, 0
    %2626 = vmatpush.msra.mxu0 0.0
    %2627 = vmatpush.msra.mxu0 0.0
    %2628 = vmatpush.msra.mxu0 0.0
    %2629 = vmatpush.msra.mxu0 0.0
    %2630 = vmatpush.msra.mxu0 0.0
    %2631 = vmatpush.msra.mxu0 0.0
    %2632 = vmatpush.msra.mxu0 0.0
    %2633 = vmatpush.msra.mxu0 0.0
    %2634 = vmatpush.msra.mxu0 0.0
    %2635 = vmatpush.msra.mxu0 0.0
    %2636 = vmatpush.msra.mxu0 0.0
    %2637 = vmatpush.msra.mxu0 0.0
    %2638 = vmatpush.msra.mxu0 0.0
    %2639 = vmatpush.msra.mxu0 0.0
    %2640 = vmatpush.msra.mxu0 %v1483
    %2641 = vmatpush.msra.mxu0 %v1482
    %2642 = vmatmul.f32.gmra.mxu0 %v2624
    %v2643 = vpop.f32.mrf.mxu0
    %v2644 = vadd.f32 %v1492, %v2643
    %2645 = vdwg.mxu0
    %v2646 = vadd.f32 %v2619, %v2644
    %v2647 = vxor.u32 %v2646, 2147483648
    %v2648 = vmul.f32 %v2647, 1.442695
    %v2649 = vpow.pop %v2648
    %v2650 = vadd.f32 %v2649, 1.0
    %v2651 = vrcp.pop %v2650
    %v2652 = vmul.f32 %v2650, %v2651
    %v2653 = vsub.f32 1.0, %v2652
    %v2654 = vmul.f32 %v2651, %v2653
    %v2655 = vadd.f32 %v2651, %v2654
    %vm2656 = vweird.f32 %v2650
    %vm2657 = vweird.f32 %v2651
    %vm2658 = vmor %vm2656, %vm2657
    %v2659 = vsel %vm2658, %v2651, %v2655
    %v2660 = vand.u32 2147483647, %v2650
    %vm2661 = vcmp.eq.f32.partialorder %v2660, 8.507059e+37
    %v2662 = vand.u32 %v2650, 2147483648
    %v2663 = vor.u32 1.1754944e-38, %v2662
    %v2664 = vsel %vm2661, %v2663, %v2659
    %v2665 = vmul.f32 1.0, %v2664
    %2667 = vrot.lane.b32.xlu0 %v2644, 96
    %v2668 = vpop.permute.xlu0 %2667
    %v2670 = vmul.f32 %v2665, %v2668
    %2672 = vrot.lane.b32.xlu0 %v2670, 32
    %v2673 = vpop.permute.xlu0 %2672
    %v2675 = vadd.f32 %v2619, %v2673
    %v2676 = vtanh.pop %v2675
    %v2677 = vsub.f32 1.0, %v2665
    %2679 = vrot.lane.b32.xlu0 %v2676, 112
    %v2680 = vpop.permute.xlu0 %2679
    %v2682 = vmul.f32 %v2677, %v2680
    %v2683 = vmul.f32 %v2665, %v2600
    %v2684 = vadd.f32 %v2682, %v2683
    %2685 = vmatpush.msra.mxu0 0.0
    %2686 = vmatpush.msra.mxu0 0.0
    %2687 = vmatpush.msra.mxu0 0.0
    %2688 = vmatpush.msra.mxu0 0.0
    %2689 = vmatpush.msra.mxu0 0.0
    %2690 = vmatpush.msra.mxu0 0.0
    %2691 = vmatpush.msra.mxu0 0.0
    %2692 = vmatpush.msra.mxu0 0.0
    %2693 = vmatpush.msra.mxu0 0.0
    %2694 = vmatpush.msra.mxu0 0.0
    %2695 = vmatpush.msra.mxu0 0.0
    %2696 = vmatpush.msra.mxu0 0.0
    %2697 = vmatpush.msra.mxu0 %v1480
    %2698 = vmatpush.msra.mxu0 %v1479
    %2699 = vmatpush.msra.mxu0 %v1478
    %2700 = vmatpush.msra.mxu0 %v1477
    %2701 = vmatmul.f32.gmra.mxu0 %v1578
    %v2702 = vpop.f32.mrf.mxu0
    %v2703 = vadd.f32 %v1487, %v2702
    %2704 = vdwg.mxu0
    %2706 = vrot.lane.b32.xlu0 %v2684, 112
    %v2707 = vpop.permute.xlu0 %2706
    %v2708 = vsel %vm78, %v2707, 0
    %2710 = vmatpush.msra.mxu0 0.0
    %2711 = vmatpush.msra.mxu0 0.0
    %2712 = vmatpush.msra.mxu0 0.0
    %2713 = vmatpush.msra.mxu0 0.0
    %2714 = vmatpush.msra.mxu0 0.0
    %2715 = vmatpush.msra.mxu0 0.0
    %2716 = vmatpush.msra.mxu0 0.0
    %2717 = vmatpush.msra.mxu0 0.0
    %2718 = vmatpush.msra.mxu0 0.0
    %2719 = vmatpush.msra.mxu0 0.0
    %2720 = vmatpush.msra.mxu0 0.0
    %2721 = vmatpush.msra.mxu0 0.0
    %2722 = vmatpush.msra.mxu0 0.0
    %2723 = vmatpush.msra.mxu0 0.0
    %2724 = vmatpush.msra.mxu0 %v1483
    %2725 = vmatpush.msra.mxu0 %v1482
    %2726 = vmatmul.f32.gmra.mxu0 %v2708
    %v2727 = vpop.f32.mrf.mxu0
    %v2728 = vadd.f32 %v1492, %v2727
    %2729 = vdwg.mxu0
    %v2730 = vadd.f32 %v2703, %v2728
    %v2731 = vxor.u32 %v2730, 2147483648
    %v2732 = vmul.f32 %v2731, 1.442695
    %v2733 = vpow.pop %v2732
    %v2734 = vadd.f32 %v2733, 1.0
    %v2735 = vrcp.pop %v2734
    %v2736 = vmul.f32 %v2734, %v2735
    %v2737 = vsub.f32 1.0, %v2736
    %v2738 = vmul.f32 %v2735, %v2737
    %v2739 = vadd.f32 %v2735, %v2738
    %vm2740 = vweird.f32 %v2734
    %vm2741 = vweird.f32 %v2735
    %vm2742 = vmor %vm2740, %vm2741
    %v2743 = vsel %vm2742, %v2735, %v2739
    %v2744 = vand.u32 2147483647, %v2734
    %vm2745 = vcmp.eq.f32.partialorder %v2744, 8.507059e+37
    %v2746 = vand.u32 %v2734, 2147483648
    %v2747 = vor.u32 1.1754944e-38, %v2746
    %v2748 = vsel %vm2745, %v2747, %v2743
    %v2749 = vmul.f32 1.0, %v2748
    %2751 = vrot.lane.b32.xlu0 %v2728, 96
    %v2752 = vpop.permute.xlu0 %2751
    %v2754 = vmul.f32 %v2749, %v2752
    %2756 = vrot.lane.b32.xlu0 %v2754, 32
    %v2757 = vpop.permute.xlu0 %2756
    %v2759 = vadd.f32 %v2703, %v2757
    %v2760 = vtanh.pop %v2759
    %v2761 = vsub.f32 1.0, %v2749
    %2763 = vrot.lane.b32.xlu0 %v2760, 112
    %v2764 = vpop.permute.xlu0 %2763
    %v2766 = vmul.f32 %v2761, %v2764
    %v2767 = vmul.f32 %v2749, %v2684
    %v2768 = vadd.f32 %v2766, %v2767
    %2769 = vmatpush.msra.mxu0 0.0
    %2770 = vmatpush.msra.mxu0 0.0
    %2771 = vmatpush.msra.mxu0 0.0
    %2772 = vmatpush.msra.mxu0 0.0
    %2773 = vmatpush.msra.mxu0 0.0
    %2774 = vmatpush.msra.mxu0 0.0
    %2775 = vmatpush.msra.mxu0 0.0
    %2776 = vmatpush.msra.mxu0 0.0
    %2777 = vmatpush.msra.mxu0 0.0
    %2778 = vmatpush.msra.mxu0 0.0
    %2779 = vmatpush.msra.mxu0 0.0
    %2780 = vmatpush.msra.mxu0 0.0
    %2781 = vmatpush.msra.mxu0 %v1480
    %2782 = vmatpush.msra.mxu0 %v1479
    %2783 = vmatpush.msra.mxu0 %v1478
    %2784 = vmatpush.msra.mxu0 %v1477
    %2785 = vmatmul.f32.gmra.mxu0 %v1496
    %v2786 = vpop.f32.mrf.mxu0
    %v2787 = vadd.f32 %v1487, %v2786
    %2788 = vdwg.mxu0
    %2790 = vrot.lane.b32.xlu0 %v2768, 112
    %v2791 = vpop.permute.xlu0 %2790
    %v2792 = vsel %vm78, %v2791, 0
    %2794 = vmatpush.msra.mxu0 0.0
    %2795 = vmatpush.msra.mxu0 0.0
    %2796 = vmatpush.msra.mxu0 0.0
    %2797 = vmatpush.msra.mxu0 0.0
    %2798 = vmatpush.msra.mxu0 0.0
    %2799 = vmatpush.msra.mxu0 0.0
    %2800 = vmatpush.msra.mxu0 0.0
    %2801 = vmatpush.msra.mxu0 0.0
    %2802 = vmatpush.msra.mxu0 0.0
    %2803 = vmatpush.msra.mxu0 0.0
    %2804 = vmatpush.msra.mxu0 0.0
    %2805 = vmatpush.msra.mxu0 0.0
    %2806 = vmatpush.msra.mxu0 0.0
    %2807 = vmatpush.msra.mxu0 0.0
    %2808 = vmatpush.msra.mxu0 %v1483
    %2809 = vmatpush.msra.mxu0 %v1482
    %2810 = vmatmul.f32.gmra.mxu0 %v2792
    %v2811 = vpop.f32.mrf.mxu0
    %v2812 = vadd.f32 %v1492, %v2811
    %2813 = vdwg.mxu0
    %v2814 = vadd.f32 %v2787, %v2812
    %v2815 = vxor.u32 %v2814, 2147483648
    %v2816 = vmul.f32 %v2815, 1.442695
    %v2817 = vpow.pop %v2816
    %v2818 = vadd.f32 %v2817, 1.0
    %v2819 = vrcp.pop %v2818
    %v2820 = vmul.f32 %v2818, %v2819
    %v2821 = vsub.f32 1.0, %v2820
    %v2822 = vmul.f32 %v2819, %v2821
    %v2823 = vadd.f32 %v2819, %v2822
    %vm2824 = vweird.f32 %v2818
    %vm2825 = vweird.f32 %v2819
    %vm2826 = vmor %vm2824, %vm2825
    %v2827 = vsel %vm2826, %v2819, %v2823
    %v2828 = vand.u32 2147483647, %v2818
    %vm2829 = vcmp.eq.f32.partialorder %v2828, 8.507059e+37
    %v2830 = vand.u32 %v2818, 2147483648
    %v2831 = vor.u32 1.1754944e-38, %v2830
    %v2832 = vsel %vm2829, %v2831, %v2827
    %v2833 = vmul.f32 1.0, %v2832
    %2835 = vrot.lane.b32.xlu0 %v2812, 96
    %v2836 = vpop.permute.xlu0 %2835
    %v2838 = vmul.f32 %v2833, %v2836
    %2840 = vrot.lane.b32.xlu0 %v2838, 32
    %v2841 = vpop.permute.xlu0 %2840
    %v2843 = vadd.f32 %v2787, %v2841
    %v2844 = vtanh.pop %v2843
    %v2845 = vsub.f32 1.0, %v2833
    %2847 = vrot.lane.b32.xlu0 %v2844, 112
    %v2848 = vpop.permute.xlu0 %2847
    %v2850 = vmul.f32 %v2845, %v2848
    %v2851 = vmul.f32 %v2833, %v2768
    %v2852 = vadd.f32 %v2850, %v2851
    %v2854 = vsel %vm78, %v1602, %v2852
    %v2856 = vsel %vm78, %v1689, %v2768
    %v2858 = vsel %vm78, %v1776, %v2684
    %v2860 = vsel %vm78, %v1863, %v2600
    %v2862 = vsel %vm78, %v1950, %v2516
    %v2864 = vsel %vm78, %v2037, %v2432
    %v2866 = vsel %vm78, %v2124, %v2348
    %2868 = vrot.lane.b32.xlu0 %v2185, 112
    %v2869 = vpop.permute.xlu0 %2868
    %v2871 = vsel %vm78, %v2869, %v2264
    %v2872 = vsel %vm78, %v2869, %v2852
    %s2873 = scalar_lea.vmem %s10, 2
    %2874 = vst.msk [vmem:[%s2873] sm:$0x3] %vm1460, %v2872
    %2875 = vst.msk [vmem:[#allocation2] sm:$0x3] %vm1460, %v2854
    %s2876 = scalar_lea.vmem [#allocation2], 2
    %2877 = vst.msk [vmem:[%s2876] sm:$0x3] %vm1460, %v2856
    %s2878 = scalar_lea.vmem [#allocation2], 4
    %2879 = vst.msk [vmem:[%s2878] sm:$0x3] %vm1460, %v2858
    %s2880 = scalar_lea.vmem [#allocation2], 6
    %2881 = vst.msk [vmem:[%s2880] sm:$0x3] %vm1460, %v2860
    %s2882 = scalar_lea.vmem [#allocation2], 8
    %2883 = vst.msk [vmem:[%s2882] sm:$0x3] %vm1460, %v2862
    %s2884 = scalar_lea.vmem [#allocation2], 10
    %2885 = vst.msk [vmem:[%s2884] sm:$0x3] %vm1460, %v2864
    %s2886 = scalar_lea.vmem [#allocation2], 12
    %2887 = vst.msk [vmem:[%s2886] sm:$0x3] %vm1460, %v2866
    %s2888 = scalar_lea.vmem [#allocation2], 14
    %2889 = vst.msk [vmem:[%s2888] sm:$0x3] %vm1460, %v2871
    // Predicated region
    $region38: #{seq2seq_forward.2} parent=1 // pred_check
      _
    $region39: #{seq2seq_forward.2} parent=1 // pred_check_branch
      %2891 = sbr.rel (0) target = $region41
    $region40: #{seq2seq_forward.2} parent=1 // pred_region
      %2893 = vsyncadd [#allocation3], 0
      %s2894 = sshll.u32 [#allocation2], 4
      %s2895 = int_to_ptr.vmem [resolvable:$true] %s2894
      %s2896 = sshll.u32 %s9, 4
      %s2897 = int_to_ptr.hbm [resolvable:$true] %s2896
      %2902 = dma.vmem_to_hbm [thread:$0]  %s2895, 256, %s2897, [#allocation3], 32, 32, 2
    $region41: #{seq2seq_forward.2} parent=1 // pred_fallthru
      _
    // Predicated region
    $region42: #{seq2seq_forward.2} parent=1 // pred_check
      _
    $region43: #{seq2seq_forward.2} parent=1 // pred_check_branch
      %2904 = sbr.rel (0) target = $region45
    $region44: #{seq2seq_forward.2} parent=1 // pred_region
      _
    $region45: #{seq2seq_forward.2} parent=1 // pred_fallthru
      _
    // Predicated region
    $region46: #{seq2seq_forward.2} parent=1 // pred_check
      _
    $region47: #{seq2seq_forward.2} parent=1 // pred_check_branch
      %2906 = sbr.rel (0) target = $region49
    $region48: #{seq2seq_forward.2} parent=1 // pred_region
      %2908 = dma.done [#allocation3], 256
    $region49: #{seq2seq_forward.2} parent=1 // pred_fallthru
      _
    // Predicated region
    $region50: #{seq2seq_forward.2} parent=1 // pred_check
      _
    $region51: #{seq2seq_forward.2} parent=1 // pred_check_branch
      %2910 = sbr.rel (0) target = $region53
    $region52: #{seq2seq_forward.2} parent=1 // pred_region
      _
    $region53: #{seq2seq_forward.2} parent=1 // pred_fallthru
      _
    %2911 = vsyncpa [#allocation3], 1

</llo_original>
